<compile_context>
chip_gen: v7x
topology: tpu7x:2x2x1
jax: 0.10.0
libtpu: 0.0.40
codegen_flags: <defaults>
</compile_context>

<pallas_src>
import jax
import jax.numpy as jnp
from jax import lax
from jax.experimental import pallas as pl
from jax.experimental.pallas import tpu as pltpu

N_EMBD = 384
N_HEADS = 6
HEAD_SIZE = N_EMBD // N_HEADS        # 64 (Block recomputes head_size = n_embd // n_heads)
SCALE = float(HEAD_SIZE) ** -0.5
EPS = 1e-5                           # nn.LayerNorm default
NEG_INF = -1e30                      # large finite negative (masked-softmax safe)


def _layernorm(v, gamma, beta):
    mu = jnp.mean(v, axis=-1, keepdims=True)
    var = jnp.mean((v - mu) ** 2, axis=-1, keepdims=True)
    return (v - mu) * lax.rsqrt(var + EPS) * gamma + beta


def block_kernel(x_ref, mask_ref, g1_ref, b1_ref, g2_ref, b2_ref,
                 wq_ref, wk_ref, wv_ref,
                 w1_ref, bias1_ref, w2_ref, bias2_ref,
                 o_ref, attn_ref):
    bb, T, C = x_ref.shape
    M = bb * T

    x = x_ref[...].reshape(M, C)                       # (M, C) f32 slab

    # ---- norm1 + QKV projection (bf16 operands, f32 accumulation) ----
    xn1 = _layernorm(x, g1_ref[0], b1_ref[0])
    xn1_b = xn1.astype(jnp.bfloat16)
    q = (jnp.dot(xn1_b, wq_ref[...], preferred_element_type=jnp.float32)
         * SCALE).reshape(bb, T, C)                    # 1/sqrt(d) folded into q
    k = jnp.dot(xn1_b, wk_ref[...],
                preferred_element_type=jnp.float32).reshape(bb, T, C)
    v = jnp.dot(xn1_b, wv_ref[...],
                preferred_element_type=jnp.float32).reshape(bb, T, C)

    mask = mask_ref[...]                               # (T, T) additive bias

    # ---- multi-head causal attention: heads write into VMEM scratch ----
    for h in range(N_HEADS):                           # static unroll (6 heads)
        sl = slice(h * HEAD_SIZE, (h + 1) * HEAD_SIZE)
        qh = q[:, :, sl].astype(jnp.bfloat16)          # (bb, T, Dh)
        kh = k[:, :, sl].astype(jnp.bfloat16)
        vh = v[:, :, sl].astype(jnp.bfloat16)
        s = jnp.einsum("bqd,bkd->bqk", qh, kh,
                       preferred_element_type=jnp.float32)     # (bb, T, T) f32
        s = s + mask                                   # masked_fill equivalent
        s = s - jnp.max(s, axis=-1, keepdims=True)     # softmax (f32)
        p = jnp.exp(s)
        p = p * pl.reciprocal(jnp.sum(p, axis=-1, keepdims=True), approx=True)
        attn_ref[:, :, sl] = jnp.einsum("bqk,bkd->bqd",
                                        p.astype(jnp.bfloat16), vh,
                                        preferred_element_type=jnp.float32)

    x1 = x + attn_ref[...].reshape(M, C)               # residual 1 (f32)

    # ---- norm2 + feed-forward network ----
    xn2 = _layernorm(x1, g2_ref[0], b2_ref[0])
    hdn = (jnp.dot(xn2.astype(jnp.bfloat16), w1_ref[...],
                   preferred_element_type=jnp.float32) + bias1_ref[0])
    hdn = jnp.maximum(hdn, 0.0)                        # ReLU (f32)
    y = (jnp.dot(hdn.astype(jnp.bfloat16), w2_ref[...],
                 preferred_element_type=jnp.float32) + bias2_ref[0])

    o_ref[...] = (x1 + y).reshape(bb, T, C)            # residual 2


def _pick_batch_tile(B, T, target_rows=256):
    """Largest divisor of B such that bb*T >= target_rows (or all of B if small)."""
    bb = min(B, max(1, -(-target_rows // T)))
    while B % bb:
        bb -= 1
    return bb


def block_forward(x, params):
    B, T, C = x.shape
    assert C == N_EMBD
    bb = _pick_batch_tile(B, T)
    grid = (B // bb,)

    # Causal additive mask, precomputed once on the host (hoisted out of kernel).
    tri = jnp.tril(jnp.ones((T, T), jnp.bool_))
    mask = jnp.where(tri, 0.0, NEG_INF).astype(jnp.float32)

    bf16 = jnp.bfloat16
    wq, wk, wv = (params[n].astype(bf16) for n in ("wq", "wk", "wv"))
    w1, w2 = params["w1"].astype(bf16), params["w2"].astype(bf16)

    def const_spec(shape):
        return pl.BlockSpec(shape, lambda i: tuple(0 for _ in shape))

    in_specs = [
        pl.BlockSpec((bb, T, C), lambda i: (i, 0, 0)),   # x
        const_spec((T, T)),                              # causal mask bias
        const_spec((1, C)), const_spec((1, C)),          # gamma1, beta1
        const_spec((1, C)), const_spec((1, C)),          # gamma2, beta2
        const_spec((C, C)), const_spec((C, C)), const_spec((C, C)),  # Wq, Wk, Wv
        const_spec((C, 4 * C)), const_spec((1, 4 * C)),  # W1, b1
        const_spec((4 * C, C)), const_spec((1, C)),      # W2, b2
    ]

    return pl.pallas_call(
        block_kernel,
        out_shape=jax.ShapeDtypeStruct((B, T, C), jnp.float32),
        grid=grid,
        in_specs=in_specs,
        out_specs=pl.BlockSpec((bb, T, C), lambda i: (i, 0, 0)),
        scratch_shapes=[pltpu.VMEM((bb, T, C), jnp.float32)],
        compiler_params=pltpu.CompilerParams(
            dimension_semantics=("parallel",),     # batch axis is independent (v7x 2 TCs)
            vmem_limit_bytes=48 << 20,             # <= v7x's 64 MiB physical VMEM
        ),
    )(x, mask, params["g1"], params["b1"], params["g2"], params["b2"],
      wq, wk, wv, w1, params["bias1"], w2, params["bias2"])


def make_params(key):
    C = N_EMBD
    ks = jax.random.split(key, 8)
    scale = 0.02
    return {
        "g1": jnp.ones((1, C), jnp.float32),
        "b1": jnp.zeros((1, C), jnp.float32),
        "g2": jnp.ones((1, C), jnp.float32),
        "b2": jnp.zeros((1, C), jnp.float32),
        # per-head q/k/v projections packed column-wise: cols [h*64:(h+1)*64] = head h
        "wq": scale * jax.random.normal(ks[0], (C, C), jnp.float32),
        "wk": scale * jax.random.normal(ks[1], (C, C), jnp.float32),
        "wv": scale * jax.random.normal(ks[2], (C, C), jnp.float32),
        "w1": scale * jax.random.normal(ks[3], (C, 4 * C), jnp.float32),
        "bias1": scale * jax.random.normal(ks[4], (1, 4 * C), jnp.float32),
        "w2": scale * jax.random.normal(ks[5], (4 * C, C), jnp.float32),
        "bias2": scale * jax.random.normal(ks[6], (1, C), jnp.float32),
    }


def block_forward_ref(x, params):
    """Pure-JAX f32 reference mirroring the PyTorch forward (correctness check)."""
    def ln(v, g, b):
        mu = jnp.mean(v, axis=-1, keepdims=True)
        var = jnp.mean((v - mu) ** 2, axis=-1, keepdims=True)
        return (v - mu) * lax.rsqrt(var + EPS) * g + b

    B, T, C = x.shape
    xn1 = ln(x, params["g1"][0], params["b1"][0])
    q = xn1 @ params["wq"]
    k = xn1 @ params["wk"]
    v = xn1 @ params["wv"]
    causal = jnp.tril(jnp.ones((T, T), bool))
    outs = []
    for h in range(N_HEADS):
        sl = slice(h * HEAD_SIZE, (h + 1) * HEAD_SIZE)
        s = jnp.einsum("btd,bsd->bts", q[..., sl], k[..., sl]) * HEAD_SIZE ** -0.5
        s = jnp.where(causal, s, -jnp.inf)
        p = jax.nn.softmax(s, axis=-1)
        outs.append(jnp.einsum("bts,bsd->btd", p, v[..., sl]))
    x = x + jnp.concatenate(outs, axis=-1)
    xn2 = ln(x, params["g2"][0], params["b2"][0])
    hdn = jnp.maximum(xn2 @ params["w1"] + params["bias1"][0], 0.0)
    return x + hdn @ params["w2"] + params["bias2"][0]


if __name__ == "__main__":
    key = jax.random.PRNGKey(0)
    k_x, k_p = jax.random.split(key)

    B, T, C = 2, 8, N_EMBD
    x = jax.random.normal(k_x, (B, T, C), jnp.float32)
    params = make_params(k_p)

    out = jax.block_until_ready(block_forward(x, params))
    ref = block_forward_ref(x, params)

    assert out.shape == (B, T, C)
    err = float(jnp.max(jnp.abs(out - ref)))
    # bf16 matmul operands + approx reciprocal => loose-ish tolerance vs f32 ref
    assert err < 2e-2, f"max abs err {err}"

    print("KERNEL_OK")
</pallas_src>

<mosaic_0001>
module attributes {stable_mosaic.version = 11 : i64} {
  func.func @block_kernel(%arg0: i32, %arg1: memref<2x8x384xf32, #tpu.memory_space<vmem>>, %arg2: memref<8x8xf32, #tpu.memory_space<vmem>>, %arg3: memref<1x384xf32, #tpu.memory_space<vmem>>, %arg4: memref<1x384xf32, #tpu.memory_space<vmem>>, %arg5: memref<1x384xf32, #tpu.memory_space<vmem>>, %arg6: memref<1x384xf32, #tpu.memory_space<vmem>>, %arg7: memref<384x384xbf16, #tpu.memory_space<vmem>>, %arg8: memref<384x384xbf16, #tpu.memory_space<vmem>>, %arg9: memref<384x384xbf16, #tpu.memory_space<vmem>>, %arg10: memref<384x1536xbf16, #tpu.memory_space<vmem>>, %arg11: memref<1x1536xf32, #tpu.memory_space<vmem>>, %arg12: memref<1536x384xbf16, #tpu.memory_space<vmem>>, %arg13: memref<1x384xf32, #tpu.memory_space<vmem>>, %arg14: memref<2x8x384xf32, #tpu.memory_space<vmem>>, %arg15: memref<2x8x384xf32, #tpu.memory_space<vmem>>) attributes {dimension_semantics = [#tpu.dimension_semantics<parallel>], iteration_bounds = array<i64: 1>, scalar_prefetch = 0 : i64, scratch_operands = 1 : i64, tpu.core_type = #tpu.core_type<tc>, window_params = [{transform_indices = @transform_0, window_bounds = array<i64: 2, 8, 384>}, {pipeline_mode = #tpu.pipeline_mode<synchronous>, transform_indices = @transform_1, window_bounds = array<i64: 8, 8>}, {pipeline_mode = #tpu.pipeline_mode<synchronous>, transform_indices = @transform_2, window_bounds = array<i64: 1, 384>}, {pipeline_mode = #tpu.pipeline_mode<synchronous>, transform_indices = @transform_3, window_bounds = array<i64: 1, 384>}, {pipeline_mode = #tpu.pipeline_mode<synchronous>, transform_indices = @transform_4, window_bounds = array<i64: 1, 384>}, {pipeline_mode = #tpu.pipeline_mode<synchronous>, transform_indices = @transform_5, window_bounds = array<i64: 1, 384>}, {pipeline_mode = #tpu.pipeline_mode<synchronous>, transform_indices = @transform_6, window_bounds = array<i64: 384, 384>}, {pipeline_mode = #tpu.pipeline_mode<synchronous>, transform_indices = @transform_7, window_bounds = array<i64: 384, 384>}, {pipeline_mode = #tpu.pipeline_mode<synchronous>, transform_indices = @transform_8, window_bounds = array<i64: 384, 384>}, {pipeline_mode = #tpu.pipeline_mode<synchronous>, transform_indices = @transform_9, window_bounds = array<i64: 384, 1536>}, {pipeline_mode = #tpu.pipeline_mode<synchronous>, transform_indices = @transform_10, window_bounds = array<i64: 1, 1536>}, {pipeline_mode = #tpu.pipeline_mode<synchronous>, transform_indices = @transform_11, window_bounds = array<i64: 1536, 384>}, {pipeline_mode = #tpu.pipeline_mode<synchronous>, transform_indices = @transform_12, window_bounds = array<i64: 1, 384>}, {transform_indices = @transform_13, window_bounds = array<i64: 2, 8, 384>}]} {
    %c0 = arith.constant 0 : index
    %c0_0 = arith.constant 0 : index
    %c0_1 = arith.constant 0 : index
    %0 = vector.load %arg1[%c0, %c0_0, %c0_1] : memref<2x8x384xf32, #tpu.memory_space<vmem>>, vector<2x8x384xf32>
    %1 = vector.shape_cast %0 : vector<2x8x384xf32> to vector<16x384xf32>
    %c0_2 = arith.constant 0 : index
    %c0_3 = arith.constant 0 : index
    %2 = vector.load %arg3[%c0_2, %c0_3] : memref<1x384xf32, #tpu.memory_space<vmem>>, vector<1x384xf32>
    %3 = vector.shape_cast %2 : vector<1x384xf32> to vector<384xf32>
    %c0_4 = arith.constant 0 : index
    %c0_5 = arith.constant 0 : index
    %4 = vector.load %arg4[%c0_4, %c0_5] : memref<1x384xf32, #tpu.memory_space<vmem>>, vector<1x384xf32>
    %5 = vector.shape_cast %4 : vector<1x384xf32> to vector<384xf32>
    %cst = arith.constant dense<0.000000e+00> : vector<16xf32>
    %6 = vector.multi_reduction <add>, %1, %cst [1] : vector<16x384xf32> to vector<16xf32>
    %7 = vector.shape_cast %6 : vector<16xf32> to vector<16x1xf32>
    %cst_6 = arith.constant 3.840000e+02 : f32
    %8 = vector.broadcast %cst_6 : f32 to vector<16x1xf32>
    %9 = arith.divf %7, %8 : vector<16x1xf32>
    %10 = vector.broadcast %9 : vector<16x1xf32> to vector<16x384xf32>
    %11 = arith.subf %1, %10 : vector<16x384xf32>
    %12 = arith.mulf %11, %11 : vector<16x384xf32>
    %cst_7 = arith.constant dense<0.000000e+00> : vector<16xf32>
    %13 = vector.multi_reduction <add>, %12, %cst_7 [1] : vector<16x384xf32> to vector<16xf32>
    %14 = vector.shape_cast %13 : vector<16xf32> to vector<16x1xf32>
    %cst_8 = arith.constant 3.840000e+02 : f32
    %15 = vector.broadcast %cst_8 : f32 to vector<16x1xf32>
    %16 = arith.divf %14, %15 : vector<16x1xf32>
    %17 = vector.broadcast %9 : vector<16x1xf32> to vector<16x384xf32>
    %18 = arith.subf %1, %17 : vector<16x384xf32>
    %cst_9 = arith.constant 9.99999974E-6 : f32
    %19 = vector.broadcast %cst_9 : f32 to vector<16x1xf32>
    %20 = arith.addf %16, %19 : vector<16x1xf32>
    %21 = math.rsqrt %20 : vector<16x1xf32>
    %22 = vector.broadcast %21 : vector<16x1xf32> to vector<16x384xf32>
    %23 = arith.mulf %18, %22 : vector<16x384xf32>
    %24 = vector.shape_cast %3 : vector<384xf32> to vector<1x384xf32>
    %25 = vector.broadcast %24 : vector<1x384xf32> to vector<16x384xf32>
    %26 = arith.mulf %23, %25 : vector<16x384xf32>
    %27 = vector.shape_cast %5 : vector<384xf32> to vector<1x384xf32>
    %28 = vector.broadcast %27 : vector<1x384xf32> to vector<16x384xf32>
    %29 = arith.addf %26, %28 : vector<16x384xf32>
    %30 = arith.truncf %29 : vector<16x384xf32> to vector<16x384xbf16>
    %c0_10 = arith.constant 0 : index
    %c0_11 = arith.constant 0 : index
    %31 = vector.load %arg7[%c0_10, %c0_11] : memref<384x384xbf16, #tpu.memory_space<vmem>>, vector<384x384xbf16>
    %cst_12 = arith.constant dense<0.000000e+00> : vector<16x384xf32>
    %32 = tpu.matmul %30, %31, %cst_12 {dimension_numbers = #tpu.dot_dimension_numbers<[1], [0], [0], [1], [0, 0, 1, 1], [], []>} : vector<16x384xbf16>, vector<384x384xbf16>, vector<16x384xf32> -> vector<16x384xf32>
    %cst_13 = arith.constant 1.250000e-01 : f32
    %33 = vector.broadcast %cst_13 : f32 to vector<16x384xf32>
    %34 = arith.mulf %32, %33 : vector<16x384xf32>
    %35 = vector.shape_cast %34 : vector<16x384xf32> to vector<2x8x384xf32>
    %c0_14 = arith.constant 0 : index
    %c0_15 = arith.constant 0 : index
    %36 = vector.load %arg8[%c0_14, %c0_15] : memref<384x384xbf16, #tpu.memory_space<vmem>>, vector<384x384xbf16>
    %cst_16 = arith.constant dense<0.000000e+00> : vector<16x384xf32>
    %37 = tpu.matmul %30, %36, %cst_16 {dimension_numbers = #tpu.dot_dimension_numbers<[1], [0], [0], [1], [0, 0, 1, 1], [], []>} : vector<16x384xbf16>, vector<384x384xbf16>, vector<16x384xf32> -> vector<16x384xf32>
    %38 = vector.shape_cast %37 : vector<16x384xf32> to vector<2x8x384xf32>
    %c0_17 = arith.constant 0 : index
    %c0_18 = arith.constant 0 : index
    %39 = vector.load %arg9[%c0_17, %c0_18] : memref<384x384xbf16, #tpu.memory_space<vmem>>, vector<384x384xbf16>
    %cst_19 = arith.constant dense<0.000000e+00> : vector<16x384xf32>
    %40 = tpu.matmul %30, %39, %cst_19 {dimension_numbers = #tpu.dot_dimension_numbers<[1], [0], [0], [1], [0, 0, 1, 1], [], []>} : vector<16x384xbf16>, vector<384x384xbf16>, vector<16x384xf32> -> vector<16x384xf32>
    %41 = vector.shape_cast %40 : vector<16x384xf32> to vector<2x8x384xf32>
    %c0_20 = arith.constant 0 : index
    %c0_21 = arith.constant 0 : index
    %42 = vector.load %arg2[%c0_20, %c0_21] : memref<8x8xf32, #tpu.memory_space<vmem>>, vector<8x8xf32>
    %43 = vector.extract_strided_slice %35 {offsets = [0, 0, 0], sizes = [2, 8, 64], strides = [1, 1, 1]} : vector<2x8x384xf32> to vector<2x8x64xf32>
    %44 = arith.truncf %43 : vector<2x8x64xf32> to vector<2x8x64xbf16>
    %45 = vector.extract_strided_slice %38 {offsets = [0, 0, 0], sizes = [2, 8, 64], strides = [1, 1, 1]} : vector<2x8x384xf32> to vector<2x8x64xf32>
    %46 = arith.truncf %45 : vector<2x8x64xf32> to vector<2x8x64xbf16>
    %47 = vector.extract_strided_slice %41 {offsets = [0, 0, 0], sizes = [2, 8, 64], strides = [1, 1, 1]} : vector<2x8x384xf32> to vector<2x8x64xf32>
    %48 = arith.truncf %47 : vector<2x8x64xf32> to vector<2x8x64xbf16>
    "tpu.trace_start"() <{level = 10 : i32, message = "bqd,bkd->bqk"}> : () -> ()
    %cst_22 = arith.constant dense<0.000000e+00> : vector<2x8x8xf32>
    %49 = tpu.matmul %44, %46, %cst_22 {dimension_numbers = #tpu.dot_dimension_numbers<[2], [2], [1], [1], [0, 0, 0, 1, 1, 1], [0], [0]>} : vector<2x8x64xbf16>, vector<2x8x64xbf16>, vector<2x8x8xf32> -> vector<2x8x8xf32>
    "tpu.trace_stop"() : () -> ()
    %50 = vector.shape_cast %42 : vector<8x8xf32> to vector<1x8x8xf32>
    %51 = vector.broadcast %50 : vector<1x8x8xf32> to vector<2x8x8xf32>
    %52 = arith.addf %49, %51 : vector<2x8x8xf32>
    %cst_23 = arith.constant dense<0xFF800000> : vector<2x8xf32>
    %53 = vector.multi_reduction <maximumf>, %52, %cst_23 [2] : vector<2x8x8xf32> to vector<2x8xf32>
    %54 = vector.shape_cast %53 : vector<2x8xf32> to vector<2x8x1xf32>
    %55 = vector.broadcast %54 : vector<2x8x1xf32> to vector<2x8x8xf32>
    %56 = arith.subf %52, %55 : vector<2x8x8xf32>
    %57 = math.exp %56 : vector<2x8x8xf32>
    %cst_24 = arith.constant dense<0.000000e+00> : vector<2x8xf32>
    %58 = vector.multi_reduction <add>, %57, %cst_24 [2] : vector<2x8x8xf32> to vector<2x8xf32>
    %59 = vector.shape_cast %58 : vector<2x8xf32> to vector<2x8x1xf32>
    %60 = tpu.reciprocal %59 {approx = true} : vector<2x8x1xf32> -> vector<2x8x1xf32>
    %61 = vector.broadcast %60 : vector<2x8x1xf32> to vector<2x8x8xf32>
    %62 = arith.mulf %57, %61 : vector<2x8x8xf32>
    %63 = arith.truncf %62 : vector<2x8x8xf32> to vector<2x8x8xbf16>
    "tpu.trace_start"() <{level = 10 : i32, message = "bqk,bkd->bqd"}> : () -> ()
    %cst_25 = arith.constant dense<0.000000e+00> : vector<2x8x64xf32>
    %64 = tpu.matmul %63, %48, %cst_25 {dimension_numbers = #tpu.dot_dimension_numbers<[2], [1], [1], [2], [0, 0, 0, 1, 1, 2], [0], [0]>} : vector<2x8x8xbf16>, vector<2x8x64xbf16>, vector<2x8x64xf32> -> vector<2x8x64xf32>
    "tpu.trace_stop"() : () -> ()
    %c0_26 = arith.constant 0 : index
    %c0_27 = arith.constant 0 : index
    %c0_28 = arith.constant 0 : index
    %65 = vector.load %arg15[%c0_26, %c0_27, %c0_28] : memref<2x8x384xf32, #tpu.memory_space<vmem>>, vector<2x8x64xf32>
    tpu.vector_store %arg15[%c0_26, %c0_27, %c0_28], %64 {strides = array<i32>} : memref<2x8x384xf32, #tpu.memory_space<vmem>>, vector<2x8x64xf32>,
    %66 = vector.extract_strided_slice %35 {offsets = [0, 0, 64], sizes = [2, 8, 64], strides = [1, 1, 1]} : vector<2x8x384xf32> to vector<2x8x64xf32>
    %67 = arith.truncf %66 : vector<2x8x64xf32> to vector<2x8x64xbf16>
    %68 = vector.extract_strided_slice %38 {offsets = [0, 0, 64], sizes = [2, 8, 64], strides = [1, 1, 1]} : vector<2x8x384xf32> to vector<2x8x64xf32>
    %69 = arith.truncf %68 : vector<2x8x64xf32> to vector<2x8x64xbf16>
    %70 = vector.extract_strided_slice %41 {offsets = [0, 0, 64], sizes = [2, 8, 64], strides = [1, 1, 1]} : vector<2x8x384xf32> to vector<2x8x64xf32>
    %71 = arith.truncf %70 : vector<2x8x64xf32> to vector<2x8x64xbf16>
    "tpu.trace_start"() <{level = 10 : i32, message = "bqd,bkd->bqk"}> : () -> ()
    %cst_29 = arith.constant dense<0.000000e+00> : vector<2x8x8xf32>
    %72 = tpu.matmul %67, %69, %cst_29 {dimension_numbers = #tpu.dot_dimension_numbers<[2], [2], [1], [1], [0, 0, 0, 1, 1, 1], [0], [0]>} : vector<2x8x64xbf16>, vector<2x8x64xbf16>, vector<2x8x8xf32> -> vector<2x8x8xf32>
    "tpu.trace_stop"() : () -> ()
    %73 = vector.shape_cast %42 : vector<8x8xf32> to vector<1x8x8xf32>
    %74 = vector.broadcast %73 : vector<1x8x8xf32> to vector<2x8x8xf32>
    %75 = arith.addf %72, %74 : vector<2x8x8xf32>
    %cst_30 = arith.constant dense<0xFF800000> : vector<2x8xf32>
    %76 = vector.multi_reduction <maximumf>, %75, %cst_30 [2] : vector<2x8x8xf32> to vector<2x8xf32>
    %77 = vector.shape_cast %76 : vector<2x8xf32> to vector<2x8x1xf32>
    %78 = vector.broadcast %77 : vector<2x8x1xf32> to vector<2x8x8xf32>
    %79 = arith.subf %75, %78 : vector<2x8x8xf32>
    %80 = math.exp %79 : vector<2x8x8xf32>
    %cst_31 = arith.constant dense<0.000000e+00> : vector<2x8xf32>
    %81 = vector.multi_reduction <add>, %80, %cst_31 [2] : vector<2x8x8xf32> to vector<2x8xf32>
    %82 = vector.shape_cast %81 : vector<2x8xf32> to vector<2x8x1xf32>
    %83 = tpu.reciprocal %82 {approx = true} : vector<2x8x1xf32> -> vector<2x8x1xf32>
    %84 = vector.broadcast %83 : vector<2x8x1xf32> to vector<2x8x8xf32>
    %85 = arith.mulf %80, %84 : vector<2x8x8xf32>
    %86 = arith.truncf %85 : vector<2x8x8xf32> to vector<2x8x8xbf16>
    "tpu.trace_start"() <{level = 10 : i32, message = "bqk,bkd->bqd"}> : () -> ()
    %cst_32 = arith.constant dense<0.000000e+00> : vector<2x8x64xf32>
    %87 = tpu.matmul %86, %71, %cst_32 {dimension_numbers = #tpu.dot_dimension_numbers<[2], [1], [1], [2], [0, 0, 0, 1, 1, 2], [0], [0]>} : vector<2x8x8xbf16>, vector<2x8x64xbf16>, vector<2x8x64xf32> -> vector<2x8x64xf32>
    "tpu.trace_stop"() : () -> ()
    %c0_33 = arith.constant 0 : index
    %c0_34 = arith.constant 0 : index
    %c64 = arith.constant 64 : index
    %88 = vector.load %arg15[%c0_33, %c0_34, %c64] : memref<2x8x384xf32, #tpu.memory_space<vmem>>, vector<2x8x64xf32>
    tpu.vector_store %arg15[%c0_33, %c0_34, %c64], %87 {strides = array<i32>} : memref<2x8x384xf32, #tpu.memory_space<vmem>>, vector<2x8x64xf32>,
    %89 = vector.extract_strided_slice %35 {offsets = [0, 0, 128], sizes = [2, 8, 64], strides = [1, 1, 1]} : vector<2x8x384xf32> to vector<2x8x64xf32>
    %90 = arith.truncf %89 : vector<2x8x64xf32> to vector<2x8x64xbf16>
    %91 = vector.extract_strided_slice %38 {offsets = [0, 0, 128], sizes = [2, 8, 64], strides = [1, 1, 1]} : vector<2x8x384xf32> to vector<2x8x64xf32>
    %92 = arith.truncf %91 : vector<2x8x64xf32> to vector<2x8x64xbf16>
    %93 = vector.extract_strided_slice %41 {offsets = [0, 0, 128], sizes = [2, 8, 64], strides = [1, 1, 1]} : vector<2x8x384xf32> to vector<2x8x64xf32>
    %94 = arith.truncf %93 : vector<2x8x64xf32> to vector<2x8x64xbf16>
    "tpu.trace_start"() <{level = 10 : i32, message = "bqd,bkd->bqk"}> : () -> ()
    %cst_35 = arith.constant dense<0.000000e+00> : vector<2x8x8xf32>
    %95 = tpu.matmul %90, %92, %cst_35 {dimension_numbers = #tpu.dot_dimension_numbers<[2], [2], [1], [1], [0, 0, 0, 1, 1, 1], [0], [0]>} : vector<2x8x64xbf16>, vector<2x8x64xbf16>, vector<2x8x8xf32> -> vector<2x8x8xf32>
    "tpu.trace_stop"() : () -> ()
    %96 = vector.shape_cast %42 : vector<8x8xf32> to vector<1x8x8xf32>
    %97 = vector.broadcast %96 : vector<1x8x8xf32> to vector<2x8x8xf32>
    %98 = arith.addf %95, %97 : vector<2x8x8xf32>
    %cst_36 = arith.constant dense<0xFF800000> : vector<2x8xf32>
    %99 = vector.multi_reduction <maximumf>, %98, %cst_36 [2] : vector<2x8x8xf32> to vector<2x8xf32>
    %100 = vector.shape_cast %99 : vector<2x8xf32> to vector<2x8x1xf32>
    %101 = vector.broadcast %100 : vector<2x8x1xf32> to vector<2x8x8xf32>
    %102 = arith.subf %98, %101 : vector<2x8x8xf32>
    %103 = math.exp %102 : vector<2x8x8xf32>
    %cst_37 = arith.constant dense<0.000000e+00> : vector<2x8xf32>
    %104 = vector.multi_reduction <add>, %103, %cst_37 [2] : vector<2x8x8xf32> to vector<2x8xf32>
    %105 = vector.shape_cast %104 : vector<2x8xf32> to vector<2x8x1xf32>
    %106 = tpu.reciprocal %105 {approx = true} : vector<2x8x1xf32> -> vector<2x8x1xf32>
    %107 = vector.broadcast %106 : vector<2x8x1xf32> to vector<2x8x8xf32>
    %108 = arith.mulf %103, %107 : vector<2x8x8xf32>
    %109 = arith.truncf %108 : vector<2x8x8xf32> to vector<2x8x8xbf16>
    "tpu.trace_start"() <{level = 10 : i32, message = "bqk,bkd->bqd"}> : () -> ()
    %cst_38 = arith.constant dense<0.000000e+00> : vector<2x8x64xf32>
    %110 = tpu.matmul %109, %94, %cst_38 {dimension_numbers = #tpu.dot_dimension_numbers<[2], [1], [1], [2], [0, 0, 0, 1, 1, 2], [0], [0]>} : vector<2x8x8xbf16>, vector<2x8x64xbf16>, vector<2x8x64xf32> -> vector<2x8x64xf32>
    "tpu.trace_stop"() : () -> ()
    %c0_39 = arith.constant 0 : index
    %c0_40 = arith.constant 0 : index
    %c128 = arith.constant 128 : index
    %111 = vector.load %arg15[%c0_39, %c0_40, %c128] : memref<2x8x384xf32, #tpu.memory_space<vmem>>, vector<2x8x64xf32>
    tpu.vector_store %arg15[%c0_39, %c0_40, %c128], %110 {strides = array<i32>} : memref<2x8x384xf32, #tpu.memory_space<vmem>>, vector<2x8x64xf32>,
    %112 = vector.extract_strided_slice %35 {offsets = [0, 0, 192], sizes = [2, 8, 64], strides = [1, 1, 1]} : vector<2x8x384xf32> to vector<2x8x64xf32>
    %113 = arith.truncf %112 : vector<2x8x64xf32> to vector<2x8x64xbf16>
    %114 = vector.extract_strided_slice %38 {offsets = [0, 0, 192], sizes = [2, 8, 64], strides = [1, 1, 1]} : vector<2x8x384xf32> to vector<2x8x64xf32>
    %115 = arith.truncf %114 : vector<2x8x64xf32> to vector<2x8x64xbf16>
    %116 = vector.extract_strided_slice %41 {offsets = [0, 0, 192], sizes = [2, 8, 64], strides = [1, 1, 1]} : vector<2x8x384xf32> to vector<2x8x64xf32>
    %117 = arith.truncf %116 : vector<2x8x64xf32> to vector<2x8x64xbf16>
    "tpu.trace_start"() <{level = 10 : i32, message = "bqd,bkd->bqk"}> : () -> ()
    %cst_41 = arith.constant dense<0.000000e+00> : vector<2x8x8xf32>
    %118 = tpu.matmul %113, %115, %cst_41 {dimension_numbers = #tpu.dot_dimension_numbers<[2], [2], [1], [1], [0, 0, 0, 1, 1, 1], [0], [0]>} : vector<2x8x64xbf16>, vector<2x8x64xbf16>, vector<2x8x8xf32> -> vector<2x8x8xf32>
    "tpu.trace_stop"() : () -> ()
    %119 = vector.shape_cast %42 : vector<8x8xf32> to vector<1x8x8xf32>
    %120 = vector.broadcast %119 : vector<1x8x8xf32> to vector<2x8x8xf32>
    %121 = arith.addf %118, %120 : vector<2x8x8xf32>
    %cst_42 = arith.constant dense<0xFF800000> : vector<2x8xf32>
    %122 = vector.multi_reduction <maximumf>, %121, %cst_42 [2] : vector<2x8x8xf32> to vector<2x8xf32>
    %123 = vector.shape_cast %122 : vector<2x8xf32> to vector<2x8x1xf32>
    %124 = vector.broadcast %123 : vector<2x8x1xf32> to vector<2x8x8xf32>
    %125 = arith.subf %121, %124 : vector<2x8x8xf32>
    %126 = math.exp %125 : vector<2x8x8xf32>
    %cst_43 = arith.constant dense<0.000000e+00> : vector<2x8xf32>
    %127 = vector.multi_reduction <add>, %126, %cst_43 [2] : vector<2x8x8xf32> to vector<2x8xf32>
    %128 = vector.shape_cast %127 : vector<2x8xf32> to vector<2x8x1xf32>
    %129 = tpu.reciprocal %128 {approx = true} : vector<2x8x1xf32> -> vector<2x8x1xf32>
    %130 = vector.broadcast %129 : vector<2x8x1xf32> to vector<2x8x8xf32>
    %131 = arith.mulf %126, %130 : vector<2x8x8xf32>
    %132 = arith.truncf %131 : vector<2x8x8xf32> to vector<2x8x8xbf16>
    "tpu.trace_start"() <{level = 10 : i32, message = "bqk,bkd->bqd"}> : () -> ()
    %cst_44 = arith.constant dense<0.000000e+00> : vector<2x8x64xf32>
    %133 = tpu.matmul %132, %117, %cst_44 {dimension_numbers = #tpu.dot_dimension_numbers<[2], [1], [1], [2], [0, 0, 0, 1, 1, 2], [0], [0]>} : vector<2x8x8xbf16>, vector<2x8x64xbf16>, vector<2x8x64xf32> -> vector<2x8x64xf32>
    "tpu.trace_stop"() : () -> ()
    %c0_45 = arith.constant 0 : index
    %c0_46 = arith.constant 0 : index
    %c192 = arith.constant 192 : index
    %134 = vector.load %arg15[%c0_45, %c0_46, %c192] : memref<2x8x384xf32, #tpu.memory_space<vmem>>, vector<2x8x64xf32>
    tpu.vector_store %arg15[%c0_45, %c0_46, %c192], %133 {strides = array<i32>} : memref<2x8x384xf32, #tpu.memory_space<vmem>>, vector<2x8x64xf32>,
    %135 = vector.extract_strided_slice %35 {offsets = [0, 0, 256], sizes = [2, 8, 64], strides = [1, 1, 1]} : vector<2x8x384xf32> to vector<2x8x64xf32>
    %136 = arith.truncf %135 : vector<2x8x64xf32> to vector<2x8x64xbf16>
    %137 = vector.extract_strided_slice %38 {offsets = [0, 0, 256], sizes = [2, 8, 64], strides = [1, 1, 1]} : vector<2x8x384xf32> to vector<2x8x64xf32>
    %138 = arith.truncf %137 : vector<2x8x64xf32> to vector<2x8x64xbf16>
    %139 = vector.extract_strided_slice %41 {offsets = [0, 0, 256], sizes = [2, 8, 64], strides = [1, 1, 1]} : vector<2x8x384xf32> to vector<2x8x64xf32>
    %140 = arith.truncf %139 : vector<2x8x64xf32> to vector<2x8x64xbf16>
    "tpu.trace_start"() <{level = 10 : i32, message = "bqd,bkd->bqk"}> : () -> ()
    %cst_47 = arith.constant dense<0.000000e+00> : vector<2x8x8xf32>
    %141 = tpu.matmul %136, %138, %cst_47 {dimension_numbers = #tpu.dot_dimension_numbers<[2], [2], [1], [1], [0, 0, 0, 1, 1, 1], [0], [0]>} : vector<2x8x64xbf16>, vector<2x8x64xbf16>, vector<2x8x8xf32> -> vector<2x8x8xf32>
    "tpu.trace_stop"() : () -> ()
    %142 = vector.shape_cast %42 : vector<8x8xf32> to vector<1x8x8xf32>
    %143 = vector.broadcast %142 : vector<1x8x8xf32> to vector<2x8x8xf32>
    %144 = arith.addf %141, %143 : vector<2x8x8xf32>
    %cst_48 = arith.constant dense<0xFF800000> : vector<2x8xf32>
    %145 = vector.multi_reduction <maximumf>, %144, %cst_48 [2] : vector<2x8x8xf32> to vector<2x8xf32>
    %146 = vector.shape_cast %145 : vector<2x8xf32> to vector<2x8x1xf32>
    %147 = vector.broadcast %146 : vector<2x8x1xf32> to vector<2x8x8xf32>
    %148 = arith.subf %144, %147 : vector<2x8x8xf32>
    %149 = math.exp %148 : vector<2x8x8xf32>
    %cst_49 = arith.constant dense<0.000000e+00> : vector<2x8xf32>
    %150 = vector.multi_reduction <add>, %149, %cst_49 [2] : vector<2x8x8xf32> to vector<2x8xf32>
    %151 = vector.shape_cast %150 : vector<2x8xf32> to vector<2x8x1xf32>
    %152 = tpu.reciprocal %151 {approx = true} : vector<2x8x1xf32> -> vector<2x8x1xf32>
    %153 = vector.broadcast %152 : vector<2x8x1xf32> to vector<2x8x8xf32>
    %154 = arith.mulf %149, %153 : vector<2x8x8xf32>
    %155 = arith.truncf %154 : vector<2x8x8xf32> to vector<2x8x8xbf16>
    "tpu.trace_start"() <{level = 10 : i32, message = "bqk,bkd->bqd"}> : () -> ()
    %cst_50 = arith.constant dense<0.000000e+00> : vector<2x8x64xf32>
    %156 = tpu.matmul %155, %140, %cst_50 {dimension_numbers = #tpu.dot_dimension_numbers<[2], [1], [1], [2], [0, 0, 0, 1, 1, 2], [0], [0]>} : vector<2x8x8xbf16>, vector<2x8x64xbf16>, vector<2x8x64xf32> -> vector<2x8x64xf32>
    "tpu.trace_stop"() : () -> ()
    %c0_51 = arith.constant 0 : index
    %c0_52 = arith.constant 0 : index
    %c256 = arith.constant 256 : index
    %157 = vector.load %arg15[%c0_51, %c0_52, %c256] : memref<2x8x384xf32, #tpu.memory_space<vmem>>, vector<2x8x64xf32>
    tpu.vector_store %arg15[%c0_51, %c0_52, %c256], %156 {strides = array<i32>} : memref<2x8x384xf32, #tpu.memory_space<vmem>>, vector<2x8x64xf32>,
    %158 = vector.extract_strided_slice %35 {offsets = [0, 0, 320], sizes = [2, 8, 64], strides = [1, 1, 1]} : vector<2x8x384xf32> to vector<2x8x64xf32>
    %159 = arith.truncf %158 : vector<2x8x64xf32> to vector<2x8x64xbf16>
    %160 = vector.extract_strided_slice %38 {offsets = [0, 0, 320], sizes = [2, 8, 64], strides = [1, 1, 1]} : vector<2x8x384xf32> to vector<2x8x64xf32>
    %161 = arith.truncf %160 : vector<2x8x64xf32> to vector<2x8x64xbf16>
    %162 = vector.extract_strided_slice %41 {offsets = [0, 0, 320], sizes = [2, 8, 64], strides = [1, 1, 1]} : vector<2x8x384xf32> to vector<2x8x64xf32>
    %163 = arith.truncf %162 : vector<2x8x64xf32> to vector<2x8x64xbf16>
    "tpu.trace_start"() <{level = 10 : i32, message = "bqd,bkd->bqk"}> : () -> ()
    %cst_53 = arith.constant dense<0.000000e+00> : vector<2x8x8xf32>
    %164 = tpu.matmul %159, %161, %cst_53 {dimension_numbers = #tpu.dot_dimension_numbers<[2], [2], [1], [1], [0, 0, 0, 1, 1, 1], [0], [0]>} : vector<2x8x64xbf16>, vector<2x8x64xbf16>, vector<2x8x8xf32> -> vector<2x8x8xf32>
    "tpu.trace_stop"() : () -> ()
    %165 = vector.shape_cast %42 : vector<8x8xf32> to vector<1x8x8xf32>
    %166 = vector.broadcast %165 : vector<1x8x8xf32> to vector<2x8x8xf32>
    %167 = arith.addf %164, %166 : vector<2x8x8xf32>
    %cst_54 = arith.constant dense<0xFF800000> : vector<2x8xf32>
    %168 = vector.multi_reduction <maximumf>, %167, %cst_54 [2] : vector<2x8x8xf32> to vector<2x8xf32>
    %169 = vector.shape_cast %168 : vector<2x8xf32> to vector<2x8x1xf32>
    %170 = vector.broadcast %169 : vector<2x8x1xf32> to vector<2x8x8xf32>
    %171 = arith.subf %167, %170 : vector<2x8x8xf32>
    %172 = math.exp %171 : vector<2x8x8xf32>
    %cst_55 = arith.constant dense<0.000000e+00> : vector<2x8xf32>
    %173 = vector.multi_reduction <add>, %172, %cst_55 [2] : vector<2x8x8xf32> to vector<2x8xf32>
    %174 = vector.shape_cast %173 : vector<2x8xf32> to vector<2x8x1xf32>
    %175 = tpu.reciprocal %174 {approx = true} : vector<2x8x1xf32> -> vector<2x8x1xf32>
    %176 = vector.broadcast %175 : vector<2x8x1xf32> to vector<2x8x8xf32>
    %177 = arith.mulf %172, %176 : vector<2x8x8xf32>
    %178 = arith.truncf %177 : vector<2x8x8xf32> to vector<2x8x8xbf16>
    "tpu.trace_start"() <{level = 10 : i32, message = "bqk,bkd->bqd"}> : () -> ()
    %cst_56 = arith.constant dense<0.000000e+00> : vector<2x8x64xf32>
    %179 = tpu.matmul %178, %163, %cst_56 {dimension_numbers = #tpu.dot_dimension_numbers<[2], [1], [1], [2], [0, 0, 0, 1, 1, 2], [0], [0]>} : vector<2x8x8xbf16>, vector<2x8x64xbf16>, vector<2x8x64xf32> -> vector<2x8x64xf32>
    "tpu.trace_stop"() : () -> ()
    %c0_57 = arith.constant 0 : index
    %c0_58 = arith.constant 0 : index
    %c320 = arith.constant 320 : index
    %180 = vector.load %arg15[%c0_57, %c0_58, %c320] : memref<2x8x384xf32, #tpu.memory_space<vmem>>, vector<2x8x64xf32>
    tpu.vector_store %arg15[%c0_57, %c0_58, %c320], %179 {strides = array<i32>} : memref<2x8x384xf32, #tpu.memory_space<vmem>>, vector<2x8x64xf32>,
    %c0_59 = arith.constant 0 : index
    %c0_60 = arith.constant 0 : index
    %c0_61 = arith.constant 0 : index
    %181 = vector.load %arg15[%c0_59, %c0_60, %c0_61] : memref<2x8x384xf32, #tpu.memory_space<vmem>>, vector<2x8x384xf32>
    %182 = vector.shape_cast %181 : vector<2x8x384xf32> to vector<16x384xf32>
    %183 = arith.addf %1, %182 : vector<16x384xf32>
    %c0_62 = arith.constant 0 : index
    %c0_63 = arith.constant 0 : index
    %184 = vector.load %arg5[%c0_62, %c0_63] : memref<1x384xf32, #tpu.memory_space<vmem>>, vector<1x384xf32>
    %185 = vector.shape_cast %184 : vector<1x384xf32> to vector<384xf32>
    %c0_64 = arith.constant 0 : index
    %c0_65 = arith.constant 0 : index
    %186 = vector.load %arg6[%c0_64, %c0_65] : memref<1x384xf32, #tpu.memory_space<vmem>>, vector<1x384xf32>
    %187 = vector.shape_cast %186 : vector<1x384xf32> to vector<384xf32>
    %cst_66 = arith.constant dense<0.000000e+00> : vector<16xf32>
    %188 = vector.multi_reduction <add>, %183, %cst_66 [1] : vector<16x384xf32> to vector<16xf32>
    %189 = vector.shape_cast %188 : vector<16xf32> to vector<16x1xf32>
    %cst_67 = arith.constant 3.840000e+02 : f32
    %190 = vector.broadcast %cst_67 : f32 to vector<16x1xf32>
    %191 = arith.divf %189, %190 : vector<16x1xf32>
    %192 = vector.broadcast %191 : vector<16x1xf32> to vector<16x384xf32>
    %193 = arith.subf %183, %192 : vector<16x384xf32>
    %194 = arith.mulf %193, %193 : vector<16x384xf32>
    %cst_68 = arith.constant dense<0.000000e+00> : vector<16xf32>
    %195 = vector.multi_reduction <add>, %194, %cst_68 [1] : vector<16x384xf32> to vector<16xf32>
    %196 = vector.shape_cast %195 : vector<16xf32> to vector<16x1xf32>
    %cst_69 = arith.constant 3.840000e+02 : f32
    %197 = vector.broadcast %cst_69 : f32 to vector<16x1xf32>
    %198 = arith.divf %196, %197 : vector<16x1xf32>
    %199 = vector.broadcast %191 : vector<16x1xf32> to vector<16x384xf32>
    %200 = arith.subf %183, %199 : vector<16x384xf32>
    %cst_70 = arith.constant 9.99999974E-6 : f32
    %201 = vector.broadcast %cst_70 : f32 to vector<16x1xf32>
    %202 = arith.addf %198, %201 : vector<16x1xf32>
    %203 = math.rsqrt %202 : vector<16x1xf32>
    %204 = vector.broadcast %203 : vector<16x1xf32> to vector<16x384xf32>
    %205 = arith.mulf %200, %204 : vector<16x384xf32>
    %206 = vector.shape_cast %185 : vector<384xf32> to vector<1x384xf32>
    %207 = vector.broadcast %206 : vector<1x384xf32> to vector<16x384xf32>
    %208 = arith.mulf %205, %207 : vector<16x384xf32>
    %209 = vector.shape_cast %187 : vector<384xf32> to vector<1x384xf32>
    %210 = vector.broadcast %209 : vector<1x384xf32> to vector<16x384xf32>
    %211 = arith.addf %208, %210 : vector<16x384xf32>
    %212 = arith.truncf %211 : vector<16x384xf32> to vector<16x384xbf16>
    %c0_71 = arith.constant 0 : index
    %c0_72 = arith.constant 0 : index
    %213 = vector.load %arg10[%c0_71, %c0_72] : memref<384x1536xbf16, #tpu.memory_space<vmem>>, vector<384x1536xbf16>
    %cst_73 = arith.constant dense<0.000000e+00> : vector<16x1536xf32>
    %214 = tpu.matmul %212, %213, %cst_73 {dimension_numbers = #tpu.dot_dimension_numbers<[1], [0], [0], [1], [0, 0, 1, 1], [], []>} : vector<16x384xbf16>, vector<384x1536xbf16>, vector<16x1536xf32> -> vector<16x1536xf32>
    %c0_74 = arith.constant 0 : index
    %c0_75 = arith.constant 0 : index
    %215 = vector.load %arg11[%c0_74, %c0_75] : memref<1x1536xf32, #tpu.memory_space<vmem>>, vector<1x1536xf32>
    %216 = vector.shape_cast %215 : vector<1x1536xf32> to vector<1536xf32>
    %217 = vector.shape_cast %216 : vector<1536xf32> to vector<1x1536xf32>
    %218 = vector.broadcast %217 : vector<1x1536xf32> to vector<16x1536xf32>
    %219 = arith.addf %214, %218 : vector<16x1536xf32>
    %cst_76 = arith.constant 0.000000e+00 : f32
    %220 = vector.broadcast %cst_76 : f32 to vector<16x1536xf32>
    %221 = arith.maximumf %219, %220 : vector<16x1536xf32>
    %222 = arith.truncf %221 : vector<16x1536xf32> to vector<16x1536xbf16>
    %c0_77 = arith.constant 0 : index
    %c0_78 = arith.constant 0 : index
    %223 = vector.load %arg12[%c0_77, %c0_78] : memref<1536x384xbf16, #tpu.memory_space<vmem>>, vector<1536x384xbf16>
    %cst_79 = arith.constant dense<0.000000e+00> : vector<16x384xf32>
    %224 = tpu.matmul %222, %223, %cst_79 {dimension_numbers = #tpu.dot_dimension_numbers<[1], [0], [0], [1], [0, 0, 1, 1], [], []>} : vector<16x1536xbf16>, vector<1536x384xbf16>, vector<16x384xf32> -> vector<16x384xf32>
    %c0_80 = arith.constant 0 : index
    %c0_81 = arith.constant 0 : index
    %225 = vector.load %arg13[%c0_80, %c0_81] : memref<1x384xf32, #tpu.memory_space<vmem>>, vector<1x384xf32>
    %226 = vector.shape_cast %225 : vector<1x384xf32> to vector<384xf32>
    %227 = vector.shape_cast %226 : vector<384xf32> to vector<1x384xf32>
    %228 = vector.broadcast %227 : vector<1x384xf32> to vector<16x384xf32>
    %229 = arith.addf %224, %228 : vector<16x384xf32>
    %230 = arith.addf %183, %229 : vector<16x384xf32>
    %231 = vector.shape_cast %230 : vector<16x384xf32> to vector<2x8x384xf32>
    %c0_82 = arith.constant 0 : index
    %c0_83 = arith.constant 0 : index
    %c0_84 = arith.constant 0 : index
    %232 = vector.load %arg14[%c0_82, %c0_83, %c0_84] : memref<2x8x384xf32, #tpu.memory_space<vmem>>, vector<2x8x384xf32>
    tpu.vector_store %arg14[%c0_82, %c0_83, %c0_84], %231 {strides = array<i32>} : memref<2x8x384xf32, #tpu.memory_space<vmem>>, vector<2x8x384xf32>,
    return
  }
  func.func @transform_0(%arg0: i32) -> (i32, i32, i32) {
    %c0_i32 = arith.constant 0 : i32
    %c0_i32_0 = arith.constant 0 : i32
    %c0_i32_1 = arith.constant 0 : i32
    return %arg0, %c0_i32, %c0_i32_0 : i32, i32, i32
  }
  func.func @transform_1(%arg0: i32) -> (i32, i32) {
    %c0_i32 = arith.constant 0 : i32
    %c0_i32_0 = arith.constant 0 : i32
    %c0_i32_1 = arith.constant 0 : i32
    return %c0_i32, %c0_i32_0 : i32, i32
  }
  func.func @transform_2(%arg0: i32) -> (i32, i32) {
    %c0_i32 = arith.constant 0 : i32
    %c0_i32_0 = arith.constant 0 : i32
    %c0_i32_1 = arith.constant 0 : i32
    return %c0_i32, %c0_i32_0 : i32, i32
  }
  func.func @transform_3(%arg0: i32) -> (i32, i32) {
    %c0_i32 = arith.constant 0 : i32
    %c0_i32_0 = arith.constant 0 : i32
    %c0_i32_1 = arith.constant 0 : i32
    return %c0_i32, %c0_i32_0 : i32, i32
  }
  func.func @transform_4(%arg0: i32) -> (i32, i32) {
    %c0_i32 = arith.constant 0 : i32
    %c0_i32_0 = arith.constant 0 : i32
    %c0_i32_1 = arith.constant 0 : i32
    return %c0_i32, %c0_i32_0 : i32, i32
  }
  func.func @transform_5(%arg0: i32) -> (i32, i32) {
    %c0_i32 = arith.constant 0 : i32
    %c0_i32_0 = arith.constant 0 : i32
    %c0_i32_1 = arith.constant 0 : i32
    return %c0_i32, %c0_i32_0 : i32, i32
  }
  func.func @transform_6(%arg0: i32) -> (i32, i32) {
    %c0_i32 = arith.constant 0 : i32
    %c0_i32_0 = arith.constant 0 : i32
    %c0_i32_1 = arith.constant 0 : i32
    return %c0_i32, %c0_i32_0 : i32, i32
  }
  func.func @transform_7(%arg0: i32) -> (i32, i32) {
    %c0_i32 = arith.constant 0 : i32
    %c0_i32_0 = arith.constant 0 : i32
    %c0_i32_1 = arith.constant 0 : i32
    return %c0_i32, %c0_i32_0 : i32, i32
  }
  func.func @transform_8(%arg0: i32) -> (i32, i32) {
    %c0_i32 = arith.constant 0 : i32
    %c0_i32_0 = arith.constant 0 : i32
    %c0_i32_1 = arith.constant 0 : i32
    return %c0_i32, %c0_i32_0 : i32, i32
  }
  func.func @transform_9(%arg0: i32) -> (i32, i32) {
    %c0_i32 = arith.constant 0 : i32
    %c0_i32_0 = arith.constant 0 : i32
    %c0_i32_1 = arith.constant 0 : i32
    return %c0_i32, %c0_i32_0 : i32, i32
  }
  func.func @transform_10(%arg0: i32) -> (i32, i32) {
    %c0_i32 = arith.constant 0 : i32
    %c0_i32_0 = arith.constant 0 : i32
    %c0_i32_1 = arith.constant 0 : i32
    return %c0_i32, %c0_i32_0 : i32, i32
  }
  func.func @transform_11(%arg0: i32) -> (i32, i32) {
    %c0_i32 = arith.constant 0 : i32
    %c0_i32_0 = arith.constant 0 : i32
    %c0_i32_1 = arith.constant 0 : i32
    return %c0_i32, %c0_i32_0 : i32, i32
  }
  func.func @transform_12(%arg0: i32) -> (i32, i32) {
    %c0_i32 = arith.constant 0 : i32
    %c0_i32_0 = arith.constant 0 : i32
    %c0_i32_1 = arith.constant 0 : i32
    return %c0_i32, %c0_i32_0 : i32, i32
  }
  func.func @transform_13(%arg0: i32) -> (i32, i32, i32) {
    %c0_i32 = arith.constant 0 : i32
    %c0_i32_0 = arith.constant 0 : i32
    %c0_i32_1 = arith.constant 0 : i32
    return %arg0, %c0_i32, %c0_i32_0 : i32, i32, i32
  }
}

</mosaic_0001>

<llo_original>
// kernel: tpu_custom_call.1
$region0: #{tpu_custom_call.1}
  #allocation0 [shape = 'u32[]', space=smem, size = 0x4, offset = 0x4, fixed_abs, tag = 'smem constant byte address 0x4 - core index']
  #allocation1 [shape = 'u32[144,128]{1,0:T(1,128)}', space=vmem, size = 0x12000, scoped, tag = 'internal scratch']
  #allocation2 [shape = 'f32[2,8,384]{2,1,0:T(8,128)}', space=vmem, size = 0x6000, scoped, tag = 'scratch operand']
  %s0 = inlined_call_operand.hbm [shape: f32[2,8,384], index: 0, kind: input, shape index: {}]
  %s1 = inlined_call_operand.hbm [shape: f32[8,8], index: 1, kind: input, shape index: {}]
  %s2 = inlined_call_operand.hbm [shape: f32[1,384], index: 2, kind: input, shape index: {}]
  %s3 = inlined_call_operand.hbm [shape: f32[1,384], index: 3, kind: input, shape index: {}]
  %s4 = inlined_call_operand.hbm [shape: f32[1,384], index: 4, kind: input, shape index: {}]
  %s5 = inlined_call_operand.hbm [shape: f32[1,384], index: 5, kind: input, shape index: {}]
  %s6 = inlined_call_operand.hbm [shape: bf16[384,384], index: 6, kind: input, shape index: {}]
  %s7 = inlined_call_operand.hbm [shape: bf16[384,384], index: 7, kind: input, shape index: {}]
  %s8 = inlined_call_operand.hbm [shape: bf16[384,384], index: 8, kind: input, shape index: {}]
  %s9 = inlined_call_operand.hbm [shape: bf16[384,1536], index: 9, kind: input, shape index: {}]
  %s10 = inlined_call_operand.hbm [shape: f32[1,1536], index: 10, kind: input, shape index: {}]
  %s11 = inlined_call_operand.hbm [shape: bf16[1536,384], index: 11, kind: input, shape index: {}]
  %s12 = inlined_call_operand.hbm [shape: f32[1,384], index: 12, kind: input, shape index: {}]
  %s13 = inlined_call_operand.hbm [shape: f32[2,8,384], index: 13, kind: output, shape index: {}]
  %s14 = sld [smem:[#allocation0]]
  $region114: #{tpu_custom_call.1} parent=0
    _
  %s16 = ssub.s32 1, %s14
  %s17 = scalar_select 0, %s16, %s14
  $region1: #{tpu_custom_call.1} parent=0
    #allocation3 [shape = 'u8[24576]{0}', space=vmem, size = 0x6000, scoped, tag = 'input window, operand 0, single buffered']
    #allocation4 [shape = 's32[1]{0}', space=sflag, size = 0x4, scoped, tag = 'scoped memory for tpu_custom_call.1']
    #allocation5 [shape = 's32[1]{0}', space=sflag, size = 0x4, scoped, tag = 'scoped memory for tpu_custom_call.1']
    #allocation6 [shape = 'u8[4096]{0}', space=vmem, size = 0x1000, scoped, tag = 'input window, operand 1, single buffered']
    #allocation7 [shape = 's32[1]{0}', space=sflag, size = 0x4, scoped, tag = 'scoped memory for tpu_custom_call.1']
    #allocation8 [shape = 'u8[1536]{0}', space=vmem, size = 0x800, scoped, tag = 'input window, operand 2, single buffered']
    #allocation9 [shape = 'u8[1536]{0}', space=vmem, size = 0x800, scoped, tag = 'input window, operand 3, single buffered']
    #allocation10 [shape = 's32[1]{0}', space=sflag, size = 0x4, scoped, tag = 'scoped memory for tpu_custom_call.1']
    #allocation11 [shape = 'u8[1536]{0}', space=vmem, size = 0x800, scoped, tag = 'input window, operand 4, single buffered']
    #allocation12 [shape = 'u8[1536]{0}', space=vmem, size = 0x800, scoped, tag = 'input window, operand 5, single buffered']
    #allocation13 [shape = 's32[1]{0}', space=sflag, size = 0x4, scoped, tag = 'scoped memory for tpu_custom_call.1']
    #allocation14 [shape = 'u8[294912]{0}', space=vmem, size = 0x48000, scoped, tag = 'input window, operand 6, single buffered']
    #allocation15 [shape = 'u8[294912]{0}', space=vmem, size = 0x48000, scoped, tag = 'input window, operand 7, single buffered']
    #allocation16 [shape = 's32[1]{0}', space=sflag, size = 0x4, scoped, tag = 'scoped memory for tpu_custom_call.1']
    #allocation17 [shape = 'u8[294912]{0}', space=vmem, size = 0x48000, scoped, tag = 'input window, operand 8, single buffered']
    #allocation18 [shape = 'u8[1179648]{0}', space=vmem, size = 0x120000, scoped, tag = 'input window, operand 9, single buffered']
    #allocation19 [shape = 's32[1]{0}', space=sflag, size = 0x4, scoped, tag = 'scoped memory for tpu_custom_call.1']
    #allocation20 [shape = 'u8[6144]{0}', space=vmem, size = 0x1800, scoped, tag = 'input window, operand 10, single buffered']
    #allocation21 [shape = 'u8[1179648]{0}', space=vmem, size = 0x120000, scoped, tag = 'input window, operand 11, single buffered']
    #allocation22 [shape = 's32[1]{0}', space=sflag, size = 0x4, scoped, tag = 'scoped memory for tpu_custom_call.1']
    #allocation23 [shape = 'u8[1536]{0}', space=vmem, size = 0x800, scoped, tag = 'input window, operand 12, single buffered']
    #allocation24 [shape = 'u8[24576]{0}', space=vmem, size = 0x6000, scoped, tag = 'output window, operand 0, single buffered']
    %18 = vsyncpa [#allocation4], 0
    %19 = vsyncpa [#allocation7], 0
    %20 = vsyncpa [#allocation10], 0
    %21 = vsyncpa [#allocation13], 0
    %22 = vsyncpa [#allocation16], 0
    %23 = vsyncpa [#allocation19], 0
    %24 = vsyncpa [#allocation22], 0
    %25 = vsyncpa [#allocation5], 0
    // Predicated region
    $region2: #{tpu_custom_call.1} parent=1 // pred_check
      _
    $region3: #{tpu_custom_call.1} parent=1 // pred_check_branch
      %27 = sbr.rel (0) target = $region5
    $region4: #{tpu_custom_call.1} parent=1 // pred_region
      %s29 = ssub.s32 768, 768
      %30 = vsyncadd [#allocation4], %s29
      %s31 = sshll.u32 [#allocation3], 4
      %s32 = int_to_ptr.vmem [resolvable:$true] %s31
      %37 = dma.hbm_to_vmem [thread:$0]  %s0, 768, %s32, [#allocation4], 384, 384, 24
    $region5: #{tpu_custom_call.1} parent=1 // pred_fallthru
      _
    // Predicated region
    $region6: #{tpu_custom_call.1} parent=1 // pred_check
      _
    $region7: #{tpu_custom_call.1} parent=1 // pred_check_branch
      %39 = sbr.rel (0) target = $region9
    $region8: #{tpu_custom_call.1} parent=1 // pred_region
      %s41 = ssub.s32 128, 128
      %42 = vsyncadd [#allocation7], %s41
      %s44 = sshll.u32 [#allocation6], 4
      %s45 = int_to_ptr.vmem [resolvable:$true] %s44
      %47 = dma.hbm_to_vmem [thread:$0]  %s1, 128, %s45, [#allocation7]
    $region9: #{tpu_custom_call.1} parent=1 // pred_fallthru
      _
    // Predicated region
    $region10: #{tpu_custom_call.1} parent=1 // pred_check
      _
    $region11: #{tpu_custom_call.1} parent=1 // pred_check_branch
      %49 = sbr.rel (0) target = $region13
    $region12: #{tpu_custom_call.1} parent=1 // pred_region
      %s51 = ssub.s32 48, 48
      %52 = vsyncadd [#allocation7], %s51
      %s54 = sshll.u32 [#allocation8], 4
      %s55 = int_to_ptr.vmem [resolvable:$true] %s54
      %57 = dma.hbm_to_vmem [thread:$0]  %s2, 48, %s55, [#allocation7]
    $region13: #{tpu_custom_call.1} parent=1 // pred_fallthru
      _
    // Predicated region
    $region14: #{tpu_custom_call.1} parent=1 // pred_check
      _
    $region15: #{tpu_custom_call.1} parent=1 // pred_check_branch
      %59 = sbr.rel (0) target = $region17
    $region16: #{tpu_custom_call.1} parent=1 // pred_region
      %s61 = ssub.s32 48, 48
      %62 = vsyncadd [#allocation10], %s61
      %s64 = sshll.u32 [#allocation9], 4
      %s65 = int_to_ptr.vmem [resolvable:$true] %s64
      %67 = dma.hbm_to_vmem [thread:$0]  %s3, 48, %s65, [#allocation10]
    $region17: #{tpu_custom_call.1} parent=1 // pred_fallthru
      _
    // Predicated region
    $region18: #{tpu_custom_call.1} parent=1 // pred_check
      _
    $region19: #{tpu_custom_call.1} parent=1 // pred_check_branch
      %69 = sbr.rel (0) target = $region21
    $region20: #{tpu_custom_call.1} parent=1 // pred_region
      %s71 = ssub.s32 48, 48
      %72 = vsyncadd [#allocation10], %s71
      %s74 = sshll.u32 [#allocation11], 4
      %s75 = int_to_ptr.vmem [resolvable:$true] %s74
      %77 = dma.hbm_to_vmem [thread:$0]  %s4, 48, %s75, [#allocation10]
    $region21: #{tpu_custom_call.1} parent=1 // pred_fallthru
      _
    // Predicated region
    $region22: #{tpu_custom_call.1} parent=1 // pred_check
      _
    $region23: #{tpu_custom_call.1} parent=1 // pred_check_branch
      %79 = sbr.rel (0) target = $region25
    $region24: #{tpu_custom_call.1} parent=1 // pred_region
      %s81 = ssub.s32 48, 48
      %82 = vsyncadd [#allocation13], %s81
      %s84 = sshll.u32 [#allocation12], 4
      %s85 = int_to_ptr.vmem [resolvable:$true] %s84
      %87 = dma.hbm_to_vmem [thread:$0]  %s5, 48, %s85, [#allocation13]
    $region25: #{tpu_custom_call.1} parent=1 // pred_fallthru
      _
    // Predicated region
    $region26: #{tpu_custom_call.1} parent=1 // pred_check
      _
    $region27: #{tpu_custom_call.1} parent=1 // pred_check_branch
      %89 = sbr.rel (0) target = $region29
    $region28: #{tpu_custom_call.1} parent=1 // pred_region
      %s91 = ssub.s32 9216, 9216
      %92 = vsyncadd [#allocation13], %s91
      %s93 = sshll.u32 [#allocation14], 4
      %s94 = int_to_ptr.vmem [resolvable:$true] %s93
      %99 = dma.hbm_to_vmem [thread:$0]  %s6, 9216, %s94, [#allocation13], 192, 192, 12
    $region29: #{tpu_custom_call.1} parent=1 // pred_fallthru
      _
    // Predicated region
    $region30: #{tpu_custom_call.1} parent=1 // pred_check
      _
    $region31: #{tpu_custom_call.1} parent=1 // pred_check_branch
      %101 = sbr.rel (0) target = $region33
    $region32: #{tpu_custom_call.1} parent=1 // pred_region
      %s103 = ssub.s32 9216, 9216
      %104 = vsyncadd [#allocation16], %s103
      %s105 = sshll.u32 [#allocation15], 4
      %s106 = int_to_ptr.vmem [resolvable:$true] %s105
      %111 = dma.hbm_to_vmem [thread:$0]  %s7, 9216, %s106, [#allocation16], 192, 192, 12
    $region33: #{tpu_custom_call.1} parent=1 // pred_fallthru
      _
    // Predicated region
    $region34: #{tpu_custom_call.1} parent=1 // pred_check
      _
    $region35: #{tpu_custom_call.1} parent=1 // pred_check_branch
      %113 = sbr.rel (0) target = $region37
    $region36: #{tpu_custom_call.1} parent=1 // pred_region
      %s115 = ssub.s32 9216, 9216
      %116 = vsyncadd [#allocation16], %s115
      %s117 = sshll.u32 [#allocation17], 4
      %s118 = int_to_ptr.vmem [resolvable:$true] %s117
      %123 = dma.hbm_to_vmem [thread:$0]  %s8, 9216, %s118, [#allocation16], 192, 192, 12
    $region37: #{tpu_custom_call.1} parent=1 // pred_fallthru
      _
    // Predicated region
    $region38: #{tpu_custom_call.1} parent=1 // pred_check
      _
    $region39: #{tpu_custom_call.1} parent=1 // pred_check_branch
      %125 = sbr.rel (0) target = $region41
    $region40: #{tpu_custom_call.1} parent=1 // pred_region
      %s127 = ssub.s32 36864, 36864
      %128 = vsyncadd [#allocation19], %s127
      %s129 = sshll.u32 [#allocation18], 4
      %s130 = int_to_ptr.vmem [resolvable:$true] %s129
      %135 = dma.hbm_to_vmem [thread:$0]  %s9, 36864, %s130, [#allocation19], 768, 768, 48
    $region41: #{tpu_custom_call.1} parent=1 // pred_fallthru
      _
    // Predicated region
    $region42: #{tpu_custom_call.1} parent=1 // pred_check
      _
    $region43: #{tpu_custom_call.1} parent=1 // pred_check_branch
      %137 = sbr.rel (0) target = $region45
    $region44: #{tpu_custom_call.1} parent=1 // pred_region
      %s139 = ssub.s32 192, 192
      %140 = vsyncadd [#allocation19], %s139
      %s142 = sshll.u32 [#allocation20], 4
      %s143 = int_to_ptr.vmem [resolvable:$true] %s142
      %145 = dma.hbm_to_vmem [thread:$0]  %s10, 192, %s143, [#allocation19]
    $region45: #{tpu_custom_call.1} parent=1 // pred_fallthru
      _
    // Predicated region
    $region46: #{tpu_custom_call.1} parent=1 // pred_check
      _
    $region47: #{tpu_custom_call.1} parent=1 // pred_check_branch
      %147 = sbr.rel (0) target = $region49
    $region48: #{tpu_custom_call.1} parent=1 // pred_region
      %s149 = ssub.s32 36864, 36864
      %150 = vsyncadd [#allocation22], %s149
      %s151 = sshll.u32 [#allocation21], 4
      %s152 = int_to_ptr.vmem [resolvable:$true] %s151
      %157 = dma.hbm_to_vmem [thread:$0]  %s11, 36864, %s152, [#allocation22], 192, 192, 12
    $region49: #{tpu_custom_call.1} parent=1 // pred_fallthru
      _
    // Predicated region
    $region50: #{tpu_custom_call.1} parent=1 // pred_check
      _
    $region51: #{tpu_custom_call.1} parent=1 // pred_check_branch
      %159 = sbr.rel (0) target = $region53
    $region52: #{tpu_custom_call.1} parent=1 // pred_region
      %s161 = ssub.s32 48, 48
      %162 = vsyncadd [#allocation22], %s161
      %s164 = sshll.u32 [#allocation23], 4
      %s165 = int_to_ptr.vmem [resolvable:$true] %s164
      %167 = dma.hbm_to_vmem [thread:$0]  %s12, 48, %s165, [#allocation22]
    $region53: #{tpu_custom_call.1} parent=1 // pred_fallthru
      _
    // Predicated region
    $region54: #{tpu_custom_call.1} parent=1 // pred_check
      _
    $region55: #{tpu_custom_call.1} parent=1 // pred_check_branch
      %169 = sbr.rel (0) target = $region57
    $region56: #{tpu_custom_call.1} parent=1 // pred_region
      %170 = dma.done [#allocation4], 768
    $region57: #{tpu_custom_call.1} parent=1 // pred_fallthru
      _
    // Predicated region
    $region58: #{tpu_custom_call.1} parent=1 // pred_check
      _
    $region59: #{tpu_custom_call.1} parent=1 // pred_check_branch
      %172 = sbr.rel (0) target = $region61
    $region60: #{tpu_custom_call.1} parent=1 // pred_region
      %173 = dma.done [#allocation7], 128
    $region61: #{tpu_custom_call.1} parent=1 // pred_fallthru
      _
    // Predicated region
    $region62: #{tpu_custom_call.1} parent=1 // pred_check
      _
    $region63: #{tpu_custom_call.1} parent=1 // pred_check_branch
      %175 = sbr.rel (0) target = $region65
    $region64: #{tpu_custom_call.1} parent=1 // pred_region
      %176 = dma.done [#allocation7], 48
    $region65: #{tpu_custom_call.1} parent=1 // pred_fallthru
      _
    // Predicated region
    $region66: #{tpu_custom_call.1} parent=1 // pred_check
      _
    $region67: #{tpu_custom_call.1} parent=1 // pred_check_branch
      %178 = sbr.rel (0) target = $region69
    $region68: #{tpu_custom_call.1} parent=1 // pred_region
      %179 = dma.done [#allocation10], 48
    $region69: #{tpu_custom_call.1} parent=1 // pred_fallthru
      _
    // Predicated region
    $region70: #{tpu_custom_call.1} parent=1 // pred_check
      _
    $region71: #{tpu_custom_call.1} parent=1 // pred_check_branch
      %181 = sbr.rel (0) target = $region73
    $region72: #{tpu_custom_call.1} parent=1 // pred_region
      %182 = dma.done [#allocation10], 48
    $region73: #{tpu_custom_call.1} parent=1 // pred_fallthru
      _
    // Predicated region
    $region74: #{tpu_custom_call.1} parent=1 // pred_check
      _
    $region75: #{tpu_custom_call.1} parent=1 // pred_check_branch
      %184 = sbr.rel (0) target = $region77
    $region76: #{tpu_custom_call.1} parent=1 // pred_region
      %185 = dma.done [#allocation13], 48
    $region77: #{tpu_custom_call.1} parent=1 // pred_fallthru
      _
    // Predicated region
    $region78: #{tpu_custom_call.1} parent=1 // pred_check
      _
    $region79: #{tpu_custom_call.1} parent=1 // pred_check_branch
      %187 = sbr.rel (0) target = $region81
    $region80: #{tpu_custom_call.1} parent=1 // pred_region
      %188 = dma.done [#allocation13], 9216
    $region81: #{tpu_custom_call.1} parent=1 // pred_fallthru
      _
    // Predicated region
    $region82: #{tpu_custom_call.1} parent=1 // pred_check
      _
    $region83: #{tpu_custom_call.1} parent=1 // pred_check_branch
      %190 = sbr.rel (0) target = $region85
    $region84: #{tpu_custom_call.1} parent=1 // pred_region
      %191 = dma.done [#allocation16], 9216
    $region85: #{tpu_custom_call.1} parent=1 // pred_fallthru
      _
    // Predicated region
    $region86: #{tpu_custom_call.1} parent=1 // pred_check
      _
    $region87: #{tpu_custom_call.1} parent=1 // pred_check_branch
      %193 = sbr.rel (0) target = $region89
    $region88: #{tpu_custom_call.1} parent=1 // pred_region
      %194 = dma.done [#allocation16], 9216
    $region89: #{tpu_custom_call.1} parent=1 // pred_fallthru
      _
    // Predicated region
    $region90: #{tpu_custom_call.1} parent=1 // pred_check
      _
    $region91: #{tpu_custom_call.1} parent=1 // pred_check_branch
      %196 = sbr.rel (0) target = $region93
    $region92: #{tpu_custom_call.1} parent=1 // pred_region
      %197 = dma.done [#allocation19], 36864
    $region93: #{tpu_custom_call.1} parent=1 // pred_fallthru
      _
    // Predicated region
    $region94: #{tpu_custom_call.1} parent=1 // pred_check
      _
    $region95: #{tpu_custom_call.1} parent=1 // pred_check_branch
      %199 = sbr.rel (0) target = $region97
    $region96: #{tpu_custom_call.1} parent=1 // pred_region
      %200 = dma.done [#allocation19], 192
    $region97: #{tpu_custom_call.1} parent=1 // pred_fallthru
      _
    // Predicated region
    $region98: #{tpu_custom_call.1} parent=1 // pred_check
      _
    $region99: #{tpu_custom_call.1} parent=1 // pred_check_branch
      %202 = sbr.rel (0) target = $region101
    $region100: #{tpu_custom_call.1} parent=1 // pred_region
      %203 = dma.done [#allocation22], 36864
    $region101: #{tpu_custom_call.1} parent=1 // pred_fallthru
      _
    // Predicated region
    $region102: #{tpu_custom_call.1} parent=1 // pred_check
      _
    $region103: #{tpu_custom_call.1} parent=1 // pred_check_branch
      %205 = sbr.rel (0) target = $region105
    $region104: #{tpu_custom_call.1} parent=1 // pred_region
      %206 = dma.done [#allocation22], 48
    $region105: #{tpu_custom_call.1} parent=1 // pred_fallthru
      _
    %v208 = vld [vmem:[#allocation3] sm:$0xff]
    %v209 = vld [vmem:[#allocation3 + $0x8] sm:$0xff]
    %v210 = vld [vmem:[#allocation3 + $0x10] sm:$0xff]
    %v211 = vld [vmem:[#allocation3 + $0x18] sm:$0xff]
    %v212 = vld [vmem:[#allocation3 + $0x20] sm:$0xff]
    %v213 = vld [vmem:[#allocation3 + $0x28] sm:$0xff]
    %v214 = vld [vmem:[#allocation8] sm:$0x7]
    %v215 = vld [vmem:[#allocation9] sm:$0x7]
    %v216 = vadd.f32 %v208, %v209
    %v217 = vadd.f32 %v216, %v210
    %218 = vadd.xlane.f32.xlu0 %v217
    %v219 = vpop.xlane.xlu0 %218
    %v220 = vadd.f32 %v211, %v212
    %v221 = vadd.f32 %v220, %v213
    %222 = vadd.xlane.f32.xlu0 %v221
    %v223 = vpop.xlane.xlu0 %222
    %v224 = vrcp.pop 384.0
    %v225 = vmul.f32 %v219, %v224
    %v226 = vmul.f32 %v223, %v224
    %v227 = vsub.f32 %v208, %v225
    %v228 = vsub.f32 %v209, %v225
    %v229 = vsub.f32 %v210, %v225
    %v230 = vsub.f32 %v211, %v226
    %v231 = vsub.f32 %v212, %v226
    %v232 = vsub.f32 %v213, %v226
    %v233 = vmul.f32 %v227, %v227
    %v234 = vmul.f32 %v228, %v228
    %v235 = vmul.f32 %v229, %v229
    %v236 = vmul.f32 %v230, %v230
    %v237 = vmul.f32 %v231, %v231
    %v238 = vmul.f32 %v232, %v232
    %v239 = vadd.f32 %v233, %v234
    %v240 = vadd.f32 %v239, %v235
    %241 = vadd.xlane.f32.xlu0 %v240
    %v242 = vpop.xlane.xlu0 %241
    %v243 = vadd.f32 %v236, %v237
    %v244 = vadd.f32 %v243, %v238
    %245 = vadd.xlane.f32.xlu0 %v244
    %v246 = vpop.xlane.xlu0 %245
    %v247 = vmul.f32 %v242, %v224
    %v248 = vmul.f32 %v246, %v224
    %v249 = vadd.f32 %v247, 1e-05
    %v250 = vadd.f32 %v248, 1e-05
    %v251 = vrsqrt.pop %v249
    %v252 = vrsqrt.pop %v250
    %v253 = vmul.f32 %v227, %v251
    %v254 = vmul.f32 %v228, %v251
    %v255 = vmul.f32 %v229, %v251
    %v256 = vmul.f32 %v230, %v252
    %v257 = vmul.f32 %v231, %v252
    %v258 = vmul.f32 %v232, %v252
    %v260 = vlaneseq
    %v261 = vshrl.u32 %v260, 7
    %v262 = vsub.s32 0, %v261
    %v263 = vrot.slane %v214, %v262
    %v264 = vlaneseq
    %v265 = vshrl.u32 %v264, 7
    %v266 = vsub.s32 1, %v265
    %v267 = vrot.slane %v214, %v266
    %v268 = vlaneseq
    %v269 = vshrl.u32 %v268, 7
    %v270 = vsub.s32 2, %v269
    %v271 = vrot.slane %v214, %v270
    %v275 = vmul.f32 %v253, %v263
    %v276 = vmul.f32 %v254, %v267
    %v277 = vmul.f32 %v255, %v271
    %v278 = vmul.f32 %v256, %v263
    %v279 = vmul.f32 %v257, %v267
    %v280 = vmul.f32 %v258, %v271
    %v282 = vlaneseq
    %v283 = vshrl.u32 %v282, 7
    %v284 = vsub.s32 0, %v283
    %v285 = vrot.slane %v215, %v284
    %v286 = vlaneseq
    %v287 = vshrl.u32 %v286, 7
    %v288 = vsub.s32 1, %v287
    %v289 = vrot.slane %v215, %v288
    %v290 = vlaneseq
    %v291 = vshrl.u32 %v290, 7
    %v292 = vsub.s32 2, %v291
    %v293 = vrot.slane %v215, %v292
    %v297 = vadd.f32 %v275, %v285
    %v298 = vadd.f32 %v276, %v289
    %v299 = vadd.f32 %v277, %v293
    %v300 = vadd.f32 %v278, %v285
    %v301 = vadd.f32 %v279, %v289
    %v302 = vadd.f32 %v280, %v293
    %v303 = vpack.c.bf16 %v300, %v297
    %v304 = vpack.c.bf16 %v301, %v298
    %v305 = vpack.c.bf16 %v302, %v299
    %v306 = vld [vmem:[#allocation14] sm:$0xff]
    %v307 = vld [vmem:[#allocation14 + $0x8] sm:$0xf]
    %v308 = vld [vmem:[#allocation14 + $0xc] sm:$0xff]
    %v309 = vld [vmem:[#allocation14 + $0x14] sm:$0xf]
    %v310 = vld [vmem:[#allocation14 + $0x18] sm:$0xff]
    %v311 = vld [vmem:[#allocation14 + $0x20] sm:$0xf]
    %v312 = vld [vmem:[#allocation14 + $0x24] sm:$0xff]
    %v313 = vld [vmem:[#allocation14 + $0x2c] sm:$0xf]
    %v314 = vld [vmem:[#allocation14 + $0x30] sm:$0xff]
    %v315 = vld [vmem:[#allocation14 + $0x38] sm:$0xf]
    %v316 = vld [vmem:[#allocation14 + $0x3c] sm:$0xff]
    %v317 = vld [vmem:[#allocation14 + $0x44] sm:$0xf]
    %v318 = vld [vmem:[#allocation14 + $0x48] sm:$0xff]
    %v319 = vld [vmem:[#allocation14 + $0x50] sm:$0xf]
    %v320 = vld [vmem:[#allocation14 + $0x54] sm:$0xff]
    %v321 = vld [vmem:[#allocation14 + $0x5c] sm:$0xf]
    %v322 = vld [vmem:[#allocation14 + $0x60] sm:$0xff]
    %v323 = vld [vmem:[#allocation14 + $0x68] sm:$0xf]
    %v324 = vld [vmem:[#allocation14 + $0x6c] sm:$0xff]
    %v325 = vld [vmem:[#allocation14 + $0x74] sm:$0xf]
    %v326 = vld [vmem:[#allocation14 + $0x78] sm:$0xff]
    %v327 = vld [vmem:[#allocation14 + $0x80] sm:$0xf]
    %v328 = vld [vmem:[#allocation14 + $0x84] sm:$0xff]
    %v329 = vld [vmem:[#allocation14 + $0x8c] sm:$0xf]
    %v330 = vld [vmem:[#allocation14 + $0x90] sm:$0xff]
    %v331 = vld [vmem:[#allocation14 + $0x98] sm:$0xf]
    %v332 = vld [vmem:[#allocation14 + $0x9c] sm:$0xff]
    %v333 = vld [vmem:[#allocation14 + $0xa4] sm:$0xf]
    %v334 = vld [vmem:[#allocation14 + $0xa8] sm:$0xff]
    %v335 = vld [vmem:[#allocation14 + $0xb0] sm:$0xf]
    %v336 = vld [vmem:[#allocation14 + $0xb4] sm:$0xff]
    %v337 = vld [vmem:[#allocation14 + $0xbc] sm:$0xf]
    %v338 = vld [vmem:[#allocation14 + $0xc0] sm:$0xff]
    %v339 = vld [vmem:[#allocation14 + $0xc8] sm:$0xf]
    %v340 = vld [vmem:[#allocation14 + $0xcc] sm:$0xff]
    %v341 = vld [vmem:[#allocation14 + $0xd4] sm:$0xf]
    %v342 = vld [vmem:[#allocation14 + $0xd8] sm:$0xff]
    %v343 = vld [vmem:[#allocation14 + $0xe0] sm:$0xf]
    %v344 = vld [vmem:[#allocation14 + $0xe4] sm:$0xff]
    %v345 = vld [vmem:[#allocation14 + $0xec] sm:$0xf]
    %v346 = vld [vmem:[#allocation14 + $0xf0] sm:$0xff]
    %v347 = vld [vmem:[#allocation14 + $0xf8] sm:$0xf]
    %v348 = vld [vmem:[#allocation14 + $0xfc] sm:$0xff]
    %v349 = vld [vmem:[#allocation14 + $0x104] sm:$0xf]
    %v350 = vld [vmem:[#allocation14 + $0x108] sm:$0xff]
    %v351 = vld [vmem:[#allocation14 + $0x110] sm:$0xf]
    %v352 = vld [vmem:[#allocation14 + $0x114] sm:$0xff]
    %v353 = vld [vmem:[#allocation14 + $0x11c] sm:$0xf]
    %v354 = vld [vmem:[#allocation14 + $0x120] sm:$0xff]
    %v355 = vld [vmem:[#allocation14 + $0x128] sm:$0xf]
    %v356 = vld [vmem:[#allocation14 + $0x12c] sm:$0xff]
    %v357 = vld [vmem:[#allocation14 + $0x134] sm:$0xf]
    %v358 = vld [vmem:[#allocation14 + $0x138] sm:$0xff]
    %v359 = vld [vmem:[#allocation14 + $0x140] sm:$0xf]
    %v360 = vld [vmem:[#allocation14 + $0x144] sm:$0xff]
    %v361 = vld [vmem:[#allocation14 + $0x14c] sm:$0xf]
    %v362 = vld [vmem:[#allocation14 + $0x150] sm:$0xff]
    %v363 = vld [vmem:[#allocation14 + $0x158] sm:$0xf]
    %v364 = vld [vmem:[#allocation14 + $0x15c] sm:$0xff]
    %v365 = vld [vmem:[#allocation14 + $0x164] sm:$0xf]
    %v366 = vld [vmem:[#allocation14 + $0x168] sm:$0xff]
    %v367 = vld [vmem:[#allocation14 + $0x170] sm:$0xf]
    %v368 = vld [vmem:[#allocation14 + $0x174] sm:$0xff]
    %v369 = vld [vmem:[#allocation14 + $0x17c] sm:$0xf]
    %v370 = vld [vmem:[#allocation14 + $0x180] sm:$0xff]
    %v371 = vld [vmem:[#allocation14 + $0x188] sm:$0xf]
    %v372 = vld [vmem:[#allocation14 + $0x18c] sm:$0xff]
    %v373 = vld [vmem:[#allocation14 + $0x194] sm:$0xf]
    %v374 = vld [vmem:[#allocation14 + $0x198] sm:$0xff]
    %v375 = vld [vmem:[#allocation14 + $0x1a0] sm:$0xf]
    %v376 = vld [vmem:[#allocation14 + $0x1a4] sm:$0xff]
    %v377 = vld [vmem:[#allocation14 + $0x1ac] sm:$0xf]
    %v378 = vld [vmem:[#allocation14 + $0x1b0] sm:$0xff]
    %v379 = vld [vmem:[#allocation14 + $0x1b8] sm:$0xf]
    %v380 = vld [vmem:[#allocation14 + $0x1bc] sm:$0xff]
    %v381 = vld [vmem:[#allocation14 + $0x1c4] sm:$0xf]
    %v382 = vld [vmem:[#allocation14 + $0x1c8] sm:$0xff]
    %v383 = vld [vmem:[#allocation14 + $0x1d0] sm:$0xf]
    %v384 = vld [vmem:[#allocation14 + $0x1d4] sm:$0xff]
    %v385 = vld [vmem:[#allocation14 + $0x1dc] sm:$0xf]
    %v386 = vld [vmem:[#allocation14 + $0x1e0] sm:$0xff]
    %v387 = vld [vmem:[#allocation14 + $0x1e8] sm:$0xf]
    %v388 = vld [vmem:[#allocation14 + $0x1ec] sm:$0xff]
    %v389 = vld [vmem:[#allocation14 + $0x1f4] sm:$0xf]
    %v390 = vld [vmem:[#allocation14 + $0x1f8] sm:$0xff]
    %v391 = vld [vmem:[#allocation14 + $0x200] sm:$0xf]
    %v392 = vld [vmem:[#allocation14 + $0x204] sm:$0xff]
    %v393 = vld [vmem:[#allocation14 + $0x20c] sm:$0xf]
    %v394 = vld [vmem:[#allocation14 + $0x210] sm:$0xff]
    %v395 = vld [vmem:[#allocation14 + $0x218] sm:$0xf]
    %v396 = vld [vmem:[#allocation14 + $0x21c] sm:$0xff]
    %v397 = vld [vmem:[#allocation14 + $0x224] sm:$0xf]
    %v398 = vld [vmem:[#allocation14 + $0x228] sm:$0xff]
    %v399 = vld [vmem:[#allocation14 + $0x230] sm:$0xf]
    %v400 = vld [vmem:[#allocation14 + $0x234] sm:$0xff]
    %v401 = vld [vmem:[#allocation14 + $0x23c] sm:$0xf]
    %v498 = vunpack.c.l.b16 %v306
    %v499 = vunpack.c.h.b16 %v306
    %v500 = vunpack.c.l.b16 %v307
    %v501 = vunpack.c.l.b16 %v308
    %v502 = vunpack.c.h.b16 %v308
    %v503 = vunpack.c.l.b16 %v309
    %v504 = vunpack.c.l.b16 %v310
    %v505 = vunpack.c.h.b16 %v310
    %v506 = vunpack.c.l.b16 %v311
    %v507 = vunpack.c.l.b16 %v312
    %v508 = vunpack.c.h.b16 %v312
    %v509 = vunpack.c.l.b16 %v313
    %v510 = vunpack.c.l.b16 %v314
    %v511 = vunpack.c.h.b16 %v314
    %v512 = vunpack.c.l.b16 %v315
    %v513 = vunpack.c.l.b16 %v316
    %v514 = vunpack.c.h.b16 %v316
    %v515 = vunpack.c.l.b16 %v317
    %v516 = vunpack.c.l.b16 %v318
    %v517 = vunpack.c.h.b16 %v318
    %v518 = vunpack.c.l.b16 %v319
    %v519 = vunpack.c.l.b16 %v320
    %v520 = vunpack.c.h.b16 %v320
    %v521 = vunpack.c.l.b16 %v321
    %v522 = vunpack.c.l.b16 %v322
    %v523 = vunpack.c.h.b16 %v322
    %v524 = vunpack.c.l.b16 %v323
    %v525 = vunpack.c.l.b16 %v324
    %v526 = vunpack.c.h.b16 %v324
    %v527 = vunpack.c.l.b16 %v325
    %v528 = vunpack.c.l.b16 %v326
    %v529 = vunpack.c.h.b16 %v326
    %v530 = vunpack.c.l.b16 %v327
    %v531 = vunpack.c.l.b16 %v328
    %v532 = vunpack.c.h.b16 %v328
    %v533 = vunpack.c.l.b16 %v329
    %v534 = vunpack.c.l.b16 %v330
    %v535 = vunpack.c.h.b16 %v330
    %v536 = vunpack.c.l.b16 %v331
    %v537 = vunpack.c.l.b16 %v332
    %v538 = vunpack.c.h.b16 %v332
    %v539 = vunpack.c.l.b16 %v333
    %v540 = vunpack.c.l.b16 %v334
    %v541 = vunpack.c.h.b16 %v334
    %v542 = vunpack.c.l.b16 %v335
    %v543 = vunpack.c.l.b16 %v336
    %v544 = vunpack.c.h.b16 %v336
    %v545 = vunpack.c.l.b16 %v337
    %v546 = vunpack.c.l.b16 %v338
    %v547 = vunpack.c.h.b16 %v338
    %v548 = vunpack.c.l.b16 %v339
    %v549 = vunpack.c.l.b16 %v340
    %v550 = vunpack.c.h.b16 %v340
    %v551 = vunpack.c.l.b16 %v341
    %v552 = vunpack.c.l.b16 %v342
    %v553 = vunpack.c.h.b16 %v342
    %v554 = vunpack.c.l.b16 %v343
    %v555 = vunpack.c.l.b16 %v344
    %v556 = vunpack.c.h.b16 %v344
    %v557 = vunpack.c.l.b16 %v345
    %v558 = vunpack.c.l.b16 %v346
    %v559 = vunpack.c.h.b16 %v346
    %v560 = vunpack.c.l.b16 %v347
    %v561 = vunpack.c.l.b16 %v348
    %v562 = vunpack.c.h.b16 %v348
    %v563 = vunpack.c.l.b16 %v349
    %v564 = vunpack.c.l.b16 %v350
    %v565 = vunpack.c.h.b16 %v350
    %v566 = vunpack.c.l.b16 %v351
    %v567 = vunpack.c.l.b16 %v352
    %v568 = vunpack.c.h.b16 %v352
    %v569 = vunpack.c.l.b16 %v353
    %v570 = vunpack.c.l.b16 %v354
    %v571 = vunpack.c.h.b16 %v354
    %v572 = vunpack.c.l.b16 %v355
    %v573 = vunpack.c.l.b16 %v356
    %v574 = vunpack.c.h.b16 %v356
    %v575 = vunpack.c.l.b16 %v357
    %v576 = vunpack.c.l.b16 %v358
    %v577 = vunpack.c.h.b16 %v358
    %v578 = vunpack.c.l.b16 %v359
    %v579 = vunpack.c.l.b16 %v360
    %v580 = vunpack.c.h.b16 %v360
    %v581 = vunpack.c.l.b16 %v361
    %v582 = vunpack.c.l.b16 %v362
    %v583 = vunpack.c.h.b16 %v362
    %v584 = vunpack.c.l.b16 %v363
    %v585 = vunpack.c.l.b16 %v364
    %v586 = vunpack.c.h.b16 %v364
    %v587 = vunpack.c.l.b16 %v365
    %v588 = vunpack.c.l.b16 %v366
    %v589 = vunpack.c.h.b16 %v366
    %v590 = vunpack.c.l.b16 %v367
    %v591 = vunpack.c.l.b16 %v368
    %v592 = vunpack.c.h.b16 %v368
    %v593 = vunpack.c.l.b16 %v369
    %v594 = vunpack.c.l.b16 %v370
    %v595 = vunpack.c.h.b16 %v370
    %v596 = vunpack.c.l.b16 %v371
    %v597 = vunpack.c.l.b16 %v372
    %v598 = vunpack.c.h.b16 %v372
    %v599 = vunpack.c.l.b16 %v373
    %v600 = vunpack.c.l.b16 %v374
    %v601 = vunpack.c.h.b16 %v374
    %v602 = vunpack.c.l.b16 %v375
    %v603 = vunpack.c.l.b16 %v376
    %v604 = vunpack.c.h.b16 %v376
    %v605 = vunpack.c.l.b16 %v377
    %v606 = vunpack.c.l.b16 %v378
    %v607 = vunpack.c.h.b16 %v378
    %v608 = vunpack.c.l.b16 %v379
    %v609 = vunpack.c.l.b16 %v380
    %v610 = vunpack.c.h.b16 %v380
    %v611 = vunpack.c.l.b16 %v381
    %v612 = vunpack.c.l.b16 %v382
    %v613 = vunpack.c.h.b16 %v382
    %v614 = vunpack.c.l.b16 %v383
    %v615 = vunpack.c.l.b16 %v384
    %v616 = vunpack.c.h.b16 %v384
    %v617 = vunpack.c.l.b16 %v385
    %v618 = vunpack.c.l.b16 %v386
    %v619 = vunpack.c.h.b16 %v386
    %v620 = vunpack.c.l.b16 %v387
    %v621 = vunpack.c.l.b16 %v388
    %v622 = vunpack.c.h.b16 %v388
    %v623 = vunpack.c.l.b16 %v389
    %v624 = vunpack.c.l.b16 %v390
    %v625 = vunpack.c.h.b16 %v390
    %v626 = vunpack.c.l.b16 %v391
    %v627 = vunpack.c.l.b16 %v392
    %v628 = vunpack.c.h.b16 %v392
    %v629 = vunpack.c.l.b16 %v393
    %v630 = vunpack.c.l.b16 %v394
    %v631 = vunpack.c.h.b16 %v394
    %v632 = vunpack.c.l.b16 %v395
    %v633 = vunpack.c.l.b16 %v396
    %v634 = vunpack.c.h.b16 %v396
    %v635 = vunpack.c.l.b16 %v397
    %v636 = vunpack.c.l.b16 %v398
    %v637 = vunpack.c.h.b16 %v398
    %v638 = vunpack.c.l.b16 %v399
    %v639 = vunpack.c.l.b16 %v400
    %v640 = vunpack.c.h.b16 %v400
    %v641 = vunpack.c.l.b16 %v401
    %v642 = vpack.c.b16 %v501, %v498
    %v643 = vpack.c.b16 %v502, %v499
    %v644 = vpack.c.b16 %v503, %v500
    %v645 = vpack.c.b16 %v507, %v504
    %v646 = vpack.c.b16 %v508, %v505
    %v647 = vpack.c.b16 %v509, %v506
    %v648 = vpack.c.b16 %v513, %v510
    %v649 = vpack.c.b16 %v514, %v511
    %v650 = vpack.c.b16 %v515, %v512
    %v651 = vpack.c.b16 %v519, %v516
    %v652 = vpack.c.b16 %v520, %v517
    %v653 = vpack.c.b16 %v521, %v518
    %v654 = vpack.c.b16 %v525, %v522
    %v655 = vpack.c.b16 %v526, %v523
    %v656 = vpack.c.b16 %v527, %v524
    %v657 = vpack.c.b16 %v531, %v528
    %v658 = vpack.c.b16 %v532, %v529
    %v659 = vpack.c.b16 %v533, %v530
    %v660 = vpack.c.b16 %v537, %v534
    %v661 = vpack.c.b16 %v538, %v535
    %v662 = vpack.c.b16 %v539, %v536
    %v663 = vpack.c.b16 %v543, %v540
    %v664 = vpack.c.b16 %v544, %v541
    %v665 = vpack.c.b16 %v545, %v542
    %v666 = vpack.c.b16 %v549, %v546
    %v667 = vpack.c.b16 %v550, %v547
    %v668 = vpack.c.b16 %v551, %v548
    %v669 = vpack.c.b16 %v555, %v552
    %v670 = vpack.c.b16 %v556, %v553
    %v671 = vpack.c.b16 %v557, %v554
    %v672 = vpack.c.b16 %v561, %v558
    %v673 = vpack.c.b16 %v562, %v559
    %v674 = vpack.c.b16 %v563, %v560
    %v675 = vpack.c.b16 %v567, %v564
    %v676 = vpack.c.b16 %v568, %v565
    %v677 = vpack.c.b16 %v569, %v566
    %v678 = vpack.c.b16 %v573, %v570
    %v679 = vpack.c.b16 %v574, %v571
    %v680 = vpack.c.b16 %v575, %v572
    %v681 = vpack.c.b16 %v579, %v576
    %v682 = vpack.c.b16 %v580, %v577
    %v683 = vpack.c.b16 %v581, %v578
    %v684 = vpack.c.b16 %v585, %v582
    %v685 = vpack.c.b16 %v586, %v583
    %v686 = vpack.c.b16 %v587, %v584
    %v687 = vpack.c.b16 %v591, %v588
    %v688 = vpack.c.b16 %v592, %v589
    %v689 = vpack.c.b16 %v593, %v590
    %v690 = vpack.c.b16 %v597, %v594
    %v691 = vpack.c.b16 %v598, %v595
    %v692 = vpack.c.b16 %v599, %v596
    %v693 = vpack.c.b16 %v603, %v600
    %v694 = vpack.c.b16 %v604, %v601
    %v695 = vpack.c.b16 %v605, %v602
    %v696 = vpack.c.b16 %v609, %v606
    %v697 = vpack.c.b16 %v610, %v607
    %v698 = vpack.c.b16 %v611, %v608
    %v699 = vpack.c.b16 %v615, %v612
    %v700 = vpack.c.b16 %v616, %v613
    %v701 = vpack.c.b16 %v617, %v614
    %v702 = vpack.c.b16 %v621, %v618
    %v703 = vpack.c.b16 %v622, %v619
    %v704 = vpack.c.b16 %v623, %v620
    %v705 = vpack.c.b16 %v627, %v624
    %v706 = vpack.c.b16 %v628, %v625
    %v707 = vpack.c.b16 %v629, %v626
    %v708 = vpack.c.b16 %v633, %v630
    %v709 = vpack.c.b16 %v634, %v631
    %v710 = vpack.c.b16 %v635, %v632
    %v711 = vpack.c.b16 %v639, %v636
    %v712 = vpack.c.b16 %v640, %v637
    %v713 = vpack.c.b16 %v641, %v638
    %786 = vmatprep.subr.bf16.mxu0 %v643
    %787 = vmatpush1.bf16.msra.mxu0 %v642
    %788 = vmatprep.subr.bf16.mxu0 %v646
    %789 = vmatpush1.bf16.msra.mxu0 %v645
    %790 = vmatprep.subr.bf16.mxu0 %v649
    %791 = vmatpush1.bf16.msra.mxu0 %v648
    %792 = vmatprep.subr.bf16.mxu0 %v652
    %793 = vmatpush1.bf16.msra.mxu0 %v651
    %794 = vmatprep.subr.bf16.mxu0 %v655
    %795 = vmatpush1.bf16.msra.mxu0 %v654
    %796 = vmatprep.subr.bf16.mxu0 %v658
    %797 = vmatpush1.bf16.msra.mxu0 %v657
    %798 = vmatprep.subr.bf16.mxu0 %v661
    %799 = vmatpush1.bf16.msra.mxu0 %v660
    %800 = vmatprep.subr.bf16.mxu0 %v664
    %801 = vmatpush1.bf16.msra.mxu0 %v663
    %802 = vmatprep.subr.bf16.mxu0 %v667
    %803 = vmatpush1.bf16.msra.mxu0 %v666
    %804 = vmatprep.subr.bf16.mxu0 %v670
    %805 = vmatpush1.bf16.msra.mxu0 %v669
    %806 = vmatprep.subr.bf16.mxu0 %v673
    %807 = vmatpush1.bf16.msra.mxu0 %v672
    %808 = vmatprep.subr.bf16.mxu0 %v676
    %809 = vmatpush1.bf16.msra.mxu0 %v675
    %810 = vmatprep.subr.bf16.mxu0 %v679
    %811 = vmatpush1.bf16.msra.mxu0 %v678
    %812 = vmatprep.subr.bf16.mxu0 %v682
    %813 = vmatpush1.bf16.msra.mxu0 %v681
    %814 = vmatprep.subr.bf16.mxu0 %v685
    %815 = vmatpush1.bf16.msra.mxu0 %v684
    %816 = vmatprep.subr.bf16.mxu0 %v688
    %817 = vmatpush1.bf16.msra.mxu0 %v687
    %818 = vmatprep.mubr.bf16.mxu0 %v304
    %819 = vmatmul.mubr.bf16.gmra.mrb[0].mxu0 %v303
    %v820 = vpop.f32.mrb[0].mxu0
    %v821 = vadd.f32 0.0, %v820
    %v822 = vpop.f32.mrb[0].mxu0
    %v823 = vadd.f32 0.0, %v822
    %v824 = vpop.f32.mrb[0].mxu0
    %v825 = vadd.f32 0.0, %v824
    %v826 = vpop.f32.mrb[0].mxu0
    %v827 = vadd.f32 0.0, %v826
    %828 = vdwg.mxu0
    %829 = vmatprep.subr.bf16.mxu0 %v691
    %830 = vmatpush1.bf16.msra.mxu0 %v690
    %831 = vmatprep.subr.bf16.mxu0 %v694
    %832 = vmatpush1.bf16.msra.mxu0 %v693
    %833 = vmatprep.subr.bf16.mxu0 %v697
    %834 = vmatpush1.bf16.msra.mxu0 %v696
    %835 = vmatprep.subr.bf16.mxu0 %v700
    %836 = vmatpush1.bf16.msra.mxu0 %v699
    %837 = vmatprep.subr.bf16.mxu0 %v703
    %838 = vmatpush1.bf16.msra.mxu0 %v702
    %839 = vmatprep.subr.bf16.mxu0 %v706
    %840 = vmatpush1.bf16.msra.mxu0 %v705
    %841 = vmatprep.subr.bf16.mxu0 %v709
    %842 = vmatpush1.bf16.msra.mxu0 %v708
    %843 = vmatprep.subr.bf16.mxu0 %v712
    %844 = vmatpush1.bf16.msra.mxu0 %v711
    %845 = vmatprep.subr.bf16.mxu0 0
    %846 = vmatpush1.bf16.msra.mxu0 0
    %847 = vmatprep.subr.bf16.mxu0 0
    %848 = vmatpush1.bf16.msra.mxu0 0
    %849 = vmatprep.subr.bf16.mxu0 0
    %850 = vmatpush1.bf16.msra.mxu0 0
    %851 = vmatprep.subr.bf16.mxu0 0
    %852 = vmatpush1.bf16.msra.mxu0 0
    %853 = vmatprep.subr.bf16.mxu0 0
    %854 = vmatpush1.bf16.msra.mxu0 0
    %855 = vmatprep.subr.bf16.mxu0 0
    %856 = vmatpush1.bf16.msra.mxu0 0
    %857 = vmatprep.subr.bf16.mxu0 0
    %858 = vmatpush1.bf16.msra.mxu0 0
    %859 = vmatprep.subr.bf16.mxu0 0
    %860 = vmatpush1.bf16.msra.mxu0 0
    %861 = vmatprep.mubr.bf16.mxu0 0
    %862 = vmatmul.mubr.bf16.gmra.mrb[0].mxu0 %v305
    %v863 = vpop.f32.mrb[0].mxu0
    %v864 = vadd.f32 %v821, %v863
    %v865 = vpop.f32.mrb[0].mxu0
    %v866 = vadd.f32 %v823, %v865
    %v867 = vpop.f32.mrb[0].mxu0
    %v868 = vadd.f32 %v825, %v867
    %v869 = vpop.f32.mrb[0].mxu0
    %v870 = vadd.f32 %v827, %v869
    %871 = vdwg.mxu0
    %872 = vmatprep.subr.bf16.mxu0 0
    %873 = vmatpush1.bf16.msra.mxu0 %v644
    %874 = vmatprep.subr.bf16.mxu0 0
    %875 = vmatpush1.bf16.msra.mxu0 %v647
    %876 = vmatprep.subr.bf16.mxu0 0
    %877 = vmatpush1.bf16.msra.mxu0 %v650
    %878 = vmatprep.subr.bf16.mxu0 0
    %879 = vmatpush1.bf16.msra.mxu0 %v653
    %880 = vmatprep.subr.bf16.mxu0 0
    %881 = vmatpush1.bf16.msra.mxu0 %v656
    %882 = vmatprep.subr.bf16.mxu0 0
    %883 = vmatpush1.bf16.msra.mxu0 %v659
    %884 = vmatprep.subr.bf16.mxu0 0
    %885 = vmatpush1.bf16.msra.mxu0 %v662
    %886 = vmatprep.subr.bf16.mxu0 0
    %887 = vmatpush1.bf16.msra.mxu0 %v665
    %888 = vmatprep.subr.bf16.mxu0 0
    %889 = vmatpush1.bf16.msra.mxu0 %v668
    %890 = vmatprep.subr.bf16.mxu0 0
    %891 = vmatpush1.bf16.msra.mxu0 %v671
    %892 = vmatprep.subr.bf16.mxu0 0
    %893 = vmatpush1.bf16.msra.mxu0 %v674
    %894 = vmatprep.subr.bf16.mxu0 0
    %895 = vmatpush1.bf16.msra.mxu0 %v677
    %896 = vmatprep.subr.bf16.mxu0 0
    %897 = vmatpush1.bf16.msra.mxu0 %v680
    %898 = vmatprep.subr.bf16.mxu0 0
    %899 = vmatpush1.bf16.msra.mxu0 %v683
    %900 = vmatprep.subr.bf16.mxu0 0
    %901 = vmatpush1.bf16.msra.mxu0 %v686
    %902 = vmatprep.subr.bf16.mxu0 0
    %903 = vmatpush1.bf16.msra.mxu0 %v689
    %904 = vmatprep.mubr.bf16.mxu0 %v304
    %905 = vmatmul.mubr.bf16.gmra.mrb[0].mxu0 %v303
    %v906 = vpop.f32.mrb[0].mxu0
    %v907 = vadd.f32 0.0, %v906
    %v908 = vpop.f32.mrb[0].mxu0
    %v909 = vpop.f32.mrb[0].mxu0
    %v910 = vadd.f32 0.0, %v909
    %v911 = vpop.f32.mrb[0].mxu0
    %912 = vdwg.mxu0
    %913 = vmatprep.subr.bf16.mxu0 0
    %914 = vmatpush1.bf16.msra.mxu0 %v692
    %915 = vmatprep.subr.bf16.mxu0 0
    %916 = vmatpush1.bf16.msra.mxu0 %v695
    %917 = vmatprep.subr.bf16.mxu0 0
    %918 = vmatpush1.bf16.msra.mxu0 %v698
    %919 = vmatprep.subr.bf16.mxu0 0
    %920 = vmatpush1.bf16.msra.mxu0 %v701
    %921 = vmatprep.subr.bf16.mxu0 0
    %922 = vmatpush1.bf16.msra.mxu0 %v704
    %923 = vmatprep.subr.bf16.mxu0 0
    %924 = vmatpush1.bf16.msra.mxu0 %v707
    %925 = vmatprep.subr.bf16.mxu0 0
    %926 = vmatpush1.bf16.msra.mxu0 %v710
    %927 = vmatprep.subr.bf16.mxu0 0
    %928 = vmatpush1.bf16.msra.mxu0 %v713
    %929 = vmatprep.subr.bf16.mxu0 0
    %930 = vmatpush1.bf16.msra.mxu0 0
    %931 = vmatprep.subr.bf16.mxu0 0
    %932 = vmatpush1.bf16.msra.mxu0 0
    %933 = vmatprep.subr.bf16.mxu0 0
    %934 = vmatpush1.bf16.msra.mxu0 0
    %935 = vmatprep.subr.bf16.mxu0 0
    %936 = vmatpush1.bf16.msra.mxu0 0
    %937 = vmatprep.subr.bf16.mxu0 0
    %938 = vmatpush1.bf16.msra.mxu0 0
    %939 = vmatprep.subr.bf16.mxu0 0
    %940 = vmatpush1.bf16.msra.mxu0 0
    %941 = vmatprep.subr.bf16.mxu0 0
    %942 = vmatpush1.bf16.msra.mxu0 0
    %943 = vmatprep.subr.bf16.mxu0 0
    %944 = vmatpush1.bf16.msra.mxu0 0
    %945 = vmatprep.mubr.bf16.mxu0 0
    %946 = vmatmul.mubr.bf16.gmra.mrb[0].mxu0 %v305
    %v947 = vpop.f32.mrb[0].mxu0
    %v948 = vadd.f32 %v907, %v947
    %v949 = vpop.f32.mrb[0].mxu0
    %v950 = vpop.f32.mrb[0].mxu0
    %v951 = vadd.f32 %v910, %v950
    %v952 = vpop.f32.mrb[0].mxu0
    %953 = vdwg.mxu0
    %v954 = vmul.f32 %v864, 0.125
    %v955 = vmul.f32 %v866, 0.125
    %v956 = vmul.f32 %v948, 0.125
    %v957 = vmul.f32 %v868, 0.125
    %v958 = vmul.f32 %v870, 0.125
    %v959 = vmul.f32 %v951, 0.125
    %v960 = vld [vmem:[#allocation15] sm:$0xff]
    %v961 = vld [vmem:[#allocation15 + $0x8] sm:$0xf]
    %v962 = vld [vmem:[#allocation15 + $0xc] sm:$0xff]
    %v963 = vld [vmem:[#allocation15 + $0x14] sm:$0xf]
    %v964 = vld [vmem:[#allocation15 + $0x18] sm:$0xff]
    %v965 = vld [vmem:[#allocation15 + $0x20] sm:$0xf]
    %v966 = vld [vmem:[#allocation15 + $0x24] sm:$0xff]
    %v967 = vld [vmem:[#allocation15 + $0x2c] sm:$0xf]
    %v968 = vld [vmem:[#allocation15 + $0x30] sm:$0xff]
    %v969 = vld [vmem:[#allocation15 + $0x38] sm:$0xf]
    %v970 = vld [vmem:[#allocation15 + $0x3c] sm:$0xff]
    %v971 = vld [vmem:[#allocation15 + $0x44] sm:$0xf]
    %v972 = vld [vmem:[#allocation15 + $0x48] sm:$0xff]
    %v973 = vld [vmem:[#allocation15 + $0x50] sm:$0xf]
    %v974 = vld [vmem:[#allocation15 + $0x54] sm:$0xff]
    %v975 = vld [vmem:[#allocation15 + $0x5c] sm:$0xf]
    %v976 = vld [vmem:[#allocation15 + $0x60] sm:$0xff]
    %v977 = vld [vmem:[#allocation15 + $0x68] sm:$0xf]
    %v978 = vld [vmem:[#allocation15 + $0x6c] sm:$0xff]
    %v979 = vld [vmem:[#allocation15 + $0x74] sm:$0xf]
    %v980 = vld [vmem:[#allocation15 + $0x78] sm:$0xff]
    %v981 = vld [vmem:[#allocation15 + $0x80] sm:$0xf]
    %v982 = vld [vmem:[#allocation15 + $0x84] sm:$0xff]
    %v983 = vld [vmem:[#allocation15 + $0x8c] sm:$0xf]
    %v984 = vld [vmem:[#allocation15 + $0x90] sm:$0xff]
    %v985 = vld [vmem:[#allocation15 + $0x98] sm:$0xf]
    %v986 = vld [vmem:[#allocation15 + $0x9c] sm:$0xff]
    %v987 = vld [vmem:[#allocation15 + $0xa4] sm:$0xf]
    %v988 = vld [vmem:[#allocation15 + $0xa8] sm:$0xff]
    %v989 = vld [vmem:[#allocation15 + $0xb0] sm:$0xf]
    %v990 = vld [vmem:[#allocation15 + $0xb4] sm:$0xff]
    %v991 = vld [vmem:[#allocation15 + $0xbc] sm:$0xf]
    %v992 = vld [vmem:[#allocation15 + $0xc0] sm:$0xff]
    %v993 = vld [vmem:[#allocation15 + $0xc8] sm:$0xf]
    %v994 = vld [vmem:[#allocation15 + $0xcc] sm:$0xff]
    %v995 = vld [vmem:[#allocation15 + $0xd4] sm:$0xf]
    %v996 = vld [vmem:[#allocation15 + $0xd8] sm:$0xff]
    %v997 = vld [vmem:[#allocation15 + $0xe0] sm:$0xf]
    %v998 = vld [vmem:[#allocation15 + $0xe4] sm:$0xff]
    %v999 = vld [vmem:[#allocation15 + $0xec] sm:$0xf]
    %v1000 = vld [vmem:[#allocation15 + $0xf0] sm:$0xff]
    %v1001 = vld [vmem:[#allocation15 + $0xf8] sm:$0xf]
    %v1002 = vld [vmem:[#allocation15 + $0xfc] sm:$0xff]
    %v1003 = vld [vmem:[#allocation15 + $0x104] sm:$0xf]
    %v1004 = vld [vmem:[#allocation15 + $0x108] sm:$0xff]
    %v1005 = vld [vmem:[#allocation15 + $0x110] sm:$0xf]
    %v1006 = vld [vmem:[#allocation15 + $0x114] sm:$0xff]
    %v1007 = vld [vmem:[#allocation15 + $0x11c] sm:$0xf]
    %v1008 = vld [vmem:[#allocation15 + $0x120] sm:$0xff]
    %v1009 = vld [vmem:[#allocation15 + $0x128] sm:$0xf]
    %v1010 = vld [vmem:[#allocation15 + $0x12c] sm:$0xff]
    %v1011 = vld [vmem:[#allocation15 + $0x134] sm:$0xf]
    %v1012 = vld [vmem:[#allocation15 + $0x138] sm:$0xff]
    %v1013 = vld [vmem:[#allocation15 + $0x140] sm:$0xf]
    %v1014 = vld [vmem:[#allocation15 + $0x144] sm:$0xff]
    %v1015 = vld [vmem:[#allocation15 + $0x14c] sm:$0xf]
    %v1016 = vld [vmem:[#allocation15 + $0x150] sm:$0xff]
    %v1017 = vld [vmem:[#allocation15 + $0x158] sm:$0xf]
    %v1018 = vld [vmem:[#allocation15 + $0x15c] sm:$0xff]
    %v1019 = vld [vmem:[#allocation15 + $0x164] sm:$0xf]
    %v1020 = vld [vmem:[#allocation15 + $0x168] sm:$0xff]
    %v1021 = vld [vmem:[#allocation15 + $0x170] sm:$0xf]
    %v1022 = vld [vmem:[#allocation15 + $0x174] sm:$0xff]
    %v1023 = vld [vmem:[#allocation15 + $0x17c] sm:$0xf]
    %v1024 = vld [vmem:[#allocation15 + $0x180] sm:$0xff]
    %v1025 = vld [vmem:[#allocation15 + $0x188] sm:$0xf]
    %v1026 = vld [vmem:[#allocation15 + $0x18c] sm:$0xff]
    %v1027 = vld [vmem:[#allocation15 + $0x194] sm:$0xf]
    %v1028 = vld [vmem:[#allocation15 + $0x198] sm:$0xff]
    %v1029 = vld [vmem:[#allocation15 + $0x1a0] sm:$0xf]
    %v1030 = vld [vmem:[#allocation15 + $0x1a4] sm:$0xff]
    %v1031 = vld [vmem:[#allocation15 + $0x1ac] sm:$0xf]
    %v1032 = vld [vmem:[#allocation15 + $0x1b0] sm:$0xff]
    %v1033 = vld [vmem:[#allocation15 + $0x1b8] sm:$0xf]
    %v1034 = vld [vmem:[#allocation15 + $0x1bc] sm:$0xff]
    %v1035 = vld [vmem:[#allocation15 + $0x1c4] sm:$0xf]
    %v1036 = vld [vmem:[#allocation15 + $0x1c8] sm:$0xff]
    %v1037 = vld [vmem:[#allocation15 + $0x1d0] sm:$0xf]
    %v1038 = vld [vmem:[#allocation15 + $0x1d4] sm:$0xff]
    %v1039 = vld [vmem:[#allocation15 + $0x1dc] sm:$0xf]
    %v1040 = vld [vmem:[#allocation15 + $0x1e0] sm:$0xff]
    %v1041 = vld [vmem:[#allocation15 + $0x1e8] sm:$0xf]
    %v1042 = vld [vmem:[#allocation15 + $0x1ec] sm:$0xff]
    %v1043 = vld [vmem:[#allocation15 + $0x1f4] sm:$0xf]
    %v1044 = vld [vmem:[#allocation15 + $0x1f8] sm:$0xff]
    %v1045 = vld [vmem:[#allocation15 + $0x200] sm:$0xf]
    %v1046 = vld [vmem:[#allocation15 + $0x204] sm:$0xff]
    %v1047 = vld [vmem:[#allocation15 + $0x20c] sm:$0xf]
    %v1048 = vld [vmem:[#allocation15 + $0x210] sm:$0xff]
    %v1049 = vld [vmem:[#allocation15 + $0x218] sm:$0xf]
    %v1050 = vld [vmem:[#allocation15 + $0x21c] sm:$0xff]
    %v1051 = vld [vmem:[#allocation15 + $0x224] sm:$0xf]
    %v1052 = vld [vmem:[#allocation15 + $0x228] sm:$0xff]
    %v1053 = vld [vmem:[#allocation15 + $0x230] sm:$0xf]
    %v1054 = vld [vmem:[#allocation15 + $0x234] sm:$0xff]
    %v1055 = vld [vmem:[#allocation15 + $0x23c] sm:$0xf]
    %v1152 = vunpack.c.l.b16 %v960
    %v1153 = vunpack.c.h.b16 %v960
    %v1154 = vunpack.c.l.b16 %v961
    %v1155 = vunpack.c.l.b16 %v962
    %v1156 = vunpack.c.h.b16 %v962
    %v1157 = vunpack.c.l.b16 %v963
    %v1158 = vunpack.c.l.b16 %v964
    %v1159 = vunpack.c.h.b16 %v964
    %v1160 = vunpack.c.l.b16 %v965
    %v1161 = vunpack.c.l.b16 %v966
    %v1162 = vunpack.c.h.b16 %v966
    %v1163 = vunpack.c.l.b16 %v967
    %v1164 = vunpack.c.l.b16 %v968
    %v1165 = vunpack.c.h.b16 %v968
    %v1166 = vunpack.c.l.b16 %v969
    %v1167 = vunpack.c.l.b16 %v970
    %v1168 = vunpack.c.h.b16 %v970
    %v1169 = vunpack.c.l.b16 %v971
    %v1170 = vunpack.c.l.b16 %v972
    %v1171 = vunpack.c.h.b16 %v972
    %v1172 = vunpack.c.l.b16 %v973
    %v1173 = vunpack.c.l.b16 %v974
    %v1174 = vunpack.c.h.b16 %v974
    %v1175 = vunpack.c.l.b16 %v975
    %v1176 = vunpack.c.l.b16 %v976
    %v1177 = vunpack.c.h.b16 %v976
    %v1178 = vunpack.c.l.b16 %v977
    %v1179 = vunpack.c.l.b16 %v978
    %v1180 = vunpack.c.h.b16 %v978
    %v1181 = vunpack.c.l.b16 %v979
    %v1182 = vunpack.c.l.b16 %v980
    %v1183 = vunpack.c.h.b16 %v980
    %v1184 = vunpack.c.l.b16 %v981
    %v1185 = vunpack.c.l.b16 %v982
    %v1186 = vunpack.c.h.b16 %v982
    %v1187 = vunpack.c.l.b16 %v983
    %v1188 = vunpack.c.l.b16 %v984
    %v1189 = vunpack.c.h.b16 %v984
    %v1190 = vunpack.c.l.b16 %v985
    %v1191 = vunpack.c.l.b16 %v986
    %v1192 = vunpack.c.h.b16 %v986
    %v1193 = vunpack.c.l.b16 %v987
    %v1194 = vunpack.c.l.b16 %v988
    %v1195 = vunpack.c.h.b16 %v988
    %v1196 = vunpack.c.l.b16 %v989
    %v1197 = vunpack.c.l.b16 %v990
    %v1198 = vunpack.c.h.b16 %v990
    %v1199 = vunpack.c.l.b16 %v991
    %v1200 = vunpack.c.l.b16 %v992
    %v1201 = vunpack.c.h.b16 %v992
    %v1202 = vunpack.c.l.b16 %v993
    %v1203 = vunpack.c.l.b16 %v994
    %v1204 = vunpack.c.h.b16 %v994
    %v1205 = vunpack.c.l.b16 %v995
    %v1206 = vunpack.c.l.b16 %v996
    %v1207 = vunpack.c.h.b16 %v996
    %v1208 = vunpack.c.l.b16 %v997
    %v1209 = vunpack.c.l.b16 %v998
    %v1210 = vunpack.c.h.b16 %v998
    %v1211 = vunpack.c.l.b16 %v999
    %v1212 = vunpack.c.l.b16 %v1000
    %v1213 = vunpack.c.h.b16 %v1000
    %v1214 = vunpack.c.l.b16 %v1001
    %v1215 = vunpack.c.l.b16 %v1002
    %v1216 = vunpack.c.h.b16 %v1002
    %v1217 = vunpack.c.l.b16 %v1003
    %v1218 = vunpack.c.l.b16 %v1004
    %v1219 = vunpack.c.h.b16 %v1004
    %v1220 = vunpack.c.l.b16 %v1005
    %v1221 = vunpack.c.l.b16 %v1006
    %v1222 = vunpack.c.h.b16 %v1006
    %v1223 = vunpack.c.l.b16 %v1007
    %v1224 = vunpack.c.l.b16 %v1008
    %v1225 = vunpack.c.h.b16 %v1008
    %v1226 = vunpack.c.l.b16 %v1009
    %v1227 = vunpack.c.l.b16 %v1010
    %v1228 = vunpack.c.h.b16 %v1010
    %v1229 = vunpack.c.l.b16 %v1011
    %v1230 = vunpack.c.l.b16 %v1012
    %v1231 = vunpack.c.h.b16 %v1012
    %v1232 = vunpack.c.l.b16 %v1013
    %v1233 = vunpack.c.l.b16 %v1014
    %v1234 = vunpack.c.h.b16 %v1014
    %v1235 = vunpack.c.l.b16 %v1015
    %v1236 = vunpack.c.l.b16 %v1016
    %v1237 = vunpack.c.h.b16 %v1016
    %v1238 = vunpack.c.l.b16 %v1017
    %v1239 = vunpack.c.l.b16 %v1018
    %v1240 = vunpack.c.h.b16 %v1018
    %v1241 = vunpack.c.l.b16 %v1019
    %v1242 = vunpack.c.l.b16 %v1020
    %v1243 = vunpack.c.h.b16 %v1020
    %v1244 = vunpack.c.l.b16 %v1021
    %v1245 = vunpack.c.l.b16 %v1022
    %v1246 = vunpack.c.h.b16 %v1022
    %v1247 = vunpack.c.l.b16 %v1023
    %v1248 = vunpack.c.l.b16 %v1024
    %v1249 = vunpack.c.h.b16 %v1024
    %v1250 = vunpack.c.l.b16 %v1025
    %v1251 = vunpack.c.l.b16 %v1026
    %v1252 = vunpack.c.h.b16 %v1026
    %v1253 = vunpack.c.l.b16 %v1027
    %v1254 = vunpack.c.l.b16 %v1028
    %v1255 = vunpack.c.h.b16 %v1028
    %v1256 = vunpack.c.l.b16 %v1029
    %v1257 = vunpack.c.l.b16 %v1030
    %v1258 = vunpack.c.h.b16 %v1030
    %v1259 = vunpack.c.l.b16 %v1031
    %v1260 = vunpack.c.l.b16 %v1032
    %v1261 = vunpack.c.h.b16 %v1032
    %v1262 = vunpack.c.l.b16 %v1033
    %v1263 = vunpack.c.l.b16 %v1034
    %v1264 = vunpack.c.h.b16 %v1034
    %v1265 = vunpack.c.l.b16 %v1035
    %v1266 = vunpack.c.l.b16 %v1036
    %v1267 = vunpack.c.h.b16 %v1036
    %v1268 = vunpack.c.l.b16 %v1037
    %v1269 = vunpack.c.l.b16 %v1038
    %v1270 = vunpack.c.h.b16 %v1038
    %v1271 = vunpack.c.l.b16 %v1039
    %v1272 = vunpack.c.l.b16 %v1040
    %v1273 = vunpack.c.h.b16 %v1040
    %v1274 = vunpack.c.l.b16 %v1041
    %v1275 = vunpack.c.l.b16 %v1042
    %v1276 = vunpack.c.h.b16 %v1042
    %v1277 = vunpack.c.l.b16 %v1043
    %v1278 = vunpack.c.l.b16 %v1044
    %v1279 = vunpack.c.h.b16 %v1044
    %v1280 = vunpack.c.l.b16 %v1045
    %v1281 = vunpack.c.l.b16 %v1046
    %v1282 = vunpack.c.h.b16 %v1046
    %v1283 = vunpack.c.l.b16 %v1047
    %v1284 = vunpack.c.l.b16 %v1048
    %v1285 = vunpack.c.h.b16 %v1048
    %v1286 = vunpack.c.l.b16 %v1049
    %v1287 = vunpack.c.l.b16 %v1050
    %v1288 = vunpack.c.h.b16 %v1050
    %v1289 = vunpack.c.l.b16 %v1051
    %v1290 = vunpack.c.l.b16 %v1052
    %v1291 = vunpack.c.h.b16 %v1052
    %v1292 = vunpack.c.l.b16 %v1053
    %v1293 = vunpack.c.l.b16 %v1054
    %v1294 = vunpack.c.h.b16 %v1054
    %v1295 = vunpack.c.l.b16 %v1055
    %v1296 = vpack.c.b16 %v1155, %v1152
    %v1297 = vpack.c.b16 %v1156, %v1153
    %v1298 = vpack.c.b16 %v1157, %v1154
    %v1299 = vpack.c.b16 %v1161, %v1158
    %v1300 = vpack.c.b16 %v1162, %v1159
    %v1301 = vpack.c.b16 %v1163, %v1160
    %v1302 = vpack.c.b16 %v1167, %v1164
    %v1303 = vpack.c.b16 %v1168, %v1165
    %v1304 = vpack.c.b16 %v1169, %v1166
    %v1305 = vpack.c.b16 %v1173, %v1170
    %v1306 = vpack.c.b16 %v1174, %v1171
    %v1307 = vpack.c.b16 %v1175, %v1172
    %v1308 = vpack.c.b16 %v1179, %v1176
    %v1309 = vpack.c.b16 %v1180, %v1177
    %v1310 = vpack.c.b16 %v1181, %v1178
    %v1311 = vpack.c.b16 %v1185, %v1182
    %v1312 = vpack.c.b16 %v1186, %v1183
    %v1313 = vpack.c.b16 %v1187, %v1184
    %v1314 = vpack.c.b16 %v1191, %v1188
    %v1315 = vpack.c.b16 %v1192, %v1189
    %v1316 = vpack.c.b16 %v1193, %v1190
    %v1317 = vpack.c.b16 %v1197, %v1194
    %v1318 = vpack.c.b16 %v1198, %v1195
    %v1319 = vpack.c.b16 %v1199, %v1196
    %v1320 = vpack.c.b16 %v1203, %v1200
    %v1321 = vpack.c.b16 %v1204, %v1201
    %v1322 = vpack.c.b16 %v1205, %v1202
    %v1323 = vpack.c.b16 %v1209, %v1206
    %v1324 = vpack.c.b16 %v1210, %v1207
    %v1325 = vpack.c.b16 %v1211, %v1208
    %v1326 = vpack.c.b16 %v1215, %v1212
    %v1327 = vpack.c.b16 %v1216, %v1213
    %v1328 = vpack.c.b16 %v1217, %v1214
    %v1329 = vpack.c.b16 %v1221, %v1218
    %v1330 = vpack.c.b16 %v1222, %v1219
    %v1331 = vpack.c.b16 %v1223, %v1220
    %v1332 = vpack.c.b16 %v1227, %v1224
    %v1333 = vpack.c.b16 %v1228, %v1225
    %v1334 = vpack.c.b16 %v1229, %v1226
    %v1335 = vpack.c.b16 %v1233, %v1230
    %v1336 = vpack.c.b16 %v1234, %v1231
    %v1337 = vpack.c.b16 %v1235, %v1232
    %v1338 = vpack.c.b16 %v1239, %v1236
    %v1339 = vpack.c.b16 %v1240, %v1237
    %v1340 = vpack.c.b16 %v1241, %v1238
    %v1341 = vpack.c.b16 %v1245, %v1242
    %v1342 = vpack.c.b16 %v1246, %v1243
    %v1343 = vpack.c.b16 %v1247, %v1244
    %v1344 = vpack.c.b16 %v1251, %v1248
    %v1345 = vpack.c.b16 %v1252, %v1249
    %v1346 = vpack.c.b16 %v1253, %v1250
    %v1347 = vpack.c.b16 %v1257, %v1254
    %v1348 = vpack.c.b16 %v1258, %v1255
    %v1349 = vpack.c.b16 %v1259, %v1256
    %v1350 = vpack.c.b16 %v1263, %v1260
    %v1351 = vpack.c.b16 %v1264, %v1261
    %v1352 = vpack.c.b16 %v1265, %v1262
    %v1353 = vpack.c.b16 %v1269, %v1266
    %v1354 = vpack.c.b16 %v1270, %v1267
    %v1355 = vpack.c.b16 %v1271, %v1268
    %v1356 = vpack.c.b16 %v1275, %v1272
    %v1357 = vpack.c.b16 %v1276, %v1273
    %v1358 = vpack.c.b16 %v1277, %v1274
    %v1359 = vpack.c.b16 %v1281, %v1278
    %v1360 = vpack.c.b16 %v1282, %v1279
    %v1361 = vpack.c.b16 %v1283, %v1280
    %v1362 = vpack.c.b16 %v1287, %v1284
    %v1363 = vpack.c.b16 %v1288, %v1285
    %v1364 = vpack.c.b16 %v1289, %v1286
    %v1365 = vpack.c.b16 %v1293, %v1290
    %v1366 = vpack.c.b16 %v1294, %v1291
    %v1367 = vpack.c.b16 %v1295, %v1292
    %1440 = vmatprep.subr.bf16.mxu0 %v1297
    %1441 = vmatpush1.bf16.msra.mxu0 %v1296
    %1442 = vmatprep.subr.bf16.mxu0 %v1300
    %1443 = vmatpush1.bf16.msra.mxu0 %v1299
    %1444 = vmatprep.subr.bf16.mxu0 %v1303
    %1445 = vmatpush1.bf16.msra.mxu0 %v1302
    %1446 = vmatprep.subr.bf16.mxu0 %v1306
    %1447 = vmatpush1.bf16.msra.mxu0 %v1305
    %1448 = vmatprep.subr.bf16.mxu0 %v1309
    %1449 = vmatpush1.bf16.msra.mxu0 %v1308
    %1450 = vmatprep.subr.bf16.mxu0 %v1312
    %1451 = vmatpush1.bf16.msra.mxu0 %v1311
    %1452 = vmatprep.subr.bf16.mxu0 %v1315
    %1453 = vmatpush1.bf16.msra.mxu0 %v1314
    %1454 = vmatprep.subr.bf16.mxu0 %v1318
    %1455 = vmatpush1.bf16.msra.mxu0 %v1317
    %1456 = vmatprep.subr.bf16.mxu0 %v1321
    %1457 = vmatpush1.bf16.msra.mxu0 %v1320
    %1458 = vmatprep.subr.bf16.mxu0 %v1324
    %1459 = vmatpush1.bf16.msra.mxu0 %v1323
    %1460 = vmatprep.subr.bf16.mxu0 %v1327
    %1461 = vmatpush1.bf16.msra.mxu0 %v1326
    %1462 = vmatprep.subr.bf16.mxu0 %v1330
    %1463 = vmatpush1.bf16.msra.mxu0 %v1329
    %1464 = vmatprep.subr.bf16.mxu0 %v1333
    %1465 = vmatpush1.bf16.msra.mxu0 %v1332
    %1466 = vmatprep.subr.bf16.mxu0 %v1336
    %1467 = vmatpush1.bf16.msra.mxu0 %v1335
    %1468 = vmatprep.subr.bf16.mxu0 %v1339
    %1469 = vmatpush1.bf16.msra.mxu0 %v1338
    %1470 = vmatprep.subr.bf16.mxu0 %v1342
    %1471 = vmatpush1.bf16.msra.mxu0 %v1341
    %1472 = vmatprep.mubr.bf16.mxu0 %v304
    %1473 = vmatmul.mubr.bf16.gmra.mrb[0].mxu0 %v303
    %v1474 = vpop.f32.mrb[0].mxu0
    %v1475 = vadd.f32 0.0, %v1474
    %v1476 = vpop.f32.mrb[0].mxu0
    %v1477 = vadd.f32 0.0, %v1476
    %v1478 = vpop.f32.mrb[0].mxu0
    %v1479 = vadd.f32 0.0, %v1478
    %v1480 = vpop.f32.mrb[0].mxu0
    %v1481 = vadd.f32 0.0, %v1480
    %1482 = vdwg.mxu0
    %1483 = vmatprep.subr.bf16.mxu0 %v1345
    %1484 = vmatpush1.bf16.msra.mxu0 %v1344
    %1485 = vmatprep.subr.bf16.mxu0 %v1348
    %1486 = vmatpush1.bf16.msra.mxu0 %v1347
    %1487 = vmatprep.subr.bf16.mxu0 %v1351
    %1488 = vmatpush1.bf16.msra.mxu0 %v1350
    %1489 = vmatprep.subr.bf16.mxu0 %v1354
    %1490 = vmatpush1.bf16.msra.mxu0 %v1353
    %1491 = vmatprep.subr.bf16.mxu0 %v1357
    %1492 = vmatpush1.bf16.msra.mxu0 %v1356
    %1493 = vmatprep.subr.bf16.mxu0 %v1360
    %1494 = vmatpush1.bf16.msra.mxu0 %v1359
    %1495 = vmatprep.subr.bf16.mxu0 %v1363
    %1496 = vmatpush1.bf16.msra.mxu0 %v1362
    %1497 = vmatprep.subr.bf16.mxu0 %v1366
    %1498 = vmatpush1.bf16.msra.mxu0 %v1365
    %1499 = vmatprep.subr.bf16.mxu0 0
    %1500 = vmatpush1.bf16.msra.mxu0 0
    %1501 = vmatprep.subr.bf16.mxu0 0
    %1502 = vmatpush1.bf16.msra.mxu0 0
    %1503 = vmatprep.subr.bf16.mxu0 0
    %1504 = vmatpush1.bf16.msra.mxu0 0
    %1505 = vmatprep.subr.bf16.mxu0 0
    %1506 = vmatpush1.bf16.msra.mxu0 0
    %1507 = vmatprep.subr.bf16.mxu0 0
    %1508 = vmatpush1.bf16.msra.mxu0 0
    %1509 = vmatprep.subr.bf16.mxu0 0
    %1510 = vmatpush1.bf16.msra.mxu0 0
    %1511 = vmatprep.subr.bf16.mxu0 0
    %1512 = vmatpush1.bf16.msra.mxu0 0
    %1513 = vmatprep.subr.bf16.mxu0 0
    %1514 = vmatpush1.bf16.msra.mxu0 0
    %1515 = vmatprep.mubr.bf16.mxu0 0
    %1516 = vmatmul.mubr.bf16.gmra.mrb[0].mxu0 %v305
    %v1517 = vpop.f32.mrb[0].mxu0
    %v1518 = vadd.f32 %v1475, %v1517
    %v1519 = vpop.f32.mrb[0].mxu0
    %v1520 = vadd.f32 %v1477, %v1519
    %v1521 = vpop.f32.mrb[0].mxu0
    %v1522 = vadd.f32 %v1479, %v1521
    %v1523 = vpop.f32.mrb[0].mxu0
    %v1524 = vadd.f32 %v1481, %v1523
    %1525 = vdwg.mxu0
    %1526 = vmatprep.subr.bf16.mxu0 0
    %1527 = vmatpush1.bf16.msra.mxu0 %v1298
    %1528 = vmatprep.subr.bf16.mxu0 0
    %1529 = vmatpush1.bf16.msra.mxu0 %v1301
    %1530 = vmatprep.subr.bf16.mxu0 0
    %1531 = vmatpush1.bf16.msra.mxu0 %v1304
    %1532 = vmatprep.subr.bf16.mxu0 0
    %1533 = vmatpush1.bf16.msra.mxu0 %v1307
    %1534 = vmatprep.subr.bf16.mxu0 0
    %1535 = vmatpush1.bf16.msra.mxu0 %v1310
    %1536 = vmatprep.subr.bf16.mxu0 0
    %1537 = vmatpush1.bf16.msra.mxu0 %v1313
    %1538 = vmatprep.subr.bf16.mxu0 0
    %1539 = vmatpush1.bf16.msra.mxu0 %v1316
    %1540 = vmatprep.subr.bf16.mxu0 0
    %1541 = vmatpush1.bf16.msra.mxu0 %v1319
    %1542 = vmatprep.subr.bf16.mxu0 0
    %1543 = vmatpush1.bf16.msra.mxu0 %v1322
    %1544 = vmatprep.subr.bf16.mxu0 0
    %1545 = vmatpush1.bf16.msra.mxu0 %v1325
    %1546 = vmatprep.subr.bf16.mxu0 0
    %1547 = vmatpush1.bf16.msra.mxu0 %v1328
    %1548 = vmatprep.subr.bf16.mxu0 0
    %1549 = vmatpush1.bf16.msra.mxu0 %v1331
    %1550 = vmatprep.subr.bf16.mxu0 0
    %1551 = vmatpush1.bf16.msra.mxu0 %v1334
    %1552 = vmatprep.subr.bf16.mxu0 0
    %1553 = vmatpush1.bf16.msra.mxu0 %v1337
    %1554 = vmatprep.subr.bf16.mxu0 0
    %1555 = vmatpush1.bf16.msra.mxu0 %v1340
    %1556 = vmatprep.subr.bf16.mxu0 0
    %1557 = vmatpush1.bf16.msra.mxu0 %v1343
    %1558 = vmatprep.mubr.bf16.mxu0 %v304
    %1559 = vmatmul.mubr.bf16.gmra.mrb[0].mxu0 %v303
    %v1560 = vpop.f32.mrb[0].mxu0
    %v1561 = vadd.f32 0.0, %v1560
    %v1562 = vpop.f32.mrb[0].mxu0
    %v1563 = vpop.f32.mrb[0].mxu0
    %v1564 = vadd.f32 0.0, %v1563
    %v1565 = vpop.f32.mrb[0].mxu0
    %1566 = vdwg.mxu0
    %1567 = vmatprep.subr.bf16.mxu0 0
    %1568 = vmatpush1.bf16.msra.mxu0 %v1346
    %1569 = vmatprep.subr.bf16.mxu0 0
    %1570 = vmatpush1.bf16.msra.mxu0 %v1349
    %1571 = vmatprep.subr.bf16.mxu0 0
    %1572 = vmatpush1.bf16.msra.mxu0 %v1352
    %1573 = vmatprep.subr.bf16.mxu0 0
    %1574 = vmatpush1.bf16.msra.mxu0 %v1355
    %1575 = vmatprep.subr.bf16.mxu0 0
    %1576 = vmatpush1.bf16.msra.mxu0 %v1358
    %1577 = vmatprep.subr.bf16.mxu0 0
    %1578 = vmatpush1.bf16.msra.mxu0 %v1361
    %1579 = vmatprep.subr.bf16.mxu0 0
    %1580 = vmatpush1.bf16.msra.mxu0 %v1364
    %1581 = vmatprep.subr.bf16.mxu0 0
    %1582 = vmatpush1.bf16.msra.mxu0 %v1367
    %1583 = vmatprep.subr.bf16.mxu0 0
    %1584 = vmatpush1.bf16.msra.mxu0 0
    %1585 = vmatprep.subr.bf16.mxu0 0
    %1586 = vmatpush1.bf16.msra.mxu0 0
    %1587 = vmatprep.subr.bf16.mxu0 0
    %1588 = vmatpush1.bf16.msra.mxu0 0
    %1589 = vmatprep.subr.bf16.mxu0 0
    %1590 = vmatpush1.bf16.msra.mxu0 0
    %1591 = vmatprep.subr.bf16.mxu0 0
    %1592 = vmatpush1.bf16.msra.mxu0 0
    %1593 = vmatprep.subr.bf16.mxu0 0
    %1594 = vmatpush1.bf16.msra.mxu0 0
    %1595 = vmatprep.subr.bf16.mxu0 0
    %1596 = vmatpush1.bf16.msra.mxu0 0
    %1597 = vmatprep.subr.bf16.mxu0 0
    %1598 = vmatpush1.bf16.msra.mxu0 0
    %1599 = vmatprep.mubr.bf16.mxu0 0
    %1600 = vmatmul.mubr.bf16.gmra.mrb[0].mxu0 %v305
    %v1601 = vpop.f32.mrb[0].mxu0
    %v1602 = vadd.f32 %v1561, %v1601
    %v1603 = vpop.f32.mrb[0].mxu0
    %v1604 = vpop.f32.mrb[0].mxu0
    %v1605 = vadd.f32 %v1564, %v1604
    %v1606 = vpop.f32.mrb[0].mxu0
    %1607 = vdwg.mxu0
    %v1608 = vld [vmem:[#allocation17] sm:$0xff]
    %v1609 = vld [vmem:[#allocation17 + $0x8] sm:$0xf]
    %v1610 = vld [vmem:[#allocation17 + $0xc] sm:$0xff]
    %v1611 = vld [vmem:[#allocation17 + $0x14] sm:$0xf]
    %v1612 = vld [vmem:[#allocation17 + $0x18] sm:$0xff]
    %v1613 = vld [vmem:[#allocation17 + $0x20] sm:$0xf]
    %v1614 = vld [vmem:[#allocation17 + $0x24] sm:$0xff]
    %v1615 = vld [vmem:[#allocation17 + $0x2c] sm:$0xf]
    %v1616 = vld [vmem:[#allocation17 + $0x30] sm:$0xff]
    %v1617 = vld [vmem:[#allocation17 + $0x38] sm:$0xf]
    %v1618 = vld [vmem:[#allocation17 + $0x3c] sm:$0xff]
    %v1619 = vld [vmem:[#allocation17 + $0x44] sm:$0xf]
    %v1620 = vld [vmem:[#allocation17 + $0x48] sm:$0xff]
    %v1621 = vld [vmem:[#allocation17 + $0x50] sm:$0xf]
    %v1622 = vld [vmem:[#allocation17 + $0x54] sm:$0xff]
    %v1623 = vld [vmem:[#allocation17 + $0x5c] sm:$0xf]
    %v1624 = vld [vmem:[#allocation17 + $0x60] sm:$0xff]
    %v1625 = vld [vmem:[#allocation17 + $0x68] sm:$0xf]
    %v1626 = vld [vmem:[#allocation17 + $0x6c] sm:$0xff]
    %v1627 = vld [vmem:[#allocation17 + $0x74] sm:$0xf]
    %v1628 = vld [vmem:[#allocation17 + $0x78] sm:$0xff]
    %v1629 = vld [vmem:[#allocation17 + $0x80] sm:$0xf]
    %v1630 = vld [vmem:[#allocation17 + $0x84] sm:$0xff]
    %v1631 = vld [vmem:[#allocation17 + $0x8c] sm:$0xf]
    %v1632 = vld [vmem:[#allocation17 + $0x90] sm:$0xff]
    %v1633 = vld [vmem:[#allocation17 + $0x98] sm:$0xf]
    %v1634 = vld [vmem:[#allocation17 + $0x9c] sm:$0xff]
    %v1635 = vld [vmem:[#allocation17 + $0xa4] sm:$0xf]
    %v1636 = vld [vmem:[#allocation17 + $0xa8] sm:$0xff]
    %v1637 = vld [vmem:[#allocation17 + $0xb0] sm:$0xf]
    %v1638 = vld [vmem:[#allocation17 + $0xb4] sm:$0xff]
    %v1639 = vld [vmem:[#allocation17 + $0xbc] sm:$0xf]
    %v1640 = vld [vmem:[#allocation17 + $0xc0] sm:$0xff]
    %v1641 = vld [vmem:[#allocation17 + $0xc8] sm:$0xf]
    %v1642 = vld [vmem:[#allocation17 + $0xcc] sm:$0xff]
    %v1643 = vld [vmem:[#allocation17 + $0xd4] sm:$0xf]
    %v1644 = vld [vmem:[#allocation17 + $0xd8] sm:$0xff]
    %v1645 = vld [vmem:[#allocation17 + $0xe0] sm:$0xf]
    %v1646 = vld [vmem:[#allocation17 + $0xe4] sm:$0xff]
    %v1647 = vld [vmem:[#allocation17 + $0xec] sm:$0xf]
    %v1648 = vld [vmem:[#allocation17 + $0xf0] sm:$0xff]
    %v1649 = vld [vmem:[#allocation17 + $0xf8] sm:$0xf]
    %v1650 = vld [vmem:[#allocation17 + $0xfc] sm:$0xff]
    %v1651 = vld [vmem:[#allocation17 + $0x104] sm:$0xf]
    %v1652 = vld [vmem:[#allocation17 + $0x108] sm:$0xff]
    %v1653 = vld [vmem:[#allocation17 + $0x110] sm:$0xf]
    %v1654 = vld [vmem:[#allocation17 + $0x114] sm:$0xff]
    %v1655 = vld [vmem:[#allocation17 + $0x11c] sm:$0xf]
    %v1656 = vld [vmem:[#allocation17 + $0x120] sm:$0xff]
    %v1657 = vld [vmem:[#allocation17 + $0x128] sm:$0xf]
    %v1658 = vld [vmem:[#allocation17 + $0x12c] sm:$0xff]
    %v1659 = vld [vmem:[#allocation17 + $0x134] sm:$0xf]
    %v1660 = vld [vmem:[#allocation17 + $0x138] sm:$0xff]
    %v1661 = vld [vmem:[#allocation17 + $0x140] sm:$0xf]
    %v1662 = vld [vmem:[#allocation17 + $0x144] sm:$0xff]
    %v1663 = vld [vmem:[#allocation17 + $0x14c] sm:$0xf]
    %v1664 = vld [vmem:[#allocation17 + $0x150] sm:$0xff]
    %v1665 = vld [vmem:[#allocation17 + $0x158] sm:$0xf]
    %v1666 = vld [vmem:[#allocation17 + $0x15c] sm:$0xff]
    %v1667 = vld [vmem:[#allocation17 + $0x164] sm:$0xf]
    %v1668 = vld [vmem:[#allocation17 + $0x168] sm:$0xff]
    %v1669 = vld [vmem:[#allocation17 + $0x170] sm:$0xf]
    %v1670 = vld [vmem:[#allocation17 + $0x174] sm:$0xff]
    %v1671 = vld [vmem:[#allocation17 + $0x17c] sm:$0xf]
    %v1672 = vld [vmem:[#allocation17 + $0x180] sm:$0xff]
    %v1673 = vld [vmem:[#allocation17 + $0x188] sm:$0xf]
    %v1674 = vld [vmem:[#allocation17 + $0x18c] sm:$0xff]
    %v1675 = vld [vmem:[#allocation17 + $0x194] sm:$0xf]
    %v1676 = vld [vmem:[#allocation17 + $0x198] sm:$0xff]
    %v1677 = vld [vmem:[#allocation17 + $0x1a0] sm:$0xf]
    %v1678 = vld [vmem:[#allocation17 + $0x1a4] sm:$0xff]
    %v1679 = vld [vmem:[#allocation17 + $0x1ac] sm:$0xf]
    %v1680 = vld [vmem:[#allocation17 + $0x1b0] sm:$0xff]
    %v1681 = vld [vmem:[#allocation17 + $0x1b8] sm:$0xf]
    %v1682 = vld [vmem:[#allocation17 + $0x1bc] sm:$0xff]
    %v1683 = vld [vmem:[#allocation17 + $0x1c4] sm:$0xf]
    %v1684 = vld [vmem:[#allocation17 + $0x1c8] sm:$0xff]
    %v1685 = vld [vmem:[#allocation17 + $0x1d0] sm:$0xf]
    %v1686 = vld [vmem:[#allocation17 + $0x1d4] sm:$0xff]
    %v1687 = vld [vmem:[#allocation17 + $0x1dc] sm:$0xf]
    %v1688 = vld [vmem:[#allocation17 + $0x1e0] sm:$0xff]
    %v1689 = vld [vmem:[#allocation17 + $0x1e8] sm:$0xf]
    %v1690 = vld [vmem:[#allocation17 + $0x1ec] sm:$0xff]
    %v1691 = vld [vmem:[#allocation17 + $0x1f4] sm:$0xf]
    %v1692 = vld [vmem:[#allocation17 + $0x1f8] sm:$0xff]
    %v1693 = vld [vmem:[#allocation17 + $0x200] sm:$0xf]
    %v1694 = vld [vmem:[#allocation17 + $0x204] sm:$0xff]
    %v1695 = vld [vmem:[#allocation17 + $0x20c] sm:$0xf]
    %v1696 = vld [vmem:[#allocation17 + $0x210] sm:$0xff]
    %v1697 = vld [vmem:[#allocation17 + $0x218] sm:$0xf]
    %v1698 = vld [vmem:[#allocation17 + $0x21c] sm:$0xff]
    %v1699 = vld [vmem:[#allocation17 + $0x224] sm:$0xf]
    %v1700 = vld [vmem:[#allocation17 + $0x228] sm:$0xff]
    %v1701 = vld [vmem:[#allocation17 + $0x230] sm:$0xf]
    %v1702 = vld [vmem:[#allocation17 + $0x234] sm:$0xff]
    %v1703 = vld [vmem:[#allocation17 + $0x23c] sm:$0xf]
    %v1800 = vunpack.c.l.b16 %v1608
    %v1801 = vunpack.c.h.b16 %v1608
    %v1802 = vunpack.c.l.b16 %v1609
    %v1803 = vunpack.c.l.b16 %v1610
    %v1804 = vunpack.c.h.b16 %v1610
    %v1805 = vunpack.c.l.b16 %v1611
    %v1806 = vunpack.c.l.b16 %v1612
    %v1807 = vunpack.c.h.b16 %v1612
    %v1808 = vunpack.c.l.b16 %v1613
    %v1809 = vunpack.c.l.b16 %v1614
    %v1810 = vunpack.c.h.b16 %v1614
    %v1811 = vunpack.c.l.b16 %v1615
    %v1812 = vunpack.c.l.b16 %v1616
    %v1813 = vunpack.c.h.b16 %v1616
    %v1814 = vunpack.c.l.b16 %v1617
    %v1815 = vunpack.c.l.b16 %v1618
    %v1816 = vunpack.c.h.b16 %v1618
    %v1817 = vunpack.c.l.b16 %v1619
    %v1818 = vunpack.c.l.b16 %v1620
    %v1819 = vunpack.c.h.b16 %v1620
    %v1820 = vunpack.c.l.b16 %v1621
    %v1821 = vunpack.c.l.b16 %v1622
    %v1822 = vunpack.c.h.b16 %v1622
    %v1823 = vunpack.c.l.b16 %v1623
    %v1824 = vunpack.c.l.b16 %v1624
    %v1825 = vunpack.c.h.b16 %v1624
    %v1826 = vunpack.c.l.b16 %v1625
    %v1827 = vunpack.c.l.b16 %v1626
    %v1828 = vunpack.c.h.b16 %v1626
    %v1829 = vunpack.c.l.b16 %v1627
    %v1830 = vunpack.c.l.b16 %v1628
    %v1831 = vunpack.c.h.b16 %v1628
    %v1832 = vunpack.c.l.b16 %v1629
    %v1833 = vunpack.c.l.b16 %v1630
    %v1834 = vunpack.c.h.b16 %v1630
    %v1835 = vunpack.c.l.b16 %v1631
    %v1836 = vunpack.c.l.b16 %v1632
    %v1837 = vunpack.c.h.b16 %v1632
    %v1838 = vunpack.c.l.b16 %v1633
    %v1839 = vunpack.c.l.b16 %v1634
    %v1840 = vunpack.c.h.b16 %v1634
    %v1841 = vunpack.c.l.b16 %v1635
    %v1842 = vunpack.c.l.b16 %v1636
    %v1843 = vunpack.c.h.b16 %v1636
    %v1844 = vunpack.c.l.b16 %v1637
    %v1845 = vunpack.c.l.b16 %v1638
    %v1846 = vunpack.c.h.b16 %v1638
    %v1847 = vunpack.c.l.b16 %v1639
    %v1848 = vunpack.c.l.b16 %v1640
    %v1849 = vunpack.c.h.b16 %v1640
    %v1850 = vunpack.c.l.b16 %v1641
    %v1851 = vunpack.c.l.b16 %v1642
    %v1852 = vunpack.c.h.b16 %v1642
    %v1853 = vunpack.c.l.b16 %v1643
    %v1854 = vunpack.c.l.b16 %v1644
    %v1855 = vunpack.c.h.b16 %v1644
    %v1856 = vunpack.c.l.b16 %v1645
    %v1857 = vunpack.c.l.b16 %v1646
    %v1858 = vunpack.c.h.b16 %v1646
    %v1859 = vunpack.c.l.b16 %v1647
    %v1860 = vunpack.c.l.b16 %v1648
    %v1861 = vunpack.c.h.b16 %v1648
    %v1862 = vunpack.c.l.b16 %v1649
    %v1863 = vunpack.c.l.b16 %v1650
    %v1864 = vunpack.c.h.b16 %v1650
    %v1865 = vunpack.c.l.b16 %v1651
    %v1866 = vunpack.c.l.b16 %v1652
    %v1867 = vunpack.c.h.b16 %v1652
    %v1868 = vunpack.c.l.b16 %v1653
    %v1869 = vunpack.c.l.b16 %v1654
    %v1870 = vunpack.c.h.b16 %v1654
    %v1871 = vunpack.c.l.b16 %v1655
    %v1872 = vunpack.c.l.b16 %v1656
    %v1873 = vunpack.c.h.b16 %v1656
    %v1874 = vunpack.c.l.b16 %v1657
    %v1875 = vunpack.c.l.b16 %v1658
    %v1876 = vunpack.c.h.b16 %v1658
    %v1877 = vunpack.c.l.b16 %v1659
    %v1878 = vunpack.c.l.b16 %v1660
    %v1879 = vunpack.c.h.b16 %v1660
    %v1880 = vunpack.c.l.b16 %v1661
    %v1881 = vunpack.c.l.b16 %v1662
    %v1882 = vunpack.c.h.b16 %v1662
    %v1883 = vunpack.c.l.b16 %v1663
    %v1884 = vunpack.c.l.b16 %v1664
    %v1885 = vunpack.c.h.b16 %v1664
    %v1886 = vunpack.c.l.b16 %v1665
    %v1887 = vunpack.c.l.b16 %v1666
    %v1888 = vunpack.c.h.b16 %v1666
    %v1889 = vunpack.c.l.b16 %v1667
    %v1890 = vunpack.c.l.b16 %v1668
    %v1891 = vunpack.c.h.b16 %v1668
    %v1892 = vunpack.c.l.b16 %v1669
    %v1893 = vunpack.c.l.b16 %v1670
    %v1894 = vunpack.c.h.b16 %v1670
    %v1895 = vunpack.c.l.b16 %v1671
    %v1896 = vunpack.c.l.b16 %v1672
    %v1897 = vunpack.c.h.b16 %v1672
    %v1898 = vunpack.c.l.b16 %v1673
    %v1899 = vunpack.c.l.b16 %v1674
    %v1900 = vunpack.c.h.b16 %v1674
    %v1901 = vunpack.c.l.b16 %v1675
    %v1902 = vunpack.c.l.b16 %v1676
    %v1903 = vunpack.c.h.b16 %v1676
    %v1904 = vunpack.c.l.b16 %v1677
    %v1905 = vunpack.c.l.b16 %v1678
    %v1906 = vunpack.c.h.b16 %v1678
    %v1907 = vunpack.c.l.b16 %v1679
    %v1908 = vunpack.c.l.b16 %v1680
    %v1909 = vunpack.c.h.b16 %v1680
    %v1910 = vunpack.c.l.b16 %v1681
    %v1911 = vunpack.c.l.b16 %v1682
    %v1912 = vunpack.c.h.b16 %v1682
    %v1913 = vunpack.c.l.b16 %v1683
    %v1914 = vunpack.c.l.b16 %v1684
    %v1915 = vunpack.c.h.b16 %v1684
    %v1916 = vunpack.c.l.b16 %v1685
    %v1917 = vunpack.c.l.b16 %v1686
    %v1918 = vunpack.c.h.b16 %v1686
    %v1919 = vunpack.c.l.b16 %v1687
    %v1920 = vunpack.c.l.b16 %v1688
    %v1921 = vunpack.c.h.b16 %v1688
    %v1922 = vunpack.c.l.b16 %v1689
    %v1923 = vunpack.c.l.b16 %v1690
    %v1924 = vunpack.c.h.b16 %v1690
    %v1925 = vunpack.c.l.b16 %v1691
    %v1926 = vunpack.c.l.b16 %v1692
    %v1927 = vunpack.c.h.b16 %v1692
    %v1928 = vunpack.c.l.b16 %v1693
    %v1929 = vunpack.c.l.b16 %v1694
    %v1930 = vunpack.c.h.b16 %v1694
    %v1931 = vunpack.c.l.b16 %v1695
    %v1932 = vunpack.c.l.b16 %v1696
    %v1933 = vunpack.c.h.b16 %v1696
    %v1934 = vunpack.c.l.b16 %v1697
    %v1935 = vunpack.c.l.b16 %v1698
    %v1936 = vunpack.c.h.b16 %v1698
    %v1937 = vunpack.c.l.b16 %v1699
    %v1938 = vunpack.c.l.b16 %v1700
    %v1939 = vunpack.c.h.b16 %v1700
    %v1940 = vunpack.c.l.b16 %v1701
    %v1941 = vunpack.c.l.b16 %v1702
    %v1942 = vunpack.c.h.b16 %v1702
    %v1943 = vunpack.c.l.b16 %v1703
    %v1944 = vpack.c.b16 %v1803, %v1800
    %v1945 = vpack.c.b16 %v1804, %v1801
    %v1946 = vpack.c.b16 %v1805, %v1802
    %v1947 = vpack.c.b16 %v1809, %v1806
    %v1948 = vpack.c.b16 %v1810, %v1807
    %v1949 = vpack.c.b16 %v1811, %v1808
    %v1950 = vpack.c.b16 %v1815, %v1812
    %v1951 = vpack.c.b16 %v1816, %v1813
    %v1952 = vpack.c.b16 %v1817, %v1814
    %v1953 = vpack.c.b16 %v1821, %v1818
    %v1954 = vpack.c.b16 %v1822, %v1819
    %v1955 = vpack.c.b16 %v1823, %v1820
    %v1956 = vpack.c.b16 %v1827, %v1824
    %v1957 = vpack.c.b16 %v1828, %v1825
    %v1958 = vpack.c.b16 %v1829, %v1826
    %v1959 = vpack.c.b16 %v1833, %v1830
    %v1960 = vpack.c.b16 %v1834, %v1831
    %v1961 = vpack.c.b16 %v1835, %v1832
    %v1962 = vpack.c.b16 %v1839, %v1836
    %v1963 = vpack.c.b16 %v1840, %v1837
    %v1964 = vpack.c.b16 %v1841, %v1838
    %v1965 = vpack.c.b16 %v1845, %v1842
    %v1966 = vpack.c.b16 %v1846, %v1843
    %v1967 = vpack.c.b16 %v1847, %v1844
    %v1968 = vpack.c.b16 %v1851, %v1848
    %v1969 = vpack.c.b16 %v1852, %v1849
    %v1970 = vpack.c.b16 %v1853, %v1850
    %v1971 = vpack.c.b16 %v1857, %v1854
    %v1972 = vpack.c.b16 %v1858, %v1855
    %v1973 = vpack.c.b16 %v1859, %v1856
    %v1974 = vpack.c.b16 %v1863, %v1860
    %v1975 = vpack.c.b16 %v1864, %v1861
    %v1976 = vpack.c.b16 %v1865, %v1862
    %v1977 = vpack.c.b16 %v1869, %v1866
    %v1978 = vpack.c.b16 %v1870, %v1867
    %v1979 = vpack.c.b16 %v1871, %v1868
    %v1980 = vpack.c.b16 %v1875, %v1872
    %v1981 = vpack.c.b16 %v1876, %v1873
    %v1982 = vpack.c.b16 %v1877, %v1874
    %v1983 = vpack.c.b16 %v1881, %v1878
    %v1984 = vpack.c.b16 %v1882, %v1879
    %v1985 = vpack.c.b16 %v1883, %v1880
    %v1986 = vpack.c.b16 %v1887, %v1884
    %v1987 = vpack.c.b16 %v1888, %v1885
    %v1988 = vpack.c.b16 %v1889, %v1886
    %v1989 = vpack.c.b16 %v1893, %v1890
    %v1990 = vpack.c.b16 %v1894, %v1891
    %v1991 = vpack.c.b16 %v1895, %v1892
    %v1992 = vpack.c.b16 %v1899, %v1896
    %v1993 = vpack.c.b16 %v1900, %v1897
    %v1994 = vpack.c.b16 %v1901, %v1898
    %v1995 = vpack.c.b16 %v1905, %v1902
    %v1996 = vpack.c.b16 %v1906, %v1903
    %v1997 = vpack.c.b16 %v1907, %v1904
    %v1998 = vpack.c.b16 %v1911, %v1908
    %v1999 = vpack.c.b16 %v1912, %v1909
    %v2000 = vpack.c.b16 %v1913, %v1910
    %v2001 = vpack.c.b16 %v1917, %v1914
    %v2002 = vpack.c.b16 %v1918, %v1915
    %v2003 = vpack.c.b16 %v1919, %v1916
    %v2004 = vpack.c.b16 %v1923, %v1920
    %v2005 = vpack.c.b16 %v1924, %v1921
    %v2006 = vpack.c.b16 %v1925, %v1922
    %v2007 = vpack.c.b16 %v1929, %v1926
    %v2008 = vpack.c.b16 %v1930, %v1927
    %v2009 = vpack.c.b16 %v1931, %v1928
    %v2010 = vpack.c.b16 %v1935, %v1932
    %v2011 = vpack.c.b16 %v1936, %v1933
    %v2012 = vpack.c.b16 %v1937, %v1934
    %v2013 = vpack.c.b16 %v1941, %v1938
    %v2014 = vpack.c.b16 %v1942, %v1939
    %v2015 = vpack.c.b16 %v1943, %v1940
    %2088 = vmatprep.subr.bf16.mxu0 %v1945
    %2089 = vmatpush1.bf16.msra.mxu0 %v1944
    %2090 = vmatprep.subr.bf16.mxu0 %v1948
    %2091 = vmatpush1.bf16.msra.mxu0 %v1947
    %2092 = vmatprep.subr.bf16.mxu0 %v1951
    %2093 = vmatpush1.bf16.msra.mxu0 %v1950
    %2094 = vmatprep.subr.bf16.mxu0 %v1954
    %2095 = vmatpush1.bf16.msra.mxu0 %v1953
    %2096 = vmatprep.subr.bf16.mxu0 %v1957
    %2097 = vmatpush1.bf16.msra.mxu0 %v1956
    %2098 = vmatprep.subr.bf16.mxu0 %v1960
    %2099 = vmatpush1.bf16.msra.mxu0 %v1959
    %2100 = vmatprep.subr.bf16.mxu0 %v1963
    %2101 = vmatpush1.bf16.msra.mxu0 %v1962
    %2102 = vmatprep.subr.bf16.mxu0 %v1966
    %2103 = vmatpush1.bf16.msra.mxu0 %v1965
    %2104 = vmatprep.subr.bf16.mxu0 %v1969
    %2105 = vmatpush1.bf16.msra.mxu0 %v1968
    %2106 = vmatprep.subr.bf16.mxu0 %v1972
    %2107 = vmatpush1.bf16.msra.mxu0 %v1971
    %2108 = vmatprep.subr.bf16.mxu0 %v1975
    %2109 = vmatpush1.bf16.msra.mxu0 %v1974
    %2110 = vmatprep.subr.bf16.mxu0 %v1978
    %2111 = vmatpush1.bf16.msra.mxu0 %v1977
    %2112 = vmatprep.subr.bf16.mxu0 %v1981
    %2113 = vmatpush1.bf16.msra.mxu0 %v1980
    %2114 = vmatprep.subr.bf16.mxu0 %v1984
    %2115 = vmatpush1.bf16.msra.mxu0 %v1983
    %2116 = vmatprep.subr.bf16.mxu0 %v1987
    %2117 = vmatpush1.bf16.msra.mxu0 %v1986
    %2118 = vmatprep.subr.bf16.mxu0 %v1990
    %2119 = vmatpush1.bf16.msra.mxu0 %v1989
    %2120 = vmatprep.mubr.bf16.mxu0 %v304
    %2121 = vmatmul.mubr.bf16.gmra.mrb[0].mxu0 %v303
    %v2122 = vpop.f32.mrb[0].mxu0
    %v2123 = vadd.f32 0.0, %v2122
    %v2124 = vpop.f32.mrb[0].mxu0
    %v2125 = vadd.f32 0.0, %v2124
    %v2126 = vpop.f32.mrb[0].mxu0
    %v2127 = vadd.f32 0.0, %v2126
    %v2128 = vpop.f32.mrb[0].mxu0
    %v2129 = vadd.f32 0.0, %v2128
    %2130 = vdwg.mxu0
    %2131 = vmatprep.subr.bf16.mxu0 %v1993
    %2132 = vmatpush1.bf16.msra.mxu0 %v1992
    %2133 = vmatprep.subr.bf16.mxu0 %v1996
    %2134 = vmatpush1.bf16.msra.mxu0 %v1995
    %2135 = vmatprep.subr.bf16.mxu0 %v1999
    %2136 = vmatpush1.bf16.msra.mxu0 %v1998
    %2137 = vmatprep.subr.bf16.mxu0 %v2002
    %2138 = vmatpush1.bf16.msra.mxu0 %v2001
    %2139 = vmatprep.subr.bf16.mxu0 %v2005
    %2140 = vmatpush1.bf16.msra.mxu0 %v2004
    %2141 = vmatprep.subr.bf16.mxu0 %v2008
    %2142 = vmatpush1.bf16.msra.mxu0 %v2007
    %2143 = vmatprep.subr.bf16.mxu0 %v2011
    %2144 = vmatpush1.bf16.msra.mxu0 %v2010
    %2145 = vmatprep.subr.bf16.mxu0 %v2014
    %2146 = vmatpush1.bf16.msra.mxu0 %v2013
    %2147 = vmatprep.subr.bf16.mxu0 0
    %2148 = vmatpush1.bf16.msra.mxu0 0
    %2149 = vmatprep.subr.bf16.mxu0 0
    %2150 = vmatpush1.bf16.msra.mxu0 0
    %2151 = vmatprep.subr.bf16.mxu0 0
    %2152 = vmatpush1.bf16.msra.mxu0 0
    %2153 = vmatprep.subr.bf16.mxu0 0
    %2154 = vmatpush1.bf16.msra.mxu0 0
    %2155 = vmatprep.subr.bf16.mxu0 0
    %2156 = vmatpush1.bf16.msra.mxu0 0
    %2157 = vmatprep.subr.bf16.mxu0 0
    %2158 = vmatpush1.bf16.msra.mxu0 0
    %2159 = vmatprep.subr.bf16.mxu0 0
    %2160 = vmatpush1.bf16.msra.mxu0 0
    %2161 = vmatprep.subr.bf16.mxu0 0
    %2162 = vmatpush1.bf16.msra.mxu0 0
    %2163 = vmatprep.mubr.bf16.mxu0 0
    %2164 = vmatmul.mubr.bf16.gmra.mrb[0].mxu0 %v305
    %v2165 = vpop.f32.mrb[0].mxu0
    %v2166 = vadd.f32 %v2123, %v2165
    %v2167 = vpop.f32.mrb[0].mxu0
    %v2168 = vadd.f32 %v2125, %v2167
    %v2169 = vpop.f32.mrb[0].mxu0
    %v2170 = vadd.f32 %v2127, %v2169
    %v2171 = vpop.f32.mrb[0].mxu0
    %v2172 = vadd.f32 %v2129, %v2171
    %2173 = vdwg.mxu0
    %2174 = vmatprep.subr.bf16.mxu0 0
    %2175 = vmatpush1.bf16.msra.mxu0 %v1946
    %2176 = vmatprep.subr.bf16.mxu0 0
    %2177 = vmatpush1.bf16.msra.mxu0 %v1949
    %2178 = vmatprep.subr.bf16.mxu0 0
    %2179 = vmatpush1.bf16.msra.mxu0 %v1952
    %2180 = vmatprep.subr.bf16.mxu0 0
    %2181 = vmatpush1.bf16.msra.mxu0 %v1955
    %2182 = vmatprep.subr.bf16.mxu0 0
    %2183 = vmatpush1.bf16.msra.mxu0 %v1958
    %2184 = vmatprep.subr.bf16.mxu0 0
    %2185 = vmatpush1.bf16.msra.mxu0 %v1961
    %2186 = vmatprep.subr.bf16.mxu0 0
    %2187 = vmatpush1.bf16.msra.mxu0 %v1964
    %2188 = vmatprep.subr.bf16.mxu0 0
    %2189 = vmatpush1.bf16.msra.mxu0 %v1967
    %2190 = vmatprep.subr.bf16.mxu0 0
    %2191 = vmatpush1.bf16.msra.mxu0 %v1970
    %2192 = vmatprep.subr.bf16.mxu0 0
    %2193 = vmatpush1.bf16.msra.mxu0 %v1973
    %2194 = vmatprep.subr.bf16.mxu0 0
    %2195 = vmatpush1.bf16.msra.mxu0 %v1976
    %2196 = vmatprep.subr.bf16.mxu0 0
    %2197 = vmatpush1.bf16.msra.mxu0 %v1979
    %2198 = vmatprep.subr.bf16.mxu0 0
    %2199 = vmatpush1.bf16.msra.mxu0 %v1982
    %2200 = vmatprep.subr.bf16.mxu0 0
    %2201 = vmatpush1.bf16.msra.mxu0 %v1985
    %2202 = vmatprep.subr.bf16.mxu0 0
    %2203 = vmatpush1.bf16.msra.mxu0 %v1988
    %2204 = vmatprep.subr.bf16.mxu0 0
    %2205 = vmatpush1.bf16.msra.mxu0 %v1991
    %2206 = vmatprep.mubr.bf16.mxu0 %v304
    %2207 = vmatmul.mubr.bf16.gmra.mrb[0].mxu0 %v303
    %v2208 = vpop.f32.mrb[0].mxu0
    %v2209 = vadd.f32 0.0, %v2208
    %v2210 = vpop.f32.mrb[0].mxu0
    %v2211 = vpop.f32.mrb[0].mxu0
    %v2212 = vadd.f32 0.0, %v2211
    %v2213 = vpop.f32.mrb[0].mxu0
    %2214 = vdwg.mxu0
    %2215 = vmatprep.subr.bf16.mxu0 0
    %2216 = vmatpush1.bf16.msra.mxu0 %v1994
    %2217 = vmatprep.subr.bf16.mxu0 0
    %2218 = vmatpush1.bf16.msra.mxu0 %v1997
    %2219 = vmatprep.subr.bf16.mxu0 0
    %2220 = vmatpush1.bf16.msra.mxu0 %v2000
    %2221 = vmatprep.subr.bf16.mxu0 0
    %2222 = vmatpush1.bf16.msra.mxu0 %v2003
    %2223 = vmatprep.subr.bf16.mxu0 0
    %2224 = vmatpush1.bf16.msra.mxu0 %v2006
    %2225 = vmatprep.subr.bf16.mxu0 0
    %2226 = vmatpush1.bf16.msra.mxu0 %v2009
    %2227 = vmatprep.subr.bf16.mxu0 0
    %2228 = vmatpush1.bf16.msra.mxu0 %v2012
    %2229 = vmatprep.subr.bf16.mxu0 0
    %2230 = vmatpush1.bf16.msra.mxu0 %v2015
    %2231 = vmatprep.subr.bf16.mxu0 0
    %2232 = vmatpush1.bf16.msra.mxu0 0
    %2233 = vmatprep.subr.bf16.mxu0 0
    %2234 = vmatpush1.bf16.msra.mxu0 0
    %2235 = vmatprep.subr.bf16.mxu0 0
    %2236 = vmatpush1.bf16.msra.mxu0 0
    %2237 = vmatprep.subr.bf16.mxu0 0
    %2238 = vmatpush1.bf16.msra.mxu0 0
    %2239 = vmatprep.subr.bf16.mxu0 0
    %2240 = vmatpush1.bf16.msra.mxu0 0
    %2241 = vmatprep.subr.bf16.mxu0 0
    %2242 = vmatpush1.bf16.msra.mxu0 0
    %2243 = vmatprep.subr.bf16.mxu0 0
    %2244 = vmatpush1.bf16.msra.mxu0 0
    %2245 = vmatprep.subr.bf16.mxu0 0
    %2246 = vmatpush1.bf16.msra.mxu0 0
    %2247 = vmatprep.mubr.bf16.mxu0 0
    %2248 = vmatmul.mubr.bf16.gmra.mrb[0].mxu0 %v305
    %v2249 = vpop.f32.mrb[0].mxu0
    %v2250 = vadd.f32 %v2209, %v2249
    %v2251 = vpop.f32.mrb[0].mxu0
    %v2252 = vpop.f32.mrb[0].mxu0
    %v2253 = vadd.f32 %v2212, %v2252
    %v2254 = vpop.f32.mrb[0].mxu0
    %2255 = vdwg.mxu0
    %v2256 = vld [vmem:[#allocation6] sm:$0xff]
    %v2257 = vpack.c.bf16 %v954, %v954
    %v2258 = vpack.c.bf16 %v957, %v957
    %v2259 = vpack.c.bf16 %v1518, %v1518
    %v2260 = vpack.c.bf16 %v1522, %v1522
    %v2261 = vpack.c.bf16 %v2166, %v2166
    %v2262 = vpack.c.bf16 %v2170, %v2170
    %vm2263 = vcmask 523264
    %v2265 = vsel %vm2263, %v2257, 0
    %v2268 = vsel %vm2263, %v2259, 0
    %2270 = vmatprep.subr.bf16.mxu0 0
    %2271 = vmatpush1.bf16.xpose.msra.mxu0 %v2268
    %2272 = vmatprep.subr.bf16.mxu0 0
    %2273 = vmatpush1.bf16.xpose.msra.mxu0 0
    %2274 = vmatprep.subr.bf16.mxu0 0
    %2275 = vmatpush1.bf16.xpose.msra.mxu0 0
    %2276 = vmatprep.subr.bf16.mxu0 0
    %2277 = vmatpush1.bf16.xpose.msra.mxu0 0
    %2278 = vmatprep.subr.bf16.mxu0 0
    %2279 = vmatpush1.bf16.xpose.msra.mxu0 0
    %2280 = vmatprep.subr.bf16.mxu0 0
    %2281 = vmatpush1.bf16.xpose.msra.mxu0 0
    %2282 = vmatprep.subr.bf16.mxu0 0
    %2283 = vmatpush1.bf16.xpose.msra.mxu0 0
    %2284 = vmatprep.subr.bf16.mxu0 0
    %2285 = vmatpush1.bf16.xpose.msra.mxu0 0
    %2286 = vmatprep.subr.bf16.mxu0 0
    %2287 = vmatpush1.bf16.xpose.msra.mxu0 0
    %2288 = vmatprep.subr.bf16.mxu0 0
    %2289 = vmatpush1.bf16.xpose.msra.mxu0 0
    %2290 = vmatprep.subr.bf16.mxu0 0
    %2291 = vmatpush1.bf16.xpose.msra.mxu0 0
    %2292 = vmatprep.subr.bf16.mxu0 0
    %2293 = vmatpush1.bf16.xpose.msra.mxu0 0
    %2294 = vmatprep.subr.bf16.mxu0 0
    %2295 = vmatpush1.bf16.xpose.msra.mxu0 0
    %2296 = vmatprep.subr.bf16.mxu0 0
    %2297 = vmatpush1.bf16.xpose.msra.mxu0 0
    %2298 = vmatprep.subr.bf16.mxu0 0
    %2299 = vmatpush1.bf16.xpose.msra.mxu0 0
    %2300 = vmatprep.subr.bf16.mxu0 0
    %2301 = vmatpush1.bf16.xpose.msra.mxu0 0
    %2302 = vmatprep.mubr.bf16.mxu0 0
    %2303 = vmatmul.mubr.bf16.gmra.mrb[0].mxu0 %v2265
    %v2304 = vpop.f32.mrb[0].mxu0
    %v2305 = vadd.f32 %v2256, %v2304
    %v2306 = vpop.f32.mrb[0].mxu0
    %v2307 = vpop.f32.mrb[0].mxu0
    %v2308 = vpop.f32.mrb[0].mxu0
    %2309 = vdwg.mxu0
    %v2311 = vsel %vm2263, %v2258, 0
    %v2314 = vsel %vm2263, %v2260, 0
    %2316 = vmatprep.subr.bf16.mxu0 0
    %2317 = vmatpush1.bf16.xpose.msra.mxu0 %v2314
    %2318 = vmatprep.subr.bf16.mxu0 0
    %2319 = vmatpush1.bf16.xpose.msra.mxu0 0
    %2320 = vmatprep.subr.bf16.mxu0 0
    %2321 = vmatpush1.bf16.xpose.msra.mxu0 0
    %2322 = vmatprep.subr.bf16.mxu0 0
    %2323 = vmatpush1.bf16.xpose.msra.mxu0 0
    %2324 = vmatprep.subr.bf16.mxu0 0
    %2325 = vmatpush1.bf16.xpose.msra.mxu0 0
    %2326 = vmatprep.subr.bf16.mxu0 0
    %2327 = vmatpush1.bf16.xpose.msra.mxu0 0
    %2328 = vmatprep.subr.bf16.mxu0 0
    %2329 = vmatpush1.bf16.xpose.msra.mxu0 0
    %2330 = vmatprep.subr.bf16.mxu0 0
    %2331 = vmatpush1.bf16.xpose.msra.mxu0 0
    %2332 = vmatprep.subr.bf16.mxu0 0
    %2333 = vmatpush1.bf16.xpose.msra.mxu0 0
    %2334 = vmatprep.subr.bf16.mxu0 0
    %2335 = vmatpush1.bf16.xpose.msra.mxu0 0
    %2336 = vmatprep.subr.bf16.mxu0 0
    %2337 = vmatpush1.bf16.xpose.msra.mxu0 0
    %2338 = vmatprep.subr.bf16.mxu0 0
    %2339 = vmatpush1.bf16.xpose.msra.mxu0 0
    %2340 = vmatprep.subr.bf16.mxu0 0
    %2341 = vmatpush1.bf16.xpose.msra.mxu0 0
    %2342 = vmatprep.subr.bf16.mxu0 0
    %2343 = vmatpush1.bf16.xpose.msra.mxu0 0
    %2344 = vmatprep.subr.bf16.mxu0 0
    %2345 = vmatpush1.bf16.xpose.msra.mxu0 0
    %2346 = vmatprep.subr.bf16.mxu0 0
    %2347 = vmatpush1.bf16.xpose.msra.mxu0 0
    %2348 = vmatprep.mubr.bf16.mxu0 0
    %2349 = vmatmul.mubr.bf16.gmra.mrb[0].mxu0 %v2311
    %v2350 = vpop.f32.mrb[0].mxu0
    %v2351 = vadd.f32 %v2256, %v2350
    %v2352 = vpop.f32.mrb[0].mxu0
    %v2353 = vpop.f32.mrb[0].mxu0
    %v2354 = vpop.f32.mrb[0].mxu0
    %2355 = vdwg.mxu0
    %vm2356 = vcmask 64512
    %v2357 = vsel %vm2356, %v2305, -inf
    %2358 = vmax.xlane.f32.xlu0 %v2357
    %v2359 = vpop.xlane.xlu0 %2358
    %v2360 = vsel %vm2356, %v2351, -inf
    %2361 = vmax.xlane.f32.xlu0 %v2360
    %v2362 = vpop.xlane.xlu0 %2361
    %v2363 = vsub.f32 %v2305, %v2359
    %v2364 = vsub.f32 %v2351, %v2362
    %v2365 = vmul.f32 %v2363, 1.442695
    %v2366 = vpow.pop %v2365
    %v2367 = vmul.f32 %v2364, 1.442695
    %v2368 = vpow.pop %v2367
    %v2369 = vsel %vm2356, %v2366, 0.0
    %2370 = vadd.xlane.f32.xlu0 %v2369
    %v2371 = vpop.xlane.xlu0 %2370
    %v2372 = vsel %vm2356, %v2368, 0.0
    %2373 = vadd.xlane.f32.xlu0 %v2372
    %v2374 = vpop.xlane.xlu0 %2373
    %v2375 = vrcp.pop %v2371
    %v2376 = vrcp.pop %v2374
    %v2377 = vmul.f32 %v2366, %v2375
    %v2378 = vmul.f32 %v2368, %v2376
    %v2379 = vpack.c.bf16 %v2377, %v2377
    %v2380 = vpack.c.bf16 %v2378, %v2378
    %v2382 = vsel %vm2356, %v2379, 0
    %vm2384 = vcmask 1043456
    %v2386 = vsel %vm2384, %v2261, 0
    %2388 = vmatprep.subr.bf16.mxu0 0
    %2389 = vmatpush1.bf16.msra.mxu0 %v2386
    %2390 = vmatprep.subr.bf16.mxu0 0
    %2391 = vmatpush1.bf16.msra.mxu0 0
    %2392 = vmatprep.subr.bf16.mxu0 0
    %2393 = vmatpush1.bf16.msra.mxu0 0
    %2394 = vmatprep.subr.bf16.mxu0 0
    %2395 = vmatpush1.bf16.msra.mxu0 0
    %2396 = vmatprep.subr.bf16.mxu0 0
    %2397 = vmatpush1.bf16.msra.mxu0 0
    %2398 = vmatprep.subr.bf16.mxu0 0
    %2399 = vmatpush1.bf16.msra.mxu0 0
    %2400 = vmatprep.subr.bf16.mxu0 0
    %2401 = vmatpush1.bf16.msra.mxu0 0
    %2402 = vmatprep.subr.bf16.mxu0 0
    %2403 = vmatpush1.bf16.msra.mxu0 0
    %2404 = vmatprep.subr.bf16.mxu0 0
    %2405 = vmatpush1.bf16.msra.mxu0 0
    %2406 = vmatprep.subr.bf16.mxu0 0
    %2407 = vmatpush1.bf16.msra.mxu0 0
    %2408 = vmatprep.subr.bf16.mxu0 0
    %2409 = vmatpush1.bf16.msra.mxu0 0
    %2410 = vmatprep.subr.bf16.mxu0 0
    %2411 = vmatpush1.bf16.msra.mxu0 0
    %2412 = vmatprep.subr.bf16.mxu0 0
    %2413 = vmatpush1.bf16.msra.mxu0 0
    %2414 = vmatprep.subr.bf16.mxu0 0
    %2415 = vmatpush1.bf16.msra.mxu0 0
    %2416 = vmatprep.subr.bf16.mxu0 0
    %2417 = vmatpush1.bf16.msra.mxu0 0
    %2418 = vmatprep.subr.bf16.mxu0 0
    %2419 = vmatpush1.bf16.msra.mxu0 0
    %2420 = vmatprep.mubr.bf16.mxu0 0
    %2421 = vmatmul.mubr.bf16.gmra.mrb[0].mxu0 %v2382
    %v2422 = vpop.f32.mrb[0].mxu0
    %v2423 = vadd.f32 0.0, %v2422
    %v2424 = vpop.f32.mrb[0].mxu0
    %v2425 = vpop.f32.mrb[0].mxu0
    %v2426 = vpop.f32.mrb[0].mxu0
    %2427 = vdwg.mxu0
    %v2429 = vsel %vm2356, %v2380, 0
    %v2432 = vsel %vm2384, %v2262, 0
    %2434 = vmatprep.subr.bf16.mxu0 0
    %2435 = vmatpush1.bf16.msra.mxu0 %v2432
    %2436 = vmatprep.subr.bf16.mxu0 0
    %2437 = vmatpush1.bf16.msra.mxu0 0
    %2438 = vmatprep.subr.bf16.mxu0 0
    %2439 = vmatpush1.bf16.msra.mxu0 0
    %2440 = vmatprep.subr.bf16.mxu0 0
    %2441 = vmatpush1.bf16.msra.mxu0 0
    %2442 = vmatprep.subr.bf16.mxu0 0
    %2443 = vmatpush1.bf16.msra.mxu0 0
    %2444 = vmatprep.subr.bf16.mxu0 0
    %2445 = vmatpush1.bf16.msra.mxu0 0
    %2446 = vmatprep.subr.bf16.mxu0 0
    %2447 = vmatpush1.bf16.msra.mxu0 0
    %2448 = vmatprep.subr.bf16.mxu0 0
    %2449 = vmatpush1.bf16.msra.mxu0 0
    %2450 = vmatprep.subr.bf16.mxu0 0
    %2451 = vmatpush1.bf16.msra.mxu0 0
    %2452 = vmatprep.subr.bf16.mxu0 0
    %2453 = vmatpush1.bf16.msra.mxu0 0
    %2454 = vmatprep.subr.bf16.mxu0 0
    %2455 = vmatpush1.bf16.msra.mxu0 0
    %2456 = vmatprep.subr.bf16.mxu0 0
    %2457 = vmatpush1.bf16.msra.mxu0 0
    %2458 = vmatprep.subr.bf16.mxu0 0
    %2459 = vmatpush1.bf16.msra.mxu0 0
    %2460 = vmatprep.subr.bf16.mxu0 0
    %2461 = vmatpush1.bf16.msra.mxu0 0
    %2462 = vmatprep.subr.bf16.mxu0 0
    %2463 = vmatpush1.bf16.msra.mxu0 0
    %2464 = vmatprep.subr.bf16.mxu0 0
    %2465 = vmatpush1.bf16.msra.mxu0 0
    %2466 = vmatprep.mubr.bf16.mxu0 0
    %2467 = vmatmul.mubr.bf16.gmra.mrb[0].mxu0 %v2429
    %v2468 = vpop.f32.mrb[0].mxu0
    %v2469 = vadd.f32 0.0, %v2468
    %v2470 = vpop.f32.mrb[0].mxu0
    %v2471 = vpop.f32.mrb[0].mxu0
    %v2472 = vpop.f32.mrb[0].mxu0
    %2473 = vdwg.mxu0
    %2474 = vst.msk [vmem:[#allocation2] sm:$0xff] %vm2263, %v2423
    %2475 = vst.msk [vmem:[#allocation2 + $0x18] sm:$0xff] %vm2263, %v2469
    %2477 = vrot.lane.b32.xlu0 %v2257, 64
    %v2478 = vpop.permute.xlu0 %2477
    %2480 = vrot.lane.b32.xlu0 %v2259, 64
    %v2481 = vpop.permute.xlu0 %2480
    %v2483 = vsel %vm2263, %v2478, 0
    %v2486 = vsel %vm2263, %v2481, 0
    %2488 = vmatprep.subr.bf16.mxu0 0
    %2489 = vmatpush1.bf16.xpose.msra.mxu0 %v2486
    %2490 = vmatprep.subr.bf16.mxu0 0
    %2491 = vmatpush1.bf16.xpose.msra.mxu0 0
    %2492 = vmatprep.subr.bf16.mxu0 0
    %2493 = vmatpush1.bf16.xpose.msra.mxu0 0
    %2494 = vmatprep.subr.bf16.mxu0 0
    %2495 = vmatpush1.bf16.xpose.msra.mxu0 0
    %2496 = vmatprep.subr.bf16.mxu0 0
    %2497 = vmatpush1.bf16.xpose.msra.mxu0 0
    %2498 = vmatprep.subr.bf16.mxu0 0
    %2499 = vmatpush1.bf16.xpose.msra.mxu0 0
    %2500 = vmatprep.subr.bf16.mxu0 0
    %2501 = vmatpush1.bf16.xpose.msra.mxu0 0
    %2502 = vmatprep.subr.bf16.mxu0 0
    %2503 = vmatpush1.bf16.xpose.msra.mxu0 0
    %2504 = vmatprep.subr.bf16.mxu0 0
    %2505 = vmatpush1.bf16.xpose.msra.mxu0 0
    %2506 = vmatprep.subr.bf16.mxu0 0
    %2507 = vmatpush1.bf16.xpose.msra.mxu0 0
    %2508 = vmatprep.subr.bf16.mxu0 0
    %2509 = vmatpush1.bf16.xpose.msra.mxu0 0
    %2510 = vmatprep.subr.bf16.mxu0 0
    %2511 = vmatpush1.bf16.xpose.msra.mxu0 0
    %2512 = vmatprep.subr.bf16.mxu0 0
    %2513 = vmatpush1.bf16.xpose.msra.mxu0 0
    %2514 = vmatprep.subr.bf16.mxu0 0
    %2515 = vmatpush1.bf16.xpose.msra.mxu0 0
    %2516 = vmatprep.subr.bf16.mxu0 0
    %2517 = vmatpush1.bf16.xpose.msra.mxu0 0
    %2518 = vmatprep.subr.bf16.mxu0 0
    %2519 = vmatpush1.bf16.xpose.msra.mxu0 0
    %2520 = vmatprep.mubr.bf16.mxu0 0
    %2521 = vmatmul.mubr.bf16.gmra.mrb[0].mxu0 %v2483
    %v2522 = vpop.f32.mrb[0].mxu0
    %v2523 = vadd.f32 %v2256, %v2522
    %v2524 = vpop.f32.mrb[0].mxu0
    %v2525 = vpop.f32.mrb[0].mxu0
    %v2526 = vpop.f32.mrb[0].mxu0
    %2527 = vdwg.mxu0
    %2529 = vrot.lane.b32.xlu0 %v2258, 64
    %v2530 = vpop.permute.xlu0 %2529
    %2532 = vrot.lane.b32.xlu0 %v2260, 64
    %v2533 = vpop.permute.xlu0 %2532
    %v2535 = vsel %vm2263, %v2530, 0
    %v2538 = vsel %vm2263, %v2533, 0
    %2540 = vmatprep.subr.bf16.mxu0 0
    %2541 = vmatpush1.bf16.xpose.msra.mxu0 %v2538
    %2542 = vmatprep.subr.bf16.mxu0 0
    %2543 = vmatpush1.bf16.xpose.msra.mxu0 0
    %2544 = vmatprep.subr.bf16.mxu0 0
    %2545 = vmatpush1.bf16.xpose.msra.mxu0 0
    %2546 = vmatprep.subr.bf16.mxu0 0
    %2547 = vmatpush1.bf16.xpose.msra.mxu0 0
    %2548 = vmatprep.subr.bf16.mxu0 0
    %2549 = vmatpush1.bf16.xpose.msra.mxu0 0
    %2550 = vmatprep.subr.bf16.mxu0 0
    %2551 = vmatpush1.bf16.xpose.msra.mxu0 0
    %2552 = vmatprep.subr.bf16.mxu0 0
    %2553 = vmatpush1.bf16.xpose.msra.mxu0 0
    %2554 = vmatprep.subr.bf16.mxu0 0
    %2555 = vmatpush1.bf16.xpose.msra.mxu0 0
    %2556 = vmatprep.subr.bf16.mxu0 0
    %2557 = vmatpush1.bf16.xpose.msra.mxu0 0
    %2558 = vmatprep.subr.bf16.mxu0 0
    %2559 = vmatpush1.bf16.xpose.msra.mxu0 0
    %2560 = vmatprep.subr.bf16.mxu0 0
    %2561 = vmatpush1.bf16.xpose.msra.mxu0 0
    %2562 = vmatprep.subr.bf16.mxu0 0
    %2563 = vmatpush1.bf16.xpose.msra.mxu0 0
    %2564 = vmatprep.subr.bf16.mxu0 0
    %2565 = vmatpush1.bf16.xpose.msra.mxu0 0
    %2566 = vmatprep.subr.bf16.mxu0 0
    %2567 = vmatpush1.bf16.xpose.msra.mxu0 0
    %2568 = vmatprep.subr.bf16.mxu0 0
    %2569 = vmatpush1.bf16.xpose.msra.mxu0 0
    %2570 = vmatprep.subr.bf16.mxu0 0
    %2571 = vmatpush1.bf16.xpose.msra.mxu0 0
    %2572 = vmatprep.mubr.bf16.mxu0 0
    %2573 = vmatmul.mubr.bf16.gmra.mrb[0].mxu0 %v2535
    %v2574 = vpop.f32.mrb[0].mxu0
    %v2575 = vadd.f32 %v2256, %v2574
    %v2576 = vpop.f32.mrb[0].mxu0
    %v2577 = vpop.f32.mrb[0].mxu0
    %v2578 = vpop.f32.mrb[0].mxu0
    %2579 = vdwg.mxu0
    %v2580 = vsel %vm2356, %v2523, -inf
    %2581 = vmax.xlane.f32.xlu0 %v2580
    %v2582 = vpop.xlane.xlu0 %2581
    %v2583 = vsel %vm2356, %v2575, -inf
    %2584 = vmax.xlane.f32.xlu0 %v2583
    %v2585 = vpop.xlane.xlu0 %2584
    %v2586 = vsub.f32 %v2523, %v2582
    %v2587 = vsub.f32 %v2575, %v2585
    %v2588 = vmul.f32 %v2586, 1.442695
    %v2589 = vpow.pop %v2588
    %v2590 = vmul.f32 %v2587, 1.442695
    %v2591 = vpow.pop %v2590
    %v2592 = vsel %vm2356, %v2589, 0.0
    %2593 = vadd.xlane.f32.xlu0 %v2592
    %v2594 = vpop.xlane.xlu0 %2593
    %v2595 = vsel %vm2356, %v2591, 0.0
    %2596 = vadd.xlane.f32.xlu0 %v2595
    %v2597 = vpop.xlane.xlu0 %2596
    %v2598 = vrcp.pop %v2594
    %v2599 = vrcp.pop %v2597
    %v2600 = vmul.f32 %v2589, %v2598
    %v2601 = vmul.f32 %v2591, %v2599
    %v2602 = vpack.c.bf16 %v2600, %v2600
    %v2603 = vpack.c.bf16 %v2601, %v2601
    %2605 = vrot.lane.b32.xlu0 %v2261, 64
    %v2606 = vpop.permute.xlu0 %2605
    %v2608 = vsel %vm2356, %v2602, 0
    %v2611 = vsel %vm2384, %v2606, 0
    %2613 = vmatprep.subr.bf16.mxu0 0
    %2614 = vmatpush1.bf16.msra.mxu0 %v2611
    %2615 = vmatprep.subr.bf16.mxu0 0
    %2616 = vmatpush1.bf16.msra.mxu0 0
    %2617 = vmatprep.subr.bf16.mxu0 0
    %2618 = vmatpush1.bf16.msra.mxu0 0
    %2619 = vmatprep.subr.bf16.mxu0 0
    %2620 = vmatpush1.bf16.msra.mxu0 0
    %2621 = vmatprep.subr.bf16.mxu0 0
    %2622 = vmatpush1.bf16.msra.mxu0 0
    %2623 = vmatprep.subr.bf16.mxu0 0
    %2624 = vmatpush1.bf16.msra.mxu0 0
    %2625 = vmatprep.subr.bf16.mxu0 0
    %2626 = vmatpush1.bf16.msra.mxu0 0
    %2627 = vmatprep.subr.bf16.mxu0 0
    %2628 = vmatpush1.bf16.msra.mxu0 0
    %2629 = vmatprep.subr.bf16.mxu0 0
    %2630 = vmatpush1.bf16.msra.mxu0 0
    %2631 = vmatprep.subr.bf16.mxu0 0
    %2632 = vmatpush1.bf16.msra.mxu0 0
    %2633 = vmatprep.subr.bf16.mxu0 0
    %2634 = vmatpush1.bf16.msra.mxu0 0
    %2635 = vmatprep.subr.bf16.mxu0 0
    %2636 = vmatpush1.bf16.msra.mxu0 0
    %2637 = vmatprep.subr.bf16.mxu0 0
    %2638 = vmatpush1.bf16.msra.mxu0 0
    %2639 = vmatprep.subr.bf16.mxu0 0
    %2640 = vmatpush1.bf16.msra.mxu0 0
    %2641 = vmatprep.subr.bf16.mxu0 0
    %2642 = vmatpush1.bf16.msra.mxu0 0
    %2643 = vmatprep.subr.bf16.mxu0 0
    %2644 = vmatpush1.bf16.msra.mxu0 0
    %2645 = vmatprep.mubr.bf16.mxu0 0
    %2646 = vmatmul.mubr.bf16.gmra.mrb[0].mxu0 %v2608
    %v2647 = vpop.f32.mrb[0].mxu0
    %v2648 = vadd.f32 0.0, %v2647
    %v2649 = vpop.f32.mrb[0].mxu0
    %v2650 = vpop.f32.mrb[0].mxu0
    %v2651 = vpop.f32.mrb[0].mxu0
    %2652 = vdwg.mxu0
    %2654 = vrot.lane.b32.xlu0 %v2262, 64
    %v2655 = vpop.permute.xlu0 %2654
    %v2657 = vsel %vm2356, %v2603, 0
    %v2660 = vsel %vm2384, %v2655, 0
    %2662 = vmatprep.subr.bf16.mxu0 0
    %2663 = vmatpush1.bf16.msra.mxu0 %v2660
    %2664 = vmatprep.subr.bf16.mxu0 0
    %2665 = vmatpush1.bf16.msra.mxu0 0
    %2666 = vmatprep.subr.bf16.mxu0 0
    %2667 = vmatpush1.bf16.msra.mxu0 0
    %2668 = vmatprep.subr.bf16.mxu0 0
    %2669 = vmatpush1.bf16.msra.mxu0 0
    %2670 = vmatprep.subr.bf16.mxu0 0
    %2671 = vmatpush1.bf16.msra.mxu0 0
    %2672 = vmatprep.subr.bf16.mxu0 0
    %2673 = vmatpush1.bf16.msra.mxu0 0
    %2674 = vmatprep.subr.bf16.mxu0 0
    %2675 = vmatpush1.bf16.msra.mxu0 0
    %2676 = vmatprep.subr.bf16.mxu0 0
    %2677 = vmatpush1.bf16.msra.mxu0 0
    %2678 = vmatprep.subr.bf16.mxu0 0
    %2679 = vmatpush1.bf16.msra.mxu0 0
    %2680 = vmatprep.subr.bf16.mxu0 0
    %2681 = vmatpush1.bf16.msra.mxu0 0
    %2682 = vmatprep.subr.bf16.mxu0 0
    %2683 = vmatpush1.bf16.msra.mxu0 0
    %2684 = vmatprep.subr.bf16.mxu0 0
    %2685 = vmatpush1.bf16.msra.mxu0 0
    %2686 = vmatprep.subr.bf16.mxu0 0
    %2687 = vmatpush1.bf16.msra.mxu0 0
    %2688 = vmatprep.subr.bf16.mxu0 0
    %2689 = vmatpush1.bf16.msra.mxu0 0
    %2690 = vmatprep.subr.bf16.mxu0 0
    %2691 = vmatpush1.bf16.msra.mxu0 0
    %2692 = vmatprep.subr.bf16.mxu0 0
    %2693 = vmatpush1.bf16.msra.mxu0 0
    %2694 = vmatprep.mubr.bf16.mxu0 0
    %2695 = vmatmul.mubr.bf16.gmra.mrb[0].mxu0 %v2657
    %v2696 = vpop.f32.mrb[0].mxu0
    %v2697 = vadd.f32 0.0, %v2696
    %v2698 = vpop.f32.mrb[0].mxu0
    %v2699 = vpop.f32.mrb[0].mxu0
    %v2700 = vpop.f32.mrb[0].mxu0
    %2701 = vdwg.mxu0
    %2704 = vrot.lane.b32.xlu0 %v2648, 64
    %v2705 = vpop.permute.xlu0 %2704
    %2706 = vrot.lane.b32.xlu0 %v2697, 64
    %v2707 = vpop.permute.xlu0 %2706
    %vm2710 = vcmask 1048064
    %2711 = vst.msk [vmem:[#allocation2] sm:$0xff] %vm2710, %v2705
    %2712 = vst.msk [vmem:[#allocation2 + $0x18] sm:$0xff] %vm2710, %v2707
    %v2713 = vpack.c.bf16 %v955, %v955
    %v2714 = vpack.c.bf16 %v958, %v958
    %v2715 = vpack.c.bf16 %v1520, %v1520
    %v2716 = vpack.c.bf16 %v1524, %v1524
    %v2717 = vpack.c.bf16 %v2168, %v2168
    %v2718 = vpack.c.bf16 %v2172, %v2172
    %v2720 = vsel %vm2263, %v2713, 0
    %v2723 = vsel %vm2263, %v2715, 0
    %2725 = vmatprep.subr.bf16.mxu0 0
    %2726 = vmatpush1.bf16.xpose.msra.mxu0 %v2723
    %2727 = vmatprep.subr.bf16.mxu0 0
    %2728 = vmatpush1.bf16.xpose.msra.mxu0 0
    %2729 = vmatprep.subr.bf16.mxu0 0
    %2730 = vmatpush1.bf16.xpose.msra.mxu0 0
    %2731 = vmatprep.subr.bf16.mxu0 0
    %2732 = vmatpush1.bf16.xpose.msra.mxu0 0
    %2733 = vmatprep.subr.bf16.mxu0 0
    %2734 = vmatpush1.bf16.xpose.msra.mxu0 0
    %2735 = vmatprep.subr.bf16.mxu0 0
    %2736 = vmatpush1.bf16.xpose.msra.mxu0 0
    %2737 = vmatprep.subr.bf16.mxu0 0
    %2738 = vmatpush1.bf16.xpose.msra.mxu0 0
    %2739 = vmatprep.subr.bf16.mxu0 0
    %2740 = vmatpush1.bf16.xpose.msra.mxu0 0
    %2741 = vmatprep.subr.bf16.mxu0 0
    %2742 = vmatpush1.bf16.xpose.msra.mxu0 0
    %2743 = vmatprep.subr.bf16.mxu0 0
    %2744 = vmatpush1.bf16.xpose.msra.mxu0 0
    %2745 = vmatprep.subr.bf16.mxu0 0
    %2746 = vmatpush1.bf16.xpose.msra.mxu0 0
    %2747 = vmatprep.subr.bf16.mxu0 0
    %2748 = vmatpush1.bf16.xpose.msra.mxu0 0
    %2749 = vmatprep.subr.bf16.mxu0 0
    %2750 = vmatpush1.bf16.xpose.msra.mxu0 0
    %2751 = vmatprep.subr.bf16.mxu0 0
    %2752 = vmatpush1.bf16.xpose.msra.mxu0 0
    %2753 = vmatprep.subr.bf16.mxu0 0
    %2754 = vmatpush1.bf16.xpose.msra.mxu0 0
    %2755 = vmatprep.subr.bf16.mxu0 0
    %2756 = vmatpush1.bf16.xpose.msra.mxu0 0
    %2757 = vmatprep.mubr.bf16.mxu0 0
    %2758 = vmatmul.mubr.bf16.gmra.mrb[0].mxu0 %v2720
    %v2759 = vpop.f32.mrb[0].mxu0
    %v2760 = vadd.f32 %v2256, %v2759
    %v2761 = vpop.f32.mrb[0].mxu0
    %v2762 = vpop.f32.mrb[0].mxu0
    %v2763 = vpop.f32.mrb[0].mxu0
    %2764 = vdwg.mxu0
    %v2766 = vsel %vm2263, %v2714, 0
    %v2769 = vsel %vm2263, %v2716, 0
    %2771 = vmatprep.subr.bf16.mxu0 0
    %2772 = vmatpush1.bf16.xpose.msra.mxu0 %v2769
    %2773 = vmatprep.subr.bf16.mxu0 0
    %2774 = vmatpush1.bf16.xpose.msra.mxu0 0
    %2775 = vmatprep.subr.bf16.mxu0 0
    %2776 = vmatpush1.bf16.xpose.msra.mxu0 0
    %2777 = vmatprep.subr.bf16.mxu0 0
    %2778 = vmatpush1.bf16.xpose.msra.mxu0 0
    %2779 = vmatprep.subr.bf16.mxu0 0
    %2780 = vmatpush1.bf16.xpose.msra.mxu0 0
    %2781 = vmatprep.subr.bf16.mxu0 0
    %2782 = vmatpush1.bf16.xpose.msra.mxu0 0
    %2783 = vmatprep.subr.bf16.mxu0 0
    %2784 = vmatpush1.bf16.xpose.msra.mxu0 0
    %2785 = vmatprep.subr.bf16.mxu0 0
    %2786 = vmatpush1.bf16.xpose.msra.mxu0 0
    %2787 = vmatprep.subr.bf16.mxu0 0
    %2788 = vmatpush1.bf16.xpose.msra.mxu0 0
    %2789 = vmatprep.subr.bf16.mxu0 0
    %2790 = vmatpush1.bf16.xpose.msra.mxu0 0
    %2791 = vmatprep.subr.bf16.mxu0 0
    %2792 = vmatpush1.bf16.xpose.msra.mxu0 0
    %2793 = vmatprep.subr.bf16.mxu0 0
    %2794 = vmatpush1.bf16.xpose.msra.mxu0 0
    %2795 = vmatprep.subr.bf16.mxu0 0
    %2796 = vmatpush1.bf16.xpose.msra.mxu0 0
    %2797 = vmatprep.subr.bf16.mxu0 0
    %2798 = vmatpush1.bf16.xpose.msra.mxu0 0
    %2799 = vmatprep.subr.bf16.mxu0 0
    %2800 = vmatpush1.bf16.xpose.msra.mxu0 0
    %2801 = vmatprep.subr.bf16.mxu0 0
    %2802 = vmatpush1.bf16.xpose.msra.mxu0 0
    %2803 = vmatprep.mubr.bf16.mxu0 0
    %2804 = vmatmul.mubr.bf16.gmra.mrb[0].mxu0 %v2766
    %v2805 = vpop.f32.mrb[0].mxu0
    %v2806 = vadd.f32 %v2256, %v2805
    %v2807 = vpop.f32.mrb[0].mxu0
    %v2808 = vpop.f32.mrb[0].mxu0
    %v2809 = vpop.f32.mrb[0].mxu0
    %2810 = vdwg.mxu0
    %v2811 = vsel %vm2356, %v2760, -inf
    %2812 = vmax.xlane.f32.xlu0 %v2811
    %v2813 = vpop.xlane.xlu0 %2812
    %v2814 = vsel %vm2356, %v2806, -inf
    %2815 = vmax.xlane.f32.xlu0 %v2814
    %v2816 = vpop.xlane.xlu0 %2815
    %v2817 = vsub.f32 %v2760, %v2813
    %v2818 = vsub.f32 %v2806, %v2816
    %v2819 = vmul.f32 %v2817, 1.442695
    %v2820 = vpow.pop %v2819
    %v2821 = vmul.f32 %v2818, 1.442695
    %v2822 = vpow.pop %v2821
    %v2823 = vsel %vm2356, %v2820, 0.0
    %2824 = vadd.xlane.f32.xlu0 %v2823
    %v2825 = vpop.xlane.xlu0 %2824
    %v2826 = vsel %vm2356, %v2822, 0.0
    %2827 = vadd.xlane.f32.xlu0 %v2826
    %v2828 = vpop.xlane.xlu0 %2827
    %v2829 = vrcp.pop %v2825
    %v2830 = vrcp.pop %v2828
    %v2831 = vmul.f32 %v2820, %v2829
    %v2832 = vmul.f32 %v2822, %v2830
    %v2833 = vpack.c.bf16 %v2831, %v2831
    %v2834 = vpack.c.bf16 %v2832, %v2832
    %v2836 = vsel %vm2356, %v2833, 0
    %v2839 = vsel %vm2384, %v2717, 0
    %2841 = vmatprep.subr.bf16.mxu0 0
    %2842 = vmatpush1.bf16.msra.mxu0 %v2839
    %2843 = vmatprep.subr.bf16.mxu0 0
    %2844 = vmatpush1.bf16.msra.mxu0 0
    %2845 = vmatprep.subr.bf16.mxu0 0
    %2846 = vmatpush1.bf16.msra.mxu0 0
    %2847 = vmatprep.subr.bf16.mxu0 0
    %2848 = vmatpush1.bf16.msra.mxu0 0
    %2849 = vmatprep.subr.bf16.mxu0 0
    %2850 = vmatpush1.bf16.msra.mxu0 0
    %2851 = vmatprep.subr.bf16.mxu0 0
    %2852 = vmatpush1.bf16.msra.mxu0 0
    %2853 = vmatprep.subr.bf16.mxu0 0
    %2854 = vmatpush1.bf16.msra.mxu0 0
    %2855 = vmatprep.subr.bf16.mxu0 0
    %2856 = vmatpush1.bf16.msra.mxu0 0
    %2857 = vmatprep.subr.bf16.mxu0 0
    %2858 = vmatpush1.bf16.msra.mxu0 0
    %2859 = vmatprep.subr.bf16.mxu0 0
    %2860 = vmatpush1.bf16.msra.mxu0 0
    %2861 = vmatprep.subr.bf16.mxu0 0
    %2862 = vmatpush1.bf16.msra.mxu0 0
    %2863 = vmatprep.subr.bf16.mxu0 0
    %2864 = vmatpush1.bf16.msra.mxu0 0
    %2865 = vmatprep.subr.bf16.mxu0 0
    %2866 = vmatpush1.bf16.msra.mxu0 0
    %2867 = vmatprep.subr.bf16.mxu0 0
    %2868 = vmatpush1.bf16.msra.mxu0 0
    %2869 = vmatprep.subr.bf16.mxu0 0
    %2870 = vmatpush1.bf16.msra.mxu0 0
    %2871 = vmatprep.subr.bf16.mxu0 0
    %2872 = vmatpush1.bf16.msra.mxu0 0
    %2873 = vmatprep.mubr.bf16.mxu0 0
    %2874 = vmatmul.mubr.bf16.gmra.mrb[0].mxu0 %v2836
    %v2875 = vpop.f32.mrb[0].mxu0
    %v2876 = vadd.f32 0.0, %v2875
    %v2877 = vpop.f32.mrb[0].mxu0
    %v2878 = vpop.f32.mrb[0].mxu0
    %v2879 = vpop.f32.mrb[0].mxu0
    %2880 = vdwg.mxu0
    %v2882 = vsel %vm2356, %v2834, 0
    %v2885 = vsel %vm2384, %v2718, 0
    %2887 = vmatprep.subr.bf16.mxu0 0
    %2888 = vmatpush1.bf16.msra.mxu0 %v2885
    %2889 = vmatprep.subr.bf16.mxu0 0
    %2890 = vmatpush1.bf16.msra.mxu0 0
    %2891 = vmatprep.subr.bf16.mxu0 0
    %2892 = vmatpush1.bf16.msra.mxu0 0
    %2893 = vmatprep.subr.bf16.mxu0 0
    %2894 = vmatpush1.bf16.msra.mxu0 0
    %2895 = vmatprep.subr.bf16.mxu0 0
    %2896 = vmatpush1.bf16.msra.mxu0 0
    %2897 = vmatprep.subr.bf16.mxu0 0
    %2898 = vmatpush1.bf16.msra.mxu0 0
    %2899 = vmatprep.subr.bf16.mxu0 0
    %2900 = vmatpush1.bf16.msra.mxu0 0
    %2901 = vmatprep.subr.bf16.mxu0 0
    %2902 = vmatpush1.bf16.msra.mxu0 0
    %2903 = vmatprep.subr.bf16.mxu0 0
    %2904 = vmatpush1.bf16.msra.mxu0 0
    %2905 = vmatprep.subr.bf16.mxu0 0
    %2906 = vmatpush1.bf16.msra.mxu0 0
    %2907 = vmatprep.subr.bf16.mxu0 0
    %2908 = vmatpush1.bf16.msra.mxu0 0
    %2909 = vmatprep.subr.bf16.mxu0 0
    %2910 = vmatpush1.bf16.msra.mxu0 0
    %2911 = vmatprep.subr.bf16.mxu0 0
    %2912 = vmatpush1.bf16.msra.mxu0 0
    %2913 = vmatprep.subr.bf16.mxu0 0
    %2914 = vmatpush1.bf16.msra.mxu0 0
    %2915 = vmatprep.subr.bf16.mxu0 0
    %2916 = vmatpush1.bf16.msra.mxu0 0
    %2917 = vmatprep.subr.bf16.mxu0 0
    %2918 = vmatpush1.bf16.msra.mxu0 0
    %2919 = vmatprep.mubr.bf16.mxu0 0
    %2920 = vmatmul.mubr.bf16.gmra.mrb[0].mxu0 %v2882
    %v2921 = vpop.f32.mrb[0].mxu0
    %v2922 = vadd.f32 0.0, %v2921
    %v2923 = vpop.f32.mrb[0].mxu0
    %v2924 = vpop.f32.mrb[0].mxu0
    %v2925 = vpop.f32.mrb[0].mxu0
    %2926 = vdwg.mxu0
    %2927 = vst.msk [vmem:[#allocation2 + $0x8] sm:$0xff] %vm2263, %v2876
    %2928 = vst.msk [vmem:[#allocation2 + $0x20] sm:$0xff] %vm2263, %v2922
    %2930 = vrot.lane.b32.xlu0 %v2713, 64
    %v2931 = vpop.permute.xlu0 %2930
    %2933 = vrot.lane.b32.xlu0 %v2715, 64
    %v2934 = vpop.permute.xlu0 %2933
    %v2936 = vsel %vm2263, %v2931, 0
    %v2939 = vsel %vm2263, %v2934, 0
    %2941 = vmatprep.subr.bf16.mxu0 0
    %2942 = vmatpush1.bf16.xpose.msra.mxu0 %v2939
    %2943 = vmatprep.subr.bf16.mxu0 0
    %2944 = vmatpush1.bf16.xpose.msra.mxu0 0
    %2945 = vmatprep.subr.bf16.mxu0 0
    %2946 = vmatpush1.bf16.xpose.msra.mxu0 0
    %2947 = vmatprep.subr.bf16.mxu0 0
    %2948 = vmatpush1.bf16.xpose.msra.mxu0 0
    %2949 = vmatprep.subr.bf16.mxu0 0
    %2950 = vmatpush1.bf16.xpose.msra.mxu0 0
    %2951 = vmatprep.subr.bf16.mxu0 0
    %2952 = vmatpush1.bf16.xpose.msra.mxu0 0
    %2953 = vmatprep.subr.bf16.mxu0 0
    %2954 = vmatpush1.bf16.xpose.msra.mxu0 0
    %2955 = vmatprep.subr.bf16.mxu0 0
    %2956 = vmatpush1.bf16.xpose.msra.mxu0 0
    %2957 = vmatprep.subr.bf16.mxu0 0
    %2958 = vmatpush1.bf16.xpose.msra.mxu0 0
    %2959 = vmatprep.subr.bf16.mxu0 0
    %2960 = vmatpush1.bf16.xpose.msra.mxu0 0
    %2961 = vmatprep.subr.bf16.mxu0 0
    %2962 = vmatpush1.bf16.xpose.msra.mxu0 0
    %2963 = vmatprep.subr.bf16.mxu0 0
    %2964 = vmatpush1.bf16.xpose.msra.mxu0 0
    %2965 = vmatprep.subr.bf16.mxu0 0
    %2966 = vmatpush1.bf16.xpose.msra.mxu0 0
    %2967 = vmatprep.subr.bf16.mxu0 0
    %2968 = vmatpush1.bf16.xpose.msra.mxu0 0
    %2969 = vmatprep.subr.bf16.mxu0 0
    %2970 = vmatpush1.bf16.xpose.msra.mxu0 0
    %2971 = vmatprep.subr.bf16.mxu0 0
    %2972 = vmatpush1.bf16.xpose.msra.mxu0 0
    %2973 = vmatprep.mubr.bf16.mxu0 0
    %2974 = vmatmul.mubr.bf16.gmra.mrb[0].mxu0 %v2936
    %v2975 = vpop.f32.mrb[0].mxu0
    %v2976 = vadd.f32 %v2256, %v2975
    %v2977 = vpop.f32.mrb[0].mxu0
    %v2978 = vpop.f32.mrb[0].mxu0
    %v2979 = vpop.f32.mrb[0].mxu0
    %2980 = vdwg.mxu0
    %2982 = vrot.lane.b32.xlu0 %v2714, 64
    %v2983 = vpop.permute.xlu0 %2982
    %2985 = vrot.lane.b32.xlu0 %v2716, 64
    %v2986 = vpop.permute.xlu0 %2985
    %v2988 = vsel %vm2263, %v2983, 0
    %v2991 = vsel %vm2263, %v2986, 0
    %2993 = vmatprep.subr.bf16.mxu0 0
    %2994 = vmatpush1.bf16.xpose.msra.mxu0 %v2991
    %2995 = vmatprep.subr.bf16.mxu0 0
    %2996 = vmatpush1.bf16.xpose.msra.mxu0 0
    %2997 = vmatprep.subr.bf16.mxu0 0
    %2998 = vmatpush1.bf16.xpose.msra.mxu0 0
    %2999 = vmatprep.subr.bf16.mxu0 0
    %3000 = vmatpush1.bf16.xpose.msra.mxu0 0
    %3001 = vmatprep.subr.bf16.mxu0 0
    %3002 = vmatpush1.bf16.xpose.msra.mxu0 0
    %3003 = vmatprep.subr.bf16.mxu0 0
    %3004 = vmatpush1.bf16.xpose.msra.mxu0 0
    %3005 = vmatprep.subr.bf16.mxu0 0
    %3006 = vmatpush1.bf16.xpose.msra.mxu0 0
    %3007 = vmatprep.subr.bf16.mxu0 0
    %3008 = vmatpush1.bf16.xpose.msra.mxu0 0
    %3009 = vmatprep.subr.bf16.mxu0 0
    %3010 = vmatpush1.bf16.xpose.msra.mxu0 0
    %3011 = vmatprep.subr.bf16.mxu0 0
    %3012 = vmatpush1.bf16.xpose.msra.mxu0 0
    %3013 = vmatprep.subr.bf16.mxu0 0
    %3014 = vmatpush1.bf16.xpose.msra.mxu0 0
    %3015 = vmatprep.subr.bf16.mxu0 0
    %3016 = vmatpush1.bf16.xpose.msra.mxu0 0
    %3017 = vmatprep.subr.bf16.mxu0 0
    %3018 = vmatpush1.bf16.xpose.msra.mxu0 0
    %3019 = vmatprep.subr.bf16.mxu0 0
    %3020 = vmatpush1.bf16.xpose.msra.mxu0 0
    %3021 = vmatprep.subr.bf16.mxu0 0
    %3022 = vmatpush1.bf16.xpose.msra.mxu0 0
    %3023 = vmatprep.subr.bf16.mxu0 0
    %3024 = vmatpush1.bf16.xpose.msra.mxu0 0
    %3025 = vmatprep.mubr.bf16.mxu0 0
    %3026 = vmatmul.mubr.bf16.gmra.mrb[0].mxu0 %v2988
    %v3027 = vpop.f32.mrb[0].mxu0
    %v3028 = vadd.f32 %v2256, %v3027
    %v3029 = vpop.f32.mrb[0].mxu0
    %v3030 = vpop.f32.mrb[0].mxu0
    %v3031 = vpop.f32.mrb[0].mxu0
    %3032 = vdwg.mxu0
    %v3033 = vsel %vm2356, %v2976, -inf
    %3034 = vmax.xlane.f32.xlu0 %v3033
    %v3035 = vpop.xlane.xlu0 %3034
    %v3036 = vsel %vm2356, %v3028, -inf
    %3037 = vmax.xlane.f32.xlu0 %v3036
    %v3038 = vpop.xlane.xlu0 %3037
    %v3039 = vsub.f32 %v2976, %v3035
    %v3040 = vsub.f32 %v3028, %v3038
    %v3041 = vmul.f32 %v3039, 1.442695
    %v3042 = vpow.pop %v3041
    %v3043 = vmul.f32 %v3040, 1.442695
    %v3044 = vpow.pop %v3043
    %v3045 = vsel %vm2356, %v3042, 0.0
    %3046 = vadd.xlane.f32.xlu0 %v3045
    %v3047 = vpop.xlane.xlu0 %3046
    %v3048 = vsel %vm2356, %v3044, 0.0
    %3049 = vadd.xlane.f32.xlu0 %v3048
    %v3050 = vpop.xlane.xlu0 %3049
    %v3051 = vrcp.pop %v3047
    %v3052 = vrcp.pop %v3050
    %v3053 = vmul.f32 %v3042, %v3051
    %v3054 = vmul.f32 %v3044, %v3052
    %v3055 = vpack.c.bf16 %v3053, %v3053
    %v3056 = vpack.c.bf16 %v3054, %v3054
    %3058 = vrot.lane.b32.xlu0 %v2717, 64
    %v3059 = vpop.permute.xlu0 %3058
    %v3061 = vsel %vm2356, %v3055, 0
    %v3064 = vsel %vm2384, %v3059, 0
    %3066 = vmatprep.subr.bf16.mxu0 0
    %3067 = vmatpush1.bf16.msra.mxu0 %v3064
    %3068 = vmatprep.subr.bf16.mxu0 0
    %3069 = vmatpush1.bf16.msra.mxu0 0
    %3070 = vmatprep.subr.bf16.mxu0 0
    %3071 = vmatpush1.bf16.msra.mxu0 0
    %3072 = vmatprep.subr.bf16.mxu0 0
    %3073 = vmatpush1.bf16.msra.mxu0 0
    %3074 = vmatprep.subr.bf16.mxu0 0
    %3075 = vmatpush1.bf16.msra.mxu0 0
    %3076 = vmatprep.subr.bf16.mxu0 0
    %3077 = vmatpush1.bf16.msra.mxu0 0
    %3078 = vmatprep.subr.bf16.mxu0 0
    %3079 = vmatpush1.bf16.msra.mxu0 0
    %3080 = vmatprep.subr.bf16.mxu0 0
    %3081 = vmatpush1.bf16.msra.mxu0 0
    %3082 = vmatprep.subr.bf16.mxu0 0
    %3083 = vmatpush1.bf16.msra.mxu0 0
    %3084 = vmatprep.subr.bf16.mxu0 0
    %3085 = vmatpush1.bf16.msra.mxu0 0
    %3086 = vmatprep.subr.bf16.mxu0 0
    %3087 = vmatpush1.bf16.msra.mxu0 0
    %3088 = vmatprep.subr.bf16.mxu0 0
    %3089 = vmatpush1.bf16.msra.mxu0 0
    %3090 = vmatprep.subr.bf16.mxu0 0
    %3091 = vmatpush1.bf16.msra.mxu0 0
    %3092 = vmatprep.subr.bf16.mxu0 0
    %3093 = vmatpush1.bf16.msra.mxu0 0
    %3094 = vmatprep.subr.bf16.mxu0 0
    %3095 = vmatpush1.bf16.msra.mxu0 0
    %3096 = vmatprep.subr.bf16.mxu0 0
    %3097 = vmatpush1.bf16.msra.mxu0 0
    %3098 = vmatprep.mubr.bf16.mxu0 0
    %3099 = vmatmul.mubr.bf16.gmra.mrb[0].mxu0 %v3061
    %v3100 = vpop.f32.mrb[0].mxu0
    %v3101 = vadd.f32 0.0, %v3100
    %v3102 = vpop.f32.mrb[0].mxu0
    %v3103 = vpop.f32.mrb[0].mxu0
    %v3104 = vpop.f32.mrb[0].mxu0
    %3105 = vdwg.mxu0
    %3107 = vrot.lane.b32.xlu0 %v2718, 64
    %v3108 = vpop.permute.xlu0 %3107
    %v3110 = vsel %vm2356, %v3056, 0
    %v3113 = vsel %vm2384, %v3108, 0
    %3115 = vmatprep.subr.bf16.mxu0 0
    %3116 = vmatpush1.bf16.msra.mxu0 %v3113
    %3117 = vmatprep.subr.bf16.mxu0 0
    %3118 = vmatpush1.bf16.msra.mxu0 0
    %3119 = vmatprep.subr.bf16.mxu0 0
    %3120 = vmatpush1.bf16.msra.mxu0 0
    %3121 = vmatprep.subr.bf16.mxu0 0
    %3122 = vmatpush1.bf16.msra.mxu0 0
    %3123 = vmatprep.subr.bf16.mxu0 0
    %3124 = vmatpush1.bf16.msra.mxu0 0
    %3125 = vmatprep.subr.bf16.mxu0 0
    %3126 = vmatpush1.bf16.msra.mxu0 0
    %3127 = vmatprep.subr.bf16.mxu0 0
    %3128 = vmatpush1.bf16.msra.mxu0 0
    %3129 = vmatprep.subr.bf16.mxu0 0
    %3130 = vmatpush1.bf16.msra.mxu0 0
    %3131 = vmatprep.subr.bf16.mxu0 0
    %3132 = vmatpush1.bf16.msra.mxu0 0
    %3133 = vmatprep.subr.bf16.mxu0 0
    %3134 = vmatpush1.bf16.msra.mxu0 0
    %3135 = vmatprep.subr.bf16.mxu0 0
    %3136 = vmatpush1.bf16.msra.mxu0 0
    %3137 = vmatprep.subr.bf16.mxu0 0
    %3138 = vmatpush1.bf16.msra.mxu0 0
    %3139 = vmatprep.subr.bf16.mxu0 0
    %3140 = vmatpush1.bf16.msra.mxu0 0
    %3141 = vmatprep.subr.bf16.mxu0 0
    %3142 = vmatpush1.bf16.msra.mxu0 0
    %3143 = vmatprep.subr.bf16.mxu0 0
    %3144 = vmatpush1.bf16.msra.mxu0 0
    %3145 = vmatprep.subr.bf16.mxu0 0
    %3146 = vmatpush1.bf16.msra.mxu0 0
    %3147 = vmatprep.mubr.bf16.mxu0 0
    %3148 = vmatmul.mubr.bf16.gmra.mrb[0].mxu0 %v3110
    %v3149 = vpop.f32.mrb[0].mxu0
    %v3150 = vadd.f32 0.0, %v3149
    %v3151 = vpop.f32.mrb[0].mxu0
    %v3152 = vpop.f32.mrb[0].mxu0
    %v3153 = vpop.f32.mrb[0].mxu0
    %3154 = vdwg.mxu0
    %3157 = vrot.lane.b32.xlu0 %v3101, 64
    %v3158 = vpop.permute.xlu0 %3157
    %3159 = vrot.lane.b32.xlu0 %v3150, 64
    %v3160 = vpop.permute.xlu0 %3159
    %3163 = vst.msk [vmem:[#allocation2 + $0x8] sm:$0xff] %vm2710, %v3158
    %3164 = vst.msk [vmem:[#allocation2 + $0x20] sm:$0xff] %vm2710, %v3160
    %v3165 = vpack.c.bf16 %v956, %v956
    %v3166 = vpack.c.bf16 %v959, %v959
    %v3167 = vpack.c.bf16 %v1602, %v1602
    %v3168 = vpack.c.bf16 %v1605, %v1605
    %v3169 = vpack.c.bf16 %v2250, %v2250
    %v3170 = vpack.c.bf16 %v2253, %v2253
    %v3172 = vsel %vm2263, %v3165, 0
    %v3175 = vsel %vm2263, %v3167, 0
    %3177 = vmatprep.subr.bf16.mxu0 0
    %3178 = vmatpush1.bf16.xpose.msra.mxu0 %v3175
    %3179 = vmatprep.subr.bf16.mxu0 0
    %3180 = vmatpush1.bf16.xpose.msra.mxu0 0
    %3181 = vmatprep.subr.bf16.mxu0 0
    %3182 = vmatpush1.bf16.xpose.msra.mxu0 0
    %3183 = vmatprep.subr.bf16.mxu0 0
    %3184 = vmatpush1.bf16.xpose.msra.mxu0 0
    %3185 = vmatprep.subr.bf16.mxu0 0
    %3186 = vmatpush1.bf16.xpose.msra.mxu0 0
    %3187 = vmatprep.subr.bf16.mxu0 0
    %3188 = vmatpush1.bf16.xpose.msra.mxu0 0
    %3189 = vmatprep.subr.bf16.mxu0 0
    %3190 = vmatpush1.bf16.xpose.msra.mxu0 0
    %3191 = vmatprep.subr.bf16.mxu0 0
    %3192 = vmatpush1.bf16.xpose.msra.mxu0 0
    %3193 = vmatprep.subr.bf16.mxu0 0
    %3194 = vmatpush1.bf16.xpose.msra.mxu0 0
    %3195 = vmatprep.subr.bf16.mxu0 0
    %3196 = vmatpush1.bf16.xpose.msra.mxu0 0
    %3197 = vmatprep.subr.bf16.mxu0 0
    %3198 = vmatpush1.bf16.xpose.msra.mxu0 0
    %3199 = vmatprep.subr.bf16.mxu0 0
    %3200 = vmatpush1.bf16.xpose.msra.mxu0 0
    %3201 = vmatprep.subr.bf16.mxu0 0
    %3202 = vmatpush1.bf16.xpose.msra.mxu0 0
    %3203 = vmatprep.subr.bf16.mxu0 0
    %3204 = vmatpush1.bf16.xpose.msra.mxu0 0
    %3205 = vmatprep.subr.bf16.mxu0 0
    %3206 = vmatpush1.bf16.xpose.msra.mxu0 0
    %3207 = vmatprep.subr.bf16.mxu0 0
    %3208 = vmatpush1.bf16.xpose.msra.mxu0 0
    %3209 = vmatprep.mubr.bf16.mxu0 0
    %3210 = vmatmul.mubr.bf16.gmra.mrb[0].mxu0 %v3172
    %v3211 = vpop.f32.mrb[0].mxu0
    %v3212 = vadd.f32 %v2256, %v3211
    %v3213 = vpop.f32.mrb[0].mxu0
    %v3214 = vpop.f32.mrb[0].mxu0
    %v3215 = vpop.f32.mrb[0].mxu0
    %3216 = vdwg.mxu0
    %v3218 = vsel %vm2263, %v3166, 0
    %v3221 = vsel %vm2263, %v3168, 0
    %3223 = vmatprep.subr.bf16.mxu0 0
    %3224 = vmatpush1.bf16.xpose.msra.mxu0 %v3221
    %3225 = vmatprep.subr.bf16.mxu0 0
    %3226 = vmatpush1.bf16.xpose.msra.mxu0 0
    %3227 = vmatprep.subr.bf16.mxu0 0
    %3228 = vmatpush1.bf16.xpose.msra.mxu0 0
    %3229 = vmatprep.subr.bf16.mxu0 0
    %3230 = vmatpush1.bf16.xpose.msra.mxu0 0
    %3231 = vmatprep.subr.bf16.mxu0 0
    %3232 = vmatpush1.bf16.xpose.msra.mxu0 0
    %3233 = vmatprep.subr.bf16.mxu0 0
    %3234 = vmatpush1.bf16.xpose.msra.mxu0 0
    %3235 = vmatprep.subr.bf16.mxu0 0
    %3236 = vmatpush1.bf16.xpose.msra.mxu0 0
    %3237 = vmatprep.subr.bf16.mxu0 0
    %3238 = vmatpush1.bf16.xpose.msra.mxu0 0
    %3239 = vmatprep.subr.bf16.mxu0 0
    %3240 = vmatpush1.bf16.xpose.msra.mxu0 0
    %3241 = vmatprep.subr.bf16.mxu0 0
    %3242 = vmatpush1.bf16.xpose.msra.mxu0 0
    %3243 = vmatprep.subr.bf16.mxu0 0
    %3244 = vmatpush1.bf16.xpose.msra.mxu0 0
    %3245 = vmatprep.subr.bf16.mxu0 0
    %3246 = vmatpush1.bf16.xpose.msra.mxu0 0
    %3247 = vmatprep.subr.bf16.mxu0 0
    %3248 = vmatpush1.bf16.xpose.msra.mxu0 0
    %3249 = vmatprep.subr.bf16.mxu0 0
    %3250 = vmatpush1.bf16.xpose.msra.mxu0 0
    %3251 = vmatprep.subr.bf16.mxu0 0
    %3252 = vmatpush1.bf16.xpose.msra.mxu0 0
    %3253 = vmatprep.subr.bf16.mxu0 0
    %3254 = vmatpush1.bf16.xpose.msra.mxu0 0
    %3255 = vmatprep.mubr.bf16.mxu0 0
    %3256 = vmatmul.mubr.bf16.gmra.mrb[0].mxu0 %v3218
    %v3257 = vpop.f32.mrb[0].mxu0
    %v3258 = vadd.f32 %v2256, %v3257
    %v3259 = vpop.f32.mrb[0].mxu0
    %v3260 = vpop.f32.mrb[0].mxu0
    %v3261 = vpop.f32.mrb[0].mxu0
    %3262 = vdwg.mxu0
    %v3263 = vsel %vm2356, %v3212, -inf
    %3264 = vmax.xlane.f32.xlu0 %v3263
    %v3265 = vpop.xlane.xlu0 %3264
    %v3266 = vsel %vm2356, %v3258, -inf
    %3267 = vmax.xlane.f32.xlu0 %v3266
    %v3268 = vpop.xlane.xlu0 %3267
    %v3269 = vsub.f32 %v3212, %v3265
    %v3270 = vsub.f32 %v3258, %v3268
    %v3271 = vmul.f32 %v3269, 1.442695
    %v3272 = vpow.pop %v3271
    %v3273 = vmul.f32 %v3270, 1.442695
    %v3274 = vpow.pop %v3273
    %v3275 = vsel %vm2356, %v3272, 0.0
    %3276 = vadd.xlane.f32.xlu0 %v3275
    %v3277 = vpop.xlane.xlu0 %3276
    %v3278 = vsel %vm2356, %v3274, 0.0
    %3279 = vadd.xlane.f32.xlu0 %v3278
    %v3280 = vpop.xlane.xlu0 %3279
    %v3281 = vrcp.pop %v3277
    %v3282 = vrcp.pop %v3280
    %v3283 = vmul.f32 %v3272, %v3281
    %v3284 = vmul.f32 %v3274, %v3282
    %v3285 = vpack.c.bf16 %v3283, %v3283
    %v3286 = vpack.c.bf16 %v3284, %v3284
    %v3288 = vsel %vm2356, %v3285, 0
    %v3291 = vsel %vm2384, %v3169, 0
    %3293 = vmatprep.subr.bf16.mxu0 0
    %3294 = vmatpush1.bf16.msra.mxu0 %v3291
    %3295 = vmatprep.subr.bf16.mxu0 0
    %3296 = vmatpush1.bf16.msra.mxu0 0
    %3297 = vmatprep.subr.bf16.mxu0 0
    %3298 = vmatpush1.bf16.msra.mxu0 0
    %3299 = vmatprep.subr.bf16.mxu0 0
    %3300 = vmatpush1.bf16.msra.mxu0 0
    %3301 = vmatprep.subr.bf16.mxu0 0
    %3302 = vmatpush1.bf16.msra.mxu0 0
    %3303 = vmatprep.subr.bf16.mxu0 0
    %3304 = vmatpush1.bf16.msra.mxu0 0
    %3305 = vmatprep.subr.bf16.mxu0 0
    %3306 = vmatpush1.bf16.msra.mxu0 0
    %3307 = vmatprep.subr.bf16.mxu0 0
    %3308 = vmatpush1.bf16.msra.mxu0 0
    %3309 = vmatprep.subr.bf16.mxu0 0
    %3310 = vmatpush1.bf16.msra.mxu0 0
    %3311 = vmatprep.subr.bf16.mxu0 0
    %3312 = vmatpush1.bf16.msra.mxu0 0
    %3313 = vmatprep.subr.bf16.mxu0 0
    %3314 = vmatpush1.bf16.msra.mxu0 0
    %3315 = vmatprep.subr.bf16.mxu0 0
    %3316 = vmatpush1.bf16.msra.mxu0 0
    %3317 = vmatprep.subr.bf16.mxu0 0
    %3318 = vmatpush1.bf16.msra.mxu0 0
    %3319 = vmatprep.subr.bf16.mxu0 0
    %3320 = vmatpush1.bf16.msra.mxu0 0
    %3321 = vmatprep.subr.bf16.mxu0 0
    %3322 = vmatpush1.bf16.msra.mxu0 0
    %3323 = vmatprep.subr.bf16.mxu0 0
    %3324 = vmatpush1.bf16.msra.mxu0 0
    %3325 = vmatprep.mubr.bf16.mxu0 0
    %3326 = vmatmul.mubr.bf16.gmra.mrb[0].mxu0 %v3288
    %v3327 = vpop.f32.mrb[0].mxu0
    %v3328 = vadd.f32 0.0, %v3327
    %v3329 = vpop.f32.mrb[0].mxu0
    %v3330 = vpop.f32.mrb[0].mxu0
    %v3331 = vpop.f32.mrb[0].mxu0
    %3332 = vdwg.mxu0
    %v3334 = vsel %vm2356, %v3286, 0
    %v3337 = vsel %vm2384, %v3170, 0
    %3339 = vmatprep.subr.bf16.mxu0 0
    %3340 = vmatpush1.bf16.msra.mxu0 %v3337
    %3341 = vmatprep.subr.bf16.mxu0 0
    %3342 = vmatpush1.bf16.msra.mxu0 0
    %3343 = vmatprep.subr.bf16.mxu0 0
    %3344 = vmatpush1.bf16.msra.mxu0 0
    %3345 = vmatprep.subr.bf16.mxu0 0
    %3346 = vmatpush1.bf16.msra.mxu0 0
    %3347 = vmatprep.subr.bf16.mxu0 0
    %3348 = vmatpush1.bf16.msra.mxu0 0
    %3349 = vmatprep.subr.bf16.mxu0 0
    %3350 = vmatpush1.bf16.msra.mxu0 0
    %3351 = vmatprep.subr.bf16.mxu0 0
    %3352 = vmatpush1.bf16.msra.mxu0 0
    %3353 = vmatprep.subr.bf16.mxu0 0
    %3354 = vmatpush1.bf16.msra.mxu0 0
    %3355 = vmatprep.subr.bf16.mxu0 0
    %3356 = vmatpush1.bf16.msra.mxu0 0
    %3357 = vmatprep.subr.bf16.mxu0 0
    %3358 = vmatpush1.bf16.msra.mxu0 0
    %3359 = vmatprep.subr.bf16.mxu0 0
    %3360 = vmatpush1.bf16.msra.mxu0 0
    %3361 = vmatprep.subr.bf16.mxu0 0
    %3362 = vmatpush1.bf16.msra.mxu0 0
    %3363 = vmatprep.subr.bf16.mxu0 0
    %3364 = vmatpush1.bf16.msra.mxu0 0
    %3365 = vmatprep.subr.bf16.mxu0 0
    %3366 = vmatpush1.bf16.msra.mxu0 0
    %3367 = vmatprep.subr.bf16.mxu0 0
    %3368 = vmatpush1.bf16.msra.mxu0 0
    %3369 = vmatprep.subr.bf16.mxu0 0
    %3370 = vmatpush1.bf16.msra.mxu0 0
    %3371 = vmatprep.mubr.bf16.mxu0 0
    %3372 = vmatmul.mubr.bf16.gmra.mrb[0].mxu0 %v3334
    %v3373 = vpop.f32.mrb[0].mxu0
    %v3374 = vadd.f32 0.0, %v3373
    %v3375 = vpop.f32.mrb[0].mxu0
    %v3376 = vpop.f32.mrb[0].mxu0
    %v3377 = vpop.f32.mrb[0].mxu0
    %3378 = vdwg.mxu0
    %3379 = vst.msk [vmem:[#allocation2 + $0x10] sm:$0xff] %vm2263, %v3328
    %3380 = vst.msk [vmem:[#allocation2 + $0x28] sm:$0xff] %vm2263, %v3374
    %3382 = vrot.lane.b32.xlu0 %v3165, 64
    %v3383 = vpop.permute.xlu0 %3382
    %3385 = vrot.lane.b32.xlu0 %v3167, 64
    %v3386 = vpop.permute.xlu0 %3385
    %v3388 = vsel %vm2263, %v3383, 0
    %v3391 = vsel %vm2263, %v3386, 0
    %3393 = vmatprep.subr.bf16.mxu0 0
    %3394 = vmatpush1.bf16.xpose.msra.mxu0 %v3391
    %3395 = vmatprep.subr.bf16.mxu0 0
    %3396 = vmatpush1.bf16.xpose.msra.mxu0 0
    %3397 = vmatprep.subr.bf16.mxu0 0
    %3398 = vmatpush1.bf16.xpose.msra.mxu0 0
    %3399 = vmatprep.subr.bf16.mxu0 0
    %3400 = vmatpush1.bf16.xpose.msra.mxu0 0
    %3401 = vmatprep.subr.bf16.mxu0 0
    %3402 = vmatpush1.bf16.xpose.msra.mxu0 0
    %3403 = vmatprep.subr.bf16.mxu0 0
    %3404 = vmatpush1.bf16.xpose.msra.mxu0 0
    %3405 = vmatprep.subr.bf16.mxu0 0
    %3406 = vmatpush1.bf16.xpose.msra.mxu0 0
    %3407 = vmatprep.subr.bf16.mxu0 0
    %3408 = vmatpush1.bf16.xpose.msra.mxu0 0
    %3409 = vmatprep.subr.bf16.mxu0 0
    %3410 = vmatpush1.bf16.xpose.msra.mxu0 0
    %3411 = vmatprep.subr.bf16.mxu0 0
    %3412 = vmatpush1.bf16.xpose.msra.mxu0 0
    %3413 = vmatprep.subr.bf16.mxu0 0
    %3414 = vmatpush1.bf16.xpose.msra.mxu0 0
    %3415 = vmatprep.subr.bf16.mxu0 0
    %3416 = vmatpush1.bf16.xpose.msra.mxu0 0
    %3417 = vmatprep.subr.bf16.mxu0 0
    %3418 = vmatpush1.bf16.xpose.msra.mxu0 0
    %3419 = vmatprep.subr.bf16.mxu0 0
    %3420 = vmatpush1.bf16.xpose.msra.mxu0 0
    %3421 = vmatprep.subr.bf16.mxu0 0
    %3422 = vmatpush1.bf16.xpose.msra.mxu0 0
    %3423 = vmatprep.subr.bf16.mxu0 0
    %3424 = vmatpush1.bf16.xpose.msra.mxu0 0
    %3425 = vmatprep.mubr.bf16.mxu0 0
    %3426 = vmatmul.mubr.bf16.gmra.mrb[0].mxu0 %v3388
    %v3427 = vpop.f32.mrb[0].mxu0
    %v3428 = vadd.f32 %v2256, %v3427
    %v3429 = vpop.f32.mrb[0].mxu0
    %v3430 = vpop.f32.mrb[0].mxu0
    %v3431 = vpop.f32.mrb[0].mxu0
    %3432 = vdwg.mxu0
    %3434 = vrot.lane.b32.xlu0 %v3166, 64
    %v3435 = vpop.permute.xlu0 %3434
    %3437 = vrot.lane.b32.xlu0 %v3168, 64
    %v3438 = vpop.permute.xlu0 %3437
    %v3440 = vsel %vm2263, %v3435, 0
    %v3443 = vsel %vm2263, %v3438, 0
    %3445 = vmatprep.subr.bf16.mxu0 0
    %3446 = vmatpush1.bf16.xpose.msra.mxu0 %v3443
    %3447 = vmatprep.subr.bf16.mxu0 0
    %3448 = vmatpush1.bf16.xpose.msra.mxu0 0
    %3449 = vmatprep.subr.bf16.mxu0 0
    %3450 = vmatpush1.bf16.xpose.msra.mxu0 0
    %3451 = vmatprep.subr.bf16.mxu0 0
    %3452 = vmatpush1.bf16.xpose.msra.mxu0 0
    %3453 = vmatprep.subr.bf16.mxu0 0
    %3454 = vmatpush1.bf16.xpose.msra.mxu0 0
    %3455 = vmatprep.subr.bf16.mxu0 0
    %3456 = vmatpush1.bf16.xpose.msra.mxu0 0
    %3457 = vmatprep.subr.bf16.mxu0 0
    %3458 = vmatpush1.bf16.xpose.msra.mxu0 0
    %3459 = vmatprep.subr.bf16.mxu0 0
    %3460 = vmatpush1.bf16.xpose.msra.mxu0 0
    %3461 = vmatprep.subr.bf16.mxu0 0
    %3462 = vmatpush1.bf16.xpose.msra.mxu0 0
    %3463 = vmatprep.subr.bf16.mxu0 0
    %3464 = vmatpush1.bf16.xpose.msra.mxu0 0
    %3465 = vmatprep.subr.bf16.mxu0 0
    %3466 = vmatpush1.bf16.xpose.msra.mxu0 0
    %3467 = vmatprep.subr.bf16.mxu0 0
    %3468 = vmatpush1.bf16.xpose.msra.mxu0 0
    %3469 = vmatprep.subr.bf16.mxu0 0
    %3470 = vmatpush1.bf16.xpose.msra.mxu0 0
    %3471 = vmatprep.subr.bf16.mxu0 0
    %3472 = vmatpush1.bf16.xpose.msra.mxu0 0
    %3473 = vmatprep.subr.bf16.mxu0 0
    %3474 = vmatpush1.bf16.xpose.msra.mxu0 0
    %3475 = vmatprep.subr.bf16.mxu0 0
    %3476 = vmatpush1.bf16.xpose.msra.mxu0 0
    %3477 = vmatprep.mubr.bf16.mxu0 0
    %3478 = vmatmul.mubr.bf16.gmra.mrb[0].mxu0 %v3440
    %v3479 = vpop.f32.mrb[0].mxu0
    %v3480 = vadd.f32 %v2256, %v3479
    %v3481 = vpop.f32.mrb[0].mxu0
    %v3482 = vpop.f32.mrb[0].mxu0
    %v3483 = vpop.f32.mrb[0].mxu0
    %3484 = vdwg.mxu0
    %v3485 = vsel %vm2356, %v3428, -inf
    %3486 = vmax.xlane.f32.xlu0 %v3485
    %v3487 = vpop.xlane.xlu0 %3486
    %v3488 = vsel %vm2356, %v3480, -inf
    %3489 = vmax.xlane.f32.xlu0 %v3488
    %v3490 = vpop.xlane.xlu0 %3489
    %v3491 = vsub.f32 %v3428, %v3487
    %v3492 = vsub.f32 %v3480, %v3490
    %v3493 = vmul.f32 %v3491, 1.442695
    %v3494 = vpow.pop %v3493
    %v3495 = vmul.f32 %v3492, 1.442695
    %v3496 = vpow.pop %v3495
    %v3497 = vsel %vm2356, %v3494, 0.0
    %3498 = vadd.xlane.f32.xlu0 %v3497
    %v3499 = vpop.xlane.xlu0 %3498
    %v3500 = vsel %vm2356, %v3496, 0.0
    %3501 = vadd.xlane.f32.xlu0 %v3500
    %v3502 = vpop.xlane.xlu0 %3501
    %v3503 = vrcp.pop %v3499
    %v3504 = vrcp.pop %v3502
    %v3505 = vmul.f32 %v3494, %v3503
    %v3506 = vmul.f32 %v3496, %v3504
    %v3507 = vpack.c.bf16 %v3505, %v3505
    %v3508 = vpack.c.bf16 %v3506, %v3506
    %3510 = vrot.lane.b32.xlu0 %v3169, 64
    %v3511 = vpop.permute.xlu0 %3510
    %v3513 = vsel %vm2356, %v3507, 0
    %v3516 = vsel %vm2384, %v3511, 0
    %3518 = vmatprep.subr.bf16.mxu0 0
    %3519 = vmatpush1.bf16.msra.mxu0 %v3516
    %3520 = vmatprep.subr.bf16.mxu0 0
    %3521 = vmatpush1.bf16.msra.mxu0 0
    %3522 = vmatprep.subr.bf16.mxu0 0
    %3523 = vmatpush1.bf16.msra.mxu0 0
    %3524 = vmatprep.subr.bf16.mxu0 0
    %3525 = vmatpush1.bf16.msra.mxu0 0
    %3526 = vmatprep.subr.bf16.mxu0 0
    %3527 = vmatpush1.bf16.msra.mxu0 0
    %3528 = vmatprep.subr.bf16.mxu0 0
    %3529 = vmatpush1.bf16.msra.mxu0 0
    %3530 = vmatprep.subr.bf16.mxu0 0
    %3531 = vmatpush1.bf16.msra.mxu0 0
    %3532 = vmatprep.subr.bf16.mxu0 0
    %3533 = vmatpush1.bf16.msra.mxu0 0
    %3534 = vmatprep.subr.bf16.mxu0 0
    %3535 = vmatpush1.bf16.msra.mxu0 0
    %3536 = vmatprep.subr.bf16.mxu0 0
    %3537 = vmatpush1.bf16.msra.mxu0 0
    %3538 = vmatprep.subr.bf16.mxu0 0
    %3539 = vmatpush1.bf16.msra.mxu0 0
    %3540 = vmatprep.subr.bf16.mxu0 0
    %3541 = vmatpush1.bf16.msra.mxu0 0
    %3542 = vmatprep.subr.bf16.mxu0 0
    %3543 = vmatpush1.bf16.msra.mxu0 0
    %3544 = vmatprep.subr.bf16.mxu0 0
    %3545 = vmatpush1.bf16.msra.mxu0 0
    %3546 = vmatprep.subr.bf16.mxu0 0
    %3547 = vmatpush1.bf16.msra.mxu0 0
    %3548 = vmatprep.subr.bf16.mxu0 0
    %3549 = vmatpush1.bf16.msra.mxu0 0
    %3550 = vmatprep.mubr.bf16.mxu0 0
    %3551 = vmatmul.mubr.bf16.gmra.mrb[0].mxu0 %v3513
    %v3552 = vpop.f32.mrb[0].mxu0
    %v3553 = vadd.f32 0.0, %v3552
    %v3554 = vpop.f32.mrb[0].mxu0
    %v3555 = vpop.f32.mrb[0].mxu0
    %v3556 = vpop.f32.mrb[0].mxu0
    %3557 = vdwg.mxu0
    %3559 = vrot.lane.b32.xlu0 %v3170, 64
    %v3560 = vpop.permute.xlu0 %3559
    %v3562 = vsel %vm2356, %v3508, 0
    %v3565 = vsel %vm2384, %v3560, 0
    %3567 = vmatprep.subr.bf16.mxu0 0
    %3568 = vmatpush1.bf16.msra.mxu0 %v3565
    %3569 = vmatprep.subr.bf16.mxu0 0
    %3570 = vmatpush1.bf16.msra.mxu0 0
    %3571 = vmatprep.subr.bf16.mxu0 0
    %3572 = vmatpush1.bf16.msra.mxu0 0
    %3573 = vmatprep.subr.bf16.mxu0 0
    %3574 = vmatpush1.bf16.msra.mxu0 0
    %3575 = vmatprep.subr.bf16.mxu0 0
    %3576 = vmatpush1.bf16.msra.mxu0 0
    %3577 = vmatprep.subr.bf16.mxu0 0
    %3578 = vmatpush1.bf16.msra.mxu0 0
    %3579 = vmatprep.subr.bf16.mxu0 0
    %3580 = vmatpush1.bf16.msra.mxu0 0
    %3581 = vmatprep.subr.bf16.mxu0 0
    %3582 = vmatpush1.bf16.msra.mxu0 0
    %3583 = vmatprep.subr.bf16.mxu0 0
    %3584 = vmatpush1.bf16.msra.mxu0 0
    %3585 = vmatprep.subr.bf16.mxu0 0
    %3586 = vmatpush1.bf16.msra.mxu0 0
    %3587 = vmatprep.subr.bf16.mxu0 0
    %3588 = vmatpush1.bf16.msra.mxu0 0
    %3589 = vmatprep.subr.bf16.mxu0 0
    %3590 = vmatpush1.bf16.msra.mxu0 0
    %3591 = vmatprep.subr.bf16.mxu0 0
    %3592 = vmatpush1.bf16.msra.mxu0 0
    %3593 = vmatprep.subr.bf16.mxu0 0
    %3594 = vmatpush1.bf16.msra.mxu0 0
    %3595 = vmatprep.subr.bf16.mxu0 0
    %3596 = vmatpush1.bf16.msra.mxu0 0
    %3597 = vmatprep.subr.bf16.mxu0 0
    %3598 = vmatpush1.bf16.msra.mxu0 0
    %3599 = vmatprep.mubr.bf16.mxu0 0
    %3600 = vmatmul.mubr.bf16.gmra.mrb[0].mxu0 %v3562
    %v3601 = vpop.f32.mrb[0].mxu0
    %v3602 = vadd.f32 0.0, %v3601
    %v3603 = vpop.f32.mrb[0].mxu0
    %v3604 = vpop.f32.mrb[0].mxu0
    %v3605 = vpop.f32.mrb[0].mxu0
    %3606 = vdwg.mxu0
    %3609 = vrot.lane.b32.xlu0 %v3553, 64
    %v3610 = vpop.permute.xlu0 %3609
    %3611 = vrot.lane.b32.xlu0 %v3602, 64
    %v3612 = vpop.permute.xlu0 %3611
    %3615 = vst.msk [vmem:[#allocation2 + $0x10] sm:$0xff] %vm2710, %v3610
    %3616 = vst.msk [vmem:[#allocation2 + $0x28] sm:$0xff] %vm2710, %v3612
    %v3617 = vld [vmem:[#allocation2] sm:$0xff]
    %v3618 = vld [vmem:[#allocation2 + $0x8] sm:$0xff]
    %v3619 = vld [vmem:[#allocation2 + $0x10] sm:$0xff]
    %v3620 = vld [vmem:[#allocation2 + $0x18] sm:$0xff]
    %v3621 = vld [vmem:[#allocation2 + $0x20] sm:$0xff]
    %v3622 = vld [vmem:[#allocation2 + $0x28] sm:$0xff]
    %v3623 = vadd.f32 %v208, %v3617
    %v3624 = vadd.f32 %v209, %v3618
    %v3625 = vadd.f32 %v210, %v3619
    %v3626 = vadd.f32 %v211, %v3620
    %v3627 = vadd.f32 %v212, %v3621
    %v3628 = vadd.f32 %v213, %v3622
    %v3629 = vld [vmem:[#allocation11] sm:$0x7]
    %v3630 = vld [vmem:[#allocation12] sm:$0x7]
    %v3631 = vadd.f32 %v3623, %v3624
    %v3632 = vadd.f32 %v3631, %v3625
    %3633 = vadd.xlane.f32.xlu0 %v3632
    %v3634 = vpop.xlane.xlu0 %3633
    %v3635 = vadd.f32 %v3626, %v3627
    %v3636 = vadd.f32 %v3635, %v3628
    %3637 = vadd.xlane.f32.xlu0 %v3636
    %v3638 = vpop.xlane.xlu0 %3637
    %v3639 = vmul.f32 %v3634, %v224
    %v3640 = vmul.f32 %v3638, %v224
    %v3641 = vsub.f32 %v3623, %v3639
    %v3642 = vsub.f32 %v3624, %v3639
    %v3643 = vsub.f32 %v3625, %v3639
    %v3644 = vsub.f32 %v3626, %v3640
    %v3645 = vsub.f32 %v3627, %v3640
    %v3646 = vsub.f32 %v3628, %v3640
    %v3647 = vmul.f32 %v3641, %v3641
    %v3648 = vmul.f32 %v3642, %v3642
    %v3649 = vmul.f32 %v3643, %v3643
    %v3650 = vmul.f32 %v3644, %v3644
    %v3651 = vmul.f32 %v3645, %v3645
    %v3652 = vmul.f32 %v3646, %v3646
    %v3653 = vadd.f32 %v3647, %v3648
    %v3654 = vadd.f32 %v3653, %v3649
    %3655 = vadd.xlane.f32.xlu0 %v3654
    %v3656 = vpop.xlane.xlu0 %3655
    %v3657 = vadd.f32 %v3650, %v3651
    %v3658 = vadd.f32 %v3657, %v3652
    %3659 = vadd.xlane.f32.xlu0 %v3658
    %v3660 = vpop.xlane.xlu0 %3659
    %v3661 = vmul.f32 %v3656, %v224
    %v3662 = vmul.f32 %v3660, %v224
    %v3663 = vadd.f32 %v3661, 1e-05
    %v3664 = vadd.f32 %v3662, 1e-05
    %v3665 = vrsqrt.pop %v3663
    %v3666 = vrsqrt.pop %v3664
    %v3667 = vmul.f32 %v3641, %v3665
    %v3668 = vmul.f32 %v3642, %v3665
    %v3669 = vmul.f32 %v3643, %v3665
    %v3670 = vmul.f32 %v3644, %v3666
    %v3671 = vmul.f32 %v3645, %v3666
    %v3672 = vmul.f32 %v3646, %v3666
    %v3674 = vlaneseq
    %v3675 = vshrl.u32 %v3674, 7
    %v3676 = vsub.s32 0, %v3675
    %v3677 = vrot.slane %v3629, %v3676
    %v3678 = vlaneseq
    %v3679 = vshrl.u32 %v3678, 7
    %v3680 = vsub.s32 1, %v3679
    %v3681 = vrot.slane %v3629, %v3680
    %v3682 = vlaneseq
    %v3683 = vshrl.u32 %v3682, 7
    %v3684 = vsub.s32 2, %v3683
    %v3685 = vrot.slane %v3629, %v3684
    %v3689 = vmul.f32 %v3667, %v3677
    %v3690 = vmul.f32 %v3668, %v3681
    %v3691 = vmul.f32 %v3669, %v3685
    %v3692 = vmul.f32 %v3670, %v3677
    %v3693 = vmul.f32 %v3671, %v3681
    %v3694 = vmul.f32 %v3672, %v3685
    %v3696 = vlaneseq
    %v3697 = vshrl.u32 %v3696, 7
    %v3698 = vsub.s32 0, %v3697
    %v3699 = vrot.slane %v3630, %v3698
    %v3700 = vlaneseq
    %v3701 = vshrl.u32 %v3700, 7
    %v3702 = vsub.s32 1, %v3701
    %v3703 = vrot.slane %v3630, %v3702
    %v3704 = vlaneseq
    %v3705 = vshrl.u32 %v3704, 7
    %v3706 = vsub.s32 2, %v3705
    %v3707 = vrot.slane %v3630, %v3706
    %v3711 = vadd.f32 %v3689, %v3699
    %v3712 = vadd.f32 %v3690, %v3703
    %v3713 = vadd.f32 %v3691, %v3707
    %v3714 = vadd.f32 %v3692, %v3699
    %v3715 = vadd.f32 %v3693, %v3703
    %v3716 = vadd.f32 %v3694, %v3707
    %v3717 = vpack.c.bf16 %v3714, %v3711
    %v3718 = vpack.c.bf16 %v3715, %v3712
    %v3719 = vpack.c.bf16 %v3716, %v3713
    %v3720 = vld [vmem:[#allocation18] sm:$0xff]
    %v3721 = vld [vmem:[#allocation18 + $0x8] sm:$0xff]
    %v3722 = vld [vmem:[#allocation18 + $0x10] sm:$0xff]
    %v3723 = vld [vmem:[#allocation18 + $0x18] sm:$0xff]
    %v3724 = vld [vmem:[#allocation18 + $0x20] sm:$0xff]
    %v3725 = vld [vmem:[#allocation18 + $0x28] sm:$0xff]
    %v3726 = vld [vmem:[#allocation18 + $0x30] sm:$0xff]
    %v3727 = vld [vmem:[#allocation18 + $0x38] sm:$0xff]
    %v3728 = vld [vmem:[#allocation18 + $0x40] sm:$0xff]
    %v3729 = vld [vmem:[#allocation18 + $0x48] sm:$0xff]
    %v3730 = vld [vmem:[#allocation18 + $0x50] sm:$0xff]
    %v3731 = vld [vmem:[#allocation18 + $0x58] sm:$0xff]
    %v3732 = vld [vmem:[#allocation18 + $0x60] sm:$0xff]
    %v3733 = vld [vmem:[#allocation18 + $0x68] sm:$0xff]
    %v3734 = vld [vmem:[#allocation18 + $0x70] sm:$0xff]
    %v3735 = vld [vmem:[#allocation18 + $0x78] sm:$0xff]
    %v3736 = vld [vmem:[#allocation18 + $0x80] sm:$0xff]
    %v3737 = vld [vmem:[#allocation18 + $0x88] sm:$0xff]
    %v3738 = vld [vmem:[#allocation18 + $0x90] sm:$0xff]
    %v3739 = vld [vmem:[#allocation18 + $0x98] sm:$0xff]
    %v3740 = vld [vmem:[#allocation18 + $0xa0] sm:$0xff]
    %v3741 = vld [vmem:[#allocation18 + $0xa8] sm:$0xff]
    %v3742 = vld [vmem:[#allocation18 + $0xb0] sm:$0xff]
    %v3743 = vld [vmem:[#allocation18 + $0xb8] sm:$0xff]
    %v3744 = vld [vmem:[#allocation18 + $0xc0] sm:$0xff]
    %v3745 = vld [vmem:[#allocation18 + $0xc8] sm:$0xff]
    %v3746 = vld [vmem:[#allocation18 + $0xd0] sm:$0xff]
    %v3747 = vld [vmem:[#allocation18 + $0xd8] sm:$0xff]
    %v3748 = vld [vmem:[#allocation18 + $0xe0] sm:$0xff]
    %v3749 = vld [vmem:[#allocation18 + $0xe8] sm:$0xff]
    %v3750 = vld [vmem:[#allocation18 + $0xf0] sm:$0xff]
    %v3751 = vld [vmem:[#allocation18 + $0xf8] sm:$0xff]
    %v3752 = vld [vmem:[#allocation18 + $0x100] sm:$0xff]
    %v3753 = vld [vmem:[#allocation18 + $0x108] sm:$0xff]
    %v3754 = vld [vmem:[#allocation18 + $0x110] sm:$0xff]
    %v3755 = vld [vmem:[#allocation18 + $0x118] sm:$0xff]
    %v3756 = vld [vmem:[#allocation18 + $0x120] sm:$0xff]
    %v3757 = vld [vmem:[#allocation18 + $0x128] sm:$0xff]
    %v3758 = vld [vmem:[#allocation18 + $0x130] sm:$0xff]
    %v3759 = vld [vmem:[#allocation18 + $0x138] sm:$0xff]
    %v3760 = vld [vmem:[#allocation18 + $0x140] sm:$0xff]
    %v3761 = vld [vmem:[#allocation18 + $0x148] sm:$0xff]
    %v3762 = vld [vmem:[#allocation18 + $0x150] sm:$0xff]
    %v3763 = vld [vmem:[#allocation18 + $0x158] sm:$0xff]
    %v3764 = vld [vmem:[#allocation18 + $0x160] sm:$0xff]
    %v3765 = vld [vmem:[#allocation18 + $0x168] sm:$0xff]
    %v3766 = vld [vmem:[#allocation18 + $0x170] sm:$0xff]
    %v3767 = vld [vmem:[#allocation18 + $0x178] sm:$0xff]
    %v3768 = vld [vmem:[#allocation18 + $0x180] sm:$0xff]
    %v3769 = vld [vmem:[#allocation18 + $0x188] sm:$0xff]
    %v3770 = vld [vmem:[#allocation18 + $0x190] sm:$0xff]
    %v3771 = vld [vmem:[#allocation18 + $0x198] sm:$0xff]
    %v3772 = vld [vmem:[#allocation18 + $0x1a0] sm:$0xff]
    %v3773 = vld [vmem:[#allocation18 + $0x1a8] sm:$0xff]
    %v3774 = vld [vmem:[#allocation18 + $0x1b0] sm:$0xff]
    %v3775 = vld [vmem:[#allocation18 + $0x1b8] sm:$0xff]
    %v3776 = vld [vmem:[#allocation18 + $0x1c0] sm:$0xff]
    %v3777 = vld [vmem:[#allocation18 + $0x1c8] sm:$0xff]
    %v3778 = vld [vmem:[#allocation18 + $0x1d0] sm:$0xff]
    %v3779 = vld [vmem:[#allocation18 + $0x1d8] sm:$0xff]
    %v3780 = vld [vmem:[#allocation18 + $0x1e0] sm:$0xff]
    %v3781 = vld [vmem:[#allocation18 + $0x1e8] sm:$0xff]
    %v3782 = vld [vmem:[#allocation18 + $0x1f0] sm:$0xff]
    %v3783 = vld [vmem:[#allocation18 + $0x1f8] sm:$0xff]
    %v3784 = vld [vmem:[#allocation18 + $0x200] sm:$0xff]
    %v3785 = vld [vmem:[#allocation18 + $0x208] sm:$0xff]
    %v3786 = vld [vmem:[#allocation18 + $0x210] sm:$0xff]
    %v3787 = vld [vmem:[#allocation18 + $0x218] sm:$0xff]
    %v3788 = vld [vmem:[#allocation18 + $0x220] sm:$0xff]
    %v3789 = vld [vmem:[#allocation18 + $0x228] sm:$0xff]
    %v3790 = vld [vmem:[#allocation18 + $0x230] sm:$0xff]
    %v3791 = vld [vmem:[#allocation18 + $0x238] sm:$0xff]
    %v3792 = vld [vmem:[#allocation18 + $0x240] sm:$0xff]
    %v3793 = vld [vmem:[#allocation18 + $0x248] sm:$0xff]
    %v3794 = vld [vmem:[#allocation18 + $0x250] sm:$0xff]
    %v3795 = vld [vmem:[#allocation18 + $0x258] sm:$0xff]
    %v3796 = vld [vmem:[#allocation18 + $0x260] sm:$0xff]
    %v3797 = vld [vmem:[#allocation18 + $0x268] sm:$0xff]
    %v3798 = vld [vmem:[#allocation18 + $0x270] sm:$0xff]
    %v3799 = vld [vmem:[#allocation18 + $0x278] sm:$0xff]
    %v3800 = vld [vmem:[#allocation18 + $0x280] sm:$0xff]
    %v3801 = vld [vmem:[#allocation18 + $0x288] sm:$0xff]
    %v3802 = vld [vmem:[#allocation18 + $0x290] sm:$0xff]
    %v3803 = vld [vmem:[#allocation18 + $0x298] sm:$0xff]
    %v3804 = vld [vmem:[#allocation18 + $0x2a0] sm:$0xff]
    %v3805 = vld [vmem:[#allocation18 + $0x2a8] sm:$0xff]
    %v3806 = vld [vmem:[#allocation18 + $0x2b0] sm:$0xff]
    %v3807 = vld [vmem:[#allocation18 + $0x2b8] sm:$0xff]
    %v3808 = vld [vmem:[#allocation18 + $0x2c0] sm:$0xff]
    %v3809 = vld [vmem:[#allocation18 + $0x2c8] sm:$0xff]
    %v3810 = vld [vmem:[#allocation18 + $0x2d0] sm:$0xff]
    %v3811 = vld [vmem:[#allocation18 + $0x2d8] sm:$0xff]
    %v3812 = vld [vmem:[#allocation18 + $0x2e0] sm:$0xff]
    %v3813 = vld [vmem:[#allocation18 + $0x2e8] sm:$0xff]
    %v3814 = vld [vmem:[#allocation18 + $0x2f0] sm:$0xff]
    %v3815 = vld [vmem:[#allocation18 + $0x2f8] sm:$0xff]
    %v3816 = vld [vmem:[#allocation18 + $0x300] sm:$0xff]
    %v3817 = vld [vmem:[#allocation18 + $0x308] sm:$0xff]
    %v3818 = vld [vmem:[#allocation18 + $0x310] sm:$0xff]
    %v3819 = vld [vmem:[#allocation18 + $0x318] sm:$0xff]
    %v3820 = vld [vmem:[#allocation18 + $0x320] sm:$0xff]
    %v3821 = vld [vmem:[#allocation18 + $0x328] sm:$0xff]
    %v3822 = vld [vmem:[#allocation18 + $0x330] sm:$0xff]
    %v3823 = vld [vmem:[#allocation18 + $0x338] sm:$0xff]
    %v3824 = vld [vmem:[#allocation18 + $0x340] sm:$0xff]
    %v3825 = vld [vmem:[#allocation18 + $0x348] sm:$0xff]
    %v3826 = vld [vmem:[#allocation18 + $0x350] sm:$0xff]
    %v3827 = vld [vmem:[#allocation18 + $0x358] sm:$0xff]
    %v3828 = vld [vmem:[#allocation18 + $0x360] sm:$0xff]
    %v3829 = vld [vmem:[#allocation18 + $0x368] sm:$0xff]
    %v3830 = vld [vmem:[#allocation18 + $0x370] sm:$0xff]
    %v3831 = vld [vmem:[#allocation18 + $0x378] sm:$0xff]
    %v3832 = vld [vmem:[#allocation18 + $0x380] sm:$0xff]
    %v3833 = vld [vmem:[#allocation18 + $0x388] sm:$0xff]
    %v3834 = vld [vmem:[#allocation18 + $0x390] sm:$0xff]
    %v3835 = vld [vmem:[#allocation18 + $0x398] sm:$0xff]
    %v3836 = vld [vmem:[#allocation18 + $0x3a0] sm:$0xff]
    %v3837 = vld [vmem:[#allocation18 + $0x3a8] sm:$0xff]
    %v3838 = vld [vmem:[#allocation18 + $0x3b0] sm:$0xff]
    %v3839 = vld [vmem:[#allocation18 + $0x3b8] sm:$0xff]
    %v3840 = vld [vmem:[#allocation18 + $0x3c0] sm:$0xff]
    %v3841 = vld [vmem:[#allocation18 + $0x3c8] sm:$0xff]
    %v3842 = vld [vmem:[#allocation18 + $0x3d0] sm:$0xff]
    %v3843 = vld [vmem:[#allocation18 + $0x3d8] sm:$0xff]
    %v3844 = vld [vmem:[#allocation18 + $0x3e0] sm:$0xff]
    %v3845 = vld [vmem:[#allocation18 + $0x3e8] sm:$0xff]
    %v3846 = vld [vmem:[#allocation18 + $0x3f0] sm:$0xff]
    %v3847 = vld [vmem:[#allocation18 + $0x3f8] sm:$0xff]
    %v3848 = vld [vmem:[#allocation18 + $0x400] sm:$0xff]
    %v3849 = vld [vmem:[#allocation18 + $0x408] sm:$0xff]
    %v3850 = vld [vmem:[#allocation18 + $0x410] sm:$0xff]
    %v3851 = vld [vmem:[#allocation18 + $0x418] sm:$0xff]
    %v3852 = vld [vmem:[#allocation18 + $0x420] sm:$0xff]
    %v3853 = vld [vmem:[#allocation18 + $0x428] sm:$0xff]
    %v3854 = vld [vmem:[#allocation18 + $0x430] sm:$0xff]
    %v3855 = vld [vmem:[#allocation18 + $0x438] sm:$0xff]
    %v3856 = vld [vmem:[#allocation18 + $0x440] sm:$0xff]
    %v3857 = vld [vmem:[#allocation18 + $0x448] sm:$0xff]
    %v3858 = vld [vmem:[#allocation18 + $0x450] sm:$0xff]
    %v3859 = vld [vmem:[#allocation18 + $0x458] sm:$0xff]
    %v3860 = vld [vmem:[#allocation18 + $0x460] sm:$0xff]
    %v3861 = vld [vmem:[#allocation18 + $0x468] sm:$0xff]
    %v3862 = vld [vmem:[#allocation18 + $0x470] sm:$0xff]
    %v3863 = vld [vmem:[#allocation18 + $0x478] sm:$0xff]
    %v3864 = vld [vmem:[#allocation18 + $0x480] sm:$0xff]
    %v3865 = vld [vmem:[#allocation18 + $0x488] sm:$0xff]
    %v3866 = vld [vmem:[#allocation18 + $0x490] sm:$0xff]
    %v3867 = vld [vmem:[#allocation18 + $0x498] sm:$0xff]
    %v3868 = vld [vmem:[#allocation18 + $0x4a0] sm:$0xff]
    %v3869 = vld [vmem:[#allocation18 + $0x4a8] sm:$0xff]
    %v3870 = vld [vmem:[#allocation18 + $0x4b0] sm:$0xff]
    %v3871 = vld [vmem:[#allocation18 + $0x4b8] sm:$0xff]
    %v3872 = vld [vmem:[#allocation18 + $0x4c0] sm:$0xff]
    %v3873 = vld [vmem:[#allocation18 + $0x4c8] sm:$0xff]
    %v3874 = vld [vmem:[#allocation18 + $0x4d0] sm:$0xff]
    %v3875 = vld [vmem:[#allocation18 + $0x4d8] sm:$0xff]
    %v3876 = vld [vmem:[#allocation18 + $0x4e0] sm:$0xff]
    %v3877 = vld [vmem:[#allocation18 + $0x4e8] sm:$0xff]
    %v3878 = vld [vmem:[#allocation18 + $0x4f0] sm:$0xff]
    %v3879 = vld [vmem:[#allocation18 + $0x4f8] sm:$0xff]
    %v3880 = vld [vmem:[#allocation18 + $0x500] sm:$0xff]
    %v3881 = vld [vmem:[#allocation18 + $0x508] sm:$0xff]
    %v3882 = vld [vmem:[#allocation18 + $0x510] sm:$0xff]
    %v3883 = vld [vmem:[#allocation18 + $0x518] sm:$0xff]
    %v3884 = vld [vmem:[#allocation18 + $0x520] sm:$0xff]
    %v3885 = vld [vmem:[#allocation18 + $0x528] sm:$0xff]
    %v3886 = vld [vmem:[#allocation18 + $0x530] sm:$0xff]
    %v3887 = vld [vmem:[#allocation18 + $0x538] sm:$0xff]
    %v3888 = vld [vmem:[#allocation18 + $0x540] sm:$0xff]
    %v3889 = vld [vmem:[#allocation18 + $0x548] sm:$0xff]
    %v3890 = vld [vmem:[#allocation18 + $0x550] sm:$0xff]
    %v3891 = vld [vmem:[#allocation18 + $0x558] sm:$0xff]
    %v3892 = vld [vmem:[#allocation18 + $0x560] sm:$0xff]
    %v3893 = vld [vmem:[#allocation18 + $0x568] sm:$0xff]
    %v3894 = vld [vmem:[#allocation18 + $0x570] sm:$0xff]
    %v3895 = vld [vmem:[#allocation18 + $0x578] sm:$0xff]
    %v3896 = vld [vmem:[#allocation18 + $0x580] sm:$0xff]
    %v3897 = vld [vmem:[#allocation18 + $0x588] sm:$0xff]
    %v3898 = vld [vmem:[#allocation18 + $0x590] sm:$0xff]
    %v3899 = vld [vmem:[#allocation18 + $0x598] sm:$0xff]
    %v3900 = vld [vmem:[#allocation18 + $0x5a0] sm:$0xff]
    %v3901 = vld [vmem:[#allocation18 + $0x5a8] sm:$0xff]
    %v3902 = vld [vmem:[#allocation18 + $0x5b0] sm:$0xff]
    %v3903 = vld [vmem:[#allocation18 + $0x5b8] sm:$0xff]
    %v3904 = vld [vmem:[#allocation18 + $0x5c0] sm:$0xff]
    %v3905 = vld [vmem:[#allocation18 + $0x5c8] sm:$0xff]
    %v3906 = vld [vmem:[#allocation18 + $0x5d0] sm:$0xff]
    %v3907 = vld [vmem:[#allocation18 + $0x5d8] sm:$0xff]
    %v3908 = vld [vmem:[#allocation18 + $0x5e0] sm:$0xff]
    %v3909 = vld [vmem:[#allocation18 + $0x5e8] sm:$0xff]
    %v3910 = vld [vmem:[#allocation18 + $0x5f0] sm:$0xff]
    %v3911 = vld [vmem:[#allocation18 + $0x5f8] sm:$0xff]
    %v3912 = vld [vmem:[#allocation18 + $0x600] sm:$0xff]
    %v3913 = vld [vmem:[#allocation18 + $0x608] sm:$0xff]
    %v3914 = vld [vmem:[#allocation18 + $0x610] sm:$0xff]
    %v3915 = vld [vmem:[#allocation18 + $0x618] sm:$0xff]
    %v3916 = vld [vmem:[#allocation18 + $0x620] sm:$0xff]
    %v3917 = vld [vmem:[#allocation18 + $0x628] sm:$0xff]
    %v3918 = vld [vmem:[#allocation18 + $0x630] sm:$0xff]
    %v3919 = vld [vmem:[#allocation18 + $0x638] sm:$0xff]
    %v3920 = vld [vmem:[#allocation18 + $0x640] sm:$0xff]
    %v3921 = vld [vmem:[#allocation18 + $0x648] sm:$0xff]
    %v3922 = vld [vmem:[#allocation18 + $0x650] sm:$0xff]
    %v3923 = vld [vmem:[#allocation18 + $0x658] sm:$0xff]
    %v3924 = vld [vmem:[#allocation18 + $0x660] sm:$0xff]
    %v3925 = vld [vmem:[#allocation18 + $0x668] sm:$0xff]
    %v3926 = vld [vmem:[#allocation18 + $0x670] sm:$0xff]
    %v3927 = vld [vmem:[#allocation18 + $0x678] sm:$0xff]
    %v3928 = vld [vmem:[#allocation18 + $0x680] sm:$0xff]
    %v3929 = vld [vmem:[#allocation18 + $0x688] sm:$0xff]
    %v3930 = vld [vmem:[#allocation18 + $0x690] sm:$0xff]
    %v3931 = vld [vmem:[#allocation18 + $0x698] sm:$0xff]
    %v3932 = vld [vmem:[#allocation18 + $0x6a0] sm:$0xff]
    %v3933 = vld [vmem:[#allocation18 + $0x6a8] sm:$0xff]
    %v3934 = vld [vmem:[#allocation18 + $0x6b0] sm:$0xff]
    %v3935 = vld [vmem:[#allocation18 + $0x6b8] sm:$0xff]
    %v3936 = vld [vmem:[#allocation18 + $0x6c0] sm:$0xff]
    %v3937 = vld [vmem:[#allocation18 + $0x6c8] sm:$0xff]
    %v3938 = vld [vmem:[#allocation18 + $0x6d0] sm:$0xff]
    %v3939 = vld [vmem:[#allocation18 + $0x6d8] sm:$0xff]
    %v3940 = vld [vmem:[#allocation18 + $0x6e0] sm:$0xff]
    %v3941 = vld [vmem:[#allocation18 + $0x6e8] sm:$0xff]
    %v3942 = vld [vmem:[#allocation18 + $0x6f0] sm:$0xff]
    %v3943 = vld [vmem:[#allocation18 + $0x6f8] sm:$0xff]
    %v3944 = vld [vmem:[#allocation18 + $0x700] sm:$0xff]
    %v3945 = vld [vmem:[#allocation18 + $0x708] sm:$0xff]
    %v3946 = vld [vmem:[#allocation18 + $0x710] sm:$0xff]
    %v3947 = vld [vmem:[#allocation18 + $0x718] sm:$0xff]
    %v3948 = vld [vmem:[#allocation18 + $0x720] sm:$0xff]
    %v3949 = vld [vmem:[#allocation18 + $0x728] sm:$0xff]
    %v3950 = vld [vmem:[#allocation18 + $0x730] sm:$0xff]
    %v3951 = vld [vmem:[#allocation18 + $0x738] sm:$0xff]
    %v3952 = vld [vmem:[#allocation18 + $0x740] sm:$0xff]
    %v3953 = vld [vmem:[#allocation18 + $0x748] sm:$0xff]
    %v3954 = vld [vmem:[#allocation18 + $0x750] sm:$0xff]
    %v3955 = vld [vmem:[#allocation18 + $0x758] sm:$0xff]
    %v3956 = vld [vmem:[#allocation18 + $0x760] sm:$0xff]
    %v3957 = vld [vmem:[#allocation18 + $0x768] sm:$0xff]
    %v3958 = vld [vmem:[#allocation18 + $0x770] sm:$0xff]
    %v3959 = vld [vmem:[#allocation18 + $0x778] sm:$0xff]
    %v3960 = vld [vmem:[#allocation18 + $0x780] sm:$0xff]
    %v3961 = vld [vmem:[#allocation18 + $0x788] sm:$0xff]
    %v3962 = vld [vmem:[#allocation18 + $0x790] sm:$0xff]
    %v3963 = vld [vmem:[#allocation18 + $0x798] sm:$0xff]
    %v3964 = vld [vmem:[#allocation18 + $0x7a0] sm:$0xff]
    %v3965 = vld [vmem:[#allocation18 + $0x7a8] sm:$0xff]
    %v3966 = vld [vmem:[#allocation18 + $0x7b0] sm:$0xff]
    %v3967 = vld [vmem:[#allocation18 + $0x7b8] sm:$0xff]
    %v3968 = vld [vmem:[#allocation18 + $0x7c0] sm:$0xff]
    %v3969 = vld [vmem:[#allocation18 + $0x7c8] sm:$0xff]
    %v3970 = vld [vmem:[#allocation18 + $0x7d0] sm:$0xff]
    %v3971 = vld [vmem:[#allocation18 + $0x7d8] sm:$0xff]
    %v3972 = vld [vmem:[#allocation18 + $0x7e0] sm:$0xff]
    %v3973 = vld [vmem:[#allocation18 + $0x7e8] sm:$0xff]
    %v3974 = vld [vmem:[#allocation18 + $0x7f0] sm:$0xff]
    %v3975 = vld [vmem:[#allocation18 + $0x7f8] sm:$0xff]
    %v3976 = vld [vmem:[#allocation18 + $0x800] sm:$0xff]
    %v3977 = vld [vmem:[#allocation18 + $0x808] sm:$0xff]
    %v3978 = vld [vmem:[#allocation18 + $0x810] sm:$0xff]
    %v3979 = vld [vmem:[#allocation18 + $0x818] sm:$0xff]
    %v3980 = vld [vmem:[#allocation18 + $0x820] sm:$0xff]
    %v3981 = vld [vmem:[#allocation18 + $0x828] sm:$0xff]
    %v3982 = vld [vmem:[#allocation18 + $0x830] sm:$0xff]
    %v3983 = vld [vmem:[#allocation18 + $0x838] sm:$0xff]
    %v3984 = vld [vmem:[#allocation18 + $0x840] sm:$0xff]
    %v3985 = vld [vmem:[#allocation18 + $0x848] sm:$0xff]
    %v3986 = vld [vmem:[#allocation18 + $0x850] sm:$0xff]
    %v3987 = vld [vmem:[#allocation18 + $0x858] sm:$0xff]
    %v3988 = vld [vmem:[#allocation18 + $0x860] sm:$0xff]
    %v3989 = vld [vmem:[#allocation18 + $0x868] sm:$0xff]
    %v3990 = vld [vmem:[#allocation18 + $0x870] sm:$0xff]
    %v3991 = vld [vmem:[#allocation18 + $0x878] sm:$0xff]
    %v3992 = vld [vmem:[#allocation18 + $0x880] sm:$0xff]
    %v3993 = vld [vmem:[#allocation18 + $0x888] sm:$0xff]
    %v3994 = vld [vmem:[#allocation18 + $0x890] sm:$0xff]
    %v3995 = vld [vmem:[#allocation18 + $0x898] sm:$0xff]
    %v3996 = vld [vmem:[#allocation18 + $0x8a0] sm:$0xff]
    %v3997 = vld [vmem:[#allocation18 + $0x8a8] sm:$0xff]
    %v3998 = vld [vmem:[#allocation18 + $0x8b0] sm:$0xff]
    %v3999 = vld [vmem:[#allocation18 + $0x8b8] sm:$0xff]
    %v4000 = vld [vmem:[#allocation18 + $0x8c0] sm:$0xff]
    %v4001 = vld [vmem:[#allocation18 + $0x8c8] sm:$0xff]
    %v4002 = vld [vmem:[#allocation18 + $0x8d0] sm:$0xff]
    %v4003 = vld [vmem:[#allocation18 + $0x8d8] sm:$0xff]
    %v4004 = vld [vmem:[#allocation18 + $0x8e0] sm:$0xff]
    %v4005 = vld [vmem:[#allocation18 + $0x8e8] sm:$0xff]
    %v4006 = vld [vmem:[#allocation18 + $0x8f0] sm:$0xff]
    %v4007 = vld [vmem:[#allocation18 + $0x8f8] sm:$0xff]
    %v4008 = vld [vmem:[#allocation20] sm:$0xff]
    %v4009 = vld [vmem:[#allocation20 + $0x8] sm:$0xf]
    %v4012 = vlaneseq
    %v4013 = vshrl.u32 %v4012, 7
    %v4014 = vsub.s32 0, %v4013
    %v4015 = vrot.slane %v4008, %v4014
    %v4016 = vlaneseq
    %v4017 = vshrl.u32 %v4016, 7
    %v4018 = vsub.s32 1, %v4017
    %v4019 = vrot.slane %v4008, %v4018
    %v4020 = vlaneseq
    %v4021 = vshrl.u32 %v4020, 7
    %v4022 = vsub.s32 2, %v4021
    %v4023 = vrot.slane %v4008, %v4022
    %v4024 = vlaneseq
    %v4025 = vshrl.u32 %v4024, 7
    %v4026 = vsub.s32 3, %v4025
    %v4027 = vrot.slane %v4008, %v4026
    %v4028 = vlaneseq
    %v4029 = vshrl.u32 %v4028, 7
    %v4030 = vsub.s32 4, %v4029
    %v4031 = vrot.slane %v4008, %v4030
    %v4032 = vlaneseq
    %v4033 = vshrl.u32 %v4032, 7
    %v4034 = vsub.s32 5, %v4033
    %v4035 = vrot.slane %v4008, %v4034
    %v4036 = vlaneseq
    %v4037 = vshrl.u32 %v4036, 7
    %v4038 = vsub.s32 6, %v4037
    %v4039 = vrot.slane %v4008, %v4038
    %v4040 = vlaneseq
    %v4041 = vshrl.u32 %v4040, 7
    %v4042 = vsub.s32 7, %v4041
    %v4043 = vrot.slane %v4008, %v4042
    %v4044 = vlaneseq
    %v4045 = vshrl.u32 %v4044, 7
    %v4046 = vsub.s32 0, %v4045
    %v4047 = vrot.slane %v4009, %v4046
    %v4048 = vlaneseq
    %v4049 = vshrl.u32 %v4048, 7
    %v4050 = vsub.s32 1, %v4049
    %v4051 = vrot.slane %v4009, %v4050
    %v4052 = vlaneseq
    %v4053 = vshrl.u32 %v4052, 7
    %v4054 = vsub.s32 2, %v4053
    %v4055 = vrot.slane %v4009, %v4054
    %v4056 = vlaneseq
    %v4057 = vshrl.u32 %v4056, 7
    %v4058 = vsub.s32 3, %v4057
    %v4059 = vrot.slane %v4009, %v4058
    %v4360 = vunpack.c.l.b16 %v3720
    %v4361 = vunpack.c.h.b16 %v3720
    %v4362 = vunpack.c.l.b16 %v3721
    %v4363 = vunpack.c.h.b16 %v3721
    %v4364 = vunpack.c.l.b16 %v3722
    %v4365 = vunpack.c.h.b16 %v3722
    %v4366 = vunpack.c.l.b16 %v3723
    %v4367 = vunpack.c.h.b16 %v3723
    %v4368 = vunpack.c.l.b16 %v3724
    %v4369 = vunpack.c.h.b16 %v3724
    %v4370 = vunpack.c.l.b16 %v3725
    %v4371 = vunpack.c.h.b16 %v3725
    %v4372 = vunpack.c.l.b16 %v3726
    %v4373 = vunpack.c.h.b16 %v3726
    %v4374 = vunpack.c.l.b16 %v3727
    %v4375 = vunpack.c.h.b16 %v3727
    %v4376 = vunpack.c.l.b16 %v3728
    %v4377 = vunpack.c.h.b16 %v3728
    %v4378 = vunpack.c.l.b16 %v3729
    %v4379 = vunpack.c.h.b16 %v3729
    %v4380 = vunpack.c.l.b16 %v3730
    %v4381 = vunpack.c.h.b16 %v3730
    %v4382 = vunpack.c.l.b16 %v3731
    %v4383 = vunpack.c.h.b16 %v3731
    %v4384 = vunpack.c.l.b16 %v3732
    %v4385 = vunpack.c.h.b16 %v3732
    %v4386 = vunpack.c.l.b16 %v3733
    %v4387 = vunpack.c.h.b16 %v3733
    %v4388 = vunpack.c.l.b16 %v3734
    %v4389 = vunpack.c.h.b16 %v3734
    %v4390 = vunpack.c.l.b16 %v3735
    %v4391 = vunpack.c.h.b16 %v3735
    %v4392 = vunpack.c.l.b16 %v3736
    %v4393 = vunpack.c.h.b16 %v3736
    %v4394 = vunpack.c.l.b16 %v3737
    %v4395 = vunpack.c.h.b16 %v3737
    %v4396 = vunpack.c.l.b16 %v3738
    %v4397 = vunpack.c.h.b16 %v3738
    %v4398 = vunpack.c.l.b16 %v3739
    %v4399 = vunpack.c.h.b16 %v3739
    %v4400 = vunpack.c.l.b16 %v3740
    %v4401 = vunpack.c.h.b16 %v3740
    %v4402 = vunpack.c.l.b16 %v3741
    %v4403 = vunpack.c.h.b16 %v3741
    %v4404 = vunpack.c.l.b16 %v3742
    %v4405 = vunpack.c.h.b16 %v3742
    %v4406 = vunpack.c.l.b16 %v3743
    %v4407 = vunpack.c.h.b16 %v3743
    %v4408 = vunpack.c.l.b16 %v3744
    %v4409 = vunpack.c.h.b16 %v3744
    %v4410 = vunpack.c.l.b16 %v3745
    %v4411 = vunpack.c.h.b16 %v3745
    %v4412 = vunpack.c.l.b16 %v3746
    %v4413 = vunpack.c.h.b16 %v3746
    %v4414 = vunpack.c.l.b16 %v3747
    %v4415 = vunpack.c.h.b16 %v3747
    %v4416 = vunpack.c.l.b16 %v3748
    %v4417 = vunpack.c.h.b16 %v3748
    %v4418 = vunpack.c.l.b16 %v3749
    %v4419 = vunpack.c.h.b16 %v3749
    %v4420 = vunpack.c.l.b16 %v3750
    %v4421 = vunpack.c.h.b16 %v3750
    %v4422 = vunpack.c.l.b16 %v3751
    %v4423 = vunpack.c.h.b16 %v3751
    %v4424 = vunpack.c.l.b16 %v3752
    %v4425 = vunpack.c.h.b16 %v3752
    %v4426 = vunpack.c.l.b16 %v3753
    %v4427 = vunpack.c.h.b16 %v3753
    %v4428 = vunpack.c.l.b16 %v3754
    %v4429 = vunpack.c.h.b16 %v3754
    %v4430 = vunpack.c.l.b16 %v3755
    %v4431 = vunpack.c.h.b16 %v3755
    %v4432 = vunpack.c.l.b16 %v3756
    %v4433 = vunpack.c.h.b16 %v3756
    %v4434 = vunpack.c.l.b16 %v3757
    %v4435 = vunpack.c.h.b16 %v3757
    %v4436 = vunpack.c.l.b16 %v3758
    %v4437 = vunpack.c.h.b16 %v3758
    %v4438 = vunpack.c.l.b16 %v3759
    %v4439 = vunpack.c.h.b16 %v3759
    %v4440 = vunpack.c.l.b16 %v3760
    %v4441 = vunpack.c.h.b16 %v3760
    %v4442 = vunpack.c.l.b16 %v3761
    %v4443 = vunpack.c.h.b16 %v3761
    %v4444 = vunpack.c.l.b16 %v3762
    %v4445 = vunpack.c.h.b16 %v3762
    %v4446 = vunpack.c.l.b16 %v3763
    %v4447 = vunpack.c.h.b16 %v3763
    %v4448 = vunpack.c.l.b16 %v3764
    %v4449 = vunpack.c.h.b16 %v3764
    %v4450 = vunpack.c.l.b16 %v3765
    %v4451 = vunpack.c.h.b16 %v3765
    %v4452 = vunpack.c.l.b16 %v3766
    %v4453 = vunpack.c.h.b16 %v3766
    %v4454 = vunpack.c.l.b16 %v3767
    %v4455 = vunpack.c.h.b16 %v3767
    %v4456 = vunpack.c.l.b16 %v3768
    %v4457 = vunpack.c.h.b16 %v3768
    %v4458 = vunpack.c.l.b16 %v3769
    %v4459 = vunpack.c.h.b16 %v3769
    %v4460 = vunpack.c.l.b16 %v3770
    %v4461 = vunpack.c.h.b16 %v3770
    %v4462 = vunpack.c.l.b16 %v3771
    %v4463 = vunpack.c.h.b16 %v3771
    %v4464 = vunpack.c.l.b16 %v3772
    %v4465 = vunpack.c.h.b16 %v3772
    %v4466 = vunpack.c.l.b16 %v3773
    %v4467 = vunpack.c.h.b16 %v3773
    %v4468 = vunpack.c.l.b16 %v3774
    %v4469 = vunpack.c.h.b16 %v3774
    %v4470 = vunpack.c.l.b16 %v3775
    %v4471 = vunpack.c.h.b16 %v3775
    %v4472 = vunpack.c.l.b16 %v3776
    %v4473 = vunpack.c.h.b16 %v3776
    %v4474 = vunpack.c.l.b16 %v3777
    %v4475 = vunpack.c.h.b16 %v3777
    %v4476 = vunpack.c.l.b16 %v3778
    %v4477 = vunpack.c.h.b16 %v3778
    %v4478 = vunpack.c.l.b16 %v3779
    %v4479 = vunpack.c.h.b16 %v3779
    %v4480 = vunpack.c.l.b16 %v3780
    %v4481 = vunpack.c.h.b16 %v3780
    %v4482 = vunpack.c.l.b16 %v3781
    %v4483 = vunpack.c.h.b16 %v3781
    %v4484 = vunpack.c.l.b16 %v3782
    %v4485 = vunpack.c.h.b16 %v3782
    %v4486 = vunpack.c.l.b16 %v3783
    %v4487 = vunpack.c.h.b16 %v3783
    %v4488 = vunpack.c.l.b16 %v3784
    %v4489 = vunpack.c.h.b16 %v3784
    %v4490 = vunpack.c.l.b16 %v3785
    %v4491 = vunpack.c.h.b16 %v3785
    %v4492 = vunpack.c.l.b16 %v3786
    %v4493 = vunpack.c.h.b16 %v3786
    %v4494 = vunpack.c.l.b16 %v3787
    %v4495 = vunpack.c.h.b16 %v3787
    %v4496 = vunpack.c.l.b16 %v3788
    %v4497 = vunpack.c.h.b16 %v3788
    %v4498 = vunpack.c.l.b16 %v3789
    %v4499 = vunpack.c.h.b16 %v3789
    %v4500 = vunpack.c.l.b16 %v3790
    %v4501 = vunpack.c.h.b16 %v3790
    %v4502 = vunpack.c.l.b16 %v3791
    %v4503 = vunpack.c.h.b16 %v3791
    %v4504 = vunpack.c.l.b16 %v3792
    %v4505 = vunpack.c.h.b16 %v3792
    %v4506 = vunpack.c.l.b16 %v3793
    %v4507 = vunpack.c.h.b16 %v3793
    %v4508 = vunpack.c.l.b16 %v3794
    %v4509 = vunpack.c.h.b16 %v3794
    %v4510 = vunpack.c.l.b16 %v3795
    %v4511 = vunpack.c.h.b16 %v3795
    %v4512 = vunpack.c.l.b16 %v3796
    %v4513 = vunpack.c.h.b16 %v3796
    %v4514 = vunpack.c.l.b16 %v3797
    %v4515 = vunpack.c.h.b16 %v3797
    %v4516 = vunpack.c.l.b16 %v3798
    %v4517 = vunpack.c.h.b16 %v3798
    %v4518 = vunpack.c.l.b16 %v3799
    %v4519 = vunpack.c.h.b16 %v3799
    %v4520 = vunpack.c.l.b16 %v3800
    %v4521 = vunpack.c.h.b16 %v3800
    %v4522 = vunpack.c.l.b16 %v3801
    %v4523 = vunpack.c.h.b16 %v3801
    %v4524 = vunpack.c.l.b16 %v3802
    %v4525 = vunpack.c.h.b16 %v3802
    %v4526 = vunpack.c.l.b16 %v3803
    %v4527 = vunpack.c.h.b16 %v3803
    %v4528 = vunpack.c.l.b16 %v3804
    %v4529 = vunpack.c.h.b16 %v3804
    %v4530 = vunpack.c.l.b16 %v3805
    %v4531 = vunpack.c.h.b16 %v3805
    %v4532 = vunpack.c.l.b16 %v3806
    %v4533 = vunpack.c.h.b16 %v3806
    %v4534 = vunpack.c.l.b16 %v3807
    %v4535 = vunpack.c.h.b16 %v3807
    %v4536 = vunpack.c.l.b16 %v3808
    %v4537 = vunpack.c.h.b16 %v3808
    %v4538 = vunpack.c.l.b16 %v3809
    %v4539 = vunpack.c.h.b16 %v3809
    %v4540 = vunpack.c.l.b16 %v3810
    %v4541 = vunpack.c.h.b16 %v3810
    %v4542 = vunpack.c.l.b16 %v3811
    %v4543 = vunpack.c.h.b16 %v3811
    %v4544 = vunpack.c.l.b16 %v3812
    %v4545 = vunpack.c.h.b16 %v3812
    %v4546 = vunpack.c.l.b16 %v3813
    %v4547 = vunpack.c.h.b16 %v3813
    %v4548 = vunpack.c.l.b16 %v3814
    %v4549 = vunpack.c.h.b16 %v3814
    %v4550 = vunpack.c.l.b16 %v3815
    %v4551 = vunpack.c.h.b16 %v3815
    %v4552 = vunpack.c.l.b16 %v3816
    %v4553 = vunpack.c.h.b16 %v3816
    %v4554 = vunpack.c.l.b16 %v3817
    %v4555 = vunpack.c.h.b16 %v3817
    %v4556 = vunpack.c.l.b16 %v3818
    %v4557 = vunpack.c.h.b16 %v3818
    %v4558 = vunpack.c.l.b16 %v3819
    %v4559 = vunpack.c.h.b16 %v3819
    %v4560 = vunpack.c.l.b16 %v3820
    %v4561 = vunpack.c.h.b16 %v3820
    %v4562 = vunpack.c.l.b16 %v3821
    %v4563 = vunpack.c.h.b16 %v3821
    %v4564 = vunpack.c.l.b16 %v3822
    %v4565 = vunpack.c.h.b16 %v3822
    %v4566 = vunpack.c.l.b16 %v3823
    %v4567 = vunpack.c.h.b16 %v3823
    %v4568 = vunpack.c.l.b16 %v3824
    %v4569 = vunpack.c.h.b16 %v3824
    %v4570 = vunpack.c.l.b16 %v3825
    %v4571 = vunpack.c.h.b16 %v3825
    %v4572 = vunpack.c.l.b16 %v3826
    %v4573 = vunpack.c.h.b16 %v3826
    %v4574 = vunpack.c.l.b16 %v3827
    %v4575 = vunpack.c.h.b16 %v3827
    %v4576 = vunpack.c.l.b16 %v3828
    %v4577 = vunpack.c.h.b16 %v3828
    %v4578 = vunpack.c.l.b16 %v3829
    %v4579 = vunpack.c.h.b16 %v3829
    %v4580 = vunpack.c.l.b16 %v3830
    %v4581 = vunpack.c.h.b16 %v3830
    %v4582 = vunpack.c.l.b16 %v3831
    %v4583 = vunpack.c.h.b16 %v3831
    %v4584 = vunpack.c.l.b16 %v3832
    %v4585 = vunpack.c.h.b16 %v3832
    %v4586 = vunpack.c.l.b16 %v3833
    %v4587 = vunpack.c.h.b16 %v3833
    %v4588 = vunpack.c.l.b16 %v3834
    %v4589 = vunpack.c.h.b16 %v3834
    %v4590 = vunpack.c.l.b16 %v3835
    %v4591 = vunpack.c.h.b16 %v3835
    %v4592 = vunpack.c.l.b16 %v3836
    %v4593 = vunpack.c.h.b16 %v3836
    %v4594 = vunpack.c.l.b16 %v3837
    %v4595 = vunpack.c.h.b16 %v3837
    %v4596 = vunpack.c.l.b16 %v3838
    %v4597 = vunpack.c.h.b16 %v3838
    %v4598 = vunpack.c.l.b16 %v3839
    %v4599 = vunpack.c.h.b16 %v3839
    %v4600 = vunpack.c.l.b16 %v3840
    %v4601 = vunpack.c.h.b16 %v3840
    %v4602 = vunpack.c.l.b16 %v3841
    %v4603 = vunpack.c.h.b16 %v3841
    %v4604 = vunpack.c.l.b16 %v3842
    %v4605 = vunpack.c.h.b16 %v3842
    %v4606 = vunpack.c.l.b16 %v3843
    %v4607 = vunpack.c.h.b16 %v3843
    %v4608 = vunpack.c.l.b16 %v3844
    %v4609 = vunpack.c.h.b16 %v3844
    %v4610 = vunpack.c.l.b16 %v3845
    %v4611 = vunpack.c.h.b16 %v3845
    %v4612 = vunpack.c.l.b16 %v3846
    %v4613 = vunpack.c.h.b16 %v3846
    %v4614 = vunpack.c.l.b16 %v3847
    %v4615 = vunpack.c.h.b16 %v3847
    %v4616 = vunpack.c.l.b16 %v3848
    %v4617 = vunpack.c.h.b16 %v3848
    %v4618 = vunpack.c.l.b16 %v3849
    %v4619 = vunpack.c.h.b16 %v3849
    %v4620 = vunpack.c.l.b16 %v3850
    %v4621 = vunpack.c.h.b16 %v3850
    %v4622 = vunpack.c.l.b16 %v3851
    %v4623 = vunpack.c.h.b16 %v3851
    %v4624 = vunpack.c.l.b16 %v3852
    %v4625 = vunpack.c.h.b16 %v3852
    %v4626 = vunpack.c.l.b16 %v3853
    %v4627 = vunpack.c.h.b16 %v3853
    %v4628 = vunpack.c.l.b16 %v3854
    %v4629 = vunpack.c.h.b16 %v3854
    %v4630 = vunpack.c.l.b16 %v3855
    %v4631 = vunpack.c.h.b16 %v3855
    %v4632 = vunpack.c.l.b16 %v3856
    %v4633 = vunpack.c.h.b16 %v3856
    %v4634 = vunpack.c.l.b16 %v3857
    %v4635 = vunpack.c.h.b16 %v3857
    %v4636 = vunpack.c.l.b16 %v3858
    %v4637 = vunpack.c.h.b16 %v3858
    %v4638 = vunpack.c.l.b16 %v3859
    %v4639 = vunpack.c.h.b16 %v3859
    %v4640 = vunpack.c.l.b16 %v3860
    %v4641 = vunpack.c.h.b16 %v3860
    %v4642 = vunpack.c.l.b16 %v3861
    %v4643 = vunpack.c.h.b16 %v3861
    %v4644 = vunpack.c.l.b16 %v3862
    %v4645 = vunpack.c.h.b16 %v3862
    %v4646 = vunpack.c.l.b16 %v3863
    %v4647 = vunpack.c.h.b16 %v3863
    %v4648 = vunpack.c.l.b16 %v3864
    %v4649 = vunpack.c.h.b16 %v3864
    %v4650 = vunpack.c.l.b16 %v3865
    %v4651 = vunpack.c.h.b16 %v3865
    %v4652 = vunpack.c.l.b16 %v3866
    %v4653 = vunpack.c.h.b16 %v3866
    %v4654 = vunpack.c.l.b16 %v3867
    %v4655 = vunpack.c.h.b16 %v3867
    %v4656 = vunpack.c.l.b16 %v3868
    %v4657 = vunpack.c.h.b16 %v3868
    %v4658 = vunpack.c.l.b16 %v3869
    %v4659 = vunpack.c.h.b16 %v3869
    %v4660 = vunpack.c.l.b16 %v3870
    %v4661 = vunpack.c.h.b16 %v3870
    %v4662 = vunpack.c.l.b16 %v3871
    %v4663 = vunpack.c.h.b16 %v3871
    %v4664 = vunpack.c.l.b16 %v3872
    %v4665 = vunpack.c.h.b16 %v3872
    %v4666 = vunpack.c.l.b16 %v3873
    %v4667 = vunpack.c.h.b16 %v3873
    %v4668 = vunpack.c.l.b16 %v3874
    %v4669 = vunpack.c.h.b16 %v3874
    %v4670 = vunpack.c.l.b16 %v3875
    %v4671 = vunpack.c.h.b16 %v3875
    %v4672 = vunpack.c.l.b16 %v3876
    %v4673 = vunpack.c.h.b16 %v3876
    %v4674 = vunpack.c.l.b16 %v3877
    %v4675 = vunpack.c.h.b16 %v3877
    %v4676 = vunpack.c.l.b16 %v3878
    %v4677 = vunpack.c.h.b16 %v3878
    %v4678 = vunpack.c.l.b16 %v3879
    %v4679 = vunpack.c.h.b16 %v3879
    %v4680 = vunpack.c.l.b16 %v3880
    %v4681 = vunpack.c.h.b16 %v3880
    %v4682 = vunpack.c.l.b16 %v3881
    %v4683 = vunpack.c.h.b16 %v3881
    %v4684 = vunpack.c.l.b16 %v3882
    %v4685 = vunpack.c.h.b16 %v3882
    %v4686 = vunpack.c.l.b16 %v3883
    %v4687 = vunpack.c.h.b16 %v3883
    %v4688 = vunpack.c.l.b16 %v3884
    %v4689 = vunpack.c.h.b16 %v3884
    %v4690 = vunpack.c.l.b16 %v3885
    %v4691 = vunpack.c.h.b16 %v3885
    %v4692 = vunpack.c.l.b16 %v3886
    %v4693 = vunpack.c.h.b16 %v3886
    %v4694 = vunpack.c.l.b16 %v3887
    %v4695 = vunpack.c.h.b16 %v3887
    %v4696 = vunpack.c.l.b16 %v3888
    %v4697 = vunpack.c.h.b16 %v3888
    %v4698 = vunpack.c.l.b16 %v3889
    %v4699 = vunpack.c.h.b16 %v3889
    %v4700 = vunpack.c.l.b16 %v3890
    %v4701 = vunpack.c.h.b16 %v3890
    %v4702 = vunpack.c.l.b16 %v3891
    %v4703 = vunpack.c.h.b16 %v3891
    %v4704 = vunpack.c.l.b16 %v3892
    %v4705 = vunpack.c.h.b16 %v3892
    %v4706 = vunpack.c.l.b16 %v3893
    %v4707 = vunpack.c.h.b16 %v3893
    %v4708 = vunpack.c.l.b16 %v3894
    %v4709 = vunpack.c.h.b16 %v3894
    %v4710 = vunpack.c.l.b16 %v3895
    %v4711 = vunpack.c.h.b16 %v3895
    %v4712 = vunpack.c.l.b16 %v3896
    %v4713 = vunpack.c.h.b16 %v3896
    %v4714 = vunpack.c.l.b16 %v3897
    %v4715 = vunpack.c.h.b16 %v3897
    %v4716 = vunpack.c.l.b16 %v3898
    %v4717 = vunpack.c.h.b16 %v3898
    %v4718 = vunpack.c.l.b16 %v3899
    %v4719 = vunpack.c.h.b16 %v3899
    %v4720 = vunpack.c.l.b16 %v3900
    %v4721 = vunpack.c.h.b16 %v3900
    %v4722 = vunpack.c.l.b16 %v3901
    %v4723 = vunpack.c.h.b16 %v3901
    %v4724 = vunpack.c.l.b16 %v3902
    %v4725 = vunpack.c.h.b16 %v3902
    %v4726 = vunpack.c.l.b16 %v3903
    %v4727 = vunpack.c.h.b16 %v3903
    %v4728 = vunpack.c.l.b16 %v3904
    %v4729 = vunpack.c.h.b16 %v3904
    %v4730 = vunpack.c.l.b16 %v3905
    %v4731 = vunpack.c.h.b16 %v3905
    %v4732 = vunpack.c.l.b16 %v3906
    %v4733 = vunpack.c.h.b16 %v3906
    %v4734 = vunpack.c.l.b16 %v3907
    %v4735 = vunpack.c.h.b16 %v3907
    %v4736 = vunpack.c.l.b16 %v3908
    %v4737 = vunpack.c.h.b16 %v3908
    %v4738 = vunpack.c.l.b16 %v3909
    %v4739 = vunpack.c.h.b16 %v3909
    %v4740 = vunpack.c.l.b16 %v3910
    %v4741 = vunpack.c.h.b16 %v3910
    %v4742 = vunpack.c.l.b16 %v3911
    %v4743 = vunpack.c.h.b16 %v3911
    %v4744 = vunpack.c.l.b16 %v3912
    %v4745 = vunpack.c.h.b16 %v3912
    %v4746 = vunpack.c.l.b16 %v3913
    %v4747 = vunpack.c.h.b16 %v3913
    %v4748 = vunpack.c.l.b16 %v3914
    %v4749 = vunpack.c.h.b16 %v3914
    %v4750 = vunpack.c.l.b16 %v3915
    %v4751 = vunpack.c.h.b16 %v3915
    %v4752 = vunpack.c.l.b16 %v3916
    %v4753 = vunpack.c.h.b16 %v3916
    %v4754 = vunpack.c.l.b16 %v3917
    %v4755 = vunpack.c.h.b16 %v3917
    %v4756 = vunpack.c.l.b16 %v3918
    %v4757 = vunpack.c.h.b16 %v3918
    %v4758 = vunpack.c.l.b16 %v3919
    %v4759 = vunpack.c.h.b16 %v3919
    %v4760 = vunpack.c.l.b16 %v3920
    %v4761 = vunpack.c.h.b16 %v3920
    %v4762 = vunpack.c.l.b16 %v3921
    %v4763 = vunpack.c.h.b16 %v3921
    %v4764 = vunpack.c.l.b16 %v3922
    %v4765 = vunpack.c.h.b16 %v3922
    %v4766 = vunpack.c.l.b16 %v3923
    %v4767 = vunpack.c.h.b16 %v3923
    %v4768 = vunpack.c.l.b16 %v3924
    %v4769 = vunpack.c.h.b16 %v3924
    %v4770 = vunpack.c.l.b16 %v3925
    %v4771 = vunpack.c.h.b16 %v3925
    %v4772 = vunpack.c.l.b16 %v3926
    %v4773 = vunpack.c.h.b16 %v3926
    %v4774 = vunpack.c.l.b16 %v3927
    %v4775 = vunpack.c.h.b16 %v3927
    %v4776 = vunpack.c.l.b16 %v3928
    %v4777 = vunpack.c.h.b16 %v3928
    %v4778 = vunpack.c.l.b16 %v3929
    %v4779 = vunpack.c.h.b16 %v3929
    %v4780 = vunpack.c.l.b16 %v3930
    %v4781 = vunpack.c.h.b16 %v3930
    %v4782 = vunpack.c.l.b16 %v3931
    %v4783 = vunpack.c.h.b16 %v3931
    %v4784 = vunpack.c.l.b16 %v3932
    %v4785 = vunpack.c.h.b16 %v3932
    %v4786 = vunpack.c.l.b16 %v3933
    %v4787 = vunpack.c.h.b16 %v3933
    %v4788 = vunpack.c.l.b16 %v3934
    %v4789 = vunpack.c.h.b16 %v3934
    %v4790 = vunpack.c.l.b16 %v3935
    %v4791 = vunpack.c.h.b16 %v3935
    %v4792 = vunpack.c.l.b16 %v3936
    %v4793 = vunpack.c.h.b16 %v3936
    %v4794 = vunpack.c.l.b16 %v3937
    %v4795 = vunpack.c.h.b16 %v3937
    %v4796 = vunpack.c.l.b16 %v3938
    %v4797 = vunpack.c.h.b16 %v3938
    %v4798 = vunpack.c.l.b16 %v3939
    %v4799 = vunpack.c.h.b16 %v3939
    %v4800 = vunpack.c.l.b16 %v3940
    %v4801 = vunpack.c.h.b16 %v3940
    %v4802 = vunpack.c.l.b16 %v3941
    %v4803 = vunpack.c.h.b16 %v3941
    %v4804 = vunpack.c.l.b16 %v3942
    %v4805 = vunpack.c.h.b16 %v3942
    %v4806 = vunpack.c.l.b16 %v3943
    %v4807 = vunpack.c.h.b16 %v3943
    %v4808 = vunpack.c.l.b16 %v3944
    %v4809 = vunpack.c.h.b16 %v3944
    %v4810 = vunpack.c.l.b16 %v3945
    %v4811 = vunpack.c.h.b16 %v3945
    %v4812 = vunpack.c.l.b16 %v3946
    %v4813 = vunpack.c.h.b16 %v3946
    %v4814 = vunpack.c.l.b16 %v3947
    %v4815 = vunpack.c.h.b16 %v3947
    %v4816 = vunpack.c.l.b16 %v3948
    %v4817 = vunpack.c.h.b16 %v3948
    %v4818 = vunpack.c.l.b16 %v3949
    %v4819 = vunpack.c.h.b16 %v3949
    %v4820 = vunpack.c.l.b16 %v3950
    %v4821 = vunpack.c.h.b16 %v3950
    %v4822 = vunpack.c.l.b16 %v3951
    %v4823 = vunpack.c.h.b16 %v3951
    %v4824 = vunpack.c.l.b16 %v3952
    %v4825 = vunpack.c.h.b16 %v3952
    %v4826 = vunpack.c.l.b16 %v3953
    %v4827 = vunpack.c.h.b16 %v3953
    %v4828 = vunpack.c.l.b16 %v3954
    %v4829 = vunpack.c.h.b16 %v3954
    %v4830 = vunpack.c.l.b16 %v3955
    %v4831 = vunpack.c.h.b16 %v3955
    %v4832 = vunpack.c.l.b16 %v3956
    %v4833 = vunpack.c.h.b16 %v3956
    %v4834 = vunpack.c.l.b16 %v3957
    %v4835 = vunpack.c.h.b16 %v3957
    %v4836 = vunpack.c.l.b16 %v3958
    %v4837 = vunpack.c.h.b16 %v3958
    %v4838 = vunpack.c.l.b16 %v3959
    %v4839 = vunpack.c.h.b16 %v3959
    %v4840 = vunpack.c.l.b16 %v3960
    %v4841 = vunpack.c.h.b16 %v3960
    %v4842 = vunpack.c.l.b16 %v3961
    %v4843 = vunpack.c.h.b16 %v3961
    %v4844 = vunpack.c.l.b16 %v3962
    %v4845 = vunpack.c.h.b16 %v3962
    %v4846 = vunpack.c.l.b16 %v3963
    %v4847 = vunpack.c.h.b16 %v3963
    %v4848 = vunpack.c.l.b16 %v3964
    %v4849 = vunpack.c.h.b16 %v3964
    %v4850 = vunpack.c.l.b16 %v3965
    %v4851 = vunpack.c.h.b16 %v3965
    %v4852 = vunpack.c.l.b16 %v3966
    %v4853 = vunpack.c.h.b16 %v3966
    %v4854 = vunpack.c.l.b16 %v3967
    %v4855 = vunpack.c.h.b16 %v3967
    %v4856 = vunpack.c.l.b16 %v3968
    %v4857 = vunpack.c.h.b16 %v3968
    %v4858 = vunpack.c.l.b16 %v3969
    %v4859 = vunpack.c.h.b16 %v3969
    %v4860 = vunpack.c.l.b16 %v3970
    %v4861 = vunpack.c.h.b16 %v3970
    %v4862 = vunpack.c.l.b16 %v3971
    %v4863 = vunpack.c.h.b16 %v3971
    %v4864 = vunpack.c.l.b16 %v3972
    %v4865 = vunpack.c.h.b16 %v3972
    %v4866 = vunpack.c.l.b16 %v3973
    %v4867 = vunpack.c.h.b16 %v3973
    %v4868 = vunpack.c.l.b16 %v3974
    %v4869 = vunpack.c.h.b16 %v3974
    %v4870 = vunpack.c.l.b16 %v3975
    %v4871 = vunpack.c.h.b16 %v3975
    %v4872 = vunpack.c.l.b16 %v3976
    %v4873 = vunpack.c.h.b16 %v3976
    %v4874 = vunpack.c.l.b16 %v3977
    %v4875 = vunpack.c.h.b16 %v3977
    %v4876 = vunpack.c.l.b16 %v3978
    %v4877 = vunpack.c.h.b16 %v3978
    %v4878 = vunpack.c.l.b16 %v3979
    %v4879 = vunpack.c.h.b16 %v3979
    %v4880 = vunpack.c.l.b16 %v3980
    %v4881 = vunpack.c.h.b16 %v3980
    %v4882 = vunpack.c.l.b16 %v3981
    %v4883 = vunpack.c.h.b16 %v3981
    %v4884 = vunpack.c.l.b16 %v3982
    %v4885 = vunpack.c.h.b16 %v3982
    %v4886 = vunpack.c.l.b16 %v3983
    %v4887 = vunpack.c.h.b16 %v3983
    %v4888 = vunpack.c.l.b16 %v3984
    %v4889 = vunpack.c.h.b16 %v3984
    %v4890 = vunpack.c.l.b16 %v3985
    %v4891 = vunpack.c.h.b16 %v3985
    %v4892 = vunpack.c.l.b16 %v3986
    %v4893 = vunpack.c.h.b16 %v3986
    %v4894 = vunpack.c.l.b16 %v3987
    %v4895 = vunpack.c.h.b16 %v3987
    %v4896 = vunpack.c.l.b16 %v3988
    %v4897 = vunpack.c.h.b16 %v3988
    %v4898 = vunpack.c.l.b16 %v3989
    %v4899 = vunpack.c.h.b16 %v3989
    %v4900 = vunpack.c.l.b16 %v3990
    %v4901 = vunpack.c.h.b16 %v3990
    %v4902 = vunpack.c.l.b16 %v3991
    %v4903 = vunpack.c.h.b16 %v3991
    %v4904 = vunpack.c.l.b16 %v3992
    %v4905 = vunpack.c.h.b16 %v3992
    %v4906 = vunpack.c.l.b16 %v3993
    %v4907 = vunpack.c.h.b16 %v3993
    %v4908 = vunpack.c.l.b16 %v3994
    %v4909 = vunpack.c.h.b16 %v3994
    %v4910 = vunpack.c.l.b16 %v3995
    %v4911 = vunpack.c.h.b16 %v3995
    %v4912 = vunpack.c.l.b16 %v3996
    %v4913 = vunpack.c.h.b16 %v3996
    %v4914 = vunpack.c.l.b16 %v3997
    %v4915 = vunpack.c.h.b16 %v3997
    %v4916 = vunpack.c.l.b16 %v3998
    %v4917 = vunpack.c.h.b16 %v3998
    %v4918 = vunpack.c.l.b16 %v3999
    %v4919 = vunpack.c.h.b16 %v3999
    %v4920 = vunpack.c.l.b16 %v4000
    %v4921 = vunpack.c.h.b16 %v4000
    %v4922 = vunpack.c.l.b16 %v4001
    %v4923 = vunpack.c.h.b16 %v4001
    %v4924 = vunpack.c.l.b16 %v4002
    %v4925 = vunpack.c.h.b16 %v4002
    %v4926 = vunpack.c.l.b16 %v4003
    %v4927 = vunpack.c.h.b16 %v4003
    %v4928 = vunpack.c.l.b16 %v4004
    %v4929 = vunpack.c.h.b16 %v4004
    %v4930 = vunpack.c.l.b16 %v4005
    %v4931 = vunpack.c.h.b16 %v4005
    %v4932 = vunpack.c.l.b16 %v4006
    %v4933 = vunpack.c.h.b16 %v4006
    %v4934 = vunpack.c.l.b16 %v4007
    %v4935 = vunpack.c.h.b16 %v4007
    %v4936 = vpack.c.b16 %v4372, %v4360
    %v4937 = vpack.c.b16 %v4373, %v4361
    %v4938 = vpack.c.b16 %v4374, %v4362
    %v4939 = vpack.c.b16 %v4375, %v4363
    %v4940 = vpack.c.b16 %v4376, %v4364
    %v4941 = vpack.c.b16 %v4377, %v4365
    %v4942 = vpack.c.b16 %v4378, %v4366
    %v4943 = vpack.c.b16 %v4379, %v4367
    %v4944 = vpack.c.b16 %v4380, %v4368
    %v4945 = vpack.c.b16 %v4381, %v4369
    %v4946 = vpack.c.b16 %v4382, %v4370
    %v4947 = vpack.c.b16 %v4383, %v4371
    %v4948 = vpack.c.b16 %v4396, %v4384
    %v4949 = vpack.c.b16 %v4397, %v4385
    %v4950 = vpack.c.b16 %v4398, %v4386
    %v4951 = vpack.c.b16 %v4399, %v4387
    %v4952 = vpack.c.b16 %v4400, %v4388
    %v4953 = vpack.c.b16 %v4401, %v4389
    %v4954 = vpack.c.b16 %v4402, %v4390
    %v4955 = vpack.c.b16 %v4403, %v4391
    %v4956 = vpack.c.b16 %v4404, %v4392
    %v4957 = vpack.c.b16 %v4405, %v4393
    %v4958 = vpack.c.b16 %v4406, %v4394
    %v4959 = vpack.c.b16 %v4407, %v4395
    %v4960 = vpack.c.b16 %v4420, %v4408
    %v4961 = vpack.c.b16 %v4421, %v4409
    %v4962 = vpack.c.b16 %v4422, %v4410
    %v4963 = vpack.c.b16 %v4423, %v4411
    %v4964 = vpack.c.b16 %v4424, %v4412
    %v4965 = vpack.c.b16 %v4425, %v4413
    %v4966 = vpack.c.b16 %v4426, %v4414
    %v4967 = vpack.c.b16 %v4427, %v4415
    %v4968 = vpack.c.b16 %v4428, %v4416
    %v4969 = vpack.c.b16 %v4429, %v4417
    %v4970 = vpack.c.b16 %v4430, %v4418
    %v4971 = vpack.c.b16 %v4431, %v4419
    %v4972 = vpack.c.b16 %v4444, %v4432
    %v4973 = vpack.c.b16 %v4445, %v4433
    %v4974 = vpack.c.b16 %v4446, %v4434
    %v4975 = vpack.c.b16 %v4447, %v4435
    %v4976 = vpack.c.b16 %v4448, %v4436
    %v4977 = vpack.c.b16 %v4449, %v4437
    %v4978 = vpack.c.b16 %v4450, %v4438
    %v4979 = vpack.c.b16 %v4451, %v4439
    %v4980 = vpack.c.b16 %v4452, %v4440
    %v4981 = vpack.c.b16 %v4453, %v4441
    %v4982 = vpack.c.b16 %v4454, %v4442
    %v4983 = vpack.c.b16 %v4455, %v4443
    %v4984 = vpack.c.b16 %v4468, %v4456
    %v4985 = vpack.c.b16 %v4469, %v4457
    %v4986 = vpack.c.b16 %v4470, %v4458
    %v4987 = vpack.c.b16 %v4471, %v4459
    %v4988 = vpack.c.b16 %v4472, %v4460
    %v4989 = vpack.c.b16 %v4473, %v4461
    %v4990 = vpack.c.b16 %v4474, %v4462
    %v4991 = vpack.c.b16 %v4475, %v4463
    %v4992 = vpack.c.b16 %v4476, %v4464
    %v4993 = vpack.c.b16 %v4477, %v4465
    %v4994 = vpack.c.b16 %v4478, %v4466
    %v4995 = vpack.c.b16 %v4479, %v4467
    %v4996 = vpack.c.b16 %v4492, %v4480
    %v4997 = vpack.c.b16 %v4493, %v4481
    %v4998 = vpack.c.b16 %v4494, %v4482
    %v4999 = vpack.c.b16 %v4495, %v4483
    %v5000 = vpack.c.b16 %v4496, %v4484
    %v5001 = vpack.c.b16 %v4497, %v4485
    %v5002 = vpack.c.b16 %v4498, %v4486
    %v5003 = vpack.c.b16 %v4499, %v4487
    %v5004 = vpack.c.b16 %v4500, %v4488
    %v5005 = vpack.c.b16 %v4501, %v4489
    %v5006 = vpack.c.b16 %v4502, %v4490
    %v5007 = vpack.c.b16 %v4503, %v4491
    %v5008 = vpack.c.b16 %v4516, %v4504
    %v5009 = vpack.c.b16 %v4517, %v4505
    %v5010 = vpack.c.b16 %v4518, %v4506
    %v5011 = vpack.c.b16 %v4519, %v4507
    %v5012 = vpack.c.b16 %v4520, %v4508
    %v5013 = vpack.c.b16 %v4521, %v4509
    %v5014 = vpack.c.b16 %v4522, %v4510
    %v5015 = vpack.c.b16 %v4523, %v4511
    %v5016 = vpack.c.b16 %v4524, %v4512
    %v5017 = vpack.c.b16 %v4525, %v4513
    %v5018 = vpack.c.b16 %v4526, %v4514
    %v5019 = vpack.c.b16 %v4527, %v4515
    %v5020 = vpack.c.b16 %v4540, %v4528
    %v5021 = vpack.c.b16 %v4541, %v4529
    %v5022 = vpack.c.b16 %v4542, %v4530
    %v5023 = vpack.c.b16 %v4543, %v4531
    %v5024 = vpack.c.b16 %v4544, %v4532
    %v5025 = vpack.c.b16 %v4545, %v4533
    %v5026 = vpack.c.b16 %v4546, %v4534
    %v5027 = vpack.c.b16 %v4547, %v4535
    %v5028 = vpack.c.b16 %v4548, %v4536
    %v5029 = vpack.c.b16 %v4549, %v4537
    %v5030 = vpack.c.b16 %v4550, %v4538
    %v5031 = vpack.c.b16 %v4551, %v4539
    %v5032 = vpack.c.b16 %v4564, %v4552
    %v5033 = vpack.c.b16 %v4565, %v4553
    %v5034 = vpack.c.b16 %v4566, %v4554
    %v5035 = vpack.c.b16 %v4567, %v4555
    %v5036 = vpack.c.b16 %v4568, %v4556
    %v5037 = vpack.c.b16 %v4569, %v4557
    %v5038 = vpack.c.b16 %v4570, %v4558
    %v5039 = vpack.c.b16 %v4571, %v4559
    %v5040 = vpack.c.b16 %v4572, %v4560
    %v5041 = vpack.c.b16 %v4573, %v4561
    %v5042 = vpack.c.b16 %v4574, %v4562
    %v5043 = vpack.c.b16 %v4575, %v4563
    %v5044 = vpack.c.b16 %v4588, %v4576
    %v5045 = vpack.c.b16 %v4589, %v4577
    %v5046 = vpack.c.b16 %v4590, %v4578
    %v5047 = vpack.c.b16 %v4591, %v4579
    %v5048 = vpack.c.b16 %v4592, %v4580
    %v5049 = vpack.c.b16 %v4593, %v4581
    %v5050 = vpack.c.b16 %v4594, %v4582
    %v5051 = vpack.c.b16 %v4595, %v4583
    %v5052 = vpack.c.b16 %v4596, %v4584
    %v5053 = vpack.c.b16 %v4597, %v4585
    %v5054 = vpack.c.b16 %v4598, %v4586
    %v5055 = vpack.c.b16 %v4599, %v4587
    %v5056 = vpack.c.b16 %v4612, %v4600
    %v5057 = vpack.c.b16 %v4613, %v4601
    %v5058 = vpack.c.b16 %v4614, %v4602
    %v5059 = vpack.c.b16 %v4615, %v4603
    %v5060 = vpack.c.b16 %v4616, %v4604
    %v5061 = vpack.c.b16 %v4617, %v4605
    %v5062 = vpack.c.b16 %v4618, %v4606
    %v5063 = vpack.c.b16 %v4619, %v4607
    %v5064 = vpack.c.b16 %v4620, %v4608
    %v5065 = vpack.c.b16 %v4621, %v4609
    %v5066 = vpack.c.b16 %v4622, %v4610
    %v5067 = vpack.c.b16 %v4623, %v4611
    %v5068 = vpack.c.b16 %v4636, %v4624
    %v5069 = vpack.c.b16 %v4637, %v4625
    %v5070 = vpack.c.b16 %v4638, %v4626
    %v5071 = vpack.c.b16 %v4639, %v4627
    %v5072 = vpack.c.b16 %v4640, %v4628
    %v5073 = vpack.c.b16 %v4641, %v4629
    %v5074 = vpack.c.b16 %v4642, %v4630
    %v5075 = vpack.c.b16 %v4643, %v4631
    %v5076 = vpack.c.b16 %v4644, %v4632
    %v5077 = vpack.c.b16 %v4645, %v4633
    %v5078 = vpack.c.b16 %v4646, %v4634
    %v5079 = vpack.c.b16 %v4647, %v4635
    %v5080 = vpack.c.b16 %v4660, %v4648
    %v5081 = vpack.c.b16 %v4661, %v4649
    %v5082 = vpack.c.b16 %v4662, %v4650
    %v5083 = vpack.c.b16 %v4663, %v4651
    %v5084 = vpack.c.b16 %v4664, %v4652
    %v5085 = vpack.c.b16 %v4665, %v4653
    %v5086 = vpack.c.b16 %v4666, %v4654
    %v5087 = vpack.c.b16 %v4667, %v4655
    %v5088 = vpack.c.b16 %v4668, %v4656
    %v5089 = vpack.c.b16 %v4669, %v4657
    %v5090 = vpack.c.b16 %v4670, %v4658
    %v5091 = vpack.c.b16 %v4671, %v4659
    %v5092 = vpack.c.b16 %v4684, %v4672
    %v5093 = vpack.c.b16 %v4685, %v4673
    %v5094 = vpack.c.b16 %v4686, %v4674
    %v5095 = vpack.c.b16 %v4687, %v4675
    %v5096 = vpack.c.b16 %v4688, %v4676
    %v5097 = vpack.c.b16 %v4689, %v4677
    %v5098 = vpack.c.b16 %v4690, %v4678
    %v5099 = vpack.c.b16 %v4691, %v4679
    %v5100 = vpack.c.b16 %v4692, %v4680
    %v5101 = vpack.c.b16 %v4693, %v4681
    %v5102 = vpack.c.b16 %v4694, %v4682
    %v5103 = vpack.c.b16 %v4695, %v4683
    %v5104 = vpack.c.b16 %v4708, %v4696
    %v5105 = vpack.c.b16 %v4709, %v4697
    %v5106 = vpack.c.b16 %v4710, %v4698
    %v5107 = vpack.c.b16 %v4711, %v4699
    %v5108 = vpack.c.b16 %v4712, %v4700
    %v5109 = vpack.c.b16 %v4713, %v4701
    %v5110 = vpack.c.b16 %v4714, %v4702
    %v5111 = vpack.c.b16 %v4715, %v4703
    %v5112 = vpack.c.b16 %v4716, %v4704
    %v5113 = vpack.c.b16 %v4717, %v4705
    %v5114 = vpack.c.b16 %v4718, %v4706
    %v5115 = vpack.c.b16 %v4719, %v4707
    %v5116 = vpack.c.b16 %v4732, %v4720
    %v5117 = vpack.c.b16 %v4733, %v4721
    %v5118 = vpack.c.b16 %v4734, %v4722
    %v5119 = vpack.c.b16 %v4735, %v4723
    %v5120 = vpack.c.b16 %v4736, %v4724
    %v5121 = vpack.c.b16 %v4737, %v4725
    %v5122 = vpack.c.b16 %v4738, %v4726
    %v5123 = vpack.c.b16 %v4739, %v4727
    %v5124 = vpack.c.b16 %v4740, %v4728
    %v5125 = vpack.c.b16 %v4741, %v4729
    %v5126 = vpack.c.b16 %v4742, %v4730
    %v5127 = vpack.c.b16 %v4743, %v4731
    %v5128 = vpack.c.b16 %v4756, %v4744
    %v5129 = vpack.c.b16 %v4757, %v4745
    %v5130 = vpack.c.b16 %v4758, %v4746
    %v5131 = vpack.c.b16 %v4759, %v4747
    %v5132 = vpack.c.b16 %v4760, %v4748
    %v5133 = vpack.c.b16 %v4761, %v4749
    %v5134 = vpack.c.b16 %v4762, %v4750
    %v5135 = vpack.c.b16 %v4763, %v4751
    %v5136 = vpack.c.b16 %v4764, %v4752
    %v5137 = vpack.c.b16 %v4765, %v4753
    %v5138 = vpack.c.b16 %v4766, %v4754
    %v5139 = vpack.c.b16 %v4767, %v4755
    %v5140 = vpack.c.b16 %v4780, %v4768
    %v5141 = vpack.c.b16 %v4781, %v4769
    %v5142 = vpack.c.b16 %v4782, %v4770
    %v5143 = vpack.c.b16 %v4783, %v4771
    %v5144 = vpack.c.b16 %v4784, %v4772
    %v5145 = vpack.c.b16 %v4785, %v4773
    %v5146 = vpack.c.b16 %v4786, %v4774
    %v5147 = vpack.c.b16 %v4787, %v4775
    %v5148 = vpack.c.b16 %v4788, %v4776
    %v5149 = vpack.c.b16 %v4789, %v4777
    %v5150 = vpack.c.b16 %v4790, %v4778
    %v5151 = vpack.c.b16 %v4791, %v4779
    %v5152 = vpack.c.b16 %v4804, %v4792
    %v5153 = vpack.c.b16 %v4805, %v4793
    %v5154 = vpack.c.b16 %v4806, %v4794
    %v5155 = vpack.c.b16 %v4807, %v4795
    %v5156 = vpack.c.b16 %v4808, %v4796
    %v5157 = vpack.c.b16 %v4809, %v4797
    %v5158 = vpack.c.b16 %v4810, %v4798
    %v5159 = vpack.c.b16 %v4811, %v4799
    %v5160 = vpack.c.b16 %v4812, %v4800
    %v5161 = vpack.c.b16 %v4813, %v4801
    %v5162 = vpack.c.b16 %v4814, %v4802
    %v5163 = vpack.c.b16 %v4815, %v4803
    %v5164 = vpack.c.b16 %v4828, %v4816
    %v5165 = vpack.c.b16 %v4829, %v4817
    %v5166 = vpack.c.b16 %v4830, %v4818
    %v5167 = vpack.c.b16 %v4831, %v4819
    %v5168 = vpack.c.b16 %v4832, %v4820
    %v5169 = vpack.c.b16 %v4833, %v4821
    %v5170 = vpack.c.b16 %v4834, %v4822
    %v5171 = vpack.c.b16 %v4835, %v4823
    %v5172 = vpack.c.b16 %v4836, %v4824
    %v5173 = vpack.c.b16 %v4837, %v4825
    %v5174 = vpack.c.b16 %v4838, %v4826
    %v5175 = vpack.c.b16 %v4839, %v4827
    %v5176 = vpack.c.b16 %v4852, %v4840
    %v5177 = vpack.c.b16 %v4853, %v4841
    %v5178 = vpack.c.b16 %v4854, %v4842
    %v5179 = vpack.c.b16 %v4855, %v4843
    %v5180 = vpack.c.b16 %v4856, %v4844
    %v5181 = vpack.c.b16 %v4857, %v4845
    %v5182 = vpack.c.b16 %v4858, %v4846
    %v5183 = vpack.c.b16 %v4859, %v4847
    %v5184 = vpack.c.b16 %v4860, %v4848
    %v5185 = vpack.c.b16 %v4861, %v4849
    %v5186 = vpack.c.b16 %v4862, %v4850
    %v5187 = vpack.c.b16 %v4863, %v4851
    %v5188 = vpack.c.b16 %v4876, %v4864
    %v5189 = vpack.c.b16 %v4877, %v4865
    %v5190 = vpack.c.b16 %v4878, %v4866
    %v5191 = vpack.c.b16 %v4879, %v4867
    %v5192 = vpack.c.b16 %v4880, %v4868
    %v5193 = vpack.c.b16 %v4881, %v4869
    %v5194 = vpack.c.b16 %v4882, %v4870
    %v5195 = vpack.c.b16 %v4883, %v4871
    %v5196 = vpack.c.b16 %v4884, %v4872
    %v5197 = vpack.c.b16 %v4885, %v4873
    %v5198 = vpack.c.b16 %v4886, %v4874
    %v5199 = vpack.c.b16 %v4887, %v4875
    %v5200 = vpack.c.b16 %v4900, %v4888
    %v5201 = vpack.c.b16 %v4901, %v4889
    %v5202 = vpack.c.b16 %v4902, %v4890
    %v5203 = vpack.c.b16 %v4903, %v4891
    %v5204 = vpack.c.b16 %v4904, %v4892
    %v5205 = vpack.c.b16 %v4905, %v4893
    %v5206 = vpack.c.b16 %v4906, %v4894
    %v5207 = vpack.c.b16 %v4907, %v4895
    %v5208 = vpack.c.b16 %v4908, %v4896
    %v5209 = vpack.c.b16 %v4909, %v4897
    %v5210 = vpack.c.b16 %v4910, %v4898
    %v5211 = vpack.c.b16 %v4911, %v4899
    %v5212 = vpack.c.b16 %v4924, %v4912
    %v5213 = vpack.c.b16 %v4925, %v4913
    %v5214 = vpack.c.b16 %v4926, %v4914
    %v5215 = vpack.c.b16 %v4927, %v4915
    %v5216 = vpack.c.b16 %v4928, %v4916
    %v5217 = vpack.c.b16 %v4929, %v4917
    %v5218 = vpack.c.b16 %v4930, %v4918
    %v5219 = vpack.c.b16 %v4931, %v4919
    %v5220 = vpack.c.b16 %v4932, %v4920
    %v5221 = vpack.c.b16 %v4933, %v4921
    %v5222 = vpack.c.b16 %v4934, %v4922
    %v5223 = vpack.c.b16 %v4935, %v4923
    %5512 = vmatprep.subr.bf16.mxu0 %v4937
    %5513 = vmatpush1.bf16.msra.mxu0 %v4936
    %5514 = vmatprep.subr.bf16.mxu0 %v4949
    %5515 = vmatpush1.bf16.msra.mxu0 %v4948
    %5516 = vmatprep.subr.bf16.mxu0 %v4961
    %5517 = vmatpush1.bf16.msra.mxu0 %v4960
    %5518 = vmatprep.subr.bf16.mxu0 %v4973
    %5519 = vmatpush1.bf16.msra.mxu0 %v4972
    %5520 = vmatprep.subr.bf16.mxu0 %v4985
    %5521 = vmatpush1.bf16.msra.mxu0 %v4984
    %5522 = vmatprep.subr.bf16.mxu0 %v4997
    %5523 = vmatpush1.bf16.msra.mxu0 %v4996
    %5524 = vmatprep.subr.bf16.mxu0 %v5009
    %5525 = vmatpush1.bf16.msra.mxu0 %v5008
    %5526 = vmatprep.subr.bf16.mxu0 %v5021
    %5527 = vmatpush1.bf16.msra.mxu0 %v5020
    %5528 = vmatprep.subr.bf16.mxu0 %v5033
    %5529 = vmatpush1.bf16.msra.mxu0 %v5032
    %5530 = vmatprep.subr.bf16.mxu0 %v5045
    %5531 = vmatpush1.bf16.msra.mxu0 %v5044
    %5532 = vmatprep.subr.bf16.mxu0 %v5057
    %5533 = vmatpush1.bf16.msra.mxu0 %v5056
    %5534 = vmatprep.subr.bf16.mxu0 %v5069
    %5535 = vmatpush1.bf16.msra.mxu0 %v5068
    %5536 = vmatprep.subr.bf16.mxu0 %v5081
    %5537 = vmatpush1.bf16.msra.mxu0 %v5080
    %5538 = vmatprep.subr.bf16.mxu0 %v5093
    %5539 = vmatpush1.bf16.msra.mxu0 %v5092
    %5540 = vmatprep.subr.bf16.mxu0 %v5105
    %5541 = vmatpush1.bf16.msra.mxu0 %v5104
    %5542 = vmatprep.subr.bf16.mxu0 %v5117
    %5543 = vmatpush1.bf16.msra.mxu0 %v5116
    %5544 = vmatprep.mubr.bf16.mxu0 %v3718
    %5545 = vmatmul.mubr.bf16.gmra.mrb[0].mxu0 %v3717
    %v5546 = vpop.f32.mrb[0].mxu0
    %v5547 = vadd.f32 %v4015, %v5546
    %v5548 = vpop.f32.mrb[0].mxu0
    %v5549 = vadd.f32 %v4019, %v5548
    %v5550 = vpop.f32.mrb[0].mxu0
    %v5551 = vadd.f32 %v4015, %v5550
    %v5552 = vpop.f32.mrb[0].mxu0
    %v5553 = vadd.f32 %v4019, %v5552
    %5554 = vdwg.mxu0
    %5555 = vmatprep.subr.bf16.mxu0 %v5129
    %5556 = vmatpush1.bf16.msra.mxu0 %v5128
    %5557 = vmatprep.subr.bf16.mxu0 %v5141
    %5558 = vmatpush1.bf16.msra.mxu0 %v5140
    %5559 = vmatprep.subr.bf16.mxu0 %v5153
    %5560 = vmatpush1.bf16.msra.mxu0 %v5152
    %5561 = vmatprep.subr.bf16.mxu0 %v5165
    %5562 = vmatpush1.bf16.msra.mxu0 %v5164
    %5563 = vmatprep.subr.bf16.mxu0 %v5177
    %5564 = vmatpush1.bf16.msra.mxu0 %v5176
    %5565 = vmatprep.subr.bf16.mxu0 %v5189
    %5566 = vmatpush1.bf16.msra.mxu0 %v5188
    %5567 = vmatprep.subr.bf16.mxu0 %v5201
    %5568 = vmatpush1.bf16.msra.mxu0 %v5200
    %5569 = vmatprep.subr.bf16.mxu0 %v5213
    %5570 = vmatpush1.bf16.msra.mxu0 %v5212
    %5571 = vmatprep.subr.bf16.mxu0 0
    %5572 = vmatpush1.bf16.msra.mxu0 0
    %5573 = vmatprep.subr.bf16.mxu0 0
    %5574 = vmatpush1.bf16.msra.mxu0 0
    %5575 = vmatprep.subr.bf16.mxu0 0
    %5576 = vmatpush1.bf16.msra.mxu0 0
    %5577 = vmatprep.subr.bf16.mxu0 0
    %5578 = vmatpush1.bf16.msra.mxu0 0
    %5579 = vmatprep.subr.bf16.mxu0 0
    %5580 = vmatpush1.bf16.msra.mxu0 0
    %5581 = vmatprep.subr.bf16.mxu0 0
    %5582 = vmatpush1.bf16.msra.mxu0 0
    %5583 = vmatprep.subr.bf16.mxu0 0
    %5584 = vmatpush1.bf16.msra.mxu0 0
    %5585 = vmatprep.subr.bf16.mxu0 0
    %5586 = vmatpush1.bf16.msra.mxu0 0
    %5587 = vmatprep.mubr.bf16.mxu0 0
    %5588 = vmatmul.mubr.bf16.gmra.mrb[0].mxu0 %v3719
    %v5589 = vpop.f32.mrb[0].mxu0
    %v5590 = vadd.f32 %v5547, %v5589
    %v5591 = vpop.f32.mrb[0].mxu0
    %v5592 = vadd.f32 %v5549, %v5591
    %v5593 = vpop.f32.mrb[0].mxu0
    %v5594 = vadd.f32 %v5551, %v5593
    %v5595 = vpop.f32.mrb[0].mxu0
    %v5596 = vadd.f32 %v5553, %v5595
    %5597 = vdwg.mxu0
    %5598 = vmatprep.subr.bf16.mxu0 %v4939
    %5599 = vmatpush1.bf16.msra.mxu0 %v4938
    %5600 = vmatprep.subr.bf16.mxu0 %v4951
    %5601 = vmatpush1.bf16.msra.mxu0 %v4950
    %5602 = vmatprep.subr.bf16.mxu0 %v4963
    %5603 = vmatpush1.bf16.msra.mxu0 %v4962
    %5604 = vmatprep.subr.bf16.mxu0 %v4975
    %5605 = vmatpush1.bf16.msra.mxu0 %v4974
    %5606 = vmatprep.subr.bf16.mxu0 %v4987
    %5607 = vmatpush1.bf16.msra.mxu0 %v4986
    %5608 = vmatprep.subr.bf16.mxu0 %v4999
    %5609 = vmatpush1.bf16.msra.mxu0 %v4998
    %5610 = vmatprep.subr.bf16.mxu0 %v5011
    %5611 = vmatpush1.bf16.msra.mxu0 %v5010
    %5612 = vmatprep.subr.bf16.mxu0 %v5023
    %5613 = vmatpush1.bf16.msra.mxu0 %v5022
    %5614 = vmatprep.subr.bf16.mxu0 %v5035
    %5615 = vmatpush1.bf16.msra.mxu0 %v5034
    %5616 = vmatprep.subr.bf16.mxu0 %v5047
    %5617 = vmatpush1.bf16.msra.mxu0 %v5046
    %5618 = vmatprep.subr.bf16.mxu0 %v5059
    %5619 = vmatpush1.bf16.msra.mxu0 %v5058
    %5620 = vmatprep.subr.bf16.mxu0 %v5071
    %5621 = vmatpush1.bf16.msra.mxu0 %v5070
    %5622 = vmatprep.subr.bf16.mxu0 %v5083
    %5623 = vmatpush1.bf16.msra.mxu0 %v5082
    %5624 = vmatprep.subr.bf16.mxu0 %v5095
    %5625 = vmatpush1.bf16.msra.mxu0 %v5094
    %5626 = vmatprep.subr.bf16.mxu0 %v5107
    %5627 = vmatpush1.bf16.msra.mxu0 %v5106
    %5628 = vmatprep.subr.bf16.mxu0 %v5119
    %5629 = vmatpush1.bf16.msra.mxu0 %v5118
    %5630 = vmatprep.mubr.bf16.mxu0 %v3718
    %5631 = vmatmul.mubr.bf16.gmra.mrb[0].mxu0 %v3717
    %v5632 = vpop.f32.mrb[0].mxu0
    %v5633 = vadd.f32 %v4023, %v5632
    %v5634 = vpop.f32.mrb[0].mxu0
    %v5635 = vadd.f32 %v4027, %v5634
    %v5636 = vpop.f32.mrb[0].mxu0
    %v5637 = vadd.f32 %v4023, %v5636
    %v5638 = vpop.f32.mrb[0].mxu0
    %v5639 = vadd.f32 %v4027, %v5638
    %5640 = vdwg.mxu0
    %5641 = vmatprep.subr.bf16.mxu0 %v5131
    %5642 = vmatpush1.bf16.msra.mxu0 %v5130
    %5643 = vmatprep.subr.bf16.mxu0 %v5143
    %5644 = vmatpush1.bf16.msra.mxu0 %v5142
    %5645 = vmatprep.subr.bf16.mxu0 %v5155
    %5646 = vmatpush1.bf16.msra.mxu0 %v5154
    %5647 = vmatprep.subr.bf16.mxu0 %v5167
    %5648 = vmatpush1.bf16.msra.mxu0 %v5166
    %5649 = vmatprep.subr.bf16.mxu0 %v5179
    %5650 = vmatpush1.bf16.msra.mxu0 %v5178
    %5651 = vmatprep.subr.bf16.mxu0 %v5191
    %5652 = vmatpush1.bf16.msra.mxu0 %v5190
    %5653 = vmatprep.subr.bf16.mxu0 %v5203
    %5654 = vmatpush1.bf16.msra.mxu0 %v5202
    %5655 = vmatprep.subr.bf16.mxu0 %v5215
    %5656 = vmatpush1.bf16.msra.mxu0 %v5214
    %5657 = vmatprep.subr.bf16.mxu0 0
    %5658 = vmatpush1.bf16.msra.mxu0 0
    %5659 = vmatprep.subr.bf16.mxu0 0
    %5660 = vmatpush1.bf16.msra.mxu0 0
    %5661 = vmatprep.subr.bf16.mxu0 0
    %5662 = vmatpush1.bf16.msra.mxu0 0
    %5663 = vmatprep.subr.bf16.mxu0 0
    %5664 = vmatpush1.bf16.msra.mxu0 0
    %5665 = vmatprep.subr.bf16.mxu0 0
    %5666 = vmatpush1.bf16.msra.mxu0 0
    %5667 = vmatprep.subr.bf16.mxu0 0
    %5668 = vmatpush1.bf16.msra.mxu0 0
    %5669 = vmatprep.subr.bf16.mxu0 0
    %5670 = vmatpush1.bf16.msra.mxu0 0
    %5671 = vmatprep.subr.bf16.mxu0 0
    %5672 = vmatpush1.bf16.msra.mxu0 0
    %5673 = vmatprep.mubr.bf16.mxu0 0
    %5674 = vmatmul.mubr.bf16.gmra.mrb[0].mxu0 %v3719
    %v5675 = vpop.f32.mrb[0].mxu0
    %v5676 = vadd.f32 %v5633, %v5675
    %v5677 = vpop.f32.mrb[0].mxu0
    %v5678 = vadd.f32 %v5635, %v5677
    %v5679 = vpop.f32.mrb[0].mxu0
    %v5680 = vadd.f32 %v5637, %v5679
    %v5681 = vpop.f32.mrb[0].mxu0
    %v5682 = vadd.f32 %v5639, %v5681
    %5683 = vdwg.mxu0
    %5684 = vmatprep.subr.bf16.mxu0 %v4941
    %5685 = vmatpush1.bf16.msra.mxu0 %v4940
    %5686 = vmatprep.subr.bf16.mxu0 %v4953
    %5687 = vmatpush1.bf16.msra.mxu0 %v4952
    %5688 = vmatprep.subr.bf16.mxu0 %v4965
    %5689 = vmatpush1.bf16.msra.mxu0 %v4964
    %5690 = vmatprep.subr.bf16.mxu0 %v4977
    %5691 = vmatpush1.bf16.msra.mxu0 %v4976
    %5692 = vmatprep.subr.bf16.mxu0 %v4989
    %5693 = vmatpush1.bf16.msra.mxu0 %v4988
    %5694 = vmatprep.subr.bf16.mxu0 %v5001
    %5695 = vmatpush1.bf16.msra.mxu0 %v5000
    %5696 = vmatprep.subr.bf16.mxu0 %v5013
    %5697 = vmatpush1.bf16.msra.mxu0 %v5012
    %5698 = vmatprep.subr.bf16.mxu0 %v5025
    %5699 = vmatpush1.bf16.msra.mxu0 %v5024
    %5700 = vmatprep.subr.bf16.mxu0 %v5037
    %5701 = vmatpush1.bf16.msra.mxu0 %v5036
    %5702 = vmatprep.subr.bf16.mxu0 %v5049
    %5703 = vmatpush1.bf16.msra.mxu0 %v5048
    %5704 = vmatprep.subr.bf16.mxu0 %v5061
    %5705 = vmatpush1.bf16.msra.mxu0 %v5060
    %5706 = vmatprep.subr.bf16.mxu0 %v5073
    %5707 = vmatpush1.bf16.msra.mxu0 %v5072
    %5708 = vmatprep.subr.bf16.mxu0 %v5085
    %5709 = vmatpush1.bf16.msra.mxu0 %v5084
    %5710 = vmatprep.subr.bf16.mxu0 %v5097
    %5711 = vmatpush1.bf16.msra.mxu0 %v5096
    %5712 = vmatprep.subr.bf16.mxu0 %v5109
    %5713 = vmatpush1.bf16.msra.mxu0 %v5108
    %5714 = vmatprep.subr.bf16.mxu0 %v5121
    %5715 = vmatpush1.bf16.msra.mxu0 %v5120
    %5716 = vmatprep.mubr.bf16.mxu0 %v3718
    %5717 = vmatmul.mubr.bf16.gmra.mrb[0].mxu0 %v3717
    %v5718 = vpop.f32.mrb[0].mxu0
    %v5719 = vadd.f32 %v4031, %v5718
    %v5720 = vpop.f32.mrb[0].mxu0
    %v5721 = vadd.f32 %v4035, %v5720
    %v5722 = vpop.f32.mrb[0].mxu0
    %v5723 = vadd.f32 %v4031, %v5722
    %v5724 = vpop.f32.mrb[0].mxu0
    %v5725 = vadd.f32 %v4035, %v5724
    %5726 = vdwg.mxu0
    %5727 = vmatprep.subr.bf16.mxu0 %v5133
    %5728 = vmatpush1.bf16.msra.mxu0 %v5132
    %5729 = vmatprep.subr.bf16.mxu0 %v5145
    %5730 = vmatpush1.bf16.msra.mxu0 %v5144
    %5731 = vmatprep.subr.bf16.mxu0 %v5157
    %5732 = vmatpush1.bf16.msra.mxu0 %v5156
    %5733 = vmatprep.subr.bf16.mxu0 %v5169
    %5734 = vmatpush1.bf16.msra.mxu0 %v5168
    %5735 = vmatprep.subr.bf16.mxu0 %v5181
    %5736 = vmatpush1.bf16.msra.mxu0 %v5180
    %5737 = vmatprep.subr.bf16.mxu0 %v5193
    %5738 = vmatpush1.bf16.msra.mxu0 %v5192
    %5739 = vmatprep.subr.bf16.mxu0 %v5205
    %5740 = vmatpush1.bf16.msra.mxu0 %v5204
    %5741 = vmatprep.subr.bf16.mxu0 %v5217
    %5742 = vmatpush1.bf16.msra.mxu0 %v5216
    %5743 = vmatprep.subr.bf16.mxu0 0
    %5744 = vmatpush1.bf16.msra.mxu0 0
    %5745 = vmatprep.subr.bf16.mxu0 0
    %5746 = vmatpush1.bf16.msra.mxu0 0
    %5747 = vmatprep.subr.bf16.mxu0 0
    %5748 = vmatpush1.bf16.msra.mxu0 0
    %5749 = vmatprep.subr.bf16.mxu0 0
    %5750 = vmatpush1.bf16.msra.mxu0 0
    %5751 = vmatprep.subr.bf16.mxu0 0
    %5752 = vmatpush1.bf16.msra.mxu0 0
    %5753 = vmatprep.subr.bf16.mxu0 0
    %5754 = vmatpush1.bf16.msra.mxu0 0
    %5755 = vmatprep.subr.bf16.mxu0 0
    %5756 = vmatpush1.bf16.msra.mxu0 0
    %5757 = vmatprep.subr.bf16.mxu0 0
    %5758 = vmatpush1.bf16.msra.mxu0 0
    %5759 = vmatprep.mubr.bf16.mxu0 0
    %5760 = vmatmul.mubr.bf16.gmra.mrb[0].mxu0 %v3719
    %v5761 = vpop.f32.mrb[0].mxu0
    %v5762 = vadd.f32 %v5719, %v5761
    %v5763 = vpop.f32.mrb[0].mxu0
    %v5764 = vadd.f32 %v5721, %v5763
    %v5765 = vpop.f32.mrb[0].mxu0
    %v5766 = vadd.f32 %v5723, %v5765
    %v5767 = vpop.f32.mrb[0].mxu0
    %v5768 = vadd.f32 %v5725, %v5767
    %5769 = vdwg.mxu0
    %5770 = vmatprep.subr.bf16.mxu0 %v4943
    %5771 = vmatpush1.bf16.msra.mxu0 %v4942
    %5772 = vmatprep.subr.bf16.mxu0 %v4955
    %5773 = vmatpush1.bf16.msra.mxu0 %v4954
    %5774 = vmatprep.subr.bf16.mxu0 %v4967
    %5775 = vmatpush1.bf16.msra.mxu0 %v4966
    %5776 = vmatprep.subr.bf16.mxu0 %v4979
    %5777 = vmatpush1.bf16.msra.mxu0 %v4978
    %5778 = vmatprep.subr.bf16.mxu0 %v4991
    %5779 = vmatpush1.bf16.msra.mxu0 %v4990
    %5780 = vmatprep.subr.bf16.mxu0 %v5003
    %5781 = vmatpush1.bf16.msra.mxu0 %v5002
    %5782 = vmatprep.subr.bf16.mxu0 %v5015
    %5783 = vmatpush1.bf16.msra.mxu0 %v5014
    %5784 = vmatprep.subr.bf16.mxu0 %v5027
    %5785 = vmatpush1.bf16.msra.mxu0 %v5026
    %5786 = vmatprep.subr.bf16.mxu0 %v5039
    %5787 = vmatpush1.bf16.msra.mxu0 %v5038
    %5788 = vmatprep.subr.bf16.mxu0 %v5051
    %5789 = vmatpush1.bf16.msra.mxu0 %v5050
    %5790 = vmatprep.subr.bf16.mxu0 %v5063
    %5791 = vmatpush1.bf16.msra.mxu0 %v5062
    %5792 = vmatprep.subr.bf16.mxu0 %v5075
    %5793 = vmatpush1.bf16.msra.mxu0 %v5074
    %5794 = vmatprep.subr.bf16.mxu0 %v5087
    %5795 = vmatpush1.bf16.msra.mxu0 %v5086
    %5796 = vmatprep.subr.bf16.mxu0 %v5099
    %5797 = vmatpush1.bf16.msra.mxu0 %v5098
    %5798 = vmatprep.subr.bf16.mxu0 %v5111
    %5799 = vmatpush1.bf16.msra.mxu0 %v5110
    %5800 = vmatprep.subr.bf16.mxu0 %v5123
    %5801 = vmatpush1.bf16.msra.mxu0 %v5122
    %5802 = vmatprep.mubr.bf16.mxu0 %v3718
    %5803 = vmatmul.mubr.bf16.gmra.mrb[0].mxu0 %v3717
    %v5804 = vpop.f32.mrb[0].mxu0
    %v5805 = vadd.f32 %v4039, %v5804
    %v5806 = vpop.f32.mrb[0].mxu0
    %v5807 = vadd.f32 %v4043, %v5806
    %v5808 = vpop.f32.mrb[0].mxu0
    %v5809 = vadd.f32 %v4039, %v5808
    %v5810 = vpop.f32.mrb[0].mxu0
    %v5811 = vadd.f32 %v4043, %v5810
    %5812 = vdwg.mxu0
    %5813 = vmatprep.subr.bf16.mxu0 %v5135
    %5814 = vmatpush1.bf16.msra.mxu0 %v5134
    %5815 = vmatprep.subr.bf16.mxu0 %v5147
    %5816 = vmatpush1.bf16.msra.mxu0 %v5146
    %5817 = vmatprep.subr.bf16.mxu0 %v5159
    %5818 = vmatpush1.bf16.msra.mxu0 %v5158
    %5819 = vmatprep.subr.bf16.mxu0 %v5171
    %5820 = vmatpush1.bf16.msra.mxu0 %v5170
    %5821 = vmatprep.subr.bf16.mxu0 %v5183
    %5822 = vmatpush1.bf16.msra.mxu0 %v5182
    %5823 = vmatprep.subr.bf16.mxu0 %v5195
    %5824 = vmatpush1.bf16.msra.mxu0 %v5194
    %5825 = vmatprep.subr.bf16.mxu0 %v5207
    %5826 = vmatpush1.bf16.msra.mxu0 %v5206
    %5827 = vmatprep.subr.bf16.mxu0 %v5219
    %5828 = vmatpush1.bf16.msra.mxu0 %v5218
    %5829 = vmatprep.subr.bf16.mxu0 0
    %5830 = vmatpush1.bf16.msra.mxu0 0
    %5831 = vmatprep.subr.bf16.mxu0 0
    %5832 = vmatpush1.bf16.msra.mxu0 0
    %5833 = vmatprep.subr.bf16.mxu0 0
    %5834 = vmatpush1.bf16.msra.mxu0 0
    %5835 = vmatprep.subr.bf16.mxu0 0
    %5836 = vmatpush1.bf16.msra.mxu0 0
    %5837 = vmatprep.subr.bf16.mxu0 0
    %5838 = vmatpush1.bf16.msra.mxu0 0
    %5839 = vmatprep.subr.bf16.mxu0 0
    %5840 = vmatpush1.bf16.msra.mxu0 0
    %5841 = vmatprep.subr.bf16.mxu0 0
    %5842 = vmatpush1.bf16.msra.mxu0 0
    %5843 = vmatprep.subr.bf16.mxu0 0
    %5844 = vmatpush1.bf16.msra.mxu0 0
    %5845 = vmatprep.mubr.bf16.mxu0 0
    %5846 = vmatmul.mubr.bf16.gmra.mrb[0].mxu0 %v3719
    %v5847 = vpop.f32.mrb[0].mxu0
    %v5848 = vadd.f32 %v5805, %v5847
    %v5849 = vpop.f32.mrb[0].mxu0
    %v5850 = vadd.f32 %v5807, %v5849
    %v5851 = vpop.f32.mrb[0].mxu0
    %v5852 = vadd.f32 %v5809, %v5851
    %v5853 = vpop.f32.mrb[0].mxu0
    %v5854 = vadd.f32 %v5811, %v5853
    %5855 = vdwg.mxu0
    %5856 = vmatprep.subr.bf16.mxu0 %v4945
    %5857 = vmatpush1.bf16.msra.mxu0 %v4944
    %5858 = vmatprep.subr.bf16.mxu0 %v4957
    %5859 = vmatpush1.bf16.msra.mxu0 %v4956
    %5860 = vmatprep.subr.bf16.mxu0 %v4969
    %5861 = vmatpush1.bf16.msra.mxu0 %v4968
    %5862 = vmatprep.subr.bf16.mxu0 %v4981
    %5863 = vmatpush1.bf16.msra.mxu0 %v4980
    %5864 = vmatprep.subr.bf16.mxu0 %v4993
    %5865 = vmatpush1.bf16.msra.mxu0 %v4992
    %5866 = vmatprep.subr.bf16.mxu0 %v5005
    %5867 = vmatpush1.bf16.msra.mxu0 %v5004
    %5868 = vmatprep.subr.bf16.mxu0 %v5017
    %5869 = vmatpush1.bf16.msra.mxu0 %v5016
    %5870 = vmatprep.subr.bf16.mxu0 %v5029
    %5871 = vmatpush1.bf16.msra.mxu0 %v5028
    %5872 = vmatprep.subr.bf16.mxu0 %v5041
    %5873 = vmatpush1.bf16.msra.mxu0 %v5040
    %5874 = vmatprep.subr.bf16.mxu0 %v5053
    %5875 = vmatpush1.bf16.msra.mxu0 %v5052
    %5876 = vmatprep.subr.bf16.mxu0 %v5065
    %5877 = vmatpush1.bf16.msra.mxu0 %v5064
    %5878 = vmatprep.subr.bf16.mxu0 %v5077
    %5879 = vmatpush1.bf16.msra.mxu0 %v5076
    %5880 = vmatprep.subr.bf16.mxu0 %v5089
    %5881 = vmatpush1.bf16.msra.mxu0 %v5088
    %5882 = vmatprep.subr.bf16.mxu0 %v5101
    %5883 = vmatpush1.bf16.msra.mxu0 %v5100
    %5884 = vmatprep.subr.bf16.mxu0 %v5113
    %5885 = vmatpush1.bf16.msra.mxu0 %v5112
    %5886 = vmatprep.subr.bf16.mxu0 %v5125
    %5887 = vmatpush1.bf16.msra.mxu0 %v5124
    %5888 = vmatprep.mubr.bf16.mxu0 %v3718
    %5889 = vmatmul.mubr.bf16.gmra.mrb[0].mxu0 %v3717
    %v5890 = vpop.f32.mrb[0].mxu0
    %v5891 = vadd.f32 %v4047, %v5890
    %v5892 = vpop.f32.mrb[0].mxu0
    %v5893 = vadd.f32 %v4051, %v5892
    %v5894 = vpop.f32.mrb[0].mxu0
    %v5895 = vadd.f32 %v4047, %v5894
    %v5896 = vpop.f32.mrb[0].mxu0
    %v5897 = vadd.f32 %v4051, %v5896
    %5898 = vdwg.mxu0
    %5899 = vmatprep.subr.bf16.mxu0 %v5137
    %5900 = vmatpush1.bf16.msra.mxu0 %v5136
    %5901 = vmatprep.subr.bf16.mxu0 %v5149
    %5902 = vmatpush1.bf16.msra.mxu0 %v5148
    %5903 = vmatprep.subr.bf16.mxu0 %v5161
    %5904 = vmatpush1.bf16.msra.mxu0 %v5160
    %5905 = vmatprep.subr.bf16.mxu0 %v5173
    %5906 = vmatpush1.bf16.msra.mxu0 %v5172
    %5907 = vmatprep.subr.bf16.mxu0 %v5185
    %5908 = vmatpush1.bf16.msra.mxu0 %v5184
    %5909 = vmatprep.subr.bf16.mxu0 %v5197
    %5910 = vmatpush1.bf16.msra.mxu0 %v5196
    %5911 = vmatprep.subr.bf16.mxu0 %v5209
    %5912 = vmatpush1.bf16.msra.mxu0 %v5208
    %5913 = vmatprep.subr.bf16.mxu0 %v5221
    %5914 = vmatpush1.bf16.msra.mxu0 %v5220
    %5915 = vmatprep.subr.bf16.mxu0 0
    %5916 = vmatpush1.bf16.msra.mxu0 0
    %5917 = vmatprep.subr.bf16.mxu0 0
    %5918 = vmatpush1.bf16.msra.mxu0 0
    %5919 = vmatprep.subr.bf16.mxu0 0
    %5920 = vmatpush1.bf16.msra.mxu0 0
    %5921 = vmatprep.subr.bf16.mxu0 0
    %5922 = vmatpush1.bf16.msra.mxu0 0
    %5923 = vmatprep.subr.bf16.mxu0 0
    %5924 = vmatpush1.bf16.msra.mxu0 0
    %5925 = vmatprep.subr.bf16.mxu0 0
    %5926 = vmatpush1.bf16.msra.mxu0 0
    %5927 = vmatprep.subr.bf16.mxu0 0
    %5928 = vmatpush1.bf16.msra.mxu0 0
    %5929 = vmatprep.subr.bf16.mxu0 0
    %5930 = vmatpush1.bf16.msra.mxu0 0
    %5931 = vmatprep.mubr.bf16.mxu0 0
    %5932 = vmatmul.mubr.bf16.gmra.mrb[0].mxu0 %v3719
    %v5933 = vpop.f32.mrb[0].mxu0
    %v5934 = vadd.f32 %v5891, %v5933
    %v5935 = vpop.f32.mrb[0].mxu0
    %v5936 = vadd.f32 %v5893, %v5935
    %v5937 = vpop.f32.mrb[0].mxu0
    %v5938 = vadd.f32 %v5895, %v5937
    %v5939 = vpop.f32.mrb[0].mxu0
    %v5940 = vadd.f32 %v5897, %v5939
    %5941 = vdwg.mxu0
    %5942 = vmatprep.subr.bf16.mxu0 %v4947
    %5943 = vmatpush1.bf16.msra.mxu0 %v4946
    %5944 = vmatprep.subr.bf16.mxu0 %v4959
    %5945 = vmatpush1.bf16.msra.mxu0 %v4958
    %5946 = vmatprep.subr.bf16.mxu0 %v4971
    %5947 = vmatpush1.bf16.msra.mxu0 %v4970
    %5948 = vmatprep.subr.bf16.mxu0 %v4983
    %5949 = vmatpush1.bf16.msra.mxu0 %v4982
    %5950 = vmatprep.subr.bf16.mxu0 %v4995
    %5951 = vmatpush1.bf16.msra.mxu0 %v4994
    %5952 = vmatprep.subr.bf16.mxu0 %v5007
    %5953 = vmatpush1.bf16.msra.mxu0 %v5006
    %5954 = vmatprep.subr.bf16.mxu0 %v5019
    %5955 = vmatpush1.bf16.msra.mxu0 %v5018
    %5956 = vmatprep.subr.bf16.mxu0 %v5031
    %5957 = vmatpush1.bf16.msra.mxu0 %v5030
    %5958 = vmatprep.subr.bf16.mxu0 %v5043
    %5959 = vmatpush1.bf16.msra.mxu0 %v5042
    %5960 = vmatprep.subr.bf16.mxu0 %v5055
    %5961 = vmatpush1.bf16.msra.mxu0 %v5054
    %5962 = vmatprep.subr.bf16.mxu0 %v5067
    %5963 = vmatpush1.bf16.msra.mxu0 %v5066
    %5964 = vmatprep.subr.bf16.mxu0 %v5079
    %5965 = vmatpush1.bf16.msra.mxu0 %v5078
    %5966 = vmatprep.subr.bf16.mxu0 %v5091
    %5967 = vmatpush1.bf16.msra.mxu0 %v5090
    %5968 = vmatprep.subr.bf16.mxu0 %v5103
    %5969 = vmatpush1.bf16.msra.mxu0 %v5102
    %5970 = vmatprep.subr.bf16.mxu0 %v5115
    %5971 = vmatpush1.bf16.msra.mxu0 %v5114
    %5972 = vmatprep.subr.bf16.mxu0 %v5127
    %5973 = vmatpush1.bf16.msra.mxu0 %v5126
    %5974 = vmatprep.mubr.bf16.mxu0 %v3718
    %5975 = vmatmul.mubr.bf16.gmra.mrb[0].mxu0 %v3717
    %v5976 = vpop.f32.mrb[0].mxu0
    %v5977 = vadd.f32 %v4055, %v5976
    %v5978 = vpop.f32.mrb[0].mxu0
    %v5979 = vadd.f32 %v4059, %v5978
    %v5980 = vpop.f32.mrb[0].mxu0
    %v5981 = vadd.f32 %v4055, %v5980
    %v5982 = vpop.f32.mrb[0].mxu0
    %v5983 = vadd.f32 %v4059, %v5982
    %5984 = vdwg.mxu0
    %5985 = vmatprep.subr.bf16.mxu0 %v5139
    %5986 = vmatpush1.bf16.msra.mxu0 %v5138
    %5987 = vmatprep.subr.bf16.mxu0 %v5151
    %5988 = vmatpush1.bf16.msra.mxu0 %v5150
    %5989 = vmatprep.subr.bf16.mxu0 %v5163
    %5990 = vmatpush1.bf16.msra.mxu0 %v5162
    %5991 = vmatprep.subr.bf16.mxu0 %v5175
    %5992 = vmatpush1.bf16.msra.mxu0 %v5174
    %5993 = vmatprep.subr.bf16.mxu0 %v5187
    %5994 = vmatpush1.bf16.msra.mxu0 %v5186
    %5995 = vmatprep.subr.bf16.mxu0 %v5199
    %5996 = vmatpush1.bf16.msra.mxu0 %v5198
    %5997 = vmatprep.subr.bf16.mxu0 %v5211
    %5998 = vmatpush1.bf16.msra.mxu0 %v5210
    %5999 = vmatprep.subr.bf16.mxu0 %v5223
    %6000 = vmatpush1.bf16.msra.mxu0 %v5222
    %6001 = vmatprep.subr.bf16.mxu0 0
    %6002 = vmatpush1.bf16.msra.mxu0 0
    %6003 = vmatprep.subr.bf16.mxu0 0
    %6004 = vmatpush1.bf16.msra.mxu0 0
    %6005 = vmatprep.subr.bf16.mxu0 0
    %6006 = vmatpush1.bf16.msra.mxu0 0
    %6007 = vmatprep.subr.bf16.mxu0 0
    %6008 = vmatpush1.bf16.msra.mxu0 0
    %6009 = vmatprep.subr.bf16.mxu0 0
    %6010 = vmatpush1.bf16.msra.mxu0 0
    %6011 = vmatprep.subr.bf16.mxu0 0
    %6012 = vmatpush1.bf16.msra.mxu0 0
    %6013 = vmatprep.subr.bf16.mxu0 0
    %6014 = vmatpush1.bf16.msra.mxu0 0
    %6015 = vmatprep.subr.bf16.mxu0 0
    %6016 = vmatpush1.bf16.msra.mxu0 0
    %6017 = vmatprep.mubr.bf16.mxu0 0
    %6018 = vmatmul.mubr.bf16.gmra.mrb[0].mxu0 %v3719
    %v6019 = vpop.f32.mrb[0].mxu0
    %v6020 = vadd.f32 %v5977, %v6019
    %v6021 = vpop.f32.mrb[0].mxu0
    %v6022 = vadd.f32 %v5979, %v6021
    %v6023 = vpop.f32.mrb[0].mxu0
    %v6024 = vadd.f32 %v5981, %v6023
    %v6025 = vpop.f32.mrb[0].mxu0
    %v6026 = vadd.f32 %v5983, %v6025
    %6027 = vdwg.mxu0
    %v6028 = vmax.f32 %v5590, 0.0
    %v6029 = vmax.f32 %v5592, 0.0
    %v6030 = vmax.f32 %v5676, 0.0
    %v6031 = vmax.f32 %v5678, 0.0
    %v6032 = vmax.f32 %v5762, 0.0
    %v6033 = vmax.f32 %v5764, 0.0
    %v6034 = vmax.f32 %v5848, 0.0
    %v6035 = vmax.f32 %v5850, 0.0
    %v6036 = vmax.f32 %v5934, 0.0
    %v6037 = vmax.f32 %v5936, 0.0
    %v6038 = vmax.f32 %v6020, 0.0
    %v6039 = vmax.f32 %v6022, 0.0
    %v6040 = vmax.f32 %v5594, 0.0
    %v6041 = vmax.f32 %v5596, 0.0
    %v6042 = vmax.f32 %v5680, 0.0
    %v6043 = vmax.f32 %v5682, 0.0
    %v6044 = vmax.f32 %v5766, 0.0
    %v6045 = vmax.f32 %v5768, 0.0
    %v6046 = vmax.f32 %v5852, 0.0
    %v6047 = vmax.f32 %v5854, 0.0
    %v6048 = vmax.f32 %v5938, 0.0
    %v6049 = vmax.f32 %v5940, 0.0
    %v6050 = vmax.f32 %v6024, 0.0
    %v6051 = vmax.f32 %v6026, 0.0
    %v6052 = vpack.c.bf16 %v6040, %v6028
    %v6053 = vpack.c.bf16 %v6041, %v6029
    %v6054 = vpack.c.bf16 %v6042, %v6030
    %v6055 = vpack.c.bf16 %v6043, %v6031
    %v6056 = vpack.c.bf16 %v6044, %v6032
    %v6057 = vpack.c.bf16 %v6045, %v6033
    %v6058 = vpack.c.bf16 %v6046, %v6034
    %v6059 = vpack.c.bf16 %v6047, %v6035
    %v6060 = vpack.c.bf16 %v6048, %v6036
    %v6061 = vpack.c.bf16 %v6049, %v6037
    %v6062 = vpack.c.bf16 %v6050, %v6038
    %v6063 = vpack.c.bf16 %v6051, %v6039
    %v6064 = vld [vmem:[#allocation21] sm:$0xff]
    %v6065 = vld [vmem:[#allocation21 + $0x8] sm:$0xf]
    %v6066 = vld [vmem:[#allocation21 + $0xc] sm:$0xff]
    %v6067 = vld [vmem:[#allocation21 + $0x14] sm:$0xf]
    %v6068 = vld [vmem:[#allocation21 + $0x18] sm:$0xff]
    %v6069 = vld [vmem:[#allocation21 + $0x20] sm:$0xf]
    %v6070 = vld [vmem:[#allocation21 + $0x24] sm:$0xff]
    %v6071 = vld [vmem:[#allocation21 + $0x2c] sm:$0xf]
    %v6072 = vld [vmem:[#allocation21 + $0x30] sm:$0xff]
    %v6073 = vld [vmem:[#allocation21 + $0x38] sm:$0xf]
    %v6074 = vld [vmem:[#allocation21 + $0x3c] sm:$0xff]
    %v6075 = vld [vmem:[#allocation21 + $0x44] sm:$0xf]
    %v6076 = vld [vmem:[#allocation21 + $0x48] sm:$0xff]
    %v6077 = vld [vmem:[#allocation21 + $0x50] sm:$0xf]
    %v6078 = vld [vmem:[#allocation21 + $0x54] sm:$0xff]
    %v6079 = vld [vmem:[#allocation21 + $0x5c] sm:$0xf]
    %v6080 = vld [vmem:[#allocation21 + $0x60] sm:$0xff]
    %v6081 = vld [vmem:[#allocation21 + $0x68] sm:$0xf]
    %v6082 = vld [vmem:[#allocation21 + $0x6c] sm:$0xff]
    %v6083 = vld [vmem:[#allocation21 + $0x74] sm:$0xf]
    %v6084 = vld [vmem:[#allocation21 + $0x78] sm:$0xff]
    %v6085 = vld [vmem:[#allocation21 + $0x80] sm:$0xf]
    %v6086 = vld [vmem:[#allocation21 + $0x84] sm:$0xff]
    %v6087 = vld [vmem:[#allocation21 + $0x8c] sm:$0xf]
    %v6088 = vld [vmem:[#allocation21 + $0x90] sm:$0xff]
    %v6089 = vld [vmem:[#allocation21 + $0x98] sm:$0xf]
    %v6090 = vld [vmem:[#allocation21 + $0x9c] sm:$0xff]
    %v6091 = vld [vmem:[#allocation21 + $0xa4] sm:$0xf]
    %v6092 = vld [vmem:[#allocation21 + $0xa8] sm:$0xff]
    %v6093 = vld [vmem:[#allocation21 + $0xb0] sm:$0xf]
    %v6094 = vld [vmem:[#allocation21 + $0xb4] sm:$0xff]
    %v6095 = vld [vmem:[#allocation21 + $0xbc] sm:$0xf]
    %v6096 = vld [vmem:[#allocation21 + $0xc0] sm:$0xff]
    %v6097 = vld [vmem:[#allocation21 + $0xc8] sm:$0xf]
    %v6098 = vld [vmem:[#allocation21 + $0xcc] sm:$0xff]
    %v6099 = vld [vmem:[#allocation21 + $0xd4] sm:$0xf]
    %v6100 = vld [vmem:[#allocation21 + $0xd8] sm:$0xff]
    %v6101 = vld [vmem:[#allocation21 + $0xe0] sm:$0xf]
    %v6102 = vld [vmem:[#allocation21 + $0xe4] sm:$0xff]
    %v6103 = vld [vmem:[#allocation21 + $0xec] sm:$0xf]
    %v6104 = vld [vmem:[#allocation21 + $0xf0] sm:$0xff]
    %v6105 = vld [vmem:[#allocation21 + $0xf8] sm:$0xf]
    %v6106 = vld [vmem:[#allocation21 + $0xfc] sm:$0xff]
    %v6107 = vld [vmem:[#allocation21 + $0x104] sm:$0xf]
    %v6108 = vld [vmem:[#allocation21 + $0x108] sm:$0xff]
    %v6109 = vld [vmem:[#allocation21 + $0x110] sm:$0xf]
    %v6110 = vld [vmem:[#allocation21 + $0x114] sm:$0xff]
    %v6111 = vld [vmem:[#allocation21 + $0x11c] sm:$0xf]
    %v6112 = vld [vmem:[#allocation21 + $0x120] sm:$0xff]
    %v6113 = vld [vmem:[#allocation21 + $0x128] sm:$0xf]
    %v6114 = vld [vmem:[#allocation21 + $0x12c] sm:$0xff]
    %v6115 = vld [vmem:[#allocation21 + $0x134] sm:$0xf]
    %v6116 = vld [vmem:[#allocation21 + $0x138] sm:$0xff]
    %v6117 = vld [vmem:[#allocation21 + $0x140] sm:$0xf]
    %v6118 = vld [vmem:[#allocation21 + $0x144] sm:$0xff]
    %v6119 = vld [vmem:[#allocation21 + $0x14c] sm:$0xf]
    %v6120 = vld [vmem:[#allocation21 + $0x150] sm:$0xff]
    %v6121 = vld [vmem:[#allocation21 + $0x158] sm:$0xf]
    %v6122 = vld [vmem:[#allocation21 + $0x15c] sm:$0xff]
    %v6123 = vld [vmem:[#allocation21 + $0x164] sm:$0xf]
    %v6124 = vld [vmem:[#allocation21 + $0x168] sm:$0xff]
    %v6125 = vld [vmem:[#allocation21 + $0x170] sm:$0xf]
    %v6126 = vld [vmem:[#allocation21 + $0x174] sm:$0xff]
    %v6127 = vld [vmem:[#allocation21 + $0x17c] sm:$0xf]
    %v6128 = vld [vmem:[#allocation21 + $0x180] sm:$0xff]
    %v6129 = vld [vmem:[#allocation21 + $0x188] sm:$0xf]
    %v6130 = vld [vmem:[#allocation21 + $0x18c] sm:$0xff]
    %v6131 = vld [vmem:[#allocation21 + $0x194] sm:$0xf]
    %v6132 = vld [vmem:[#allocation21 + $0x198] sm:$0xff]
    %v6133 = vld [vmem:[#allocation21 + $0x1a0] sm:$0xf]
    %v6134 = vld [vmem:[#allocation21 + $0x1a4] sm:$0xff]
    %v6135 = vld [vmem:[#allocation21 + $0x1ac] sm:$0xf]
    %v6136 = vld [vmem:[#allocation21 + $0x1b0] sm:$0xff]
    %v6137 = vld [vmem:[#allocation21 + $0x1b8] sm:$0xf]
    %v6138 = vld [vmem:[#allocation21 + $0x1bc] sm:$0xff]
    %v6139 = vld [vmem:[#allocation21 + $0x1c4] sm:$0xf]
    %v6140 = vld [vmem:[#allocation21 + $0x1c8] sm:$0xff]
    %v6141 = vld [vmem:[#allocation21 + $0x1d0] sm:$0xf]
    %v6142 = vld [vmem:[#allocation21 + $0x1d4] sm:$0xff]
    %v6143 = vld [vmem:[#allocation21 + $0x1dc] sm:$0xf]
    %v6144 = vld [vmem:[#allocation21 + $0x1e0] sm:$0xff]
    %v6145 = vld [vmem:[#allocation21 + $0x1e8] sm:$0xf]
    %v6146 = vld [vmem:[#allocation21 + $0x1ec] sm:$0xff]
    %v6147 = vld [vmem:[#allocation21 + $0x1f4] sm:$0xf]
    %v6148 = vld [vmem:[#allocation21 + $0x1f8] sm:$0xff]
    %v6149 = vld [vmem:[#allocation21 + $0x200] sm:$0xf]
    %v6150 = vld [vmem:[#allocation21 + $0x204] sm:$0xff]
    %v6151 = vld [vmem:[#allocation21 + $0x20c] sm:$0xf]
    %v6152 = vld [vmem:[#allocation21 + $0x210] sm:$0xff]
    %v6153 = vld [vmem:[#allocation21 + $0x218] sm:$0xf]
    %v6154 = vld [vmem:[#allocation21 + $0x21c] sm:$0xff]
    %v6155 = vld [vmem:[#allocation21 + $0x224] sm:$0xf]
    %v6156 = vld [vmem:[#allocation21 + $0x228] sm:$0xff]
    %v6157 = vld [vmem:[#allocation21 + $0x230] sm:$0xf]
    %v6158 = vld [vmem:[#allocation21 + $0x234] sm:$0xff]
    %v6159 = vld [vmem:[#allocation21 + $0x23c] sm:$0xf]
    %v6160 = vld [vmem:[#allocation21 + $0x240] sm:$0xff]
    %v6161 = vld [vmem:[#allocation21 + $0x248] sm:$0xf]
    %v6162 = vld [vmem:[#allocation21 + $0x24c] sm:$0xff]
    %v6163 = vld [vmem:[#allocation21 + $0x254] sm:$0xf]
    %v6164 = vld [vmem:[#allocation21 + $0x258] sm:$0xff]
    %v6165 = vld [vmem:[#allocation21 + $0x260] sm:$0xf]
    %v6166 = vld [vmem:[#allocation21 + $0x264] sm:$0xff]
    %v6167 = vld [vmem:[#allocation21 + $0x26c] sm:$0xf]
    %v6168 = vld [vmem:[#allocation21 + $0x270] sm:$0xff]
    %v6169 = vld [vmem:[#allocation21 + $0x278] sm:$0xf]
    %v6170 = vld [vmem:[#allocation21 + $0x27c] sm:$0xff]
    %v6171 = vld [vmem:[#allocation21 + $0x284] sm:$0xf]
    %v6172 = vld [vmem:[#allocation21 + $0x288] sm:$0xff]
    %v6173 = vld [vmem:[#allocation21 + $0x290] sm:$0xf]
    %v6174 = vld [vmem:[#allocation21 + $0x294] sm:$0xff]
    %v6175 = vld [vmem:[#allocation21 + $0x29c] sm:$0xf]
    %v6176 = vld [vmem:[#allocation21 + $0x2a0] sm:$0xff]
    %v6177 = vld [vmem:[#allocation21 + $0x2a8] sm:$0xf]
    %v6178 = vld [vmem:[#allocation21 + $0x2ac] sm:$0xff]
    %v6179 = vld [vmem:[#allocation21 + $0x2b4] sm:$0xf]
    %v6180 = vld [vmem:[#allocation21 + $0x2b8] sm:$0xff]
    %v6181 = vld [vmem:[#allocation21 + $0x2c0] sm:$0xf]
    %v6182 = vld [vmem:[#allocation21 + $0x2c4] sm:$0xff]
    %v6183 = vld [vmem:[#allocation21 + $0x2cc] sm:$0xf]
    %v6184 = vld [vmem:[#allocation21 + $0x2d0] sm:$0xff]
    %v6185 = vld [vmem:[#allocation21 + $0x2d8] sm:$0xf]
    %v6186 = vld [vmem:[#allocation21 + $0x2dc] sm:$0xff]
    %v6187 = vld [vmem:[#allocation21 + $0x2e4] sm:$0xf]
    %v6188 = vld [vmem:[#allocation21 + $0x2e8] sm:$0xff]
    %v6189 = vld [vmem:[#allocation21 + $0x2f0] sm:$0xf]
    %v6190 = vld [vmem:[#allocation21 + $0x2f4] sm:$0xff]
    %v6191 = vld [vmem:[#allocation21 + $0x2fc] sm:$0xf]
    %v6192 = vld [vmem:[#allocation21 + $0x300] sm:$0xff]
    %v6193 = vld [vmem:[#allocation21 + $0x308] sm:$0xf]
    %v6194 = vld [vmem:[#allocation21 + $0x30c] sm:$0xff]
    %v6195 = vld [vmem:[#allocation21 + $0x314] sm:$0xf]
    %v6196 = vld [vmem:[#allocation21 + $0x318] sm:$0xff]
    %v6197 = vld [vmem:[#allocation21 + $0x320] sm:$0xf]
    %v6198 = vld [vmem:[#allocation21 + $0x324] sm:$0xff]
    %v6199 = vld [vmem:[#allocation21 + $0x32c] sm:$0xf]
    %v6200 = vld [vmem:[#allocation21 + $0x330] sm:$0xff]
    %v6201 = vld [vmem:[#allocation21 + $0x338] sm:$0xf]
    %v6202 = vld [vmem:[#allocation21 + $0x33c] sm:$0xff]
    %v6203 = vld [vmem:[#allocation21 + $0x344] sm:$0xf]
    %v6204 = vld [vmem:[#allocation21 + $0x348] sm:$0xff]
    %v6205 = vld [vmem:[#allocation21 + $0x350] sm:$0xf]
    %v6206 = vld [vmem:[#allocation21 + $0x354] sm:$0xff]
    %v6207 = vld [vmem:[#allocation21 + $0x35c] sm:$0xf]
    %v6208 = vld [vmem:[#allocation21 + $0x360] sm:$0xff]
    %v6209 = vld [vmem:[#allocation21 + $0x368] sm:$0xf]
    %v6210 = vld [vmem:[#allocation21 + $0x36c] sm:$0xff]
    %v6211 = vld [vmem:[#allocation21 + $0x374] sm:$0xf]
    %v6212 = vld [vmem:[#allocation21 + $0x378] sm:$0xff]
    %v6213 = vld [vmem:[#allocation21 + $0x380] sm:$0xf]
    %v6214 = vld [vmem:[#allocation21 + $0x384] sm:$0xff]
    %v6215 = vld [vmem:[#allocation21 + $0x38c] sm:$0xf]
    %v6216 = vld [vmem:[#allocation21 + $0x390] sm:$0xff]
    %v6217 = vld [vmem:[#allocation21 + $0x398] sm:$0xf]
    %v6218 = vld [vmem:[#allocation21 + $0x39c] sm:$0xff]
    %v6219 = vld [vmem:[#allocation21 + $0x3a4] sm:$0xf]
    %v6220 = vld [vmem:[#allocation21 + $0x3a8] sm:$0xff]
    %v6221 = vld [vmem:[#allocation21 + $0x3b0] sm:$0xf]
    %v6222 = vld [vmem:[#allocation21 + $0x3b4] sm:$0xff]
    %v6223 = vld [vmem:[#allocation21 + $0x3bc] sm:$0xf]
    %v6224 = vld [vmem:[#allocation21 + $0x3c0] sm:$0xff]
    %v6225 = vld [vmem:[#allocation21 + $0x3c8] sm:$0xf]
    %v6226 = vld [vmem:[#allocation21 + $0x3cc] sm:$0xff]
    %v6227 = vld [vmem:[#allocation21 + $0x3d4] sm:$0xf]
    %v6228 = vld [vmem:[#allocation21 + $0x3d8] sm:$0xff]
    %v6229 = vld [vmem:[#allocation21 + $0x3e0] sm:$0xf]
    %v6230 = vld [vmem:[#allocation21 + $0x3e4] sm:$0xff]
    %v6231 = vld [vmem:[#allocation21 + $0x3ec] sm:$0xf]
    %v6232 = vld [vmem:[#allocation21 + $0x3f0] sm:$0xff]
    %v6233 = vld [vmem:[#allocation21 + $0x3f8] sm:$0xf]
    %v6234 = vld [vmem:[#allocation21 + $0x3fc] sm:$0xff]
    %v6235 = vld [vmem:[#allocation21 + $0x404] sm:$0xf]
    %v6236 = vld [vmem:[#allocation21 + $0x408] sm:$0xff]
    %v6237 = vld [vmem:[#allocation21 + $0x410] sm:$0xf]
    %v6238 = vld [vmem:[#allocation21 + $0x414] sm:$0xff]
    %v6239 = vld [vmem:[#allocation21 + $0x41c] sm:$0xf]
    %v6240 = vld [vmem:[#allocation21 + $0x420] sm:$0xff]
    %v6241 = vld [vmem:[#allocation21 + $0x428] sm:$0xf]
    %v6242 = vld [vmem:[#allocation21 + $0x42c] sm:$0xff]
    %v6243 = vld [vmem:[#allocation21 + $0x434] sm:$0xf]
    %v6244 = vld [vmem:[#allocation21 + $0x438] sm:$0xff]
    %v6245 = vld [vmem:[#allocation21 + $0x440] sm:$0xf]
    %v6246 = vld [vmem:[#allocation21 + $0x444] sm:$0xff]
    %v6247 = vld [vmem:[#allocation21 + $0x44c] sm:$0xf]
    %v6248 = vld [vmem:[#allocation21 + $0x450] sm:$0xff]
    %v6249 = vld [vmem:[#allocation21 + $0x458] sm:$0xf]
    %v6250 = vld [vmem:[#allocation21 + $0x45c] sm:$0xff]
    %v6251 = vld [vmem:[#allocation21 + $0x464] sm:$0xf]
    %v6252 = vld [vmem:[#allocation21 + $0x468] sm:$0xff]
    %v6253 = vld [vmem:[#allocation21 + $0x470] sm:$0xf]
    %v6254 = vld [vmem:[#allocation21 + $0x474] sm:$0xff]
    %v6255 = vld [vmem:[#allocation21 + $0x47c] sm:$0xf]
    %v6256 = vld [vmem:[#allocation21 + $0x480] sm:$0xff]
    %v6257 = vld [vmem:[#allocation21 + $0x488] sm:$0xf]
    %v6258 = vld [vmem:[#allocation21 + $0x48c] sm:$0xff]
    %v6259 = vld [vmem:[#allocation21 + $0x494] sm:$0xf]
    %v6260 = vld [vmem:[#allocation21 + $0x498] sm:$0xff]
    %v6261 = vld [vmem:[#allocation21 + $0x4a0] sm:$0xf]
    %v6262 = vld [vmem:[#allocation21 + $0x4a4] sm:$0xff]
    %v6263 = vld [vmem:[#allocation21 + $0x4ac] sm:$0xf]
    %v6264 = vld [vmem:[#allocation21 + $0x4b0] sm:$0xff]
    %v6265 = vld [vmem:[#allocation21 + $0x4b8] sm:$0xf]
    %v6266 = vld [vmem:[#allocation21 + $0x4bc] sm:$0xff]
    %v6267 = vld [vmem:[#allocation21 + $0x4c4] sm:$0xf]
    %v6268 = vld [vmem:[#allocation21 + $0x4c8] sm:$0xff]
    %v6269 = vld [vmem:[#allocation21 + $0x4d0] sm:$0xf]
    %v6270 = vld [vmem:[#allocation21 + $0x4d4] sm:$0xff]
    %v6271 = vld [vmem:[#allocation21 + $0x4dc] sm:$0xf]
    %v6272 = vld [vmem:[#allocation21 + $0x4e0] sm:$0xff]
    %v6273 = vld [vmem:[#allocation21 + $0x4e8] sm:$0xf]
    %v6274 = vld [vmem:[#allocation21 + $0x4ec] sm:$0xff]
    %v6275 = vld [vmem:[#allocation21 + $0x4f4] sm:$0xf]
    %v6276 = vld [vmem:[#allocation21 + $0x4f8] sm:$0xff]
    %v6277 = vld [vmem:[#allocation21 + $0x500] sm:$0xf]
    %v6278 = vld [vmem:[#allocation21 + $0x504] sm:$0xff]
    %v6279 = vld [vmem:[#allocation21 + $0x50c] sm:$0xf]
    %v6280 = vld [vmem:[#allocation21 + $0x510] sm:$0xff]
    %v6281 = vld [vmem:[#allocation21 + $0x518] sm:$0xf]
    %v6282 = vld [vmem:[#allocation21 + $0x51c] sm:$0xff]
    %v6283 = vld [vmem:[#allocation21 + $0x524] sm:$0xf]
    %v6284 = vld [vmem:[#allocation21 + $0x528] sm:$0xff]
    %v6285 = vld [vmem:[#allocation21 + $0x530] sm:$0xf]
    %v6286 = vld [vmem:[#allocation21 + $0x534] sm:$0xff]
    %v6287 = vld [vmem:[#allocation21 + $0x53c] sm:$0xf]
    %v6288 = vld [vmem:[#allocation21 + $0x540] sm:$0xff]
    %v6289 = vld [vmem:[#allocation21 + $0x548] sm:$0xf]
    %v6290 = vld [vmem:[#allocation21 + $0x54c] sm:$0xff]
    %v6291 = vld [vmem:[#allocation21 + $0x554] sm:$0xf]
    %v6292 = vld [vmem:[#allocation21 + $0x558] sm:$0xff]
    %v6293 = vld [vmem:[#allocation21 + $0x560] sm:$0xf]
    %v6294 = vld [vmem:[#allocation21 + $0x564] sm:$0xff]
    %v6295 = vld [vmem:[#allocation21 + $0x56c] sm:$0xf]
    %v6296 = vld [vmem:[#allocation21 + $0x570] sm:$0xff]
    %v6297 = vld [vmem:[#allocation21 + $0x578] sm:$0xf]
    %v6298 = vld [vmem:[#allocation21 + $0x57c] sm:$0xff]
    %v6299 = vld [vmem:[#allocation21 + $0x584] sm:$0xf]
    %v6300 = vld [vmem:[#allocation21 + $0x588] sm:$0xff]
    %v6301 = vld [vmem:[#allocation21 + $0x590] sm:$0xf]
    %v6302 = vld [vmem:[#allocation21 + $0x594] sm:$0xff]
    %v6303 = vld [vmem:[#allocation21 + $0x59c] sm:$0xf]
    %v6304 = vld [vmem:[#allocation21 + $0x5a0] sm:$0xff]
    %v6305 = vld [vmem:[#allocation21 + $0x5a8] sm:$0xf]
    %v6306 = vld [vmem:[#allocation21 + $0x5ac] sm:$0xff]
    %v6307 = vld [vmem:[#allocation21 + $0x5b4] sm:$0xf]
    %v6308 = vld [vmem:[#allocation21 + $0x5b8] sm:$0xff]
    %v6309 = vld [vmem:[#allocation21 + $0x5c0] sm:$0xf]
    %v6310 = vld [vmem:[#allocation21 + $0x5c4] sm:$0xff]
    %v6311 = vld [vmem:[#allocation21 + $0x5cc] sm:$0xf]
    %v6312 = vld [vmem:[#allocation21 + $0x5d0] sm:$0xff]
    %v6313 = vld [vmem:[#allocation21 + $0x5d8] sm:$0xf]
    %v6314 = vld [vmem:[#allocation21 + $0x5dc] sm:$0xff]
    %v6315 = vld [vmem:[#allocation21 + $0x5e4] sm:$0xf]
    %v6316 = vld [vmem:[#allocation21 + $0x5e8] sm:$0xff]
    %v6317 = vld [vmem:[#allocation21 + $0x5f0] sm:$0xf]
    %v6318 = vld [vmem:[#allocation21 + $0x5f4] sm:$0xff]
    %v6319 = vld [vmem:[#allocation21 + $0x5fc] sm:$0xf]
    %v6320 = vld [vmem:[#allocation21 + $0x600] sm:$0xff]
    %v6321 = vld [vmem:[#allocation21 + $0x608] sm:$0xf]
    %v6322 = vld [vmem:[#allocation21 + $0x60c] sm:$0xff]
    %v6323 = vld [vmem:[#allocation21 + $0x614] sm:$0xf]
    %v6324 = vld [vmem:[#allocation21 + $0x618] sm:$0xff]
    %v6325 = vld [vmem:[#allocation21 + $0x620] sm:$0xf]
    %v6326 = vld [vmem:[#allocation21 + $0x624] sm:$0xff]
    %v6327 = vld [vmem:[#allocation21 + $0x62c] sm:$0xf]
    %v6328 = vld [vmem:[#allocation21 + $0x630] sm:$0xff]
    %v6329 = vld [vmem:[#allocation21 + $0x638] sm:$0xf]
    %v6330 = vld [vmem:[#allocation21 + $0x63c] sm:$0xff]
    %v6331 = vld [vmem:[#allocation21 + $0x644] sm:$0xf]
    %v6332 = vld [vmem:[#allocation21 + $0x648] sm:$0xff]
    %v6333 = vld [vmem:[#allocation21 + $0x650] sm:$0xf]
    %v6334 = vld [vmem:[#allocation21 + $0x654] sm:$0xff]
    %v6335 = vld [vmem:[#allocation21 + $0x65c] sm:$0xf]
    %v6336 = vld [vmem:[#allocation21 + $0x660] sm:$0xff]
    %v6337 = vld [vmem:[#allocation21 + $0x668] sm:$0xf]
    %v6338 = vld [vmem:[#allocation21 + $0x66c] sm:$0xff]
    %v6339 = vld [vmem:[#allocation21 + $0x674] sm:$0xf]
    %v6340 = vld [vmem:[#allocation21 + $0x678] sm:$0xff]
    %v6341 = vld [vmem:[#allocation21 + $0x680] sm:$0xf]
    %v6342 = vld [vmem:[#allocation21 + $0x684] sm:$0xff]
    %v6343 = vld [vmem:[#allocation21 + $0x68c] sm:$0xf]
    %v6344 = vld [vmem:[#allocation21 + $0x690] sm:$0xff]
    %v6345 = vld [vmem:[#allocation21 + $0x698] sm:$0xf]
    %v6346 = vld [vmem:[#allocation21 + $0x69c] sm:$0xff]
    %v6347 = vld [vmem:[#allocation21 + $0x6a4] sm:$0xf]
    %v6348 = vld [vmem:[#allocation21 + $0x6a8] sm:$0xff]
    %v6349 = vld [vmem:[#allocation21 + $0x6b0] sm:$0xf]
    %v6350 = vld [vmem:[#allocation21 + $0x6b4] sm:$0xff]
    %v6351 = vld [vmem:[#allocation21 + $0x6bc] sm:$0xf]
    %v6352 = vld [vmem:[#allocation21 + $0x6c0] sm:$0xff]
    %v6353 = vld [vmem:[#allocation21 + $0x6c8] sm:$0xf]
    %v6354 = vld [vmem:[#allocation21 + $0x6cc] sm:$0xff]
    %v6355 = vld [vmem:[#allocation21 + $0x6d4] sm:$0xf]
    %v6356 = vld [vmem:[#allocation21 + $0x6d8] sm:$0xff]
    %v6357 = vld [vmem:[#allocation21 + $0x6e0] sm:$0xf]
    %v6358 = vld [vmem:[#allocation21 + $0x6e4] sm:$0xff]
    %v6359 = vld [vmem:[#allocation21 + $0x6ec] sm:$0xf]
    %v6360 = vld [vmem:[#allocation21 + $0x6f0] sm:$0xff]
    %v6361 = vld [vmem:[#allocation21 + $0x6f8] sm:$0xf]
    %v6362 = vld [vmem:[#allocation21 + $0x6fc] sm:$0xff]
    %v6363 = vld [vmem:[#allocation21 + $0x704] sm:$0xf]
    %v6364 = vld [vmem:[#allocation21 + $0x708] sm:$0xff]
    %v6365 = vld [vmem:[#allocation21 + $0x710] sm:$0xf]
    %v6366 = vld [vmem:[#allocation21 + $0x714] sm:$0xff]
    %v6367 = vld [vmem:[#allocation21 + $0x71c] sm:$0xf]
    %v6368 = vld [vmem:[#allocation21 + $0x720] sm:$0xff]
    %v6369 = vld [vmem:[#allocation21 + $0x728] sm:$0xf]
    %v6370 = vld [vmem:[#allocation21 + $0x72c] sm:$0xff]
    %v6371 = vld [vmem:[#allocation21 + $0x734] sm:$0xf]
    %v6372 = vld [vmem:[#allocation21 + $0x738] sm:$0xff]
    %v6373 = vld [vmem:[#allocation21 + $0x740] sm:$0xf]
    %v6374 = vld [vmem:[#allocation21 + $0x744] sm:$0xff]
    %v6375 = vld [vmem:[#allocation21 + $0x74c] sm:$0xf]
    %v6376 = vld [vmem:[#allocation21 + $0x750] sm:$0xff]
    %v6377 = vld [vmem:[#allocation21 + $0x758] sm:$0xf]
    %v6378 = vld [vmem:[#allocation21 + $0x75c] sm:$0xff]
    %v6379 = vld [vmem:[#allocation21 + $0x764] sm:$0xf]
    %v6380 = vld [vmem:[#allocation21 + $0x768] sm:$0xff]
    %v6381 = vld [vmem:[#allocation21 + $0x770] sm:$0xf]
    %v6382 = vld [vmem:[#allocation21 + $0x774] sm:$0xff]
    %v6383 = vld [vmem:[#allocation21 + $0x77c] sm:$0xf]
    %v6384 = vld [vmem:[#allocation21 + $0x780] sm:$0xff]
    %v6385 = vld [vmem:[#allocation21 + $0x788] sm:$0xf]
    %v6386 = vld [vmem:[#allocation21 + $0x78c] sm:$0xff]
    %v6387 = vld [vmem:[#allocation21 + $0x794] sm:$0xf]
    %v6388 = vld [vmem:[#allocation21 + $0x798] sm:$0xff]
    %v6389 = vld [vmem:[#allocation21 + $0x7a0] sm:$0xf]
    %v6390 = vld [vmem:[#allocation21 + $0x7a4] sm:$0xff]
    %v6391 = vld [vmem:[#allocation21 + $0x7ac] sm:$0xf]
    %v6392 = vld [vmem:[#allocation21 + $0x7b0] sm:$0xff]
    %v6393 = vld [vmem:[#allocation21 + $0x7b8] sm:$0xf]
    %v6394 = vld [vmem:[#allocation21 + $0x7bc] sm:$0xff]
    %v6395 = vld [vmem:[#allocation21 + $0x7c4] sm:$0xf]
    %v6396 = vld [vmem:[#allocation21 + $0x7c8] sm:$0xff]
    %v6397 = vld [vmem:[#allocation21 + $0x7d0] sm:$0xf]
    %v6398 = vld [vmem:[#allocation21 + $0x7d4] sm:$0xff]
    %v6399 = vld [vmem:[#allocation21 + $0x7dc] sm:$0xf]
    %v6400 = vld [vmem:[#allocation21 + $0x7e0] sm:$0xff]
    %v6401 = vld [vmem:[#allocation21 + $0x7e8] sm:$0xf]
    %v6402 = vld [vmem:[#allocation21 + $0x7ec] sm:$0xff]
    %v6403 = vld [vmem:[#allocation21 + $0x7f4] sm:$0xf]
    %v6404 = vld [vmem:[#allocation21 + $0x7f8] sm:$0xff]
    %v6405 = vld [vmem:[#allocation21 + $0x800] sm:$0xf]
    %v6406 = vld [vmem:[#allocation21 + $0x804] sm:$0xff]
    %v6407 = vld [vmem:[#allocation21 + $0x80c] sm:$0xf]
    %v6408 = vld [vmem:[#allocation21 + $0x810] sm:$0xff]
    %v6409 = vld [vmem:[#allocation21 + $0x818] sm:$0xf]
    %v6410 = vld [vmem:[#allocation21 + $0x81c] sm:$0xff]
    %v6411 = vld [vmem:[#allocation21 + $0x824] sm:$0xf]
    %v6412 = vld [vmem:[#allocation21 + $0x828] sm:$0xff]
    %v6413 = vld [vmem:[#allocation21 + $0x830] sm:$0xf]
    %v6414 = vld [vmem:[#allocation21 + $0x834] sm:$0xff]
    %v6415 = vld [vmem:[#allocation21 + $0x83c] sm:$0xf]
    %v6416 = vld [vmem:[#allocation21 + $0x840] sm:$0xff]
    %v6417 = vld [vmem:[#allocation21 + $0x848] sm:$0xf]
    %v6418 = vld [vmem:[#allocation21 + $0x84c] sm:$0xff]
    %v6419 = vld [vmem:[#allocation21 + $0x854] sm:$0xf]
    %v6420 = vld [vmem:[#allocation21 + $0x858] sm:$0xff]
    %v6421 = vld [vmem:[#allocation21 + $0x860] sm:$0xf]
    %v6422 = vld [vmem:[#allocation21 + $0x864] sm:$0xff]
    %v6423 = vld [vmem:[#allocation21 + $0x86c] sm:$0xf]
    %v6424 = vld [vmem:[#allocation21 + $0x870] sm:$0xff]
    %v6425 = vld [vmem:[#allocation21 + $0x878] sm:$0xf]
    %v6426 = vld [vmem:[#allocation21 + $0x87c] sm:$0xff]
    %v6427 = vld [vmem:[#allocation21 + $0x884] sm:$0xf]
    %v6428 = vld [vmem:[#allocation21 + $0x888] sm:$0xff]
    %v6429 = vld [vmem:[#allocation21 + $0x890] sm:$0xf]
    %v6430 = vld [vmem:[#allocation21 + $0x894] sm:$0xff]
    %v6431 = vld [vmem:[#allocation21 + $0x89c] sm:$0xf]
    %v6432 = vld [vmem:[#allocation21 + $0x8a0] sm:$0xff]
    %v6433 = vld [vmem:[#allocation21 + $0x8a8] sm:$0xf]
    %v6434 = vld [vmem:[#allocation21 + $0x8ac] sm:$0xff]
    %v6435 = vld [vmem:[#allocation21 + $0x8b4] sm:$0xf]
    %v6436 = vld [vmem:[#allocation21 + $0x8b8] sm:$0xff]
    %v6437 = vld [vmem:[#allocation21 + $0x8c0] sm:$0xf]
    %v6438 = vld [vmem:[#allocation21 + $0x8c4] sm:$0xff]
    %v6439 = vld [vmem:[#allocation21 + $0x8cc] sm:$0xf]
    %v6440 = vld [vmem:[#allocation21 + $0x8d0] sm:$0xff]
    %v6441 = vld [vmem:[#allocation21 + $0x8d8] sm:$0xf]
    %v6442 = vld [vmem:[#allocation21 + $0x8dc] sm:$0xff]
    %v6443 = vld [vmem:[#allocation21 + $0x8e4] sm:$0xf]
    %v6444 = vld [vmem:[#allocation21 + $0x8e8] sm:$0xff]
    %v6445 = vld [vmem:[#allocation21 + $0x8f0] sm:$0xf]
    %v6446 = vld [vmem:[#allocation21 + $0x8f4] sm:$0xff]
    %v6447 = vld [vmem:[#allocation21 + $0x8fc] sm:$0xf]
    %v6448 = vld [vmem:[#allocation23] sm:$0x7]
    %v6450 = vlaneseq
    %v6451 = vshrl.u32 %v6450, 7
    %v6452 = vsub.s32 0, %v6451
    %v6453 = vrot.slane %v6448, %v6452
    %v6454 = vlaneseq
    %v6455 = vshrl.u32 %v6454, 7
    %v6456 = vsub.s32 1, %v6455
    %v6457 = vrot.slane %v6448, %v6456
    %v6458 = vlaneseq
    %v6459 = vshrl.u32 %v6458, 7
    %v6460 = vsub.s32 2, %v6459
    %v6461 = vrot.slane %v6448, %v6460
    %v6849 = vunpack.c.l.b16 %v6064
    %v6850 = vunpack.c.h.b16 %v6064
    %v6851 = vunpack.c.l.b16 %v6065
    %v6852 = vunpack.c.l.b16 %v6066
    %v6853 = vunpack.c.h.b16 %v6066
    %v6854 = vunpack.c.l.b16 %v6067
    %v6855 = vunpack.c.l.b16 %v6068
    %v6856 = vunpack.c.h.b16 %v6068
    %v6857 = vunpack.c.l.b16 %v6069
    %v6858 = vunpack.c.l.b16 %v6070
    %v6859 = vunpack.c.h.b16 %v6070
    %v6860 = vunpack.c.l.b16 %v6071
    %v6861 = vunpack.c.l.b16 %v6072
    %v6862 = vunpack.c.h.b16 %v6072
    %v6863 = vunpack.c.l.b16 %v6073
    %v6864 = vunpack.c.l.b16 %v6074
    %v6865 = vunpack.c.h.b16 %v6074
    %v6866 = vunpack.c.l.b16 %v6075
    %v6867 = vunpack.c.l.b16 %v6076
    %v6868 = vunpack.c.h.b16 %v6076
    %v6869 = vunpack.c.l.b16 %v6077
    %v6870 = vunpack.c.l.b16 %v6078
    %v6871 = vunpack.c.h.b16 %v6078
    %v6872 = vunpack.c.l.b16 %v6079
    %v6873 = vunpack.c.l.b16 %v6080
    %v6874 = vunpack.c.h.b16 %v6080
    %v6875 = vunpack.c.l.b16 %v6081
    %v6876 = vunpack.c.l.b16 %v6082
    %v6877 = vunpack.c.h.b16 %v6082
    %v6878 = vunpack.c.l.b16 %v6083
    %v6879 = vunpack.c.l.b16 %v6084
    %v6880 = vunpack.c.h.b16 %v6084
    %v6881 = vunpack.c.l.b16 %v6085
    %v6882 = vunpack.c.l.b16 %v6086
    %v6883 = vunpack.c.h.b16 %v6086
    %v6884 = vunpack.c.l.b16 %v6087
    %v6885 = vunpack.c.l.b16 %v6088
    %v6886 = vunpack.c.h.b16 %v6088
    %v6887 = vunpack.c.l.b16 %v6089
    %v6888 = vunpack.c.l.b16 %v6090
    %v6889 = vunpack.c.h.b16 %v6090
    %v6890 = vunpack.c.l.b16 %v6091
    %v6891 = vunpack.c.l.b16 %v6092
    %v6892 = vunpack.c.h.b16 %v6092
    %v6893 = vunpack.c.l.b16 %v6093
    %v6894 = vunpack.c.l.b16 %v6094
    %v6895 = vunpack.c.h.b16 %v6094
    %v6896 = vunpack.c.l.b16 %v6095
    %v6897 = vunpack.c.l.b16 %v6096
    %v6898 = vunpack.c.h.b16 %v6096
    %v6899 = vunpack.c.l.b16 %v6097
    %v6900 = vunpack.c.l.b16 %v6098
    %v6901 = vunpack.c.h.b16 %v6098
    %v6902 = vunpack.c.l.b16 %v6099
    %v6903 = vunpack.c.l.b16 %v6100
    %v6904 = vunpack.c.h.b16 %v6100
    %v6905 = vunpack.c.l.b16 %v6101
    %v6906 = vunpack.c.l.b16 %v6102
    %v6907 = vunpack.c.h.b16 %v6102
    %v6908 = vunpack.c.l.b16 %v6103
    %v6909 = vunpack.c.l.b16 %v6104
    %v6910 = vunpack.c.h.b16 %v6104
    %v6911 = vunpack.c.l.b16 %v6105
    %v6912 = vunpack.c.l.b16 %v6106
    %v6913 = vunpack.c.h.b16 %v6106
    %v6914 = vunpack.c.l.b16 %v6107
    %v6915 = vunpack.c.l.b16 %v6108
    %v6916 = vunpack.c.h.b16 %v6108
    %v6917 = vunpack.c.l.b16 %v6109
    %v6918 = vunpack.c.l.b16 %v6110
    %v6919 = vunpack.c.h.b16 %v6110
    %v6920 = vunpack.c.l.b16 %v6111
    %v6921 = vunpack.c.l.b16 %v6112
    %v6922 = vunpack.c.h.b16 %v6112
    %v6923 = vunpack.c.l.b16 %v6113
    %v6924 = vunpack.c.l.b16 %v6114
    %v6925 = vunpack.c.h.b16 %v6114
    %v6926 = vunpack.c.l.b16 %v6115
    %v6927 = vunpack.c.l.b16 %v6116
    %v6928 = vunpack.c.h.b16 %v6116
    %v6929 = vunpack.c.l.b16 %v6117
    %v6930 = vunpack.c.l.b16 %v6118
    %v6931 = vunpack.c.h.b16 %v6118
    %v6932 = vunpack.c.l.b16 %v6119
    %v6933 = vunpack.c.l.b16 %v6120
    %v6934 = vunpack.c.h.b16 %v6120
    %v6935 = vunpack.c.l.b16 %v6121
    %v6936 = vunpack.c.l.b16 %v6122
    %v6937 = vunpack.c.h.b16 %v6122
    %v6938 = vunpack.c.l.b16 %v6123
    %v6939 = vunpack.c.l.b16 %v6124
    %v6940 = vunpack.c.h.b16 %v6124
    %v6941 = vunpack.c.l.b16 %v6125
    %v6942 = vunpack.c.l.b16 %v6126
    %v6943 = vunpack.c.h.b16 %v6126
    %v6944 = vunpack.c.l.b16 %v6127
    %v6945 = vunpack.c.l.b16 %v6128
    %v6946 = vunpack.c.h.b16 %v6128
    %v6947 = vunpack.c.l.b16 %v6129
    %v6948 = vunpack.c.l.b16 %v6130
    %v6949 = vunpack.c.h.b16 %v6130
    %v6950 = vunpack.c.l.b16 %v6131
    %v6951 = vunpack.c.l.b16 %v6132
    %v6952 = vunpack.c.h.b16 %v6132
    %v6953 = vunpack.c.l.b16 %v6133
    %v6954 = vunpack.c.l.b16 %v6134
    %v6955 = vunpack.c.h.b16 %v6134
    %v6956 = vunpack.c.l.b16 %v6135
    %v6957 = vunpack.c.l.b16 %v6136
    %v6958 = vunpack.c.h.b16 %v6136
    %v6959 = vunpack.c.l.b16 %v6137
    %v6960 = vunpack.c.l.b16 %v6138
    %v6961 = vunpack.c.h.b16 %v6138
    %v6962 = vunpack.c.l.b16 %v6139
    %v6963 = vunpack.c.l.b16 %v6140
    %v6964 = vunpack.c.h.b16 %v6140
    %v6965 = vunpack.c.l.b16 %v6141
    %v6966 = vunpack.c.l.b16 %v6142
    %v6967 = vunpack.c.h.b16 %v6142
    %v6968 = vunpack.c.l.b16 %v6143
    %v6969 = vunpack.c.l.b16 %v6144
    %v6970 = vunpack.c.h.b16 %v6144
    %v6971 = vunpack.c.l.b16 %v6145
    %v6972 = vunpack.c.l.b16 %v6146
    %v6973 = vunpack.c.h.b16 %v6146
    %v6974 = vunpack.c.l.b16 %v6147
    %v6975 = vunpack.c.l.b16 %v6148
    %v6976 = vunpack.c.h.b16 %v6148
    %v6977 = vunpack.c.l.b16 %v6149
    %v6978 = vunpack.c.l.b16 %v6150
    %v6979 = vunpack.c.h.b16 %v6150
    %v6980 = vunpack.c.l.b16 %v6151
    %v6981 = vunpack.c.l.b16 %v6152
    %v6982 = vunpack.c.h.b16 %v6152
    %v6983 = vunpack.c.l.b16 %v6153
    %v6984 = vunpack.c.l.b16 %v6154
    %v6985 = vunpack.c.h.b16 %v6154
    %v6986 = vunpack.c.l.b16 %v6155
    %v6987 = vunpack.c.l.b16 %v6156
    %v6988 = vunpack.c.h.b16 %v6156
    %v6989 = vunpack.c.l.b16 %v6157
    %v6990 = vunpack.c.l.b16 %v6158
    %v6991 = vunpack.c.h.b16 %v6158
    %v6992 = vunpack.c.l.b16 %v6159
    %v6993 = vunpack.c.l.b16 %v6160
    %v6994 = vunpack.c.h.b16 %v6160
    %v6995 = vunpack.c.l.b16 %v6161
    %v6996 = vunpack.c.l.b16 %v6162
    %v6997 = vunpack.c.h.b16 %v6162
    %v6998 = vunpack.c.l.b16 %v6163
    %v6999 = vunpack.c.l.b16 %v6164
    %v7000 = vunpack.c.h.b16 %v6164
    %v7001 = vunpack.c.l.b16 %v6165
    %v7002 = vunpack.c.l.b16 %v6166
    %v7003 = vunpack.c.h.b16 %v6166
    %v7004 = vunpack.c.l.b16 %v6167
    %v7005 = vunpack.c.l.b16 %v6168
    %v7006 = vunpack.c.h.b16 %v6168
    %v7007 = vunpack.c.l.b16 %v6169
    %v7008 = vunpack.c.l.b16 %v6170
    %v7009 = vunpack.c.h.b16 %v6170
    %v7010 = vunpack.c.l.b16 %v6171
    %v7011 = vunpack.c.l.b16 %v6172
    %v7012 = vunpack.c.h.b16 %v6172
    %v7013 = vunpack.c.l.b16 %v6173
    %v7014 = vunpack.c.l.b16 %v6174
    %v7015 = vunpack.c.h.b16 %v6174
    %v7016 = vunpack.c.l.b16 %v6175
    %v7017 = vunpack.c.l.b16 %v6176
    %v7018 = vunpack.c.h.b16 %v6176
    %v7019 = vunpack.c.l.b16 %v6177
    %v7020 = vunpack.c.l.b16 %v6178
    %v7021 = vunpack.c.h.b16 %v6178
    %v7022 = vunpack.c.l.b16 %v6179
    %v7023 = vunpack.c.l.b16 %v6180
    %v7024 = vunpack.c.h.b16 %v6180
    %v7025 = vunpack.c.l.b16 %v6181
    %v7026 = vunpack.c.l.b16 %v6182
    %v7027 = vunpack.c.h.b16 %v6182
    %v7028 = vunpack.c.l.b16 %v6183
    %v7029 = vunpack.c.l.b16 %v6184
    %v7030 = vunpack.c.h.b16 %v6184
    %v7031 = vunpack.c.l.b16 %v6185
    %v7032 = vunpack.c.l.b16 %v6186
    %v7033 = vunpack.c.h.b16 %v6186
    %v7034 = vunpack.c.l.b16 %v6187
    %v7035 = vunpack.c.l.b16 %v6188
    %v7036 = vunpack.c.h.b16 %v6188
    %v7037 = vunpack.c.l.b16 %v6189
    %v7038 = vunpack.c.l.b16 %v6190
    %v7039 = vunpack.c.h.b16 %v6190
    %v7040 = vunpack.c.l.b16 %v6191
    %v7041 = vunpack.c.l.b16 %v6192
    %v7042 = vunpack.c.h.b16 %v6192
    %v7043 = vunpack.c.l.b16 %v6193
    %v7044 = vunpack.c.l.b16 %v6194
    %v7045 = vunpack.c.h.b16 %v6194
    %v7046 = vunpack.c.l.b16 %v6195
    %v7047 = vunpack.c.l.b16 %v6196
    %v7048 = vunpack.c.h.b16 %v6196
    %v7049 = vunpack.c.l.b16 %v6197
    %v7050 = vunpack.c.l.b16 %v6198
    %v7051 = vunpack.c.h.b16 %v6198
    %v7052 = vunpack.c.l.b16 %v6199
    %v7053 = vunpack.c.l.b16 %v6200
    %v7054 = vunpack.c.h.b16 %v6200
    %v7055 = vunpack.c.l.b16 %v6201
    %v7056 = vunpack.c.l.b16 %v6202
    %v7057 = vunpack.c.h.b16 %v6202
    %v7058 = vunpack.c.l.b16 %v6203
    %v7059 = vunpack.c.l.b16 %v6204
    %v7060 = vunpack.c.h.b16 %v6204
    %v7061 = vunpack.c.l.b16 %v6205
    %v7062 = vunpack.c.l.b16 %v6206
    %v7063 = vunpack.c.h.b16 %v6206
    %v7064 = vunpack.c.l.b16 %v6207
    %v7065 = vunpack.c.l.b16 %v6208
    %v7066 = vunpack.c.h.b16 %v6208
    %v7067 = vunpack.c.l.b16 %v6209
    %v7068 = vunpack.c.l.b16 %v6210
    %v7069 = vunpack.c.h.b16 %v6210
    %v7070 = vunpack.c.l.b16 %v6211
    %v7071 = vunpack.c.l.b16 %v6212
    %v7072 = vunpack.c.h.b16 %v6212
    %v7073 = vunpack.c.l.b16 %v6213
    %v7074 = vunpack.c.l.b16 %v6214
    %v7075 = vunpack.c.h.b16 %v6214
    %v7076 = vunpack.c.l.b16 %v6215
    %v7077 = vunpack.c.l.b16 %v6216
    %v7078 = vunpack.c.h.b16 %v6216
    %v7079 = vunpack.c.l.b16 %v6217
    %v7080 = vunpack.c.l.b16 %v6218
    %v7081 = vunpack.c.h.b16 %v6218
    %v7082 = vunpack.c.l.b16 %v6219
    %v7083 = vunpack.c.l.b16 %v6220
    %v7084 = vunpack.c.h.b16 %v6220
    %v7085 = vunpack.c.l.b16 %v6221
    %v7086 = vunpack.c.l.b16 %v6222
    %v7087 = vunpack.c.h.b16 %v6222
    %v7088 = vunpack.c.l.b16 %v6223
    %v7089 = vunpack.c.l.b16 %v6224
    %v7090 = vunpack.c.h.b16 %v6224
    %v7091 = vunpack.c.l.b16 %v6225
    %v7092 = vunpack.c.l.b16 %v6226
    %v7093 = vunpack.c.h.b16 %v6226
    %v7094 = vunpack.c.l.b16 %v6227
    %v7095 = vunpack.c.l.b16 %v6228
    %v7096 = vunpack.c.h.b16 %v6228
    %v7097 = vunpack.c.l.b16 %v6229
    %v7098 = vunpack.c.l.b16 %v6230
    %v7099 = vunpack.c.h.b16 %v6230
    %v7100 = vunpack.c.l.b16 %v6231
    %v7101 = vunpack.c.l.b16 %v6232
    %v7102 = vunpack.c.h.b16 %v6232
    %v7103 = vunpack.c.l.b16 %v6233
    %v7104 = vunpack.c.l.b16 %v6234
    %v7105 = vunpack.c.h.b16 %v6234
    %v7106 = vunpack.c.l.b16 %v6235
    %v7107 = vunpack.c.l.b16 %v6236
    %v7108 = vunpack.c.h.b16 %v6236
    %v7109 = vunpack.c.l.b16 %v6237
    %v7110 = vunpack.c.l.b16 %v6238
    %v7111 = vunpack.c.h.b16 %v6238
    %v7112 = vunpack.c.l.b16 %v6239
    %v7113 = vunpack.c.l.b16 %v6240
    %v7114 = vunpack.c.h.b16 %v6240
    %v7115 = vunpack.c.l.b16 %v6241
    %v7116 = vunpack.c.l.b16 %v6242
    %v7117 = vunpack.c.h.b16 %v6242
    %v7118 = vunpack.c.l.b16 %v6243
    %v7119 = vunpack.c.l.b16 %v6244
    %v7120 = vunpack.c.h.b16 %v6244
    %v7121 = vunpack.c.l.b16 %v6245
    %v7122 = vunpack.c.l.b16 %v6246
    %v7123 = vunpack.c.h.b16 %v6246
    %v7124 = vunpack.c.l.b16 %v6247
    %v7125 = vunpack.c.l.b16 %v6248
    %v7126 = vunpack.c.h.b16 %v6248
    %v7127 = vunpack.c.l.b16 %v6249
    %v7128 = vunpack.c.l.b16 %v6250
    %v7129 = vunpack.c.h.b16 %v6250
    %v7130 = vunpack.c.l.b16 %v6251
    %v7131 = vunpack.c.l.b16 %v6252
    %v7132 = vunpack.c.h.b16 %v6252
    %v7133 = vunpack.c.l.b16 %v6253
    %v7134 = vunpack.c.l.b16 %v6254
    %v7135 = vunpack.c.h.b16 %v6254
    %v7136 = vunpack.c.l.b16 %v6255
    %v7137 = vunpack.c.l.b16 %v6256
    %v7138 = vunpack.c.h.b16 %v6256
    %v7139 = vunpack.c.l.b16 %v6257
    %v7140 = vunpack.c.l.b16 %v6258
    %v7141 = vunpack.c.h.b16 %v6258
    %v7142 = vunpack.c.l.b16 %v6259
    %v7143 = vunpack.c.l.b16 %v6260
    %v7144 = vunpack.c.h.b16 %v6260
    %v7145 = vunpack.c.l.b16 %v6261
    %v7146 = vunpack.c.l.b16 %v6262
    %v7147 = vunpack.c.h.b16 %v6262
    %v7148 = vunpack.c.l.b16 %v6263
    %v7149 = vunpack.c.l.b16 %v6264
    %v7150 = vunpack.c.h.b16 %v6264
    %v7151 = vunpack.c.l.b16 %v6265
    %v7152 = vunpack.c.l.b16 %v6266
    %v7153 = vunpack.c.h.b16 %v6266
    %v7154 = vunpack.c.l.b16 %v6267
    %v7155 = vunpack.c.l.b16 %v6268
    %v7156 = vunpack.c.h.b16 %v6268
    %v7157 = vunpack.c.l.b16 %v6269
    %v7158 = vunpack.c.l.b16 %v6270
    %v7159 = vunpack.c.h.b16 %v6270
    %v7160 = vunpack.c.l.b16 %v6271
    %v7161 = vunpack.c.l.b16 %v6272
    %v7162 = vunpack.c.h.b16 %v6272
    %v7163 = vunpack.c.l.b16 %v6273
    %v7164 = vunpack.c.l.b16 %v6274
    %v7165 = vunpack.c.h.b16 %v6274
    %v7166 = vunpack.c.l.b16 %v6275
    %v7167 = vunpack.c.l.b16 %v6276
    %v7168 = vunpack.c.h.b16 %v6276
    %v7169 = vunpack.c.l.b16 %v6277
    %v7170 = vunpack.c.l.b16 %v6278
    %v7171 = vunpack.c.h.b16 %v6278
    %v7172 = vunpack.c.l.b16 %v6279
    %v7173 = vunpack.c.l.b16 %v6280
    %v7174 = vunpack.c.h.b16 %v6280
    %v7175 = vunpack.c.l.b16 %v6281
    %v7176 = vunpack.c.l.b16 %v6282
    %v7177 = vunpack.c.h.b16 %v6282
    %v7178 = vunpack.c.l.b16 %v6283
    %v7179 = vunpack.c.l.b16 %v6284
    %v7180 = vunpack.c.h.b16 %v6284
    %v7181 = vunpack.c.l.b16 %v6285
    %v7182 = vunpack.c.l.b16 %v6286
    %v7183 = vunpack.c.h.b16 %v6286
    %v7184 = vunpack.c.l.b16 %v6287
    %v7185 = vunpack.c.l.b16 %v6288
    %v7186 = vunpack.c.h.b16 %v6288
    %v7187 = vunpack.c.l.b16 %v6289
    %v7188 = vunpack.c.l.b16 %v6290
    %v7189 = vunpack.c.h.b16 %v6290
    %v7190 = vunpack.c.l.b16 %v6291
    %v7191 = vunpack.c.l.b16 %v6292
    %v7192 = vunpack.c.h.b16 %v6292
    %v7193 = vunpack.c.l.b16 %v6293
    %v7194 = vunpack.c.l.b16 %v6294
    %v7195 = vunpack.c.h.b16 %v6294
    %v7196 = vunpack.c.l.b16 %v6295
    %v7197 = vunpack.c.l.b16 %v6296
    %v7198 = vunpack.c.h.b16 %v6296
    %v7199 = vunpack.c.l.b16 %v6297
    %v7200 = vunpack.c.l.b16 %v6298
    %v7201 = vunpack.c.h.b16 %v6298
    %v7202 = vunpack.c.l.b16 %v6299
    %v7203 = vunpack.c.l.b16 %v6300
    %v7204 = vunpack.c.h.b16 %v6300
    %v7205 = vunpack.c.l.b16 %v6301
    %v7206 = vunpack.c.l.b16 %v6302
    %v7207 = vunpack.c.h.b16 %v6302
    %v7208 = vunpack.c.l.b16 %v6303
    %v7209 = vunpack.c.l.b16 %v6304
    %v7210 = vunpack.c.h.b16 %v6304
    %v7211 = vunpack.c.l.b16 %v6305
    %v7212 = vunpack.c.l.b16 %v6306
    %v7213 = vunpack.c.h.b16 %v6306
    %v7214 = vunpack.c.l.b16 %v6307
    %v7215 = vunpack.c.l.b16 %v6308
    %v7216 = vunpack.c.h.b16 %v6308
    %v7217 = vunpack.c.l.b16 %v6309
    %v7218 = vunpack.c.l.b16 %v6310
    %v7219 = vunpack.c.h.b16 %v6310
    %v7220 = vunpack.c.l.b16 %v6311
    %v7221 = vunpack.c.l.b16 %v6312
    %v7222 = vunpack.c.h.b16 %v6312
    %v7223 = vunpack.c.l.b16 %v6313
    %v7224 = vunpack.c.l.b16 %v6314
    %v7225 = vunpack.c.h.b16 %v6314
    %v7226 = vunpack.c.l.b16 %v6315
    %v7227 = vunpack.c.l.b16 %v6316
    %v7228 = vunpack.c.h.b16 %v6316
    %v7229 = vunpack.c.l.b16 %v6317
    %v7230 = vunpack.c.l.b16 %v6318
    %v7231 = vunpack.c.h.b16 %v6318
    %v7232 = vunpack.c.l.b16 %v6319
    %v7233 = vunpack.c.l.b16 %v6320
    %v7234 = vunpack.c.h.b16 %v6320
    %v7235 = vunpack.c.l.b16 %v6321
    %v7236 = vunpack.c.l.b16 %v6322
    %v7237 = vunpack.c.h.b16 %v6322
    %v7238 = vunpack.c.l.b16 %v6323
    %v7239 = vunpack.c.l.b16 %v6324
    %v7240 = vunpack.c.h.b16 %v6324
    %v7241 = vunpack.c.l.b16 %v6325
    %v7242 = vunpack.c.l.b16 %v6326
    %v7243 = vunpack.c.h.b16 %v6326
    %v7244 = vunpack.c.l.b16 %v6327
    %v7245 = vunpack.c.l.b16 %v6328
    %v7246 = vunpack.c.h.b16 %v6328
    %v7247 = vunpack.c.l.b16 %v6329
    %v7248 = vunpack.c.l.b16 %v6330
    %v7249 = vunpack.c.h.b16 %v6330
    %v7250 = vunpack.c.l.b16 %v6331
    %v7251 = vunpack.c.l.b16 %v6332
    %v7252 = vunpack.c.h.b16 %v6332
    %v7253 = vunpack.c.l.b16 %v6333
    %v7254 = vunpack.c.l.b16 %v6334
    %v7255 = vunpack.c.h.b16 %v6334
    %v7256 = vunpack.c.l.b16 %v6335
    %v7257 = vunpack.c.l.b16 %v6336
    %v7258 = vunpack.c.h.b16 %v6336
    %v7259 = vunpack.c.l.b16 %v6337
    %v7260 = vunpack.c.l.b16 %v6338
    %v7261 = vunpack.c.h.b16 %v6338
    %v7262 = vunpack.c.l.b16 %v6339
    %v7263 = vunpack.c.l.b16 %v6340
    %v7264 = vunpack.c.h.b16 %v6340
    %v7265 = vunpack.c.l.b16 %v6341
    %v7266 = vunpack.c.l.b16 %v6342
    %v7267 = vunpack.c.h.b16 %v6342
    %v7268 = vunpack.c.l.b16 %v6343
    %v7269 = vunpack.c.l.b16 %v6344
    %v7270 = vunpack.c.h.b16 %v6344
    %v7271 = vunpack.c.l.b16 %v6345
    %v7272 = vunpack.c.l.b16 %v6346
    %v7273 = vunpack.c.h.b16 %v6346
    %v7274 = vunpack.c.l.b16 %v6347
    %v7275 = vunpack.c.l.b16 %v6348
    %v7276 = vunpack.c.h.b16 %v6348
    %v7277 = vunpack.c.l.b16 %v6349
    %v7278 = vunpack.c.l.b16 %v6350
    %v7279 = vunpack.c.h.b16 %v6350
    %v7280 = vunpack.c.l.b16 %v6351
    %v7281 = vunpack.c.l.b16 %v6352
    %v7282 = vunpack.c.h.b16 %v6352
    %v7283 = vunpack.c.l.b16 %v6353
    %v7284 = vunpack.c.l.b16 %v6354
    %v7285 = vunpack.c.h.b16 %v6354
    %v7286 = vunpack.c.l.b16 %v6355
    %v7287 = vunpack.c.l.b16 %v6356
    %v7288 = vunpack.c.h.b16 %v6356
    %v7289 = vunpack.c.l.b16 %v6357
    %v7290 = vunpack.c.l.b16 %v6358
    %v7291 = vunpack.c.h.b16 %v6358
    %v7292 = vunpack.c.l.b16 %v6359
    %v7293 = vunpack.c.l.b16 %v6360
    %v7294 = vunpack.c.h.b16 %v6360
    %v7295 = vunpack.c.l.b16 %v6361
    %v7296 = vunpack.c.l.b16 %v6362
    %v7297 = vunpack.c.h.b16 %v6362
    %v7298 = vunpack.c.l.b16 %v6363
    %v7299 = vunpack.c.l.b16 %v6364
    %v7300 = vunpack.c.h.b16 %v6364
    %v7301 = vunpack.c.l.b16 %v6365
    %v7302 = vunpack.c.l.b16 %v6366
    %v7303 = vunpack.c.h.b16 %v6366
    %v7304 = vunpack.c.l.b16 %v6367
    %v7305 = vunpack.c.l.b16 %v6368
    %v7306 = vunpack.c.h.b16 %v6368
    %v7307 = vunpack.c.l.b16 %v6369
    %v7308 = vunpack.c.l.b16 %v6370
    %v7309 = vunpack.c.h.b16 %v6370
    %v7310 = vunpack.c.l.b16 %v6371
    %v7311 = vunpack.c.l.b16 %v6372
    %v7312 = vunpack.c.h.b16 %v6372
    %v7313 = vunpack.c.l.b16 %v6373
    %v7314 = vunpack.c.l.b16 %v6374
    %v7315 = vunpack.c.h.b16 %v6374
    %v7316 = vunpack.c.l.b16 %v6375
    %v7317 = vunpack.c.l.b16 %v6376
    %v7318 = vunpack.c.h.b16 %v6376
    %v7319 = vunpack.c.l.b16 %v6377
    %v7320 = vunpack.c.l.b16 %v6378
    %v7321 = vunpack.c.h.b16 %v6378
    %v7322 = vunpack.c.l.b16 %v6379
    %v7323 = vunpack.c.l.b16 %v6380
    %v7324 = vunpack.c.h.b16 %v6380
    %v7325 = vunpack.c.l.b16 %v6381
    %v7326 = vunpack.c.l.b16 %v6382
    %v7327 = vunpack.c.h.b16 %v6382
    %v7328 = vunpack.c.l.b16 %v6383
    %v7329 = vunpack.c.l.b16 %v6384
    %v7330 = vunpack.c.h.b16 %v6384
    %v7331 = vunpack.c.l.b16 %v6385
    %v7332 = vunpack.c.l.b16 %v6386
    %v7333 = vunpack.c.h.b16 %v6386
    %v7334 = vunpack.c.l.b16 %v6387
    %v7335 = vunpack.c.l.b16 %v6388
    %v7336 = vunpack.c.h.b16 %v6388
    %v7337 = vunpack.c.l.b16 %v6389
    %v7338 = vunpack.c.l.b16 %v6390
    %v7339 = vunpack.c.h.b16 %v6390
    %v7340 = vunpack.c.l.b16 %v6391
    %v7341 = vunpack.c.l.b16 %v6392
    %v7342 = vunpack.c.h.b16 %v6392
    %v7343 = vunpack.c.l.b16 %v6393
    %v7344 = vunpack.c.l.b16 %v6394
    %v7345 = vunpack.c.h.b16 %v6394
    %v7346 = vunpack.c.l.b16 %v6395
    %v7347 = vunpack.c.l.b16 %v6396
    %v7348 = vunpack.c.h.b16 %v6396
    %v7349 = vunpack.c.l.b16 %v6397
    %v7350 = vunpack.c.l.b16 %v6398
    %v7351 = vunpack.c.h.b16 %v6398
    %v7352 = vunpack.c.l.b16 %v6399
    %v7353 = vunpack.c.l.b16 %v6400
    %v7354 = vunpack.c.h.b16 %v6400
    %v7355 = vunpack.c.l.b16 %v6401
    %v7356 = vunpack.c.l.b16 %v6402
    %v7357 = vunpack.c.h.b16 %v6402
    %v7358 = vunpack.c.l.b16 %v6403
    %v7359 = vunpack.c.l.b16 %v6404
    %v7360 = vunpack.c.h.b16 %v6404
    %v7361 = vunpack.c.l.b16 %v6405
    %v7362 = vunpack.c.l.b16 %v6406
    %v7363 = vunpack.c.h.b16 %v6406
    %v7364 = vunpack.c.l.b16 %v6407
    %v7365 = vunpack.c.l.b16 %v6408
    %v7366 = vunpack.c.h.b16 %v6408
    %v7367 = vunpack.c.l.b16 %v6409
    %v7368 = vunpack.c.l.b16 %v6410
    %v7369 = vunpack.c.h.b16 %v6410
    %v7370 = vunpack.c.l.b16 %v6411
    %v7371 = vunpack.c.l.b16 %v6412
    %v7372 = vunpack.c.h.b16 %v6412
    %v7373 = vunpack.c.l.b16 %v6413
    %v7374 = vunpack.c.l.b16 %v6414
    %v7375 = vunpack.c.h.b16 %v6414
    %v7376 = vunpack.c.l.b16 %v6415
    %v7377 = vunpack.c.l.b16 %v6416
    %v7378 = vunpack.c.h.b16 %v6416
    %v7379 = vunpack.c.l.b16 %v6417
    %v7380 = vunpack.c.l.b16 %v6418
    %v7381 = vunpack.c.h.b16 %v6418
    %v7382 = vunpack.c.l.b16 %v6419
    %v7383 = vunpack.c.l.b16 %v6420
    %v7384 = vunpack.c.h.b16 %v6420
    %v7385 = vunpack.c.l.b16 %v6421
    %v7386 = vunpack.c.l.b16 %v6422
    %v7387 = vunpack.c.h.b16 %v6422
    %v7388 = vunpack.c.l.b16 %v6423
    %v7389 = vunpack.c.l.b16 %v6424
    %v7390 = vunpack.c.h.b16 %v6424
    %v7391 = vunpack.c.l.b16 %v6425
    %v7392 = vunpack.c.l.b16 %v6426
    %v7393 = vunpack.c.h.b16 %v6426
    %v7394 = vunpack.c.l.b16 %v6427
    %v7395 = vunpack.c.l.b16 %v6428
    %v7396 = vunpack.c.h.b16 %v6428
    %v7397 = vunpack.c.l.b16 %v6429
    %v7398 = vunpack.c.l.b16 %v6430
    %v7399 = vunpack.c.h.b16 %v6430
    %v7400 = vunpack.c.l.b16 %v6431
    %v7401 = vunpack.c.l.b16 %v6432
    %v7402 = vunpack.c.h.b16 %v6432
    %v7403 = vunpack.c.l.b16 %v6433
    %v7404 = vunpack.c.l.b16 %v6434
    %v7405 = vunpack.c.h.b16 %v6434
    %v7406 = vunpack.c.l.b16 %v6435
    %v7407 = vunpack.c.l.b16 %v6436
    %v7408 = vunpack.c.h.b16 %v6436
    %v7409 = vunpack.c.l.b16 %v6437
    %v7410 = vunpack.c.l.b16 %v6438
    %v7411 = vunpack.c.h.b16 %v6438
    %v7412 = vunpack.c.l.b16 %v6439
    %v7413 = vunpack.c.l.b16 %v6440
    %v7414 = vunpack.c.h.b16 %v6440
    %v7415 = vunpack.c.l.b16 %v6441
    %v7416 = vunpack.c.l.b16 %v6442
    %v7417 = vunpack.c.h.b16 %v6442
    %v7418 = vunpack.c.l.b16 %v6443
    %v7419 = vunpack.c.l.b16 %v6444
    %v7420 = vunpack.c.h.b16 %v6444
    %v7421 = vunpack.c.l.b16 %v6445
    %v7422 = vunpack.c.l.b16 %v6446
    %v7423 = vunpack.c.h.b16 %v6446
    %v7424 = vunpack.c.l.b16 %v6447
    %v7425 = vpack.c.b16 %v6852, %v6849
    %v7426 = vpack.c.b16 %v6853, %v6850
    %v7427 = vpack.c.b16 %v6854, %v6851
    %v7428 = vpack.c.b16 %v6858, %v6855
    %v7429 = vpack.c.b16 %v6859, %v6856
    %v7430 = vpack.c.b16 %v6860, %v6857
    %v7431 = vpack.c.b16 %v6864, %v6861
    %v7432 = vpack.c.b16 %v6865, %v6862
    %v7433 = vpack.c.b16 %v6866, %v6863
    %v7434 = vpack.c.b16 %v6870, %v6867
    %v7435 = vpack.c.b16 %v6871, %v6868
    %v7436 = vpack.c.b16 %v6872, %v6869
    %v7437 = vpack.c.b16 %v6876, %v6873
    %v7438 = vpack.c.b16 %v6877, %v6874
    %v7439 = vpack.c.b16 %v6878, %v6875
    %v7440 = vpack.c.b16 %v6882, %v6879
    %v7441 = vpack.c.b16 %v6883, %v6880
    %v7442 = vpack.c.b16 %v6884, %v6881
    %v7443 = vpack.c.b16 %v6888, %v6885
    %v7444 = vpack.c.b16 %v6889, %v6886
    %v7445 = vpack.c.b16 %v6890, %v6887
    %v7446 = vpack.c.b16 %v6894, %v6891
    %v7447 = vpack.c.b16 %v6895, %v6892
    %v7448 = vpack.c.b16 %v6896, %v6893
    %v7449 = vpack.c.b16 %v6900, %v6897
    %v7450 = vpack.c.b16 %v6901, %v6898
    %v7451 = vpack.c.b16 %v6902, %v6899
    %v7452 = vpack.c.b16 %v6906, %v6903
    %v7453 = vpack.c.b16 %v6907, %v6904
    %v7454 = vpack.c.b16 %v6908, %v6905
    %v7455 = vpack.c.b16 %v6912, %v6909
    %v7456 = vpack.c.b16 %v6913, %v6910
    %v7457 = vpack.c.b16 %v6914, %v6911
    %v7458 = vpack.c.b16 %v6918, %v6915
    %v7459 = vpack.c.b16 %v6919, %v6916
    %v7460 = vpack.c.b16 %v6920, %v6917
    %v7461 = vpack.c.b16 %v6924, %v6921
    %v7462 = vpack.c.b16 %v6925, %v6922
    %v7463 = vpack.c.b16 %v6926, %v6923
    %v7464 = vpack.c.b16 %v6930, %v6927
    %v7465 = vpack.c.b16 %v6931, %v6928
    %v7466 = vpack.c.b16 %v6932, %v6929
    %v7467 = vpack.c.b16 %v6936, %v6933
    %v7468 = vpack.c.b16 %v6937, %v6934
    %v7469 = vpack.c.b16 %v6938, %v6935
    %v7470 = vpack.c.b16 %v6942, %v6939
    %v7471 = vpack.c.b16 %v6943, %v6940
    %v7472 = vpack.c.b16 %v6944, %v6941
    %v7473 = vpack.c.b16 %v6948, %v6945
    %v7474 = vpack.c.b16 %v6949, %v6946
    %v7475 = vpack.c.b16 %v6950, %v6947
    %v7476 = vpack.c.b16 %v6954, %v6951
    %v7477 = vpack.c.b16 %v6955, %v6952
    %v7478 = vpack.c.b16 %v6956, %v6953
    %v7479 = vpack.c.b16 %v6960, %v6957
    %v7480 = vpack.c.b16 %v6961, %v6958
    %v7481 = vpack.c.b16 %v6962, %v6959
    %v7482 = vpack.c.b16 %v6966, %v6963
    %v7483 = vpack.c.b16 %v6967, %v6964
    %v7484 = vpack.c.b16 %v6968, %v6965
    %v7485 = vpack.c.b16 %v6972, %v6969
    %v7486 = vpack.c.b16 %v6973, %v6970
    %v7487 = vpack.c.b16 %v6974, %v6971
    %v7488 = vpack.c.b16 %v6978, %v6975
    %v7489 = vpack.c.b16 %v6979, %v6976
    %v7490 = vpack.c.b16 %v6980, %v6977
    %v7491 = vpack.c.b16 %v6984, %v6981
    %v7492 = vpack.c.b16 %v6985, %v6982
    %v7493 = vpack.c.b16 %v6986, %v6983
    %v7494 = vpack.c.b16 %v6990, %v6987
    %v7495 = vpack.c.b16 %v6991, %v6988
    %v7496 = vpack.c.b16 %v6992, %v6989
    %v7497 = vpack.c.b16 %v6996, %v6993
    %v7498 = vpack.c.b16 %v6997, %v6994
    %v7499 = vpack.c.b16 %v6998, %v6995
    %v7500 = vpack.c.b16 %v7002, %v6999
    %v7501 = vpack.c.b16 %v7003, %v7000
    %v7502 = vpack.c.b16 %v7004, %v7001
    %v7503 = vpack.c.b16 %v7008, %v7005
    %v7504 = vpack.c.b16 %v7009, %v7006
    %v7505 = vpack.c.b16 %v7010, %v7007
    %v7506 = vpack.c.b16 %v7014, %v7011
    %v7507 = vpack.c.b16 %v7015, %v7012
    %v7508 = vpack.c.b16 %v7016, %v7013
    %v7509 = vpack.c.b16 %v7020, %v7017
    %v7510 = vpack.c.b16 %v7021, %v7018
    %v7511 = vpack.c.b16 %v7022, %v7019
    %v7512 = vpack.c.b16 %v7026, %v7023
    %v7513 = vpack.c.b16 %v7027, %v7024
    %v7514 = vpack.c.b16 %v7028, %v7025
    %v7515 = vpack.c.b16 %v7032, %v7029
    %v7516 = vpack.c.b16 %v7033, %v7030
    %v7517 = vpack.c.b16 %v7034, %v7031
    %v7518 = vpack.c.b16 %v7038, %v7035
    %v7519 = vpack.c.b16 %v7039, %v7036
    %v7520 = vpack.c.b16 %v7040, %v7037
    %v7521 = vpack.c.b16 %v7044, %v7041
    %v7522 = vpack.c.b16 %v7045, %v7042
    %v7523 = vpack.c.b16 %v7046, %v7043
    %v7524 = vpack.c.b16 %v7050, %v7047
    %v7525 = vpack.c.b16 %v7051, %v7048
    %v7526 = vpack.c.b16 %v7052, %v7049
    %v7527 = vpack.c.b16 %v7056, %v7053
    %v7528 = vpack.c.b16 %v7057, %v7054
    %v7529 = vpack.c.b16 %v7058, %v7055
    %v7530 = vpack.c.b16 %v7062, %v7059
    %v7531 = vpack.c.b16 %v7063, %v7060
    %v7532 = vpack.c.b16 %v7064, %v7061
    %v7533 = vpack.c.b16 %v7068, %v7065
    %v7534 = vpack.c.b16 %v7069, %v7066
    %v7535 = vpack.c.b16 %v7070, %v7067
    %v7536 = vpack.c.b16 %v7074, %v7071
    %v7537 = vpack.c.b16 %v7075, %v7072
    %v7538 = vpack.c.b16 %v7076, %v7073
    %v7539 = vpack.c.b16 %v7080, %v7077
    %v7540 = vpack.c.b16 %v7081, %v7078
    %v7541 = vpack.c.b16 %v7082, %v7079
    %v7542 = vpack.c.b16 %v7086, %v7083
    %v7543 = vpack.c.b16 %v7087, %v7084
    %v7544 = vpack.c.b16 %v7088, %v7085
    %v7545 = vpack.c.b16 %v7092, %v7089
    %v7546 = vpack.c.b16 %v7093, %v7090
    %v7547 = vpack.c.b16 %v7094, %v7091
    %v7548 = vpack.c.b16 %v7098, %v7095
    %v7549 = vpack.c.b16 %v7099, %v7096
    %v7550 = vpack.c.b16 %v7100, %v7097
    %v7551 = vpack.c.b16 %v7104, %v7101
    %v7552 = vpack.c.b16 %v7105, %v7102
    %v7553 = vpack.c.b16 %v7106, %v7103
    %v7554 = vpack.c.b16 %v7110, %v7107
    %v7555 = vpack.c.b16 %v7111, %v7108
    %v7556 = vpack.c.b16 %v7112, %v7109
    %v7557 = vpack.c.b16 %v7116, %v7113
    %v7558 = vpack.c.b16 %v7117, %v7114
    %v7559 = vpack.c.b16 %v7118, %v7115
    %v7560 = vpack.c.b16 %v7122, %v7119
    %v7561 = vpack.c.b16 %v7123, %v7120
    %v7562 = vpack.c.b16 %v7124, %v7121
    %v7563 = vpack.c.b16 %v7128, %v7125
    %v7564 = vpack.c.b16 %v7129, %v7126
    %v7565 = vpack.c.b16 %v7130, %v7127
    %v7566 = vpack.c.b16 %v7134, %v7131
    %v7567 = vpack.c.b16 %v7135, %v7132
    %v7568 = vpack.c.b16 %v7136, %v7133
    %v7569 = vpack.c.b16 %v7140, %v7137
    %v7570 = vpack.c.b16 %v7141, %v7138
    %v7571 = vpack.c.b16 %v7142, %v7139
    %v7572 = vpack.c.b16 %v7146, %v7143
    %v7573 = vpack.c.b16 %v7147, %v7144
    %v7574 = vpack.c.b16 %v7148, %v7145
    %v7575 = vpack.c.b16 %v7152, %v7149
    %v7576 = vpack.c.b16 %v7153, %v7150
    %v7577 = vpack.c.b16 %v7154, %v7151
    %v7578 = vpack.c.b16 %v7158, %v7155
    %v7579 = vpack.c.b16 %v7159, %v7156
    %v7580 = vpack.c.b16 %v7160, %v7157
    %v7581 = vpack.c.b16 %v7164, %v7161
    %v7582 = vpack.c.b16 %v7165, %v7162
    %v7583 = vpack.c.b16 %v7166, %v7163
    %v7584 = vpack.c.b16 %v7170, %v7167
    %v7585 = vpack.c.b16 %v7171, %v7168
    %v7586 = vpack.c.b16 %v7172, %v7169
    %v7587 = vpack.c.b16 %v7176, %v7173
    %v7588 = vpack.c.b16 %v7177, %v7174
    %v7589 = vpack.c.b16 %v7178, %v7175
    %v7590 = vpack.c.b16 %v7182, %v7179
    %v7591 = vpack.c.b16 %v7183, %v7180
    %v7592 = vpack.c.b16 %v7184, %v7181
    %v7593 = vpack.c.b16 %v7188, %v7185
    %v7594 = vpack.c.b16 %v7189, %v7186
    %v7595 = vpack.c.b16 %v7190, %v7187
    %v7596 = vpack.c.b16 %v7194, %v7191
    %v7597 = vpack.c.b16 %v7195, %v7192
    %v7598 = vpack.c.b16 %v7196, %v7193
    %v7599 = vpack.c.b16 %v7200, %v7197
    %v7600 = vpack.c.b16 %v7201, %v7198
    %v7601 = vpack.c.b16 %v7202, %v7199
    %v7602 = vpack.c.b16 %v7206, %v7203
    %v7603 = vpack.c.b16 %v7207, %v7204
    %v7604 = vpack.c.b16 %v7208, %v7205
    %v7605 = vpack.c.b16 %v7212, %v7209
    %v7606 = vpack.c.b16 %v7213, %v7210
    %v7607 = vpack.c.b16 %v7214, %v7211
    %v7608 = vpack.c.b16 %v7218, %v7215
    %v7609 = vpack.c.b16 %v7219, %v7216
    %v7610 = vpack.c.b16 %v7220, %v7217
    %v7611 = vpack.c.b16 %v7224, %v7221
    %v7612 = vpack.c.b16 %v7225, %v7222
    %v7613 = vpack.c.b16 %v7226, %v7223
    %v7614 = vpack.c.b16 %v7230, %v7227
    %v7615 = vpack.c.b16 %v7231, %v7228
    %v7616 = vpack.c.b16 %v7232, %v7229
    %v7617 = vpack.c.b16 %v7236, %v7233
    %v7618 = vpack.c.b16 %v7237, %v7234
    %v7619 = vpack.c.b16 %v7238, %v7235
    %v7620 = vpack.c.b16 %v7242, %v7239
    %v7621 = vpack.c.b16 %v7243, %v7240
    %v7622 = vpack.c.b16 %v7244, %v7241
    %v7623 = vpack.c.b16 %v7248, %v7245
    %v7624 = vpack.c.b16 %v7249, %v7246
    %v7625 = vpack.c.b16 %v7250, %v7247
    %v7626 = vpack.c.b16 %v7254, %v7251
    %v7627 = vpack.c.b16 %v7255, %v7252
    %v7628 = vpack.c.b16 %v7256, %v7253
    %v7629 = vpack.c.b16 %v7260, %v7257
    %v7630 = vpack.c.b16 %v7261, %v7258
    %v7631 = vpack.c.b16 %v7262, %v7259
    %v7632 = vpack.c.b16 %v7266, %v7263
    %v7633 = vpack.c.b16 %v7267, %v7264
    %v7634 = vpack.c.b16 %v7268, %v7265
    %v7635 = vpack.c.b16 %v7272, %v7269
    %v7636 = vpack.c.b16 %v7273, %v7270
    %v7637 = vpack.c.b16 %v7274, %v7271
    %v7638 = vpack.c.b16 %v7278, %v7275
    %v7639 = vpack.c.b16 %v7279, %v7276
    %v7640 = vpack.c.b16 %v7280, %v7277
    %v7641 = vpack.c.b16 %v7284, %v7281
    %v7642 = vpack.c.b16 %v7285, %v7282
    %v7643 = vpack.c.b16 %v7286, %v7283
    %v7644 = vpack.c.b16 %v7290, %v7287
    %v7645 = vpack.c.b16 %v7291, %v7288
    %v7646 = vpack.c.b16 %v7292, %v7289
    %v7647 = vpack.c.b16 %v7296, %v7293
    %v7648 = vpack.c.b16 %v7297, %v7294
    %v7649 = vpack.c.b16 %v7298, %v7295
    %v7650 = vpack.c.b16 %v7302, %v7299
    %v7651 = vpack.c.b16 %v7303, %v7300
    %v7652 = vpack.c.b16 %v7304, %v7301
    %v7653 = vpack.c.b16 %v7308, %v7305
    %v7654 = vpack.c.b16 %v7309, %v7306
    %v7655 = vpack.c.b16 %v7310, %v7307
    %v7656 = vpack.c.b16 %v7314, %v7311
    %v7657 = vpack.c.b16 %v7315, %v7312
    %v7658 = vpack.c.b16 %v7316, %v7313
    %v7659 = vpack.c.b16 %v7320, %v7317
    %v7660 = vpack.c.b16 %v7321, %v7318
    %v7661 = vpack.c.b16 %v7322, %v7319
    %v7662 = vpack.c.b16 %v7326, %v7323
    %v7663 = vpack.c.b16 %v7327, %v7324
    %v7664 = vpack.c.b16 %v7328, %v7325
    %v7665 = vpack.c.b16 %v7332, %v7329
    %v7666 = vpack.c.b16 %v7333, %v7330
    %v7667 = vpack.c.b16 %v7334, %v7331
    %v7668 = vpack.c.b16 %v7338, %v7335
    %v7669 = vpack.c.b16 %v7339, %v7336
    %v7670 = vpack.c.b16 %v7340, %v7337
    %v7671 = vpack.c.b16 %v7344, %v7341
    %v7672 = vpack.c.b16 %v7345, %v7342
    %v7673 = vpack.c.b16 %v7346, %v7343
    %v7674 = vpack.c.b16 %v7350, %v7347
    %v7675 = vpack.c.b16 %v7351, %v7348
    %v7676 = vpack.c.b16 %v7352, %v7349
    %v7677 = vpack.c.b16 %v7356, %v7353
    %v7678 = vpack.c.b16 %v7357, %v7354
    %v7679 = vpack.c.b16 %v7358, %v7355
    %v7680 = vpack.c.b16 %v7362, %v7359
    %v7681 = vpack.c.b16 %v7363, %v7360
    %v7682 = vpack.c.b16 %v7364, %v7361
    %v7683 = vpack.c.b16 %v7368, %v7365
    %v7684 = vpack.c.b16 %v7369, %v7366
    %v7685 = vpack.c.b16 %v7370, %v7367
    %v7686 = vpack.c.b16 %v7374, %v7371
    %v7687 = vpack.c.b16 %v7375, %v7372
    %v7688 = vpack.c.b16 %v7376, %v7373
    %v7689 = vpack.c.b16 %v7380, %v7377
    %v7690 = vpack.c.b16 %v7381, %v7378
    %v7691 = vpack.c.b16 %v7382, %v7379
    %v7692 = vpack.c.b16 %v7386, %v7383
    %v7693 = vpack.c.b16 %v7387, %v7384
    %v7694 = vpack.c.b16 %v7388, %v7385
    %v7695 = vpack.c.b16 %v7392, %v7389
    %v7696 = vpack.c.b16 %v7393, %v7390
    %v7697 = vpack.c.b16 %v7394, %v7391
    %v7698 = vpack.c.b16 %v7398, %v7395
    %v7699 = vpack.c.b16 %v7399, %v7396
    %v7700 = vpack.c.b16 %v7400, %v7397
    %v7701 = vpack.c.b16 %v7404, %v7401
    %v7702 = vpack.c.b16 %v7405, %v7402
    %v7703 = vpack.c.b16 %v7406, %v7403
    %v7704 = vpack.c.b16 %v7410, %v7407
    %v7705 = vpack.c.b16 %v7411, %v7408
    %v7706 = vpack.c.b16 %v7412, %v7409
    %v7707 = vpack.c.b16 %v7416, %v7413
    %v7708 = vpack.c.b16 %v7417, %v7414
    %v7709 = vpack.c.b16 %v7418, %v7415
    %v7710 = vpack.c.b16 %v7422, %v7419
    %v7711 = vpack.c.b16 %v7423, %v7420
    %v7712 = vpack.c.b16 %v7424, %v7421
    %8001 = vmatprep.subr.bf16.mxu0 %v7426
    %8002 = vmatpush1.bf16.msra.mxu0 %v7425
    %8003 = vmatprep.subr.bf16.mxu0 %v7429
    %8004 = vmatpush1.bf16.msra.mxu0 %v7428
    %8005 = vmatprep.subr.bf16.mxu0 %v7432
    %8006 = vmatpush1.bf16.msra.mxu0 %v7431
    %8007 = vmatprep.subr.bf16.mxu0 %v7435
    %8008 = vmatpush1.bf16.msra.mxu0 %v7434
    %8009 = vmatprep.subr.bf16.mxu0 %v7438
    %8010 = vmatpush1.bf16.msra.mxu0 %v7437
    %8011 = vmatprep.subr.bf16.mxu0 %v7441
    %8012 = vmatpush1.bf16.msra.mxu0 %v7440
    %8013 = vmatprep.subr.bf16.mxu0 %v7444
    %8014 = vmatpush1.bf16.msra.mxu0 %v7443
    %8015 = vmatprep.subr.bf16.mxu0 %v7447
    %8016 = vmatpush1.bf16.msra.mxu0 %v7446
    %8017 = vmatprep.subr.bf16.mxu0 %v7450
    %8018 = vmatpush1.bf16.msra.mxu0 %v7449
    %8019 = vmatprep.subr.bf16.mxu0 %v7453
    %8020 = vmatpush1.bf16.msra.mxu0 %v7452
    %8021 = vmatprep.subr.bf16.mxu0 %v7456
    %8022 = vmatpush1.bf16.msra.mxu0 %v7455
    %8023 = vmatprep.subr.bf16.mxu0 %v7459
    %8024 = vmatpush1.bf16.msra.mxu0 %v7458
    %8025 = vmatprep.subr.bf16.mxu0 %v7462
    %8026 = vmatpush1.bf16.msra.mxu0 %v7461
    %8027 = vmatprep.subr.bf16.mxu0 %v7465
    %8028 = vmatpush1.bf16.msra.mxu0 %v7464
    %8029 = vmatprep.subr.bf16.mxu0 %v7468
    %8030 = vmatpush1.bf16.msra.mxu0 %v7467
    %8031 = vmatprep.subr.bf16.mxu0 %v7471
    %8032 = vmatpush1.bf16.msra.mxu0 %v7470
    %8033 = vmatprep.mubr.bf16.mxu0 %v6053
    %8034 = vmatmul.mubr.bf16.gmra.mrb[0].mxu0 %v6052
    %v8035 = vpop.f32.mrb[0].mxu0
    %v8036 = vadd.f32 %v6453, %v8035
    %v8037 = vpop.f32.mrb[0].mxu0
    %v8038 = vadd.f32 %v6457, %v8037
    %v8039 = vpop.f32.mrb[0].mxu0
    %v8040 = vadd.f32 %v6453, %v8039
    %v8041 = vpop.f32.mrb[0].mxu0
    %v8042 = vadd.f32 %v6457, %v8041
    %8043 = vdwg.mxu0
    %8044 = vmatprep.subr.bf16.mxu0 %v7474
    %8045 = vmatpush1.bf16.msra.mxu0 %v7473
    %8046 = vmatprep.subr.bf16.mxu0 %v7477
    %8047 = vmatpush1.bf16.msra.mxu0 %v7476
    %8048 = vmatprep.subr.bf16.mxu0 %v7480
    %8049 = vmatpush1.bf16.msra.mxu0 %v7479
    %8050 = vmatprep.subr.bf16.mxu0 %v7483
    %8051 = vmatpush1.bf16.msra.mxu0 %v7482
    %8052 = vmatprep.subr.bf16.mxu0 %v7486
    %8053 = vmatpush1.bf16.msra.mxu0 %v7485
    %8054 = vmatprep.subr.bf16.mxu0 %v7489
    %8055 = vmatpush1.bf16.msra.mxu0 %v7488
    %8056 = vmatprep.subr.bf16.mxu0 %v7492
    %8057 = vmatpush1.bf16.msra.mxu0 %v7491
    %8058 = vmatprep.subr.bf16.mxu0 %v7495
    %8059 = vmatpush1.bf16.msra.mxu0 %v7494
    %8060 = vmatprep.subr.bf16.mxu0 %v7498
    %8061 = vmatpush1.bf16.msra.mxu0 %v7497
    %8062 = vmatprep.subr.bf16.mxu0 %v7501
    %8063 = vmatpush1.bf16.msra.mxu0 %v7500
    %8064 = vmatprep.subr.bf16.mxu0 %v7504
    %8065 = vmatpush1.bf16.msra.mxu0 %v7503
    %8066 = vmatprep.subr.bf16.mxu0 %v7507
    %8067 = vmatpush1.bf16.msra.mxu0 %v7506
    %8068 = vmatprep.subr.bf16.mxu0 %v7510
    %8069 = vmatpush1.bf16.msra.mxu0 %v7509
    %8070 = vmatprep.subr.bf16.mxu0 %v7513
    %8071 = vmatpush1.bf16.msra.mxu0 %v7512
    %8072 = vmatprep.subr.bf16.mxu0 %v7516
    %8073 = vmatpush1.bf16.msra.mxu0 %v7515
    %8074 = vmatprep.subr.bf16.mxu0 %v7519
    %8075 = vmatpush1.bf16.msra.mxu0 %v7518
    %8076 = vmatprep.mubr.bf16.mxu0 %v6055
    %8077 = vmatmul.mubr.bf16.gmra.mrb[0].mxu0 %v6054
    %v8078 = vpop.f32.mrb[0].mxu0
    %v8079 = vadd.f32 %v8036, %v8078
    %v8080 = vpop.f32.mrb[0].mxu0
    %v8081 = vadd.f32 %v8038, %v8080
    %v8082 = vpop.f32.mrb[0].mxu0
    %v8083 = vadd.f32 %v8040, %v8082
    %v8084 = vpop.f32.mrb[0].mxu0
    %v8085 = vadd.f32 %v8042, %v8084
    %8086 = vdwg.mxu0
    %8087 = vmatprep.subr.bf16.mxu0 %v7522
    %8088 = vmatpush1.bf16.msra.mxu0 %v7521
    %8089 = vmatprep.subr.bf16.mxu0 %v7525
    %8090 = vmatpush1.bf16.msra.mxu0 %v7524
    %8091 = vmatprep.subr.bf16.mxu0 %v7528
    %8092 = vmatpush1.bf16.msra.mxu0 %v7527
    %8093 = vmatprep.subr.bf16.mxu0 %v7531
    %8094 = vmatpush1.bf16.msra.mxu0 %v7530
    %8095 = vmatprep.subr.bf16.mxu0 %v7534
    %8096 = vmatpush1.bf16.msra.mxu0 %v7533
    %8097 = vmatprep.subr.bf16.mxu0 %v7537
    %8098 = vmatpush1.bf16.msra.mxu0 %v7536
    %8099 = vmatprep.subr.bf16.mxu0 %v7540
    %8100 = vmatpush1.bf16.msra.mxu0 %v7539
    %8101 = vmatprep.subr.bf16.mxu0 %v7543
    %8102 = vmatpush1.bf16.msra.mxu0 %v7542
    %8103 = vmatprep.subr.bf16.mxu0 %v7546
    %8104 = vmatpush1.bf16.msra.mxu0 %v7545
    %8105 = vmatprep.subr.bf16.mxu0 %v7549
    %8106 = vmatpush1.bf16.msra.mxu0 %v7548
    %8107 = vmatprep.subr.bf16.mxu0 %v7552
    %8108 = vmatpush1.bf16.msra.mxu0 %v7551
    %8109 = vmatprep.subr.bf16.mxu0 %v7555
    %8110 = vmatpush1.bf16.msra.mxu0 %v7554
    %8111 = vmatprep.subr.bf16.mxu0 %v7558
    %8112 = vmatpush1.bf16.msra.mxu0 %v7557
    %8113 = vmatprep.subr.bf16.mxu0 %v7561
    %8114 = vmatpush1.bf16.msra.mxu0 %v7560
    %8115 = vmatprep.subr.bf16.mxu0 %v7564
    %8116 = vmatpush1.bf16.msra.mxu0 %v7563
    %8117 = vmatprep.subr.bf16.mxu0 %v7567
    %8118 = vmatpush1.bf16.msra.mxu0 %v7566
    %8119 = vmatprep.mubr.bf16.mxu0 %v6057
    %8120 = vmatmul.mubr.bf16.gmra.mrb[0].mxu0 %v6056
    %v8121 = vpop.f32.mrb[0].mxu0
    %v8122 = vadd.f32 %v8079, %v8121
    %v8123 = vpop.f32.mrb[0].mxu0
    %v8124 = vadd.f32 %v8081, %v8123
    %v8125 = vpop.f32.mrb[0].mxu0
    %v8126 = vadd.f32 %v8083, %v8125
    %v8127 = vpop.f32.mrb[0].mxu0
    %v8128 = vadd.f32 %v8085, %v8127
    %8129 = vdwg.mxu0
    %8130 = vmatprep.subr.bf16.mxu0 %v7570
    %8131 = vmatpush1.bf16.msra.mxu0 %v7569
    %8132 = vmatprep.subr.bf16.mxu0 %v7573
    %8133 = vmatpush1.bf16.msra.mxu0 %v7572
    %8134 = vmatprep.subr.bf16.mxu0 %v7576
    %8135 = vmatpush1.bf16.msra.mxu0 %v7575
    %8136 = vmatprep.subr.bf16.mxu0 %v7579
    %8137 = vmatpush1.bf16.msra.mxu0 %v7578
    %8138 = vmatprep.subr.bf16.mxu0 %v7582
    %8139 = vmatpush1.bf16.msra.mxu0 %v7581
    %8140 = vmatprep.subr.bf16.mxu0 %v7585
    %8141 = vmatpush1.bf16.msra.mxu0 %v7584
    %8142 = vmatprep.subr.bf16.mxu0 %v7588
    %8143 = vmatpush1.bf16.msra.mxu0 %v7587
    %8144 = vmatprep.subr.bf16.mxu0 %v7591
    %8145 = vmatpush1.bf16.msra.mxu0 %v7590
    %8146 = vmatprep.subr.bf16.mxu0 %v7594
    %8147 = vmatpush1.bf16.msra.mxu0 %v7593
    %8148 = vmatprep.subr.bf16.mxu0 %v7597
    %8149 = vmatpush1.bf16.msra.mxu0 %v7596
    %8150 = vmatprep.subr.bf16.mxu0 %v7600
    %8151 = vmatpush1.bf16.msra.mxu0 %v7599
    %8152 = vmatprep.subr.bf16.mxu0 %v7603
    %8153 = vmatpush1.bf16.msra.mxu0 %v7602
    %8154 = vmatprep.subr.bf16.mxu0 %v7606
    %8155 = vmatpush1.bf16.msra.mxu0 %v7605
    %8156 = vmatprep.subr.bf16.mxu0 %v7609
    %8157 = vmatpush1.bf16.msra.mxu0 %v7608
    %8158 = vmatprep.subr.bf16.mxu0 %v7612
    %8159 = vmatpush1.bf16.msra.mxu0 %v7611
    %8160 = vmatprep.subr.bf16.mxu0 %v7615
    %8161 = vmatpush1.bf16.msra.mxu0 %v7614
    %8162 = vmatprep.mubr.bf16.mxu0 %v6059
    %8163 = vmatmul.mubr.bf16.gmra.mrb[0].mxu0 %v6058
    %v8164 = vpop.f32.mrb[0].mxu0
    %v8165 = vadd.f32 %v8122, %v8164
    %v8166 = vpop.f32.mrb[0].mxu0
    %v8167 = vadd.f32 %v8124, %v8166
    %v8168 = vpop.f32.mrb[0].mxu0
    %v8169 = vadd.f32 %v8126, %v8168
    %v8170 = vpop.f32.mrb[0].mxu0
    %v8171 = vadd.f32 %v8128, %v8170
    %8172 = vdwg.mxu0
    %8173 = vmatprep.subr.bf16.mxu0 %v7618
    %8174 = vmatpush1.bf16.msra.mxu0 %v7617
    %8175 = vmatprep.subr.bf16.mxu0 %v7621
    %8176 = vmatpush1.bf16.msra.mxu0 %v7620
    %8177 = vmatprep.subr.bf16.mxu0 %v7624
    %8178 = vmatpush1.bf16.msra.mxu0 %v7623
    %8179 = vmatprep.subr.bf16.mxu0 %v7627
    %8180 = vmatpush1.bf16.msra.mxu0 %v7626
    %8181 = vmatprep.subr.bf16.mxu0 %v7630
    %8182 = vmatpush1.bf16.msra.mxu0 %v7629
    %8183 = vmatprep.subr.bf16.mxu0 %v7633
    %8184 = vmatpush1.bf16.msra.mxu0 %v7632
    %8185 = vmatprep.subr.bf16.mxu0 %v7636
    %8186 = vmatpush1.bf16.msra.mxu0 %v7635
    %8187 = vmatprep.subr.bf16.mxu0 %v7639
    %8188 = vmatpush1.bf16.msra.mxu0 %v7638
    %8189 = vmatprep.subr.bf16.mxu0 %v7642
    %8190 = vmatpush1.bf16.msra.mxu0 %v7641
    %8191 = vmatprep.subr.bf16.mxu0 %v7645
    %8192 = vmatpush1.bf16.msra.mxu0 %v7644
    %8193 = vmatprep.subr.bf16.mxu0 %v7648
    %8194 = vmatpush1.bf16.msra.mxu0 %v7647
    %8195 = vmatprep.subr.bf16.mxu0 %v7651
    %8196 = vmatpush1.bf16.msra.mxu0 %v7650
    %8197 = vmatprep.subr.bf16.mxu0 %v7654
    %8198 = vmatpush1.bf16.msra.mxu0 %v7653
    %8199 = vmatprep.subr.bf16.mxu0 %v7657
    %8200 = vmatpush1.bf16.msra.mxu0 %v7656
    %8201 = vmatprep.subr.bf16.mxu0 %v7660
    %8202 = vmatpush1.bf16.msra.mxu0 %v7659
    %8203 = vmatprep.subr.bf16.mxu0 %v7663
    %8204 = vmatpush1.bf16.msra.mxu0 %v7662
    %8205 = vmatprep.mubr.bf16.mxu0 %v6061
    %8206 = vmatmul.mubr.bf16.gmra.mrb[0].mxu0 %v6060
    %v8207 = vpop.f32.mrb[0].mxu0
    %v8208 = vadd.f32 %v8165, %v8207
    %v8209 = vpop.f32.mrb[0].mxu0
    %v8210 = vadd.f32 %v8167, %v8209
    %v8211 = vpop.f32.mrb[0].mxu0
    %v8212 = vadd.f32 %v8169, %v8211
    %v8213 = vpop.f32.mrb[0].mxu0
    %v8214 = vadd.f32 %v8171, %v8213
    %8215 = vdwg.mxu0
    %8216 = vmatprep.subr.bf16.mxu0 %v7666
    %8217 = vmatpush1.bf16.msra.mxu0 %v7665
    %8218 = vmatprep.subr.bf16.mxu0 %v7669
    %8219 = vmatpush1.bf16.msra.mxu0 %v7668
    %8220 = vmatprep.subr.bf16.mxu0 %v7672
    %8221 = vmatpush1.bf16.msra.mxu0 %v7671
    %8222 = vmatprep.subr.bf16.mxu0 %v7675
    %8223 = vmatpush1.bf16.msra.mxu0 %v7674
    %8224 = vmatprep.subr.bf16.mxu0 %v7678
    %8225 = vmatpush1.bf16.msra.mxu0 %v7677
    %8226 = vmatprep.subr.bf16.mxu0 %v7681
    %8227 = vmatpush1.bf16.msra.mxu0 %v7680
    %8228 = vmatprep.subr.bf16.mxu0 %v7684
    %8229 = vmatpush1.bf16.msra.mxu0 %v7683
    %8230 = vmatprep.subr.bf16.mxu0 %v7687
    %8231 = vmatpush1.bf16.msra.mxu0 %v7686
    %8232 = vmatprep.subr.bf16.mxu0 %v7690
    %8233 = vmatpush1.bf16.msra.mxu0 %v7689
    %8234 = vmatprep.subr.bf16.mxu0 %v7693
    %8235 = vmatpush1.bf16.msra.mxu0 %v7692
    %8236 = vmatprep.subr.bf16.mxu0 %v7696
    %8237 = vmatpush1.bf16.msra.mxu0 %v7695
    %8238 = vmatprep.subr.bf16.mxu0 %v7699
    %8239 = vmatpush1.bf16.msra.mxu0 %v7698
    %8240 = vmatprep.subr.bf16.mxu0 %v7702
    %8241 = vmatpush1.bf16.msra.mxu0 %v7701
    %8242 = vmatprep.subr.bf16.mxu0 %v7705
    %8243 = vmatpush1.bf16.msra.mxu0 %v7704
    %8244 = vmatprep.subr.bf16.mxu0 %v7708
    %8245 = vmatpush1.bf16.msra.mxu0 %v7707
    %8246 = vmatprep.subr.bf16.mxu0 %v7711
    %8247 = vmatpush1.bf16.msra.mxu0 %v7710
    %8248 = vmatprep.mubr.bf16.mxu0 %v6063
    %8249 = vmatmul.mubr.bf16.gmra.mrb[0].mxu0 %v6062
    %v8250 = vpop.f32.mrb[0].mxu0
    %v8251 = vadd.f32 %v8208, %v8250
    %v8252 = vpop.f32.mrb[0].mxu0
    %v8253 = vadd.f32 %v8210, %v8252
    %v8254 = vpop.f32.mrb[0].mxu0
    %v8255 = vadd.f32 %v8212, %v8254
    %v8256 = vpop.f32.mrb[0].mxu0
    %v8257 = vadd.f32 %v8214, %v8256
    %8258 = vdwg.mxu0
    %8259 = vmatprep.subr.bf16.mxu0 0
    %8260 = vmatpush1.bf16.msra.mxu0 %v7427
    %8261 = vmatprep.subr.bf16.mxu0 0
    %8262 = vmatpush1.bf16.msra.mxu0 %v7430
    %8263 = vmatprep.subr.bf16.mxu0 0
    %8264 = vmatpush1.bf16.msra.mxu0 %v7433
    %8265 = vmatprep.subr.bf16.mxu0 0
    %8266 = vmatpush1.bf16.msra.mxu0 %v7436
    %8267 = vmatprep.subr.bf16.mxu0 0
    %8268 = vmatpush1.bf16.msra.mxu0 %v7439
    %8269 = vmatprep.subr.bf16.mxu0 0
    %8270 = vmatpush1.bf16.msra.mxu0 %v7442
    %8271 = vmatprep.subr.bf16.mxu0 0
    %8272 = vmatpush1.bf16.msra.mxu0 %v7445
    %8273 = vmatprep.subr.bf16.mxu0 0
    %8274 = vmatpush1.bf16.msra.mxu0 %v7448
    %8275 = vmatprep.subr.bf16.mxu0 0
    %8276 = vmatpush1.bf16.msra.mxu0 %v7451
    %8277 = vmatprep.subr.bf16.mxu0 0
    %8278 = vmatpush1.bf16.msra.mxu0 %v7454
    %8279 = vmatprep.subr.bf16.mxu0 0
    %8280 = vmatpush1.bf16.msra.mxu0 %v7457
    %8281 = vmatprep.subr.bf16.mxu0 0
    %8282 = vmatpush1.bf16.msra.mxu0 %v7460
    %8283 = vmatprep.subr.bf16.mxu0 0
    %8284 = vmatpush1.bf16.msra.mxu0 %v7463
    %8285 = vmatprep.subr.bf16.mxu0 0
    %8286 = vmatpush1.bf16.msra.mxu0 %v7466
    %8287 = vmatprep.subr.bf16.mxu0 0
    %8288 = vmatpush1.bf16.msra.mxu0 %v7469
    %8289 = vmatprep.subr.bf16.mxu0 0
    %8290 = vmatpush1.bf16.msra.mxu0 %v7472
    %8291 = vmatprep.mubr.bf16.mxu0 %v6053
    %8292 = vmatmul.mubr.bf16.gmra.mrb[0].mxu0 %v6052
    %v8293 = vpop.f32.mrb[0].mxu0
    %v8294 = vadd.f32 %v6461, %v8293
    %v8295 = vpop.f32.mrb[0].mxu0
    %v8296 = vpop.f32.mrb[0].mxu0
    %v8297 = vadd.f32 %v6461, %v8296
    %v8298 = vpop.f32.mrb[0].mxu0
    %8299 = vdwg.mxu0
    %8300 = vmatprep.subr.bf16.mxu0 0
    %8301 = vmatpush1.bf16.msra.mxu0 %v7475
    %8302 = vmatprep.subr.bf16.mxu0 0
    %8303 = vmatpush1.bf16.msra.mxu0 %v7478
    %8304 = vmatprep.subr.bf16.mxu0 0
    %8305 = vmatpush1.bf16.msra.mxu0 %v7481
    %8306 = vmatprep.subr.bf16.mxu0 0
    %8307 = vmatpush1.bf16.msra.mxu0 %v7484
    %8308 = vmatprep.subr.bf16.mxu0 0
    %8309 = vmatpush1.bf16.msra.mxu0 %v7487
    %8310 = vmatprep.subr.bf16.mxu0 0
    %8311 = vmatpush1.bf16.msra.mxu0 %v7490
    %8312 = vmatprep.subr.bf16.mxu0 0
    %8313 = vmatpush1.bf16.msra.mxu0 %v7493
    %8314 = vmatprep.subr.bf16.mxu0 0
    %8315 = vmatpush1.bf16.msra.mxu0 %v7496
    %8316 = vmatprep.subr.bf16.mxu0 0
    %8317 = vmatpush1.bf16.msra.mxu0 %v7499
    %8318 = vmatprep.subr.bf16.mxu0 0
    %8319 = vmatpush1.bf16.msra.mxu0 %v7502
    %8320 = vmatprep.subr.bf16.mxu0 0
    %8321 = vmatpush1.bf16.msra.mxu0 %v7505
    %8322 = vmatprep.subr.bf16.mxu0 0
    %8323 = vmatpush1.bf16.msra.mxu0 %v7508
    %8324 = vmatprep.subr.bf16.mxu0 0
    %8325 = vmatpush1.bf16.msra.mxu0 %v7511
    %8326 = vmatprep.subr.bf16.mxu0 0
    %8327 = vmatpush1.bf16.msra.mxu0 %v7514
    %8328 = vmatprep.subr.bf16.mxu0 0
    %8329 = vmatpush1.bf16.msra.mxu0 %v7517
    %8330 = vmatprep.subr.bf16.mxu0 0
    %8331 = vmatpush1.bf16.msra.mxu0 %v7520
    %8332 = vmatprep.mubr.bf16.mxu0 %v6055
    %8333 = vmatmul.mubr.bf16.gmra.mrb[0].mxu0 %v6054
    %v8334 = vpop.f32.mrb[0].mxu0
    %v8335 = vadd.f32 %v8294, %v8334
    %v8336 = vpop.f32.mrb[0].mxu0
    %v8337 = vpop.f32.mrb[0].mxu0
    %v8338 = vadd.f32 %v8297, %v8337
    %v8339 = vpop.f32.mrb[0].mxu0
    %8340 = vdwg.mxu0
    %8341 = vmatprep.subr.bf16.mxu0 0
    %8342 = vmatpush1.bf16.msra.mxu0 %v7523
    %8343 = vmatprep.subr.bf16.mxu0 0
    %8344 = vmatpush1.bf16.msra.mxu0 %v7526
    %8345 = vmatprep.subr.bf16.mxu0 0
    %8346 = vmatpush1.bf16.msra.mxu0 %v7529
    %8347 = vmatprep.subr.bf16.mxu0 0
    %8348 = vmatpush1.bf16.msra.mxu0 %v7532
    %8349 = vmatprep.subr.bf16.mxu0 0
    %8350 = vmatpush1.bf16.msra.mxu0 %v7535
    %8351 = vmatprep.subr.bf16.mxu0 0
    %8352 = vmatpush1.bf16.msra.mxu0 %v7538
    %8353 = vmatprep.subr.bf16.mxu0 0
    %8354 = vmatpush1.bf16.msra.mxu0 %v7541
    %8355 = vmatprep.subr.bf16.mxu0 0
    %8356 = vmatpush1.bf16.msra.mxu0 %v7544
    %8357 = vmatprep.subr.bf16.mxu0 0
    %8358 = vmatpush1.bf16.msra.mxu0 %v7547
    %8359 = vmatprep.subr.bf16.mxu0 0
    %8360 = vmatpush1.bf16.msra.mxu0 %v7550
    %8361 = vmatprep.subr.bf16.mxu0 0
    %8362 = vmatpush1.bf16.msra.mxu0 %v7553
    %8363 = vmatprep.subr.bf16.mxu0 0
    %8364 = vmatpush1.bf16.msra.mxu0 %v7556
    %8365 = vmatprep.subr.bf16.mxu0 0
    %8366 = vmatpush1.bf16.msra.mxu0 %v7559
    %8367 = vmatprep.subr.bf16.mxu0 0
    %8368 = vmatpush1.bf16.msra.mxu0 %v7562
    %8369 = vmatprep.subr.bf16.mxu0 0
    %8370 = vmatpush1.bf16.msra.mxu0 %v7565
    %8371 = vmatprep.subr.bf16.mxu0 0
    %8372 = vmatpush1.bf16.msra.mxu0 %v7568
    %8373 = vmatprep.mubr.bf16.mxu0 %v6057
    %8374 = vmatmul.mubr.bf16.gmra.mrb[0].mxu0 %v6056
    %v8375 = vpop.f32.mrb[0].mxu0
    %v8376 = vadd.f32 %v8335, %v8375
    %v8377 = vpop.f32.mrb[0].mxu0
    %v8378 = vpop.f32.mrb[0].mxu0
    %v8379 = vadd.f32 %v8338, %v8378
    %v8380 = vpop.f32.mrb[0].mxu0
    %8381 = vdwg.mxu0
    %8382 = vmatprep.subr.bf16.mxu0 0
    %8383 = vmatpush1.bf16.msra.mxu0 %v7571
    %8384 = vmatprep.subr.bf16.mxu0 0
    %8385 = vmatpush1.bf16.msra.mxu0 %v7574
    %8386 = vmatprep.subr.bf16.mxu0 0
    %8387 = vmatpush1.bf16.msra.mxu0 %v7577
    %8388 = vmatprep.subr.bf16.mxu0 0
    %8389 = vmatpush1.bf16.msra.mxu0 %v7580
    %8390 = vmatprep.subr.bf16.mxu0 0
    %8391 = vmatpush1.bf16.msra.mxu0 %v7583
    %8392 = vmatprep.subr.bf16.mxu0 0
    %8393 = vmatpush1.bf16.msra.mxu0 %v7586
    %8394 = vmatprep.subr.bf16.mxu0 0
    %8395 = vmatpush1.bf16.msra.mxu0 %v7589
    %8396 = vmatprep.subr.bf16.mxu0 0
    %8397 = vmatpush1.bf16.msra.mxu0 %v7592
    %8398 = vmatprep.subr.bf16.mxu0 0
    %8399 = vmatpush1.bf16.msra.mxu0 %v7595
    %8400 = vmatprep.subr.bf16.mxu0 0
    %8401 = vmatpush1.bf16.msra.mxu0 %v7598
    %8402 = vmatprep.subr.bf16.mxu0 0
    %8403 = vmatpush1.bf16.msra.mxu0 %v7601
    %8404 = vmatprep.subr.bf16.mxu0 0
    %8405 = vmatpush1.bf16.msra.mxu0 %v7604
    %8406 = vmatprep.subr.bf16.mxu0 0
    %8407 = vmatpush1.bf16.msra.mxu0 %v7607
    %8408 = vmatprep.subr.bf16.mxu0 0
    %8409 = vmatpush1.bf16.msra.mxu0 %v7610
    %8410 = vmatprep.subr.bf16.mxu0 0
    %8411 = vmatpush1.bf16.msra.mxu0 %v7613
    %8412 = vmatprep.subr.bf16.mxu0 0
    %8413 = vmatpush1.bf16.msra.mxu0 %v7616
    %8414 = vmatprep.mubr.bf16.mxu0 %v6059
    %8415 = vmatmul.mubr.bf16.gmra.mrb[0].mxu0 %v6058
    %v8416 = vpop.f32.mrb[0].mxu0
    %v8417 = vadd.f32 %v8376, %v8416
    %v8418 = vpop.f32.mrb[0].mxu0
    %v8419 = vpop.f32.mrb[0].mxu0
    %v8420 = vadd.f32 %v8379, %v8419
    %v8421 = vpop.f32.mrb[0].mxu0
    %8422 = vdwg.mxu0
    %8423 = vmatprep.subr.bf16.mxu0 0
    %8424 = vmatpush1.bf16.msra.mxu0 %v7619
    %8425 = vmatprep.subr.bf16.mxu0 0
    %8426 = vmatpush1.bf16.msra.mxu0 %v7622
    %8427 = vmatprep.subr.bf16.mxu0 0
    %8428 = vmatpush1.bf16.msra.mxu0 %v7625
    %8429 = vmatprep.subr.bf16.mxu0 0
    %8430 = vmatpush1.bf16.msra.mxu0 %v7628
    %8431 = vmatprep.subr.bf16.mxu0 0
    %8432 = vmatpush1.bf16.msra.mxu0 %v7631
    %8433 = vmatprep.subr.bf16.mxu0 0
    %8434 = vmatpush1.bf16.msra.mxu0 %v7634
    %8435 = vmatprep.subr.bf16.mxu0 0
    %8436 = vmatpush1.bf16.msra.mxu0 %v7637
    %8437 = vmatprep.subr.bf16.mxu0 0
    %8438 = vmatpush1.bf16.msra.mxu0 %v7640
    %8439 = vmatprep.subr.bf16.mxu0 0
    %8440 = vmatpush1.bf16.msra.mxu0 %v7643
    %8441 = vmatprep.subr.bf16.mxu0 0
    %8442 = vmatpush1.bf16.msra.mxu0 %v7646
    %8443 = vmatprep.subr.bf16.mxu0 0
    %8444 = vmatpush1.bf16.msra.mxu0 %v7649
    %8445 = vmatprep.subr.bf16.mxu0 0
    %8446 = vmatpush1.bf16.msra.mxu0 %v7652
    %8447 = vmatprep.subr.bf16.mxu0 0
    %8448 = vmatpush1.bf16.msra.mxu0 %v7655
    %8449 = vmatprep.subr.bf16.mxu0 0
    %8450 = vmatpush1.bf16.msra.mxu0 %v7658
    %8451 = vmatprep.subr.bf16.mxu0 0
    %8452 = vmatpush1.bf16.msra.mxu0 %v7661
    %8453 = vmatprep.subr.bf16.mxu0 0
    %8454 = vmatpush1.bf16.msra.mxu0 %v7664
    %8455 = vmatprep.mubr.bf16.mxu0 %v6061
    %8456 = vmatmul.mubr.bf16.gmra.mrb[0].mxu0 %v6060
    %v8457 = vpop.f32.mrb[0].mxu0
    %v8458 = vadd.f32 %v8417, %v8457
    %v8459 = vpop.f32.mrb[0].mxu0
    %v8460 = vpop.f32.mrb[0].mxu0
    %v8461 = vadd.f32 %v8420, %v8460
    %v8462 = vpop.f32.mrb[0].mxu0
    %8463 = vdwg.mxu0
    %8464 = vmatprep.subr.bf16.mxu0 0
    %8465 = vmatpush1.bf16.msra.mxu0 %v7667
    %8466 = vmatprep.subr.bf16.mxu0 0
    %8467 = vmatpush1.bf16.msra.mxu0 %v7670
    %8468 = vmatprep.subr.bf16.mxu0 0
    %8469 = vmatpush1.bf16.msra.mxu0 %v7673
    %8470 = vmatprep.subr.bf16.mxu0 0
    %8471 = vmatpush1.bf16.msra.mxu0 %v7676
    %8472 = vmatprep.subr.bf16.mxu0 0
    %8473 = vmatpush1.bf16.msra.mxu0 %v7679
    %8474 = vmatprep.subr.bf16.mxu0 0
    %8475 = vmatpush1.bf16.msra.mxu0 %v7682
    %8476 = vmatprep.subr.bf16.mxu0 0
    %8477 = vmatpush1.bf16.msra.mxu0 %v7685
    %8478 = vmatprep.subr.bf16.mxu0 0
    %8479 = vmatpush1.bf16.msra.mxu0 %v7688
    %8480 = vmatprep.subr.bf16.mxu0 0
    %8481 = vmatpush1.bf16.msra.mxu0 %v7691
    %8482 = vmatprep.subr.bf16.mxu0 0
    %8483 = vmatpush1.bf16.msra.mxu0 %v7694
    %8484 = vmatprep.subr.bf16.mxu0 0
    %8485 = vmatpush1.bf16.msra.mxu0 %v7697
    %8486 = vmatprep.subr.bf16.mxu0 0
    %8487 = vmatpush1.bf16.msra.mxu0 %v7700
    %8488 = vmatprep.subr.bf16.mxu0 0
    %8489 = vmatpush1.bf16.msra.mxu0 %v7703
    %8490 = vmatprep.subr.bf16.mxu0 0
    %8491 = vmatpush1.bf16.msra.mxu0 %v7706
    %8492 = vmatprep.subr.bf16.mxu0 0
    %8493 = vmatpush1.bf16.msra.mxu0 %v7709
    %8494 = vmatprep.subr.bf16.mxu0 0
    %8495 = vmatpush1.bf16.msra.mxu0 %v7712
    %8496 = vmatprep.mubr.bf16.mxu0 %v6063
    %8497 = vmatmul.mubr.bf16.gmra.mrb[0].mxu0 %v6062
    %v8498 = vpop.f32.mrb[0].mxu0
    %v8499 = vadd.f32 %v8458, %v8498
    %v8500 = vpop.f32.mrb[0].mxu0
    %v8501 = vpop.f32.mrb[0].mxu0
    %v8502 = vadd.f32 %v8461, %v8501
    %v8503 = vpop.f32.mrb[0].mxu0
    %8504 = vdwg.mxu0
    %v8505 = vadd.f32 %v3623, %v8251
    %v8506 = vadd.f32 %v3624, %v8253
    %v8507 = vadd.f32 %v3625, %v8499
    %v8508 = vadd.f32 %v3626, %v8255
    %v8509 = vadd.f32 %v3627, %v8257
    %v8510 = vadd.f32 %v3628, %v8502
    %8511 = vst [vmem:[#allocation24] sm:$0xff] %v8505
    %8512 = vst [vmem:[#allocation24 + $0x8] sm:$0xff] %v8506
    %8513 = vst [vmem:[#allocation24 + $0x10] sm:$0xff] %v8507
    %8514 = vst [vmem:[#allocation24 + $0x18] sm:$0xff] %v8508
    %8515 = vst [vmem:[#allocation24 + $0x20] sm:$0xff] %v8509
    %8516 = vst [vmem:[#allocation24 + $0x28] sm:$0xff] %v8510
    // Predicated region
    $region106: #{tpu_custom_call.1} parent=1 // pred_check
      _
    $region107: #{tpu_custom_call.1} parent=1 // pred_check_branch
      %8518 = sbr.rel (0) target = $region109
    $region108: #{tpu_custom_call.1} parent=1 // pred_region
      %s8520 = ssub.s32 768, 768
      %8521 = vsyncadd [#allocation5], %s8520
      %s8522 = sshll.u32 [#allocation24], 4
      %s8523 = int_to_ptr.vmem [resolvable:$true] %s8522
      %8528 = dma.vmem_to_hbm [thread:$0]  %s8523, 768, %s13, [#allocation5], 384, 384, 24
    $region109: #{tpu_custom_call.1} parent=1 // pred_fallthru
      _
    // Predicated region
    $region110: #{tpu_custom_call.1} parent=1 // pred_check
      _
    $region111: #{tpu_custom_call.1} parent=1 // pred_check_branch
      %8530 = sbr.rel (0) target = $region113
    $region112: #{tpu_custom_call.1} parent=1 // pred_region
      %8531 = dma.done [#allocation5], 768
    $region113: #{tpu_custom_call.1} parent=1 // pred_fallthru
      _
    %8532 = vsyncpa [#allocation4], 1
    %8533 = vsyncpa [#allocation7], 1
    %8534 = vsyncpa [#allocation10], 1
    %8535 = vsyncpa [#allocation13], 1
    %8536 = vsyncpa [#allocation16], 1
    %8537 = vsyncpa [#allocation19], 1
    %8538 = vsyncpa [#allocation22], 1
    %8539 = vsyncpa [#allocation5], 1

</llo_original>
